<compile_context>
chip_gen: v5e
topology: v5e:2x2
jax: 0.10.0
libtpu: 0.0.40
codegen_flags: <defaults>
</compile_context>

<pallas_src>
import functools

import jax
import jax.numpy as jnp
from jax.experimental import pallas as pl
from jax.experimental.pallas import tpu as pltpu

# ------------------------- small, shape-consistent config -------------------
N_FFT = 32
N_HOP = 8
NB_CHANNELS = 2
HIDDEN = 32
NB_LAYERS = 3                             # module default
NB_OUTPUT_BINS = N_FFT // 2 + 1           # 17
NB_BINS = NB_OUTPUT_BINS                  # max_bin=None
LSTM_HIDDEN = HIDDEN // 2                 # bidirectional LSTM
BN_EPS = 1e-5


def _vmem():
    return pl.BlockSpec(memory_space=pltpu.MemorySpace.VMEM)


def _smem():
    return pl.BlockSpec(memory_space=pltpu.MemorySpace.SMEM)


# ------------------------------ Kernel A -------------------------------------
def frontend_lstm_kernel(x_ref, pm_ref, ps_ref, w1_ref, s1_ref, b1_ref,
                         wih_ref, whh_ref, bias_ref, out_ref,
                         xgf_scr, xgb_scr, seqf_scr, seqb_scr,
                         *, nb_frames, nb_samples, hidden, lstm_hidden,
                         nb_layers, unroll):
    T, B, H, Hh = nb_frames, nb_samples, hidden, lstm_hidden

    # (x + input_mean) * input_scale -> fc1 (no bias) -> bn1 affine -> tanh
    xin = (x_ref[...] + pm_ref[...]) * ps_ref[...]
    h2d = jnp.tanh(
        jnp.dot(xin, w1_ref[...], preferred_element_type=jnp.float32)
        * s1_ref[...] + b1_ref[...])                          # (n, H)
    out_ref[:, :H] = h2d                                      # first half of cat

    cur2d = h2d                                               # layer input (n, H)
    for layer in range(nb_layers):
        wih_f = wih_ref[2 * layer]                            # (H, 4*Hh)
        wih_b = wih_ref[2 * layer + 1]
        whh_f = whh_ref[2 * layer]                            # (Hh, 4*Hh)
        whh_b = whh_ref[2 * layer + 1]
        b_f = bias_ref[2 * layer]                             # (1, 4*Hh)
        b_b = bias_ref[2 * layer + 1]

        # Input-gate projections for the whole sequence: one matmul / direction.
        xgf_scr[...] = jnp.dot(cur2d, wih_f,
                               preferred_element_type=jnp.float32) + b_f
        xgb_scr[...] = jnp.dot(cur2d, wih_b,
                               preferred_element_type=jnp.float32) + b_b

        def lstm_cell(gates, c_prev):
            # PyTorch gate order: i, f, g, o
            i = jax.nn.sigmoid(gates[:, 0 * Hh:1 * Hh])
            f = jax.nn.sigmoid(gates[:, 1 * Hh:2 * Hh])
            g = jnp.tanh(gates[:, 2 * Hh:3 * Hh])
            o = jax.nn.sigmoid(gates[:, 3 * Hh:4 * Hh])
            c = f * c_prev + i * g
            return o * jnp.tanh(c), c

        def step(t, carry):
            h_f, c_f, h_b, c_b = carry
            # forward direction: timestep t
            rf = pl.multiple_of(t * B, B)
            g_f = xgf_scr[pl.ds(rf, B), :] + jnp.dot(
                h_f, whh_f, preferred_element_type=jnp.float32)
            h_f, c_f = lstm_cell(g_f, c_f)
            seqf_scr[pl.ds(rf, B), :] = h_f
            # backward direction: timestep T-1-t
            rb = pl.multiple_of((T - 1 - t) * B, B)
            g_b = xgb_scr[pl.ds(rb, B), :] + jnp.dot(
                h_b, whh_b, preferred_element_type=jnp.float32)
            h_b, c_b = lstm_cell(g_b, c_b)
            seqb_scr[pl.ds(rb, B), :] = h_b
            return h_f, c_f, h_b, c_b

        z = jnp.zeros((B, Hh), jnp.float32)
        jax.lax.fori_loop(0, T, step, (z, z, z, z), unroll=unroll)

        cur2d = jnp.concatenate([seqf_scr[...], seqb_scr[...]], axis=-1)

    out_ref[:, H:] = cur2d                                    # second half of cat


def run_frontend_lstm(x2d, pre_mean, pre_scale, w1, s1, b1,
                      wih, whh, bias, nb_frames, nb_samples):
    n = nb_frames * nb_samples
    kern = functools.partial(
        frontend_lstm_kernel,
        nb_frames=nb_frames, nb_samples=nb_samples,
        hidden=HIDDEN, lstm_hidden=LSTM_HIDDEN, nb_layers=NB_LAYERS,
        unroll=nb_frames <= 32)
    return pl.pallas_call(
        kern,
        out_shape=jax.ShapeDtypeStruct((n, 2 * HIDDEN), jnp.float32),
        in_specs=[_vmem()] * 9,
        out_specs=_vmem(),
        scratch_shapes=[
            pltpu.VMEM((n, 4 * LSTM_HIDDEN), jnp.float32),    # fwd input gates
            pltpu.VMEM((n, 4 * LSTM_HIDDEN), jnp.float32),    # bwd input gates
            pltpu.VMEM((n, LSTM_HIDDEN), jnp.float32),        # fwd hidden seq
            pltpu.VMEM((n, LSTM_HIDDEN), jnp.float32),        # bwd hidden seq
        ],
    )(x2d, pre_mean, pre_scale, w1, s1, b1, wih, whh, bias)


# ------------------------------ Kernel B -------------------------------------
def head_kernel(cat_ref, w2_ref, s2_ref, b2_ref, w3_ref, s3_ref, b3_ref,
                mix_ref, yw_ref, xo_ref, y_ref, *, nb_samples):
    S = nb_samples
    n = cat_ref.shape[0]

    # fc2 (no bias) -> bn2 affine -> relu
    x2 = jnp.dot(cat_ref[...], w2_ref[...], preferred_element_type=jnp.float32)
    x2 = jnp.maximum(x2 * s2_ref[...] + b2_ref[...], 0.0)     # (n, H)

    # x branch: fc3 -> bn3 (*output_scale, +output_mean folded) -> relu -> *mix
    x3 = jnp.dot(x2, w3_ref[...], preferred_element_type=jnp.float32)
    x3 = x3 * s3_ref[...] + b3_ref[...]
    xo_ref[...] = jnp.maximum(x3, 0.0) * mix_ref[...]

    # y branch: Conv2d(1,32,(1,7),pad=(0,3)) -> AvgPool2d((hidden,1)) -> fc4
    # -> bn4 -> sigmoid, algebraically collapsed (all linear, conv kernel
    # height 1) to a 7-tap conv over frames on the per-row hidden mean.
    # Row r = frame*S + sample, so a frame shift of d is a row shift of d*S.
    m = jnp.mean(x2, axis=-1, keepdims=True)                  # (n, 1)
    zpad = jnp.zeros((3 * S, 1), jnp.float32)
    m_pad = jnp.concatenate([zpad, m, zpad], axis=0)          # (n + 6S, 1)
    acc = jnp.zeros((n, 1), jnp.float32)
    for k in range(7):                                        # static unrolled
        acc = acc + yw_ref[k] * m_pad[k * S:k * S + n, :]
    y_ref[...] = jax.nn.sigmoid(acc + yw_ref[7])


def run_head(cat, w2, s2, b2, w3, s3f, b3f, mix2d, yw, nb_samples):
    n = cat.shape[0]
    out_feat = w3.shape[1]
    kern = functools.partial(head_kernel, nb_samples=nb_samples)
    return pl.pallas_call(
        kern,
        out_shape=(jax.ShapeDtypeStruct((n, out_feat), jnp.float32),
                   jax.ShapeDtypeStruct((n, 1), jnp.float32)),
        in_specs=[_vmem()] * 8 + [_smem()],
        out_specs=(_vmem(), _vmem()),
    )(cat, w2, s2, b2, w3, s3f, b3f, mix2d, yw)


# ------------------------------- JAX glue ------------------------------------
def stft_magnitude(wave, n_fft, n_hop):
    """torch.stft(center=False, onesided, periodic hann) + Spectrogram(power=1).

    wave: (nb_samples, nb_channels, nb_timesteps)
    returns (nb_frames, nb_samples, nb_channels, nb_bins)
    """
    # TODO(synk): FFT has no Pallas TPU primitive; STFT stays in plain JAX glue.
    s, c, L = wave.shape
    window = 0.5 * (1.0 - jnp.cos(2.0 * jnp.pi * jnp.arange(n_fft) / n_fft))
    xf = wave.reshape(s * c, L)
    n_frames = 1 + (L - n_fft) // n_hop
    idx = jnp.arange(n_frames)[:, None] * n_hop + jnp.arange(n_fft)[None, :]
    frames = xf[:, idx] * window[None, None, :]               # (s*c, F, n_fft)
    spec = jnp.fft.rfft(frames, axis=-1)                      # (s*c, F, bins)
    mag = jnp.sqrt(jnp.real(spec) ** 2 + jnp.imag(spec) ** 2)  # power=1
    mag = mag.reshape(s, c, n_frames, -1)                     # (s, c, F, bins)
    return jnp.transpose(mag, (2, 0, 1, 3)).astype(jnp.float32)


def init_params(key):
    keys = jax.random.split(key, 64)
    it = iter(keys)

    def w(shape, scale=0.1):
        return (scale * jax.random.normal(next(it), shape)).astype(jnp.float32)

    def bn(num):
        gamma = 1.0 + 0.1 * jax.random.normal(next(it), (num,))
        beta = 0.1 * jax.random.normal(next(it), (num,))
        rmean = 0.05 * jax.random.normal(next(it), (num,))
        rvar = 1.0 + 0.1 * jnp.abs(jax.random.normal(next(it), (num,)))
        scale = gamma / jnp.sqrt(rvar + BN_EPS)
        shift = beta - rmean * scale
        return scale.astype(jnp.float32), shift.astype(jnp.float32)

    p = {
        "input_mean": jnp.zeros((NB_BINS,), jnp.float32),
        "input_scale": jnp.ones((NB_BINS,), jnp.float32),
        "output_scale": jnp.ones((NB_OUTPUT_BINS,), jnp.float32),
        "output_mean": jnp.ones((NB_OUTPUT_BINS,), jnp.float32),
        "w1": w((NB_BINS * NB_CHANNELS, HIDDEN)),
        "bn1": bn(HIDDEN),
        "w2": w((HIDDEN * 2, HIDDEN)),
        "bn2": bn(HIDDEN),
        "w3": w((HIDDEN, NB_OUTPUT_BINS * NB_CHANNELS)),
        "bn3": bn(NB_OUTPUT_BINS * NB_CHANNELS),
        "conv_w": w((32, 7)),        # Conv2d(1, 32, kernel=(1,7)) weight (o, k)
        "conv_b": w((32,)),          # conv bias
        "w4": w((32,)),              # fc4: Linear(32, 1, bias=False)
        "bn4": bn(1),
    }
    # Stacked LSTM weights, index = 2*layer + direction (0=fwd, 1=bwd).
    # NOTE: when loading real PyTorch weights, b must be b_ih + b_hh.
    wih, whh, bias = [], [], []
    for _layer in range(NB_LAYERS):
        for _direction in range(2):
            wih.append(w((HIDDEN, 4 * LSTM_HIDDEN)))
            whh.append(w((LSTM_HIDDEN, 4 * LSTM_HIDDEN)))
            bias.append(w((1, 4 * LSTM_HIDDEN)))
    p["lstm_wih"] = jnp.stack(wih)      # (2L, H, 4*Hh)
    p["lstm_whh"] = jnp.stack(whh)      # (2L, Hh, 4*Hh)
    p["lstm_b"] = jnp.stack(bias)       # (2L, 1, 4*Hh)
    return p


def open_unmix_mtl_conv_late_forward(wave, p):
    # transform = STFT + Spectrogram (power=1)
    x = stft_magnitude(wave, N_FFT, N_HOP)            # (F, S, C, bins)
    nb_frames, nb_samples, nb_channels, _ = x.shape
    mix = x                                           # mix = x.detach().clone()
    n = nb_frames * nb_samples

    x2d = x[..., :NB_BINS].reshape(n, nb_channels * NB_BINS)
    pre_mean = jnp.tile(p["input_mean"], nb_channels).reshape(1, -1)
    pre_scale = jnp.tile(p["input_scale"], nb_channels).reshape(1, -1)
    s1, b1 = p["bn1"]

    # Kernel A: fc1/bn1/tanh + 3-layer bi-LSTM + [h, lstm_out] concat.
    cat = run_frontend_lstm(x2d, pre_mean, pre_scale, p["w1"],
                            s1.reshape(1, -1), b1.reshape(1, -1),
                            p["lstm_wih"], p["lstm_whh"], p["lstm_b"],
                            nb_frames, nb_samples)

    # Fold bn3 with output_scale/mean, and conv+pool+fc4+bn4 into 7 taps + bias.
    s2, b2 = p["bn2"]
    s3, b3 = p["bn3"]
    osc = jnp.tile(p["output_scale"], nb_channels).reshape(1, -1)
    omn = jnp.tile(p["output_mean"], nb_channels).reshape(1, -1)
    s3f = s3.reshape(1, -1) * osc
    b3f = b3.reshape(1, -1) * osc + omn
    s4, sh4 = p["bn4"]
    w_eff = jnp.dot(p["w4"], p["conv_w"])             # (7,)  fc4 o conv taps
    c_eff = jnp.dot(p["w4"], p["conv_b"])             # scalar (conv bias thru fc4)
    yw = jnp.concatenate(
        [w_eff * s4[0], (c_eff * s4[0] + sh4[0]).reshape(1)]).astype(jnp.float32)

    mix2d = mix.reshape(n, nb_channels * NB_OUTPUT_BINS)

    # Kernel B: fc2/bn2/relu + x branch (fc3/bn3/scale/mean/relu/*mix) + y branch.
    xo, y = run_head(cat, p["w2"], s2.reshape(1, -1), b2.reshape(1, -1),
                     p["w3"], s3f, b3f, mix2d, yw, nb_samples)

    x_out = xo.reshape(nb_frames, nb_samples, nb_channels, NB_OUTPUT_BINS)
    # Raw reshape matches PyTorch's y.reshape(nb_samples, nb_frames, 1) on a
    # row-major (frames*samples, 1) tensor (bug-for-bug).
    y_out = y.reshape(nb_samples, nb_frames, 1)
    return x_out, y_out


if __name__ == "__main__":
    key = jax.random.PRNGKey(0)
    pkey, xkey = jax.random.split(key)
    params = init_params(pkey)

    nb_samples = 2
    nb_timesteps = N_FFT + 7 * N_HOP                  # -> 8 STFT frames
    wave = jax.random.normal(xkey, (nb_samples, NB_CHANNELS, nb_timesteps),
                             dtype=jnp.float32)

    fwd = jax.jit(open_unmix_mtl_conv_late_forward)
    x_out, y_out = fwd(wave, params)
    jax.block_until_ready((x_out, y_out))

    nb_frames = 1 + (nb_timesteps - N_FFT) // N_HOP
    assert x_out.shape == (nb_frames, nb_samples, NB_CHANNELS, NB_OUTPUT_BINS)
    assert y_out.shape == (nb_samples, nb_frames, 1)
    print("KERNEL_OK")
</pallas_src>

<mosaic_0001>
module attributes {stable_mosaic.version = 11 : i64} {
  func.func @head_kernel(%arg0: memref<16x64xf32, #tpu.memory_space<vmem>>, %arg1: memref<64x32xf32, #tpu.memory_space<vmem>>, %arg2: memref<1x32xf32, #tpu.memory_space<vmem>>, %arg3: memref<1x32xf32, #tpu.memory_space<vmem>>, %arg4: memref<32x34xf32, #tpu.memory_space<vmem>>, %arg5: memref<1x34xf32, #tpu.memory_space<vmem>>, %arg6: memref<1x34xf32, #tpu.memory_space<vmem>>, %arg7: memref<16x34xf32, #tpu.memory_space<vmem>>, %arg8: memref<8xf32, #tpu.memory_space<smem>>, %arg9: memref<16x34xf32, #tpu.memory_space<vmem>>, %arg10: memref<16x1xf32, #tpu.memory_space<vmem>>) attributes {dimension_semantics = [], scalar_prefetch = 0 : i64, scratch_operands = 0 : i64, tpu.core_type = #tpu.core_type<tc>} {
    %c0 = arith.constant 0 : index
    %c0_0 = arith.constant 0 : index
    %0 = vector.load %arg0[%c0, %c0_0] : memref<16x64xf32, #tpu.memory_space<vmem>>, vector<16x64xf32>
    %c0_1 = arith.constant 0 : index
    %c0_2 = arith.constant 0 : index
    %1 = vector.load %arg1[%c0_1, %c0_2] : memref<64x32xf32, #tpu.memory_space<vmem>>, vector<64x32xf32>
    %cst = arith.constant dense<0.000000e+00> : vector<16x32xf32>
    %2 = tpu.matmul %0, %1, %cst {dimension_numbers = #tpu.dot_dimension_numbers<[1], [0], [0], [1], [0, 0, 1, 1], [], []>} : vector<16x64xf32>, vector<64x32xf32>, vector<16x32xf32> -> vector<16x32xf32>
    %c0_3 = arith.constant 0 : index
    %c0_4 = arith.constant 0 : index
    %3 = vector.load %arg2[%c0_3, %c0_4] : memref<1x32xf32, #tpu.memory_space<vmem>>, vector<1x32xf32>
    %4 = vector.broadcast %3 : vector<1x32xf32> to vector<16x32xf32>
    %5 = arith.mulf %2, %4 : vector<16x32xf32>
    %c0_5 = arith.constant 0 : index
    %c0_6 = arith.constant 0 : index
    %6 = vector.load %arg3[%c0_5, %c0_6] : memref<1x32xf32, #tpu.memory_space<vmem>>, vector<1x32xf32>
    %7 = vector.broadcast %6 : vector<1x32xf32> to vector<16x32xf32>
    %8 = arith.addf %5, %7 : vector<16x32xf32>
    %cst_7 = arith.constant 0.000000e+00 : f32
    %9 = vector.broadcast %cst_7 : f32 to vector<16x32xf32>
    %10 = arith.maximumf %8, %9 : vector<16x32xf32>
    %c0_8 = arith.constant 0 : index
    %c0_9 = arith.constant 0 : index
    %11 = vector.load %arg4[%c0_8, %c0_9] : memref<32x34xf32, #tpu.memory_space<vmem>>, vector<32x34xf32>
    %cst_10 = arith.constant dense<0.000000e+00> : vector<16x34xf32>
    %12 = tpu.matmul %10, %11, %cst_10 {dimension_numbers = #tpu.dot_dimension_numbers<[1], [0], [0], [1], [0, 0, 1, 1], [], []>} : vector<16x32xf32>, vector<32x34xf32>, vector<16x34xf32> -> vector<16x34xf32>
    %c0_11 = arith.constant 0 : index
    %c0_12 = arith.constant 0 : index
    %13 = vector.load %arg5[%c0_11, %c0_12] : memref<1x34xf32, #tpu.memory_space<vmem>>, vector<1x34xf32>
    %14 = vector.broadcast %13 : vector<1x34xf32> to vector<16x34xf32>
    %15 = arith.mulf %12, %14 : vector<16x34xf32>
    %c0_13 = arith.constant 0 : index
    %c0_14 = arith.constant 0 : index
    %16 = vector.load %arg6[%c0_13, %c0_14] : memref<1x34xf32, #tpu.memory_space<vmem>>, vector<1x34xf32>
    %17 = vector.broadcast %16 : vector<1x34xf32> to vector<16x34xf32>
    %18 = arith.addf %15, %17 : vector<16x34xf32>
    %cst_15 = arith.constant 0.000000e+00 : f32
    %19 = vector.broadcast %cst_15 : f32 to vector<16x34xf32>
    %20 = arith.maximumf %18, %19 : vector<16x34xf32>
    %c0_16 = arith.constant 0 : index
    %c0_17 = arith.constant 0 : index
    %21 = vector.load %arg7[%c0_16, %c0_17] : memref<16x34xf32, #tpu.memory_space<vmem>>, vector<16x34xf32>
    %22 = arith.mulf %20, %21 : vector<16x34xf32>
    %c0_18 = arith.constant 0 : index
    %c0_19 = arith.constant 0 : index
    %23 = vector.load %arg9[%c0_18, %c0_19] : memref<16x34xf32, #tpu.memory_space<vmem>>, vector<16x34xf32>
    tpu.vector_store %arg9[%c0_18, %c0_19], %22 {strides = array<i32>} : memref<16x34xf32, #tpu.memory_space<vmem>>, vector<16x34xf32>,
    %cst_20 = arith.constant dense<0.000000e+00> : vector<16xf32>
    %24 = vector.multi_reduction <add>, %10, %cst_20 [1] : vector<16x32xf32> to vector<16xf32>
    %25 = vector.shape_cast %24 : vector<16xf32> to vector<16x1xf32>
    %cst_21 = arith.constant 3.200000e+01 : f32
    %26 = vector.broadcast %cst_21 : f32 to vector<16x1xf32>
    %27 = arith.divf %25, %26 : vector<16x1xf32>
    %cst_22 = arith.constant 0.000000e+00 : f32
    %28 = vector.broadcast %cst_22 : f32 to vector<6x1xf32>
    %29 = tpu.concatenate %28, %27, %28 in 0 : vector<6x1xf32>, vector<16x1xf32>, vector<6x1xf32> -> vector<28x1xf32>
    %cst_23 = arith.constant 0.000000e+00 : f32
    %30 = vector.broadcast %cst_23 : f32 to vector<16x1xf32>
    %c0_24 = arith.constant 0 : index
    %31 = memref.load %arg8[%c0_24] : memref<8xf32, #tpu.memory_space<smem>>
    %32 = vector.extract_strided_slice %29 {offsets = [0, 0], sizes = [16, 1], strides = [1, 1]} : vector<28x1xf32> to vector<16x1xf32>
    %33 = vector.broadcast %31 : f32 to vector<16x1xf32>
    %34 = arith.mulf %33, %32 : vector<16x1xf32>
    %35 = arith.addf %30, %34 : vector<16x1xf32>
    %c1 = arith.constant 1 : index
    %36 = memref.load %arg8[%c1] : memref<8xf32, #tpu.memory_space<smem>>
    %37 = vector.extract_strided_slice %29 {offsets = [2, 0], sizes = [16, 1], strides = [1, 1]} : vector<28x1xf32> to vector<16x1xf32>
    %38 = vector.broadcast %36 : f32 to vector<16x1xf32>
    %39 = arith.mulf %38, %37 : vector<16x1xf32>
    %40 = arith.addf %35, %39 : vector<16x1xf32>
    %c2 = arith.constant 2 : index
    %41 = memref.load %arg8[%c2] : memref<8xf32, #tpu.memory_space<smem>>
    %42 = vector.extract_strided_slice %29 {offsets = [4, 0], sizes = [16, 1], strides = [1, 1]} : vector<28x1xf32> to vector<16x1xf32>
    %43 = vector.broadcast %41 : f32 to vector<16x1xf32>
    %44 = arith.mulf %43, %42 : vector<16x1xf32>
    %45 = arith.addf %40, %44 : vector<16x1xf32>
    %c3 = arith.constant 3 : index
    %46 = memref.load %arg8[%c3] : memref<8xf32, #tpu.memory_space<smem>>
    %47 = vector.extract_strided_slice %29 {offsets = [6, 0], sizes = [16, 1], strides = [1, 1]} : vector<28x1xf32> to vector<16x1xf32>
    %48 = vector.broadcast %46 : f32 to vector<16x1xf32>
    %49 = arith.mulf %48, %47 : vector<16x1xf32>
    %50 = arith.addf %45, %49 : vector<16x1xf32>
    %c4 = arith.constant 4 : index
    %51 = memref.load %arg8[%c4] : memref<8xf32, #tpu.memory_space<smem>>
    %52 = vector.extract_strided_slice %29 {offsets = [8, 0], sizes = [16, 1], strides = [1, 1]} : vector<28x1xf32> to vector<16x1xf32>
    %53 = vector.broadcast %51 : f32 to vector<16x1xf32>
    %54 = arith.mulf %53, %52 : vector<16x1xf32>
    %55 = arith.addf %50, %54 : vector<16x1xf32>
    %c5 = arith.constant 5 : index
    %56 = memref.load %arg8[%c5] : memref<8xf32, #tpu.memory_space<smem>>
    %57 = vector.extract_strided_slice %29 {offsets = [10, 0], sizes = [16, 1], strides = [1, 1]} : vector<28x1xf32> to vector<16x1xf32>
    %58 = vector.broadcast %56 : f32 to vector<16x1xf32>
    %59 = arith.mulf %58, %57 : vector<16x1xf32>
    %60 = arith.addf %55, %59 : vector<16x1xf32>
    %c6 = arith.constant 6 : index
    %61 = memref.load %arg8[%c6] : memref<8xf32, #tpu.memory_space<smem>>
    %62 = vector.extract_strided_slice %29 {offsets = [12, 0], sizes = [16, 1], strides = [1, 1]} : vector<28x1xf32> to vector<16x1xf32>
    %63 = vector.broadcast %61 : f32 to vector<16x1xf32>
    %64 = arith.mulf %63, %62 : vector<16x1xf32>
    %65 = arith.addf %60, %64 : vector<16x1xf32>
    %c7 = arith.constant 7 : index
    %66 = memref.load %arg8[%c7] : memref<8xf32, #tpu.memory_space<smem>>
    %67 = vector.broadcast %66 : f32 to vector<16x1xf32>
    %68 = arith.addf %65, %67 : vector<16x1xf32>
    %69 = arith.negf %68 : vector<16x1xf32>
    %70 = math.exp %69 : vector<16x1xf32>
    %cst_25 = arith.constant 1.000000e+00 : f32
    %71 = vector.broadcast %cst_25 : f32 to vector<16x1xf32>
    %72 = arith.addf %71, %70 : vector<16x1xf32>
    %73 = arith.divf %71, %72 : vector<16x1xf32>
    %c0_26 = arith.constant 0 : index
    %c0_27 = arith.constant 0 : index
    %74 = vector.load %arg10[%c0_26, %c0_27] : memref<16x1xf32, #tpu.memory_space<vmem>>, vector<16x1xf32>
    tpu.vector_store %arg10[%c0_26, %c0_27], %73 {strides = array<i32>} : memref<16x1xf32, #tpu.memory_space<vmem>>, vector<16x1xf32>,
    return
  }
}

module attributes {stable_mosaic.version = 11 : i64} {
  func.func @frontend_lstm_kernel(%arg0: memref<16x34xf32, #tpu.memory_space<vmem>>, %arg1: memref<1x34xf32, #tpu.memory_space<vmem>>, %arg2: memref<1x34xf32, #tpu.memory_space<vmem>>, %arg3: memref<34x32xf32, #tpu.memory_space<vmem>>, %arg4: memref<1x32xf32, #tpu.memory_space<vmem>>, %arg5: memref<1x32xf32, #tpu.memory_space<vmem>>, %arg6: memref<6x32x64xf32, #tpu.memory_space<vmem>>, %arg7: memref<6x16x64xf32, #tpu.memory_space<vmem>>, %arg8: memref<6x1x64xf32, #tpu.memory_space<vmem>>, %arg9: memref<16x64xf32, #tpu.memory_space<vmem>>, %arg10: memref<16x64xf32, #tpu.memory_space<vmem>>, %arg11: memref<16x64xf32, #tpu.memory_space<vmem>>, %arg12: memref<16x16xf32, #tpu.memory_space<vmem>>, %arg13: memref<16x16xf32, #tpu.memory_space<vmem>>) attributes {dimension_semantics = [], scalar_prefetch = 0 : i64, scratch_operands = 4 : i64, tpu.core_type = #tpu.core_type<tc>} {
    %c0 = arith.constant 0 : index
    %c0_0 = arith.constant 0 : index
    %0 = vector.load %arg0[%c0, %c0_0] : memref<16x34xf32, #tpu.memory_space<vmem>>, vector<16x34xf32>
    %c0_1 = arith.constant 0 : index
    %c0_2 = arith.constant 0 : index
    %1 = vector.load %arg1[%c0_1, %c0_2] : memref<1x34xf32, #tpu.memory_space<vmem>>, vector<1x34xf32>
    %2 = vector.broadcast %1 : vector<1x34xf32> to vector<16x34xf32>
    %3 = arith.addf %0, %2 : vector<16x34xf32>
    %c0_3 = arith.constant 0 : index
    %c0_4 = arith.constant 0 : index
    %4 = vector.load %arg2[%c0_3, %c0_4] : memref<1x34xf32, #tpu.memory_space<vmem>>, vector<1x34xf32>
    %5 = vector.broadcast %4 : vector<1x34xf32> to vector<16x34xf32>
    %6 = arith.mulf %3, %5 : vector<16x34xf32>
    %c0_5 = arith.constant 0 : index
    %c0_6 = arith.constant 0 : index
    %7 = vector.load %arg3[%c0_5, %c0_6] : memref<34x32xf32, #tpu.memory_space<vmem>>, vector<34x32xf32>
    %cst = arith.constant dense<0.000000e+00> : vector<16x32xf32>
    %8 = tpu.matmul %6, %7, %cst {dimension_numbers = #tpu.dot_dimension_numbers<[1], [0], [0], [1], [0, 0, 1, 1], [], []>} : vector<16x34xf32>, vector<34x32xf32>, vector<16x32xf32> -> vector<16x32xf32>
    %c0_7 = arith.constant 0 : index
    %c0_8 = arith.constant 0 : index
    %9 = vector.load %arg4[%c0_7, %c0_8] : memref<1x32xf32, #tpu.memory_space<vmem>>, vector<1x32xf32>
    %10 = vector.broadcast %9 : vector<1x32xf32> to vector<16x32xf32>
    %11 = arith.mulf %8, %10 : vector<16x32xf32>
    %c0_9 = arith.constant 0 : index
    %c0_10 = arith.constant 0 : index
    %12 = vector.load %arg5[%c0_9, %c0_10] : memref<1x32xf32, #tpu.memory_space<vmem>>, vector<1x32xf32>
    %13 = vector.broadcast %12 : vector<1x32xf32> to vector<16x32xf32>
    %14 = arith.addf %11, %13 : vector<16x32xf32>
    %15 = math.tanh %14 : vector<16x32xf32>
    %c0_11 = arith.constant 0 : index
    %c0_12 = arith.constant 0 : index
    %16 = vector.load %arg9[%c0_11, %c0_12] : memref<16x64xf32, #tpu.memory_space<vmem>>, vector<16x32xf32>
    tpu.vector_store %arg9[%c0_11, %c0_12], %15 {strides = array<i32>} : memref<16x64xf32, #tpu.memory_space<vmem>>, vector<16x32xf32>,
    %c0_13 = arith.constant 0 : index
    %c0_14 = arith.constant 0 : index
    %c0_15 = arith.constant 0 : index
    %17 = vector.load %arg6[%c0_13, %c0_14, %c0_15] : memref<6x32x64xf32, #tpu.memory_space<vmem>>, vector<1x32x64xf32>
    %18 = vector.shape_cast %17 : vector<1x32x64xf32> to vector<32x64xf32>
    %c1 = arith.constant 1 : index
    %c0_16 = arith.constant 0 : index
    %c0_17 = arith.constant 0 : index
    %19 = vector.load %arg6[%c1, %c0_16, %c0_17] : memref<6x32x64xf32, #tpu.memory_space<vmem>>, vector<1x32x64xf32>
    %20 = vector.shape_cast %19 : vector<1x32x64xf32> to vector<32x64xf32>
    %c0_18 = arith.constant 0 : index
    %c0_19 = arith.constant 0 : index
    %c0_20 = arith.constant 0 : index
    %21 = vector.load %arg7[%c0_18, %c0_19, %c0_20] : memref<6x16x64xf32, #tpu.memory_space<vmem>>, vector<1x16x64xf32>
    %22 = vector.shape_cast %21 : vector<1x16x64xf32> to vector<16x64xf32>
    %c1_21 = arith.constant 1 : index
    %c0_22 = arith.constant 0 : index
    %c0_23 = arith.constant 0 : index
    %23 = vector.load %arg7[%c1_21, %c0_22, %c0_23] : memref<6x16x64xf32, #tpu.memory_space<vmem>>, vector<1x16x64xf32>
    %24 = vector.shape_cast %23 : vector<1x16x64xf32> to vector<16x64xf32>
    %c0_24 = arith.constant 0 : index
    %c0_25 = arith.constant 0 : index
    %c0_26 = arith.constant 0 : index
    %25 = vector.load %arg8[%c0_24, %c0_25, %c0_26] : memref<6x1x64xf32, #tpu.memory_space<vmem>>, vector<1x1x64xf32>
    %26 = vector.shape_cast %25 : vector<1x1x64xf32> to vector<1x64xf32>
    %c1_27 = arith.constant 1 : index
    %c0_28 = arith.constant 0 : index
    %c0_29 = arith.constant 0 : index
    %27 = vector.load %arg8[%c1_27, %c0_28, %c0_29] : memref<6x1x64xf32, #tpu.memory_space<vmem>>, vector<1x1x64xf32>
    %28 = vector.shape_cast %27 : vector<1x1x64xf32> to vector<1x64xf32>
    %cst_30 = arith.constant dense<0.000000e+00> : vector<16x64xf32>
    %29 = tpu.matmul %15, %18, %cst_30 {dimension_numbers = #tpu.dot_dimension_numbers<[1], [0], [0], [1], [0, 0, 1, 1], [], []>} : vector<16x32xf32>, vector<32x64xf32>, vector<16x64xf32> -> vector<16x64xf32>
    %30 = vector.broadcast %26 : vector<1x64xf32> to vector<16x64xf32>
    %31 = arith.addf %29, %30 : vector<16x64xf32>
    %c0_31 = arith.constant 0 : index
    %c0_32 = arith.constant 0 : index
    %32 = vector.load %arg10[%c0_31, %c0_32] : memref<16x64xf32, #tpu.memory_space<vmem>>, vector<16x64xf32>
    tpu.vector_store %arg10[%c0_31, %c0_32], %31 {strides = array<i32>} : memref<16x64xf32, #tpu.memory_space<vmem>>, vector<16x64xf32>,
    %cst_33 = arith.constant dense<0.000000e+00> : vector<16x64xf32>
    %33 = tpu.matmul %15, %20, %cst_33 {dimension_numbers = #tpu.dot_dimension_numbers<[1], [0], [0], [1], [0, 0, 1, 1], [], []>} : vector<16x32xf32>, vector<32x64xf32>, vector<16x64xf32> -> vector<16x64xf32>
    %34 = vector.broadcast %28 : vector<1x64xf32> to vector<16x64xf32>
    %35 = arith.addf %33, %34 : vector<16x64xf32>
    %c0_34 = arith.constant 0 : index
    %c0_35 = arith.constant 0 : index
    %36 = vector.load %arg11[%c0_34, %c0_35] : memref<16x64xf32, #tpu.memory_space<vmem>>, vector<16x64xf32>
    tpu.vector_store %arg11[%c0_34, %c0_35], %35 {strides = array<i32>} : memref<16x64xf32, #tpu.memory_space<vmem>>, vector<16x64xf32>,
    %cst_36 = arith.constant 0.000000e+00 : f32
    %37 = vector.broadcast %cst_36 : f32 to vector<2x16xf32>
    %c0_i32 = arith.constant 0 : i32
    %c2_i32 = arith.constant 2 : i32
    %38 = arith.muli %c0_i32, %c2_i32 : i32
    %39 = tpu.assume_multiple %38, 2 : i32
    %40 = arith.index_cast %39 : i32 to index
    %c0_37 = arith.constant 0 : index
    %41 = vector.load %arg10[%40, %c0_37] : memref<16x64xf32, #tpu.memory_space<vmem>>, vector<2x64xf32>
    %cst_38 = arith.constant dense<0.000000e+00> : vector<2x64xf32>
    %42 = tpu.matmul %37, %22, %cst_38 {dimension_numbers = #tpu.dot_dimension_numbers<[1], [0], [0], [1], [0, 0, 1, 1], [], []>} : vector<2x16xf32>, vector<16x64xf32>, vector<2x64xf32> -> vector<2x64xf32>
    %43 = arith.addf %41, %42 : vector<2x64xf32>
    %44 = vector.extract_strided_slice %43 {offsets = [0, 0], sizes = [2, 16], strides = [1, 1]} : vector<2x64xf32> to vector<2x16xf32>
    %45 = arith.negf %44 : vector<2x16xf32>
    %46 = math.exp %45 : vector<2x16xf32>
    %cst_39 = arith.constant 1.000000e+00 : f32
    %47 = vector.broadcast %cst_39 : f32 to vector<2x16xf32>
    %48 = arith.addf %47, %46 : vector<2x16xf32>
    %49 = arith.divf %47, %48 : vector<2x16xf32>
    %50 = vector.extract_strided_slice %43 {offsets = [0, 16], sizes = [2, 16], strides = [1, 1]} : vector<2x64xf32> to vector<2x16xf32>
    %51 = arith.negf %50 : vector<2x16xf32>
    %52 = math.exp %51 : vector<2x16xf32>
    %cst_40 = arith.constant 1.000000e+00 : f32
    %53 = vector.broadcast %cst_40 : f32 to vector<2x16xf32>
    %54 = arith.addf %53, %52 : vector<2x16xf32>
    %55 = arith.divf %53, %54 : vector<2x16xf32>
    %56 = vector.extract_strided_slice %43 {offsets = [0, 32], sizes = [2, 16], strides = [1, 1]} : vector<2x64xf32> to vector<2x16xf32>
    %57 = math.tanh %56 : vector<2x16xf32>
    %58 = vector.extract_strided_slice %43 {offsets = [0, 48], sizes = [2, 16], strides = [1, 1]} : vector<2x64xf32> to vector<2x16xf32>
    %59 = arith.negf %58 : vector<2x16xf32>
    %60 = math.exp %59 : vector<2x16xf32>
    %cst_41 = arith.constant 1.000000e+00 : f32
    %61 = vector.broadcast %cst_41 : f32 to vector<2x16xf32>
    %62 = arith.addf %61, %60 : vector<2x16xf32>
    %63 = arith.divf %61, %62 : vector<2x16xf32>
    %64 = arith.mulf %55, %37 : vector<2x16xf32>
    %65 = arith.mulf %49, %57 : vector<2x16xf32>
    %66 = arith.addf %64, %65 : vector<2x16xf32>
    %67 = math.tanh %66 : vector<2x16xf32>
    %68 = arith.mulf %63, %67 : vector<2x16xf32>
    %69 = arith.index_cast %39 : i32 to index
    %c0_42 = arith.constant 0 : index
    %70 = vector.load %arg12[%69, %c0_42] : memref<16x16xf32, #tpu.memory_space<vmem>>, vector<2x16xf32>
    tpu.vector_store %arg12[%69, %c0_42], %68 {strides = array<i32>} : memref<16x16xf32, #tpu.memory_space<vmem>>, vector<2x16xf32>,
    %c7_i32 = arith.constant 7 : i32
    %71 = arith.subi %c7_i32, %c0_i32 : i32
    %c2_i32_43 = arith.constant 2 : i32
    %72 = arith.muli %71, %c2_i32_43 : i32
    %73 = tpu.assume_multiple %72, 2 : i32
    %74 = arith.index_cast %73 : i32 to index
    %c0_44 = arith.constant 0 : index
    %75 = vector.load %arg11[%74, %c0_44] : memref<16x64xf32, #tpu.memory_space<vmem>>, vector<2x64xf32>
    %cst_45 = arith.constant dense<0.000000e+00> : vector<2x64xf32>
    %76 = tpu.matmul %37, %24, %cst_45 {dimension_numbers = #tpu.dot_dimension_numbers<[1], [0], [0], [1], [0, 0, 1, 1], [], []>} : vector<2x16xf32>, vector<16x64xf32>, vector<2x64xf32> -> vector<2x64xf32>
    %77 = arith.addf %75, %76 : vector<2x64xf32>
    %78 = vector.extract_strided_slice %77 {offsets = [0, 0], sizes = [2, 16], strides = [1, 1]} : vector<2x64xf32> to vector<2x16xf32>
    %79 = arith.negf %78 : vector<2x16xf32>
    %80 = math.exp %79 : vector<2x16xf32>
    %cst_46 = arith.constant 1.000000e+00 : f32
    %81 = vector.broadcast %cst_46 : f32 to vector<2x16xf32>
    %82 = arith.addf %81, %80 : vector<2x16xf32>
    %83 = arith.divf %81, %82 : vector<2x16xf32>
    %84 = vector.extract_strided_slice %77 {offsets = [0, 16], sizes = [2, 16], strides = [1, 1]} : vector<2x64xf32> to vector<2x16xf32>
    %85 = arith.negf %84 : vector<2x16xf32>
    %86 = math.exp %85 : vector<2x16xf32>
    %cst_47 = arith.constant 1.000000e+00 : f32
    %87 = vector.broadcast %cst_47 : f32 to vector<2x16xf32>
    %88 = arith.addf %87, %86 : vector<2x16xf32>
    %89 = arith.divf %87, %88 : vector<2x16xf32>
    %90 = vector.extract_strided_slice %77 {offsets = [0, 32], sizes = [2, 16], strides = [1, 1]} : vector<2x64xf32> to vector<2x16xf32>
    %91 = math.tanh %90 : vector<2x16xf32>
    %92 = vector.extract_strided_slice %77 {offsets = [0, 48], sizes = [2, 16], strides = [1, 1]} : vector<2x64xf32> to vector<2x16xf32>
    %93 = arith.negf %92 : vector<2x16xf32>
    %94 = math.exp %93 : vector<2x16xf32>
    %cst_48 = arith.constant 1.000000e+00 : f32
    %95 = vector.broadcast %cst_48 : f32 to vector<2x16xf32>
    %96 = arith.addf %95, %94 : vector<2x16xf32>
    %97 = arith.divf %95, %96 : vector<2x16xf32>
    %98 = arith.mulf %89, %37 : vector<2x16xf32>
    %99 = arith.mulf %83, %91 : vector<2x16xf32>
    %100 = arith.addf %98, %99 : vector<2x16xf32>
    %101 = math.tanh %100 : vector<2x16xf32>
    %102 = arith.mulf %97, %101 : vector<2x16xf32>
    %103 = arith.index_cast %73 : i32 to index
    %c0_49 = arith.constant 0 : index
    %104 = vector.load %arg13[%103, %c0_49] : memref<16x16xf32, #tpu.memory_space<vmem>>, vector<2x16xf32>
    tpu.vector_store %arg13[%103, %c0_49], %102 {strides = array<i32>} : memref<16x16xf32, #tpu.memory_space<vmem>>, vector<2x16xf32>,
    %c1_i32 = arith.constant 1 : i32
    %c2_i32_50 = arith.constant 2 : i32
    %105 = arith.muli %c1_i32, %c2_i32_50 : i32
    %106 = tpu.assume_multiple %105, 2 : i32
    %107 = arith.index_cast %106 : i32 to index
    %c0_51 = arith.constant 0 : index
    %108 = vector.load %arg10[%107, %c0_51] : memref<16x64xf32, #tpu.memory_space<vmem>>, vector<2x64xf32>
    %cst_52 = arith.constant dense<0.000000e+00> : vector<2x64xf32>
    %109 = tpu.matmul %68, %22, %cst_52 {dimension_numbers = #tpu.dot_dimension_numbers<[1], [0], [0], [1], [0, 0, 1, 1], [], []>} : vector<2x16xf32>, vector<16x64xf32>, vector<2x64xf32> -> vector<2x64xf32>
    %110 = arith.addf %108, %109 : vector<2x64xf32>
    %111 = vector.extract_strided_slice %110 {offsets = [0, 0], sizes = [2, 16], strides = [1, 1]} : vector<2x64xf32> to vector<2x16xf32>
    %112 = arith.negf %111 : vector<2x16xf32>
    %113 = math.exp %112 : vector<2x16xf32>
    %cst_53 = arith.constant 1.000000e+00 : f32
    %114 = vector.broadcast %cst_53 : f32 to vector<2x16xf32>
    %115 = arith.addf %114, %113 : vector<2x16xf32>
    %116 = arith.divf %114, %115 : vector<2x16xf32>
    %117 = vector.extract_strided_slice %110 {offsets = [0, 16], sizes = [2, 16], strides = [1, 1]} : vector<2x64xf32> to vector<2x16xf32>
    %118 = arith.negf %117 : vector<2x16xf32>
    %119 = math.exp %118 : vector<2x16xf32>
    %cst_54 = arith.constant 1.000000e+00 : f32
    %120 = vector.broadcast %cst_54 : f32 to vector<2x16xf32>
    %121 = arith.addf %120, %119 : vector<2x16xf32>
    %122 = arith.divf %120, %121 : vector<2x16xf32>
    %123 = vector.extract_strided_slice %110 {offsets = [0, 32], sizes = [2, 16], strides = [1, 1]} : vector<2x64xf32> to vector<2x16xf32>
    %124 = math.tanh %123 : vector<2x16xf32>
    %125 = vector.extract_strided_slice %110 {offsets = [0, 48], sizes = [2, 16], strides = [1, 1]} : vector<2x64xf32> to vector<2x16xf32>
    %126 = arith.negf %125 : vector<2x16xf32>
    %127 = math.exp %126 : vector<2x16xf32>
    %cst_55 = arith.constant 1.000000e+00 : f32
    %128 = vector.broadcast %cst_55 : f32 to vector<2x16xf32>
    %129 = arith.addf %128, %127 : vector<2x16xf32>
    %130 = arith.divf %128, %129 : vector<2x16xf32>
    %131 = arith.mulf %122, %66 : vector<2x16xf32>
    %132 = arith.mulf %116, %124 : vector<2x16xf32>
    %133 = arith.addf %131, %132 : vector<2x16xf32>
    %134 = math.tanh %133 : vector<2x16xf32>
    %135 = arith.mulf %130, %134 : vector<2x16xf32>
    %136 = arith.index_cast %106 : i32 to index
    %c0_56 = arith.constant 0 : index
    %137 = vector.load %arg12[%136, %c0_56] : memref<16x16xf32, #tpu.memory_space<vmem>>, vector<2x16xf32>
    tpu.vector_store %arg12[%136, %c0_56], %135 {strides = array<i32>} : memref<16x16xf32, #tpu.memory_space<vmem>>, vector<2x16xf32>,
    %c7_i32_57 = arith.constant 7 : i32
    %138 = arith.subi %c7_i32_57, %c1_i32 : i32
    %c2_i32_58 = arith.constant 2 : i32
    %139 = arith.muli %138, %c2_i32_58 : i32
    %140 = tpu.assume_multiple %139, 2 : i32
    %141 = arith.index_cast %140 : i32 to index
    %c0_59 = arith.constant 0 : index
    %142 = vector.load %arg11[%141, %c0_59] : memref<16x64xf32, #tpu.memory_space<vmem>>, vector<2x64xf32>
    %cst_60 = arith.constant dense<0.000000e+00> : vector<2x64xf32>
    %143 = tpu.matmul %102, %24, %cst_60 {dimension_numbers = #tpu.dot_dimension_numbers<[1], [0], [0], [1], [0, 0, 1, 1], [], []>} : vector<2x16xf32>, vector<16x64xf32>, vector<2x64xf32> -> vector<2x64xf32>
    %144 = arith.addf %142, %143 : vector<2x64xf32>
    %145 = vector.extract_strided_slice %144 {offsets = [0, 0], sizes = [2, 16], strides = [1, 1]} : vector<2x64xf32> to vector<2x16xf32>
    %146 = arith.negf %145 : vector<2x16xf32>
    %147 = math.exp %146 : vector<2x16xf32>
    %cst_61 = arith.constant 1.000000e+00 : f32
    %148 = vector.broadcast %cst_61 : f32 to vector<2x16xf32>
    %149 = arith.addf %148, %147 : vector<2x16xf32>
    %150 = arith.divf %148, %149 : vector<2x16xf32>
    %151 = vector.extract_strided_slice %144 {offsets = [0, 16], sizes = [2, 16], strides = [1, 1]} : vector<2x64xf32> to vector<2x16xf32>
    %152 = arith.negf %151 : vector<2x16xf32>
    %153 = math.exp %152 : vector<2x16xf32>
    %cst_62 = arith.constant 1.000000e+00 : f32
    %154 = vector.broadcast %cst_62 : f32 to vector<2x16xf32>
    %155 = arith.addf %154, %153 : vector<2x16xf32>
    %156 = arith.divf %154, %155 : vector<2x16xf32>
    %157 = vector.extract_strided_slice %144 {offsets = [0, 32], sizes = [2, 16], strides = [1, 1]} : vector<2x64xf32> to vector<2x16xf32>
    %158 = math.tanh %157 : vector<2x16xf32>
    %159 = vector.extract_strided_slice %144 {offsets = [0, 48], sizes = [2, 16], strides = [1, 1]} : vector<2x64xf32> to vector<2x16xf32>
    %160 = arith.negf %159 : vector<2x16xf32>
    %161 = math.exp %160 : vector<2x16xf32>
    %cst_63 = arith.constant 1.000000e+00 : f32
    %162 = vector.broadcast %cst_63 : f32 to vector<2x16xf32>
    %163 = arith.addf %162, %161 : vector<2x16xf32>
    %164 = arith.divf %162, %163 : vector<2x16xf32>
    %165 = arith.mulf %156, %100 : vector<2x16xf32>
    %166 = arith.mulf %150, %158 : vector<2x16xf32>
    %167 = arith.addf %165, %166 : vector<2x16xf32>
    %168 = math.tanh %167 : vector<2x16xf32>
    %169 = arith.mulf %164, %168 : vector<2x16xf32>
    %170 = arith.index_cast %140 : i32 to index
    %c0_64 = arith.constant 0 : index
    %171 = vector.load %arg13[%170, %c0_64] : memref<16x16xf32, #tpu.memory_space<vmem>>, vector<2x16xf32>
    tpu.vector_store %arg13[%170, %c0_64], %169 {strides = array<i32>} : memref<16x16xf32, #tpu.memory_space<vmem>>, vector<2x16xf32>,
    %c2_i32_65 = arith.constant 2 : i32
    %c2_i32_66 = arith.constant 2 : i32
    %172 = arith.muli %c2_i32_65, %c2_i32_66 : i32
    %173 = tpu.assume_multiple %172, 2 : i32
    %174 = arith.index_cast %173 : i32 to index
    %c0_67 = arith.constant 0 : index
    %175 = vector.load %arg10[%174, %c0_67] : memref<16x64xf32, #tpu.memory_space<vmem>>, vector<2x64xf32>
    %cst_68 = arith.constant dense<0.000000e+00> : vector<2x64xf32>
    %176 = tpu.matmul %135, %22, %cst_68 {dimension_numbers = #tpu.dot_dimension_numbers<[1], [0], [0], [1], [0, 0, 1, 1], [], []>} : vector<2x16xf32>, vector<16x64xf32>, vector<2x64xf32> -> vector<2x64xf32>
    %177 = arith.addf %175, %176 : vector<2x64xf32>
    %178 = vector.extract_strided_slice %177 {offsets = [0, 0], sizes = [2, 16], strides = [1, 1]} : vector<2x64xf32> to vector<2x16xf32>
    %179 = arith.negf %178 : vector<2x16xf32>
    %180 = math.exp %179 : vector<2x16xf32>
    %cst_69 = arith.constant 1.000000e+00 : f32
    %181 = vector.broadcast %cst_69 : f32 to vector<2x16xf32>
    %182 = arith.addf %181, %180 : vector<2x16xf32>
    %183 = arith.divf %181, %182 : vector<2x16xf32>
    %184 = vector.extract_strided_slice %177 {offsets = [0, 16], sizes = [2, 16], strides = [1, 1]} : vector<2x64xf32> to vector<2x16xf32>
    %185 = arith.negf %184 : vector<2x16xf32>
    %186 = math.exp %185 : vector<2x16xf32>
    %cst_70 = arith.constant 1.000000e+00 : f32
    %187 = vector.broadcast %cst_70 : f32 to vector<2x16xf32>
    %188 = arith.addf %187, %186 : vector<2x16xf32>
    %189 = arith.divf %187, %188 : vector<2x16xf32>
    %190 = vector.extract_strided_slice %177 {offsets = [0, 32], sizes = [2, 16], strides = [1, 1]} : vector<2x64xf32> to vector<2x16xf32>
    %191 = math.tanh %190 : vector<2x16xf32>
    %192 = vector.extract_strided_slice %177 {offsets = [0, 48], sizes = [2, 16], strides = [1, 1]} : vector<2x64xf32> to vector<2x16xf32>
    %193 = arith.negf %192 : vector<2x16xf32>
    %194 = math.exp %193 : vector<2x16xf32>
    %cst_71 = arith.constant 1.000000e+00 : f32
    %195 = vector.broadcast %cst_71 : f32 to vector<2x16xf32>
    %196 = arith.addf %195, %194 : vector<2x16xf32>
    %197 = arith.divf %195, %196 : vector<2x16xf32>
    %198 = arith.mulf %189, %133 : vector<2x16xf32>
    %199 = arith.mulf %183, %191 : vector<2x16xf32>
    %200 = arith.addf %198, %199 : vector<2x16xf32>
    %201 = math.tanh %200 : vector<2x16xf32>
    %202 = arith.mulf %197, %201 : vector<2x16xf32>
    %203 = arith.index_cast %173 : i32 to index
    %c0_72 = arith.constant 0 : index
    %204 = vector.load %arg12[%203, %c0_72] : memref<16x16xf32, #tpu.memory_space<vmem>>, vector<2x16xf32>
    tpu.vector_store %arg12[%203, %c0_72], %202 {strides = array<i32>} : memref<16x16xf32, #tpu.memory_space<vmem>>, vector<2x16xf32>,
    %c7_i32_73 = arith.constant 7 : i32
    %205 = arith.subi %c7_i32_73, %c2_i32_65 : i32
    %c2_i32_74 = arith.constant 2 : i32
    %206 = arith.muli %205, %c2_i32_74 : i32
    %207 = tpu.assume_multiple %206, 2 : i32
    %208 = arith.index_cast %207 : i32 to index
    %c0_75 = arith.constant 0 : index
    %209 = vector.load %arg11[%208, %c0_75] : memref<16x64xf32, #tpu.memory_space<vmem>>, vector<2x64xf32>
    %cst_76 = arith.constant dense<0.000000e+00> : vector<2x64xf32>
    %210 = tpu.matmul %169, %24, %cst_76 {dimension_numbers = #tpu.dot_dimension_numbers<[1], [0], [0], [1], [0, 0, 1, 1], [], []>} : vector<2x16xf32>, vector<16x64xf32>, vector<2x64xf32> -> vector<2x64xf32>
    %211 = arith.addf %209, %210 : vector<2x64xf32>
    %212 = vector.extract_strided_slice %211 {offsets = [0, 0], sizes = [2, 16], strides = [1, 1]} : vector<2x64xf32> to vector<2x16xf32>
    %213 = arith.negf %212 : vector<2x16xf32>
    %214 = math.exp %213 : vector<2x16xf32>
    %cst_77 = arith.constant 1.000000e+00 : f32
    %215 = vector.broadcast %cst_77 : f32 to vector<2x16xf32>
    %216 = arith.addf %215, %214 : vector<2x16xf32>
    %217 = arith.divf %215, %216 : vector<2x16xf32>
    %218 = vector.extract_strided_slice %211 {offsets = [0, 16], sizes = [2, 16], strides = [1, 1]} : vector<2x64xf32> to vector<2x16xf32>
    %219 = arith.negf %218 : vector<2x16xf32>
    %220 = math.exp %219 : vector<2x16xf32>
    %cst_78 = arith.constant 1.000000e+00 : f32
    %221 = vector.broadcast %cst_78 : f32 to vector<2x16xf32>
    %222 = arith.addf %221, %220 : vector<2x16xf32>
    %223 = arith.divf %221, %222 : vector<2x16xf32>
    %224 = vector.extract_strided_slice %211 {offsets = [0, 32], sizes = [2, 16], strides = [1, 1]} : vector<2x64xf32> to vector<2x16xf32>
    %225 = math.tanh %224 : vector<2x16xf32>
    %226 = vector.extract_strided_slice %211 {offsets = [0, 48], sizes = [2, 16], strides = [1, 1]} : vector<2x64xf32> to vector<2x16xf32>
    %227 = arith.negf %226 : vector<2x16xf32>
    %228 = math.exp %227 : vector<2x16xf32>
    %cst_79 = arith.constant 1.000000e+00 : f32
    %229 = vector.broadcast %cst_79 : f32 to vector<2x16xf32>
    %230 = arith.addf %229, %228 : vector<2x16xf32>
    %231 = arith.divf %229, %230 : vector<2x16xf32>
    %232 = arith.mulf %223, %167 : vector<2x16xf32>
    %233 = arith.mulf %217, %225 : vector<2x16xf32>
    %234 = arith.addf %232, %233 : vector<2x16xf32>
    %235 = math.tanh %234 : vector<2x16xf32>
    %236 = arith.mulf %231, %235 : vector<2x16xf32>
    %237 = arith.index_cast %207 : i32 to index
    %c0_80 = arith.constant 0 : index
    %238 = vector.load %arg13[%237, %c0_80] : memref<16x16xf32, #tpu.memory_space<vmem>>, vector<2x16xf32>
    tpu.vector_store %arg13[%237, %c0_80], %236 {strides = array<i32>} : memref<16x16xf32, #tpu.memory_space<vmem>>, vector<2x16xf32>,
    %c3_i32 = arith.constant 3 : i32
    %c2_i32_81 = arith.constant 2 : i32
    %239 = arith.muli %c3_i32, %c2_i32_81 : i32
    %240 = tpu.assume_multiple %239, 2 : i32
    %241 = arith.index_cast %240 : i32 to index
    %c0_82 = arith.constant 0 : index
    %242 = vector.load %arg10[%241, %c0_82] : memref<16x64xf32, #tpu.memory_space<vmem>>, vector<2x64xf32>
    %cst_83 = arith.constant dense<0.000000e+00> : vector<2x64xf32>
    %243 = tpu.matmul %202, %22, %cst_83 {dimension_numbers = #tpu.dot_dimension_numbers<[1], [0], [0], [1], [0, 0, 1, 1], [], []>} : vector<2x16xf32>, vector<16x64xf32>, vector<2x64xf32> -> vector<2x64xf32>
    %244 = arith.addf %242, %243 : vector<2x64xf32>
    %245 = vector.extract_strided_slice %244 {offsets = [0, 0], sizes = [2, 16], strides = [1, 1]} : vector<2x64xf32> to vector<2x16xf32>
    %246 = arith.negf %245 : vector<2x16xf32>
    %247 = math.exp %246 : vector<2x16xf32>
    %cst_84 = arith.constant 1.000000e+00 : f32
    %248 = vector.broadcast %cst_84 : f32 to vector<2x16xf32>
    %249 = arith.addf %248, %247 : vector<2x16xf32>
    %250 = arith.divf %248, %249 : vector<2x16xf32>
    %251 = vector.extract_strided_slice %244 {offsets = [0, 16], sizes = [2, 16], strides = [1, 1]} : vector<2x64xf32> to vector<2x16xf32>
    %252 = arith.negf %251 : vector<2x16xf32>
    %253 = math.exp %252 : vector<2x16xf32>
    %cst_85 = arith.constant 1.000000e+00 : f32
    %254 = vector.broadcast %cst_85 : f32 to vector<2x16xf32>
    %255 = arith.addf %254, %253 : vector<2x16xf32>
    %256 = arith.divf %254, %255 : vector<2x16xf32>
    %257 = vector.extract_strided_slice %244 {offsets = [0, 32], sizes = [2, 16], strides = [1, 1]} : vector<2x64xf32> to vector<2x16xf32>
    %258 = math.tanh %257 : vector<2x16xf32>
    %259 = vector.extract_strided_slice %244 {offsets = [0, 48], sizes = [2, 16], strides = [1, 1]} : vector<2x64xf32> to vector<2x16xf32>
    %260 = arith.negf %259 : vector<2x16xf32>
    %261 = math.exp %260 : vector<2x16xf32>
    %cst_86 = arith.constant 1.000000e+00 : f32
    %262 = vector.broadcast %cst_86 : f32 to vector<2x16xf32>
    %263 = arith.addf %262, %261 : vector<2x16xf32>
    %264 = arith.divf %262, %263 : vector<2x16xf32>
    %265 = arith.mulf %256, %200 : vector<2x16xf32>
    %266 = arith.mulf %250, %258 : vector<2x16xf32>
    %267 = arith.addf %265, %266 : vector<2x16xf32>
    %268 = math.tanh %267 : vector<2x16xf32>
    %269 = arith.mulf %264, %268 : vector<2x16xf32>
    %270 = arith.index_cast %240 : i32 to index
    %c0_87 = arith.constant 0 : index
    %271 = vector.load %arg12[%270, %c0_87] : memref<16x16xf32, #tpu.memory_space<vmem>>, vector<2x16xf32>
    tpu.vector_store %arg12[%270, %c0_87], %269 {strides = array<i32>} : memref<16x16xf32, #tpu.memory_space<vmem>>, vector<2x16xf32>,
    %c7_i32_88 = arith.constant 7 : i32
    %272 = arith.subi %c7_i32_88, %c3_i32 : i32
    %c2_i32_89 = arith.constant 2 : i32
    %273 = arith.muli %272, %c2_i32_89 : i32
    %274 = tpu.assume_multiple %273, 2 : i32
    %275 = arith.index_cast %274 : i32 to index
    %c0_90 = arith.constant 0 : index
    %276 = vector.load %arg11[%275, %c0_90] : memref<16x64xf32, #tpu.memory_space<vmem>>, vector<2x64xf32>
    %cst_91 = arith.constant dense<0.000000e+00> : vector<2x64xf32>
    %277 = tpu.matmul %236, %24, %cst_91 {dimension_numbers = #tpu.dot_dimension_numbers<[1], [0], [0], [1], [0, 0, 1, 1], [], []>} : vector<2x16xf32>, vector<16x64xf32>, vector<2x64xf32> -> vector<2x64xf32>
    %278 = arith.addf %276, %277 : vector<2x64xf32>
    %279 = vector.extract_strided_slice %278 {offsets = [0, 0], sizes = [2, 16], strides = [1, 1]} : vector<2x64xf32> to vector<2x16xf32>
    %280 = arith.negf %279 : vector<2x16xf32>
    %281 = math.exp %280 : vector<2x16xf32>
    %cst_92 = arith.constant 1.000000e+00 : f32
    %282 = vector.broadcast %cst_92 : f32 to vector<2x16xf32>
    %283 = arith.addf %282, %281 : vector<2x16xf32>
    %284 = arith.divf %282, %283 : vector<2x16xf32>
    %285 = vector.extract_strided_slice %278 {offsets = [0, 16], sizes = [2, 16], strides = [1, 1]} : vector<2x64xf32> to vector<2x16xf32>
    %286 = arith.negf %285 : vector<2x16xf32>
    %287 = math.exp %286 : vector<2x16xf32>
    %cst_93 = arith.constant 1.000000e+00 : f32
    %288 = vector.broadcast %cst_93 : f32 to vector<2x16xf32>
    %289 = arith.addf %288, %287 : vector<2x16xf32>
    %290 = arith.divf %288, %289 : vector<2x16xf32>
    %291 = vector.extract_strided_slice %278 {offsets = [0, 32], sizes = [2, 16], strides = [1, 1]} : vector<2x64xf32> to vector<2x16xf32>
    %292 = math.tanh %291 : vector<2x16xf32>
    %293 = vector.extract_strided_slice %278 {offsets = [0, 48], sizes = [2, 16], strides = [1, 1]} : vector<2x64xf32> to vector<2x16xf32>
    %294 = arith.negf %293 : vector<2x16xf32>
    %295 = math.exp %294 : vector<2x16xf32>
    %cst_94 = arith.constant 1.000000e+00 : f32
    %296 = vector.broadcast %cst_94 : f32 to vector<2x16xf32>
    %297 = arith.addf %296, %295 : vector<2x16xf32>
    %298 = arith.divf %296, %297 : vector<2x16xf32>
    %299 = arith.mulf %290, %234 : vector<2x16xf32>
    %300 = arith.mulf %284, %292 : vector<2x16xf32>
    %301 = arith.addf %299, %300 : vector<2x16xf32>
    %302 = math.tanh %301 : vector<2x16xf32>
    %303 = arith.mulf %298, %302 : vector<2x16xf32>
    %304 = arith.index_cast %274 : i32 to index
    %c0_95 = arith.constant 0 : index
    %305 = vector.load %arg13[%304, %c0_95] : memref<16x16xf32, #tpu.memory_space<vmem>>, vector<2x16xf32>
    tpu.vector_store %arg13[%304, %c0_95], %303 {strides = array<i32>} : memref<16x16xf32, #tpu.memory_space<vmem>>, vector<2x16xf32>,
    %c4_i32 = arith.constant 4 : i32
    %c2_i32_96 = arith.constant 2 : i32
    %306 = arith.muli %c4_i32, %c2_i32_96 : i32
    %307 = tpu.assume_multiple %306, 2 : i32
    %308 = arith.index_cast %307 : i32 to index
    %c0_97 = arith.constant 0 : index
    %309 = vector.load %arg10[%308, %c0_97] : memref<16x64xf32, #tpu.memory_space<vmem>>, vector<2x64xf32>
    %cst_98 = arith.constant dense<0.000000e+00> : vector<2x64xf32>
    %310 = tpu.matmul %269, %22, %cst_98 {dimension_numbers = #tpu.dot_dimension_numbers<[1], [0], [0], [1], [0, 0, 1, 1], [], []>} : vector<2x16xf32>, vector<16x64xf32>, vector<2x64xf32> -> vector<2x64xf32>
    %311 = arith.addf %309, %310 : vector<2x64xf32>
    %312 = vector.extract_strided_slice %311 {offsets = [0, 0], sizes = [2, 16], strides = [1, 1]} : vector<2x64xf32> to vector<2x16xf32>
    %313 = arith.negf %312 : vector<2x16xf32>
    %314 = math.exp %313 : vector<2x16xf32>
    %cst_99 = arith.constant 1.000000e+00 : f32
    %315 = vector.broadcast %cst_99 : f32 to vector<2x16xf32>
    %316 = arith.addf %315, %314 : vector<2x16xf32>
    %317 = arith.divf %315, %316 : vector<2x16xf32>
    %318 = vector.extract_strided_slice %311 {offsets = [0, 16], sizes = [2, 16], strides = [1, 1]} : vector<2x64xf32> to vector<2x16xf32>
    %319 = arith.negf %318 : vector<2x16xf32>
    %320 = math.exp %319 : vector<2x16xf32>
    %cst_100 = arith.constant 1.000000e+00 : f32
    %321 = vector.broadcast %cst_100 : f32 to vector<2x16xf32>
    %322 = arith.addf %321, %320 : vector<2x16xf32>
    %323 = arith.divf %321, %322 : vector<2x16xf32>
    %324 = vector.extract_strided_slice %311 {offsets = [0, 32], sizes = [2, 16], strides = [1, 1]} : vector<2x64xf32> to vector<2x16xf32>
    %325 = math.tanh %324 : vector<2x16xf32>
    %326 = vector.extract_strided_slice %311 {offsets = [0, 48], sizes = [2, 16], strides = [1, 1]} : vector<2x64xf32> to vector<2x16xf32>
    %327 = arith.negf %326 : vector<2x16xf32>
    %328 = math.exp %327 : vector<2x16xf32>
    %cst_101 = arith.constant 1.000000e+00 : f32
    %329 = vector.broadcast %cst_101 : f32 to vector<2x16xf32>
    %330 = arith.addf %329, %328 : vector<2x16xf32>
    %331 = arith.divf %329, %330 : vector<2x16xf32>
    %332 = arith.mulf %323, %267 : vector<2x16xf32>
    %333 = arith.mulf %317, %325 : vector<2x16xf32>
    %334 = arith.addf %332, %333 : vector<2x16xf32>
    %335 = math.tanh %334 : vector<2x16xf32>
    %336 = arith.mulf %331, %335 : vector<2x16xf32>
    %337 = arith.index_cast %307 : i32 to index
    %c0_102 = arith.constant 0 : index
    %338 = vector.load %arg12[%337, %c0_102] : memref<16x16xf32, #tpu.memory_space<vmem>>, vector<2x16xf32>
    tpu.vector_store %arg12[%337, %c0_102], %336 {strides = array<i32>} : memref<16x16xf32, #tpu.memory_space<vmem>>, vector<2x16xf32>,
    %c7_i32_103 = arith.constant 7 : i32
    %339 = arith.subi %c7_i32_103, %c4_i32 : i32
    %c2_i32_104 = arith.constant 2 : i32
    %340 = arith.muli %339, %c2_i32_104 : i32
    %341 = tpu.assume_multiple %340, 2 : i32
    %342 = arith.index_cast %341 : i32 to index
    %c0_105 = arith.constant 0 : index
    %343 = vector.load %arg11[%342, %c0_105] : memref<16x64xf32, #tpu.memory_space<vmem>>, vector<2x64xf32>
    %cst_106 = arith.constant dense<0.000000e+00> : vector<2x64xf32>
    %344 = tpu.matmul %303, %24, %cst_106 {dimension_numbers = #tpu.dot_dimension_numbers<[1], [0], [0], [1], [0, 0, 1, 1], [], []>} : vector<2x16xf32>, vector<16x64xf32>, vector<2x64xf32> -> vector<2x64xf32>
    %345 = arith.addf %343, %344 : vector<2x64xf32>
    %346 = vector.extract_strided_slice %345 {offsets = [0, 0], sizes = [2, 16], strides = [1, 1]} : vector<2x64xf32> to vector<2x16xf32>
    %347 = arith.negf %346 : vector<2x16xf32>
    %348 = math.exp %347 : vector<2x16xf32>
    %cst_107 = arith.constant 1.000000e+00 : f32
    %349 = vector.broadcast %cst_107 : f32 to vector<2x16xf32>
    %350 = arith.addf %349, %348 : vector<2x16xf32>
    %351 = arith.divf %349, %350 : vector<2x16xf32>
    %352 = vector.extract_strided_slice %345 {offsets = [0, 16], sizes = [2, 16], strides = [1, 1]} : vector<2x64xf32> to vector<2x16xf32>
    %353 = arith.negf %352 : vector<2x16xf32>
    %354 = math.exp %353 : vector<2x16xf32>
    %cst_108 = arith.constant 1.000000e+00 : f32
    %355 = vector.broadcast %cst_108 : f32 to vector<2x16xf32>
    %356 = arith.addf %355, %354 : vector<2x16xf32>
    %357 = arith.divf %355, %356 : vector<2x16xf32>
    %358 = vector.extract_strided_slice %345 {offsets = [0, 32], sizes = [2, 16], strides = [1, 1]} : vector<2x64xf32> to vector<2x16xf32>
    %359 = math.tanh %358 : vector<2x16xf32>
    %360 = vector.extract_strided_slice %345 {offsets = [0, 48], sizes = [2, 16], strides = [1, 1]} : vector<2x64xf32> to vector<2x16xf32>
    %361 = arith.negf %360 : vector<2x16xf32>
    %362 = math.exp %361 : vector<2x16xf32>
    %cst_109 = arith.constant 1.000000e+00 : f32
    %363 = vector.broadcast %cst_109 : f32 to vector<2x16xf32>
    %364 = arith.addf %363, %362 : vector<2x16xf32>
    %365 = arith.divf %363, %364 : vector<2x16xf32>
    %366 = arith.mulf %357, %301 : vector<2x16xf32>
    %367 = arith.mulf %351, %359 : vector<2x16xf32>
    %368 = arith.addf %366, %367 : vector<2x16xf32>
    %369 = math.tanh %368 : vector<2x16xf32>
    %370 = arith.mulf %365, %369 : vector<2x16xf32>
    %371 = arith.index_cast %341 : i32 to index
    %c0_110 = arith.constant 0 : index
    %372 = vector.load %arg13[%371, %c0_110] : memref<16x16xf32, #tpu.memory_space<vmem>>, vector<2x16xf32>
    tpu.vector_store %arg13[%371, %c0_110], %370 {strides = array<i32>} : memref<16x16xf32, #tpu.memory_space<vmem>>, vector<2x16xf32>,
    %c5_i32 = arith.constant 5 : i32
    %c2_i32_111 = arith.constant 2 : i32
    %373 = arith.muli %c5_i32, %c2_i32_111 : i32
    %374 = tpu.assume_multiple %373, 2 : i32
    %375 = arith.index_cast %374 : i32 to index
    %c0_112 = arith.constant 0 : index
    %376 = vector.load %arg10[%375, %c0_112] : memref<16x64xf32, #tpu.memory_space<vmem>>, vector<2x64xf32>
    %cst_113 = arith.constant dense<0.000000e+00> : vector<2x64xf32>
    %377 = tpu.matmul %336, %22, %cst_113 {dimension_numbers = #tpu.dot_dimension_numbers<[1], [0], [0], [1], [0, 0, 1, 1], [], []>} : vector<2x16xf32>, vector<16x64xf32>, vector<2x64xf32> -> vector<2x64xf32>
    %378 = arith.addf %376, %377 : vector<2x64xf32>
    %379 = vector.extract_strided_slice %378 {offsets = [0, 0], sizes = [2, 16], strides = [1, 1]} : vector<2x64xf32> to vector<2x16xf32>
    %380 = arith.negf %379 : vector<2x16xf32>
    %381 = math.exp %380 : vector<2x16xf32>
    %cst_114 = arith.constant 1.000000e+00 : f32
    %382 = vector.broadcast %cst_114 : f32 to vector<2x16xf32>
    %383 = arith.addf %382, %381 : vector<2x16xf32>
    %384 = arith.divf %382, %383 : vector<2x16xf32>
    %385 = vector.extract_strided_slice %378 {offsets = [0, 16], sizes = [2, 16], strides = [1, 1]} : vector<2x64xf32> to vector<2x16xf32>
    %386 = arith.negf %385 : vector<2x16xf32>
    %387 = math.exp %386 : vector<2x16xf32>
    %cst_115 = arith.constant 1.000000e+00 : f32
    %388 = vector.broadcast %cst_115 : f32 to vector<2x16xf32>
    %389 = arith.addf %388, %387 : vector<2x16xf32>
    %390 = arith.divf %388, %389 : vector<2x16xf32>
    %391 = vector.extract_strided_slice %378 {offsets = [0, 32], sizes = [2, 16], strides = [1, 1]} : vector<2x64xf32> to vector<2x16xf32>
    %392 = math.tanh %391 : vector<2x16xf32>
    %393 = vector.extract_strided_slice %378 {offsets = [0, 48], sizes = [2, 16], strides = [1, 1]} : vector<2x64xf32> to vector<2x16xf32>
    %394 = arith.negf %393 : vector<2x16xf32>
    %395 = math.exp %394 : vector<2x16xf32>
    %cst_116 = arith.constant 1.000000e+00 : f32
    %396 = vector.broadcast %cst_116 : f32 to vector<2x16xf32>
    %397 = arith.addf %396, %395 : vector<2x16xf32>
    %398 = arith.divf %396, %397 : vector<2x16xf32>
    %399 = arith.mulf %390, %334 : vector<2x16xf32>
    %400 = arith.mulf %384, %392 : vector<2x16xf32>
    %401 = arith.addf %399, %400 : vector<2x16xf32>
    %402 = math.tanh %401 : vector<2x16xf32>
    %403 = arith.mulf %398, %402 : vector<2x16xf32>
    %404 = arith.index_cast %374 : i32 to index
    %c0_117 = arith.constant 0 : index
    %405 = vector.load %arg12[%404, %c0_117] : memref<16x16xf32, #tpu.memory_space<vmem>>, vector<2x16xf32>
    tpu.vector_store %arg12[%404, %c0_117], %403 {strides = array<i32>} : memref<16x16xf32, #tpu.memory_space<vmem>>, vector<2x16xf32>,
    %c7_i32_118 = arith.constant 7 : i32
    %406 = arith.subi %c7_i32_118, %c5_i32 : i32
    %c2_i32_119 = arith.constant 2 : i32
    %407 = arith.muli %406, %c2_i32_119 : i32
    %408 = tpu.assume_multiple %407, 2 : i32
    %409 = arith.index_cast %408 : i32 to index
    %c0_120 = arith.constant 0 : index
    %410 = vector.load %arg11[%409, %c0_120] : memref<16x64xf32, #tpu.memory_space<vmem>>, vector<2x64xf32>
    %cst_121 = arith.constant dense<0.000000e+00> : vector<2x64xf32>
    %411 = tpu.matmul %370, %24, %cst_121 {dimension_numbers = #tpu.dot_dimension_numbers<[1], [0], [0], [1], [0, 0, 1, 1], [], []>} : vector<2x16xf32>, vector<16x64xf32>, vector<2x64xf32> -> vector<2x64xf32>
    %412 = arith.addf %410, %411 : vector<2x64xf32>
    %413 = vector.extract_strided_slice %412 {offsets = [0, 0], sizes = [2, 16], strides = [1, 1]} : vector<2x64xf32> to vector<2x16xf32>
    %414 = arith.negf %413 : vector<2x16xf32>
    %415 = math.exp %414 : vector<2x16xf32>
    %cst_122 = arith.constant 1.000000e+00 : f32
    %416 = vector.broadcast %cst_122 : f32 to vector<2x16xf32>
    %417 = arith.addf %416, %415 : vector<2x16xf32>
    %418 = arith.divf %416, %417 : vector<2x16xf32>
    %419 = vector.extract_strided_slice %412 {offsets = [0, 16], sizes = [2, 16], strides = [1, 1]} : vector<2x64xf32> to vector<2x16xf32>
    %420 = arith.negf %419 : vector<2x16xf32>
    %421 = math.exp %420 : vector<2x16xf32>
    %cst_123 = arith.constant 1.000000e+00 : f32
    %422 = vector.broadcast %cst_123 : f32 to vector<2x16xf32>
    %423 = arith.addf %422, %421 : vector<2x16xf32>
    %424 = arith.divf %422, %423 : vector<2x16xf32>
    %425 = vector.extract_strided_slice %412 {offsets = [0, 32], sizes = [2, 16], strides = [1, 1]} : vector<2x64xf32> to vector<2x16xf32>
    %426 = math.tanh %425 : vector<2x16xf32>
    %427 = vector.extract_strided_slice %412 {offsets = [0, 48], sizes = [2, 16], strides = [1, 1]} : vector<2x64xf32> to vector<2x16xf32>
    %428 = arith.negf %427 : vector<2x16xf32>
    %429 = math.exp %428 : vector<2x16xf32>
    %cst_124 = arith.constant 1.000000e+00 : f32
    %430 = vector.broadcast %cst_124 : f32 to vector<2x16xf32>
    %431 = arith.addf %430, %429 : vector<2x16xf32>
    %432 = arith.divf %430, %431 : vector<2x16xf32>
    %433 = arith.mulf %424, %368 : vector<2x16xf32>
    %434 = arith.mulf %418, %426 : vector<2x16xf32>
    %435 = arith.addf %433, %434 : vector<2x16xf32>
    %436 = math.tanh %435 : vector<2x16xf32>
    %437 = arith.mulf %432, %436 : vector<2x16xf32>
    %438 = arith.index_cast %408 : i32 to index
    %c0_125 = arith.constant 0 : index
    %439 = vector.load %arg13[%438, %c0_125] : memref<16x16xf32, #tpu.memory_space<vmem>>, vector<2x16xf32>
    tpu.vector_store %arg13[%438, %c0_125], %437 {strides = array<i32>} : memref<16x16xf32, #tpu.memory_space<vmem>>, vector<2x16xf32>,
    %c6_i32 = arith.constant 6 : i32
    %c2_i32_126 = arith.constant 2 : i32
    %440 = arith.muli %c6_i32, %c2_i32_126 : i32
    %441 = tpu.assume_multiple %440, 2 : i32
    %442 = arith.index_cast %441 : i32 to index
    %c0_127 = arith.constant 0 : index
    %443 = vector.load %arg10[%442, %c0_127] : memref<16x64xf32, #tpu.memory_space<vmem>>, vector<2x64xf32>
    %cst_128 = arith.constant dense<0.000000e+00> : vector<2x64xf32>
    %444 = tpu.matmul %403, %22, %cst_128 {dimension_numbers = #tpu.dot_dimension_numbers<[1], [0], [0], [1], [0, 0, 1, 1], [], []>} : vector<2x16xf32>, vector<16x64xf32>, vector<2x64xf32> -> vector<2x64xf32>
    %445 = arith.addf %443, %444 : vector<2x64xf32>
    %446 = vector.extract_strided_slice %445 {offsets = [0, 0], sizes = [2, 16], strides = [1, 1]} : vector<2x64xf32> to vector<2x16xf32>
    %447 = arith.negf %446 : vector<2x16xf32>
    %448 = math.exp %447 : vector<2x16xf32>
    %cst_129 = arith.constant 1.000000e+00 : f32
    %449 = vector.broadcast %cst_129 : f32 to vector<2x16xf32>
    %450 = arith.addf %449, %448 : vector<2x16xf32>
    %451 = arith.divf %449, %450 : vector<2x16xf32>
    %452 = vector.extract_strided_slice %445 {offsets = [0, 16], sizes = [2, 16], strides = [1, 1]} : vector<2x64xf32> to vector<2x16xf32>
    %453 = arith.negf %452 : vector<2x16xf32>
    %454 = math.exp %453 : vector<2x16xf32>
    %cst_130 = arith.constant 1.000000e+00 : f32
    %455 = vector.broadcast %cst_130 : f32 to vector<2x16xf32>
    %456 = arith.addf %455, %454 : vector<2x16xf32>
    %457 = arith.divf %455, %456 : vector<2x16xf32>
    %458 = vector.extract_strided_slice %445 {offsets = [0, 32], sizes = [2, 16], strides = [1, 1]} : vector<2x64xf32> to vector<2x16xf32>
    %459 = math.tanh %458 : vector<2x16xf32>
    %460 = vector.extract_strided_slice %445 {offsets = [0, 48], sizes = [2, 16], strides = [1, 1]} : vector<2x64xf32> to vector<2x16xf32>
    %461 = arith.negf %460 : vector<2x16xf32>
    %462 = math.exp %461 : vector<2x16xf32>
    %cst_131 = arith.constant 1.000000e+00 : f32
    %463 = vector.broadcast %cst_131 : f32 to vector<2x16xf32>
    %464 = arith.addf %463, %462 : vector<2x16xf32>
    %465 = arith.divf %463, %464 : vector<2x16xf32>
    %466 = arith.mulf %457, %401 : vector<2x16xf32>
    %467 = arith.mulf %451, %459 : vector<2x16xf32>
    %468 = arith.addf %466, %467 : vector<2x16xf32>
    %469 = math.tanh %468 : vector<2x16xf32>
    %470 = arith.mulf %465, %469 : vector<2x16xf32>
    %471 = arith.index_cast %441 : i32 to index
    %c0_132 = arith.constant 0 : index
    %472 = vector.load %arg12[%471, %c0_132] : memref<16x16xf32, #tpu.memory_space<vmem>>, vector<2x16xf32>
    tpu.vector_store %arg12[%471, %c0_132], %470 {strides = array<i32>} : memref<16x16xf32, #tpu.memory_space<vmem>>, vector<2x16xf32>,
    %c7_i32_133 = arith.constant 7 : i32
    %473 = arith.subi %c7_i32_133, %c6_i32 : i32
    %c2_i32_134 = arith.constant 2 : i32
    %474 = arith.muli %473, %c2_i32_134 : i32
    %475 = tpu.assume_multiple %474, 2 : i32
    %476 = arith.index_cast %475 : i32 to index
    %c0_135 = arith.constant 0 : index
    %477 = vector.load %arg11[%476, %c0_135] : memref<16x64xf32, #tpu.memory_space<vmem>>, vector<2x64xf32>
    %cst_136 = arith.constant dense<0.000000e+00> : vector<2x64xf32>
    %478 = tpu.matmul %437, %24, %cst_136 {dimension_numbers = #tpu.dot_dimension_numbers<[1], [0], [0], [1], [0, 0, 1, 1], [], []>} : vector<2x16xf32>, vector<16x64xf32>, vector<2x64xf32> -> vector<2x64xf32>
    %479 = arith.addf %477, %478 : vector<2x64xf32>
    %480 = vector.extract_strided_slice %479 {offsets = [0, 0], sizes = [2, 16], strides = [1, 1]} : vector<2x64xf32> to vector<2x16xf32>
    %481 = arith.negf %480 : vector<2x16xf32>
    %482 = math.exp %481 : vector<2x16xf32>
    %cst_137 = arith.constant 1.000000e+00 : f32
    %483 = vector.broadcast %cst_137 : f32 to vector<2x16xf32>
    %484 = arith.addf %483, %482 : vector<2x16xf32>
    %485 = arith.divf %483, %484 : vector<2x16xf32>
    %486 = vector.extract_strided_slice %479 {offsets = [0, 16], sizes = [2, 16], strides = [1, 1]} : vector<2x64xf32> to vector<2x16xf32>
    %487 = arith.negf %486 : vector<2x16xf32>
    %488 = math.exp %487 : vector<2x16xf32>
    %cst_138 = arith.constant 1.000000e+00 : f32
    %489 = vector.broadcast %cst_138 : f32 to vector<2x16xf32>
    %490 = arith.addf %489, %488 : vector<2x16xf32>
    %491 = arith.divf %489, %490 : vector<2x16xf32>
    %492 = vector.extract_strided_slice %479 {offsets = [0, 32], sizes = [2, 16], strides = [1, 1]} : vector<2x64xf32> to vector<2x16xf32>
    %493 = math.tanh %492 : vector<2x16xf32>
    %494 = vector.extract_strided_slice %479 {offsets = [0, 48], sizes = [2, 16], strides = [1, 1]} : vector<2x64xf32> to vector<2x16xf32>
    %495 = arith.negf %494 : vector<2x16xf32>
    %496 = math.exp %495 : vector<2x16xf32>
    %cst_139 = arith.constant 1.000000e+00 : f32
    %497 = vector.broadcast %cst_139 : f32 to vector<2x16xf32>
    %498 = arith.addf %497, %496 : vector<2x16xf32>
    %499 = arith.divf %497, %498 : vector<2x16xf32>
    %500 = arith.mulf %491, %435 : vector<2x16xf32>
    %501 = arith.mulf %485, %493 : vector<2x16xf32>
    %502 = arith.addf %500, %501 : vector<2x16xf32>
    %503 = math.tanh %502 : vector<2x16xf32>
    %504 = arith.mulf %499, %503 : vector<2x16xf32>
    %505 = arith.index_cast %475 : i32 to index
    %c0_140 = arith.constant 0 : index
    %506 = vector.load %arg13[%505, %c0_140] : memref<16x16xf32, #tpu.memory_space<vmem>>, vector<2x16xf32>
    tpu.vector_store %arg13[%505, %c0_140], %504 {strides = array<i32>} : memref<16x16xf32, #tpu.memory_space<vmem>>, vector<2x16xf32>,
    %c7_i32_141 = arith.constant 7 : i32
    %c2_i32_142 = arith.constant 2 : i32
    %507 = arith.muli %c7_i32_141, %c2_i32_142 : i32
    %508 = tpu.assume_multiple %507, 2 : i32
    %509 = arith.index_cast %508 : i32 to index
    %c0_143 = arith.constant 0 : index
    %510 = vector.load %arg10[%509, %c0_143] : memref<16x64xf32, #tpu.memory_space<vmem>>, vector<2x64xf32>
    %cst_144 = arith.constant dense<0.000000e+00> : vector<2x64xf32>
    %511 = tpu.matmul %470, %22, %cst_144 {dimension_numbers = #tpu.dot_dimension_numbers<[1], [0], [0], [1], [0, 0, 1, 1], [], []>} : vector<2x16xf32>, vector<16x64xf32>, vector<2x64xf32> -> vector<2x64xf32>
    %512 = arith.addf %510, %511 : vector<2x64xf32>
    %513 = vector.extract_strided_slice %512 {offsets = [0, 0], sizes = [2, 16], strides = [1, 1]} : vector<2x64xf32> to vector<2x16xf32>
    %514 = arith.negf %513 : vector<2x16xf32>
    %515 = math.exp %514 : vector<2x16xf32>
    %cst_145 = arith.constant 1.000000e+00 : f32
    %516 = vector.broadcast %cst_145 : f32 to vector<2x16xf32>
    %517 = arith.addf %516, %515 : vector<2x16xf32>
    %518 = arith.divf %516, %517 : vector<2x16xf32>
    %519 = vector.extract_strided_slice %512 {offsets = [0, 16], sizes = [2, 16], strides = [1, 1]} : vector<2x64xf32> to vector<2x16xf32>
    %520 = arith.negf %519 : vector<2x16xf32>
    %521 = math.exp %520 : vector<2x16xf32>
    %cst_146 = arith.constant 1.000000e+00 : f32
    %522 = vector.broadcast %cst_146 : f32 to vector<2x16xf32>
    %523 = arith.addf %522, %521 : vector<2x16xf32>
    %524 = arith.divf %522, %523 : vector<2x16xf32>
    %525 = vector.extract_strided_slice %512 {offsets = [0, 32], sizes = [2, 16], strides = [1, 1]} : vector<2x64xf32> to vector<2x16xf32>
    %526 = math.tanh %525 : vector<2x16xf32>
    %527 = vector.extract_strided_slice %512 {offsets = [0, 48], sizes = [2, 16], strides = [1, 1]} : vector<2x64xf32> to vector<2x16xf32>
    %528 = arith.negf %527 : vector<2x16xf32>
    %529 = math.exp %528 : vector<2x16xf32>
    %cst_147 = arith.constant 1.000000e+00 : f32
    %530 = vector.broadcast %cst_147 : f32 to vector<2x16xf32>
    %531 = arith.addf %530, %529 : vector<2x16xf32>
    %532 = arith.divf %530, %531 : vector<2x16xf32>
    %533 = arith.mulf %524, %468 : vector<2x16xf32>
    %534 = arith.mulf %518, %526 : vector<2x16xf32>
    %535 = arith.addf %533, %534 : vector<2x16xf32>
    %536 = math.tanh %535 : vector<2x16xf32>
    %537 = arith.mulf %532, %536 : vector<2x16xf32>
    %538 = arith.index_cast %508 : i32 to index
    %c0_148 = arith.constant 0 : index
    %539 = vector.load %arg12[%538, %c0_148] : memref<16x16xf32, #tpu.memory_space<vmem>>, vector<2x16xf32>
    tpu.vector_store %arg12[%538, %c0_148], %537 {strides = array<i32>} : memref<16x16xf32, #tpu.memory_space<vmem>>, vector<2x16xf32>,
    %c7_i32_149 = arith.constant 7 : i32
    %540 = arith.subi %c7_i32_149, %c7_i32_141 : i32
    %c2_i32_150 = arith.constant 2 : i32
    %541 = arith.muli %540, %c2_i32_150 : i32
    %542 = tpu.assume_multiple %541, 2 : i32
    %543 = arith.index_cast %542 : i32 to index
    %c0_151 = arith.constant 0 : index
    %544 = vector.load %arg11[%543, %c0_151] : memref<16x64xf32, #tpu.memory_space<vmem>>, vector<2x64xf32>
    %cst_152 = arith.constant dense<0.000000e+00> : vector<2x64xf32>
    %545 = tpu.matmul %504, %24, %cst_152 {dimension_numbers = #tpu.dot_dimension_numbers<[1], [0], [0], [1], [0, 0, 1, 1], [], []>} : vector<2x16xf32>, vector<16x64xf32>, vector<2x64xf32> -> vector<2x64xf32>
    %546 = arith.addf %544, %545 : vector<2x64xf32>
    %547 = vector.extract_strided_slice %546 {offsets = [0, 0], sizes = [2, 16], strides = [1, 1]} : vector<2x64xf32> to vector<2x16xf32>
    %548 = arith.negf %547 : vector<2x16xf32>
    %549 = math.exp %548 : vector<2x16xf32>
    %cst_153 = arith.constant 1.000000e+00 : f32
    %550 = vector.broadcast %cst_153 : f32 to vector<2x16xf32>
    %551 = arith.addf %550, %549 : vector<2x16xf32>
    %552 = arith.divf %550, %551 : vector<2x16xf32>
    %553 = vector.extract_strided_slice %546 {offsets = [0, 16], sizes = [2, 16], strides = [1, 1]} : vector<2x64xf32> to vector<2x16xf32>
    %554 = arith.negf %553 : vector<2x16xf32>
    %555 = math.exp %554 : vector<2x16xf32>
    %cst_154 = arith.constant 1.000000e+00 : f32
    %556 = vector.broadcast %cst_154 : f32 to vector<2x16xf32>
    %557 = arith.addf %556, %555 : vector<2x16xf32>
    %558 = arith.divf %556, %557 : vector<2x16xf32>
    %559 = vector.extract_strided_slice %546 {offsets = [0, 32], sizes = [2, 16], strides = [1, 1]} : vector<2x64xf32> to vector<2x16xf32>
    %560 = math.tanh %559 : vector<2x16xf32>
    %561 = vector.extract_strided_slice %546 {offsets = [0, 48], sizes = [2, 16], strides = [1, 1]} : vector<2x64xf32> to vector<2x16xf32>
    %562 = arith.negf %561 : vector<2x16xf32>
    %563 = math.exp %562 : vector<2x16xf32>
    %cst_155 = arith.constant 1.000000e+00 : f32
    %564 = vector.broadcast %cst_155 : f32 to vector<2x16xf32>
    %565 = arith.addf %564, %563 : vector<2x16xf32>
    %566 = arith.divf %564, %565 : vector<2x16xf32>
    %567 = arith.mulf %558, %502 : vector<2x16xf32>
    %568 = arith.mulf %552, %560 : vector<2x16xf32>
    %569 = arith.addf %567, %568 : vector<2x16xf32>
    %570 = math.tanh %569 : vector<2x16xf32>
    %571 = arith.mulf %566, %570 : vector<2x16xf32>
    %572 = arith.index_cast %542 : i32 to index
    %c0_156 = arith.constant 0 : index
    %573 = vector.load %arg13[%572, %c0_156] : memref<16x16xf32, #tpu.memory_space<vmem>>, vector<2x16xf32>
    tpu.vector_store %arg13[%572, %c0_156], %571 {strides = array<i32>} : memref<16x16xf32, #tpu.memory_space<vmem>>, vector<2x16xf32>,
    %c8_i32 = arith.constant 8 : i32
    %c0_157 = arith.constant 0 : index
    %c0_158 = arith.constant 0 : index
    %574 = vector.load %arg12[%c0_157, %c0_158] : memref<16x16xf32, #tpu.memory_space<vmem>>, vector<16x16xf32>
    %c0_159 = arith.constant 0 : index
    %c0_160 = arith.constant 0 : index
    %575 = vector.load %arg13[%c0_159, %c0_160] : memref<16x16xf32, #tpu.memory_space<vmem>>, vector<16x16xf32>
    %576 = tpu.concatenate %574, %575 in 1 : vector<16x16xf32>, vector<16x16xf32> -> vector<16x32xf32>
    %c2 = arith.constant 2 : index
    %c0_161 = arith.constant 0 : index
    %c0_162 = arith.constant 0 : index
    %577 = vector.load %arg6[%c2, %c0_161, %c0_162] : memref<6x32x64xf32, #tpu.memory_space<vmem>>, vector<1x32x64xf32>
    %578 = vector.shape_cast %577 : vector<1x32x64xf32> to vector<32x64xf32>
    %c3 = arith.constant 3 : index
    %c0_163 = arith.constant 0 : index
    %c0_164 = arith.constant 0 : index
    %579 = vector.load %arg6[%c3, %c0_163, %c0_164] : memref<6x32x64xf32, #tpu.memory_space<vmem>>, vector<1x32x64xf32>
    %580 = vector.shape_cast %579 : vector<1x32x64xf32> to vector<32x64xf32>
    %c2_165 = arith.constant 2 : index
    %c0_166 = arith.constant 0 : index
    %c0_167 = arith.constant 0 : index
    %581 = vector.load %arg7[%c2_165, %c0_166, %c0_167] : memref<6x16x64xf32, #tpu.memory_space<vmem>>, vector<1x16x64xf32>
    %582 = vector.shape_cast %581 : vector<1x16x64xf32> to vector<16x64xf32>
    %c3_168 = arith.constant 3 : index
    %c0_169 = arith.constant 0 : index
    %c0_170 = arith.constant 0 : index
    %583 = vector.load %arg7[%c3_168, %c0_169, %c0_170] : memref<6x16x64xf32, #tpu.memory_space<vmem>>, vector<1x16x64xf32>
    %584 = vector.shape_cast %583 : vector<1x16x64xf32> to vector<16x64xf32>
    %c2_171 = arith.constant 2 : index
    %c0_172 = arith.constant 0 : index
    %c0_173 = arith.constant 0 : index
    %585 = vector.load %arg8[%c2_171, %c0_172, %c0_173] : memref<6x1x64xf32, #tpu.memory_space<vmem>>, vector<1x1x64xf32>
    %586 = vector.shape_cast %585 : vector<1x1x64xf32> to vector<1x64xf32>
    %c3_174 = arith.constant 3 : index
    %c0_175 = arith.constant 0 : index
    %c0_176 = arith.constant 0 : index
    %587 = vector.load %arg8[%c3_174, %c0_175, %c0_176] : memref<6x1x64xf32, #tpu.memory_space<vmem>>, vector<1x1x64xf32>
    %588 = vector.shape_cast %587 : vector<1x1x64xf32> to vector<1x64xf32>
    %cst_177 = arith.constant dense<0.000000e+00> : vector<16x64xf32>
    %589 = tpu.matmul %576, %578, %cst_177 {dimension_numbers = #tpu.dot_dimension_numbers<[1], [0], [0], [1], [0, 0, 1, 1], [], []>} : vector<16x32xf32>, vector<32x64xf32>, vector<16x64xf32> -> vector<16x64xf32>
    %590 = vector.broadcast %586 : vector<1x64xf32> to vector<16x64xf32>
    %591 = arith.addf %589, %590 : vector<16x64xf32>
    %c0_178 = arith.constant 0 : index
    %c0_179 = arith.constant 0 : index
    %592 = vector.load %arg10[%c0_178, %c0_179] : memref<16x64xf32, #tpu.memory_space<vmem>>, vector<16x64xf32>
    tpu.vector_store %arg10[%c0_178, %c0_179], %591 {strides = array<i32>} : memref<16x64xf32, #tpu.memory_space<vmem>>, vector<16x64xf32>,
    %cst_180 = arith.constant dense<0.000000e+00> : vector<16x64xf32>
    %593 = tpu.matmul %576, %580, %cst_180 {dimension_numbers = #tpu.dot_dimension_numbers<[1], [0], [0], [1], [0, 0, 1, 1], [], []>} : vector<16x32xf32>, vector<32x64xf32>, vector<16x64xf32> -> vector<16x64xf32>
    %594 = vector.broadcast %588 : vector<1x64xf32> to vector<16x64xf32>
    %595 = arith.addf %593, %594 : vector<16x64xf32>
    %c0_181 = arith.constant 0 : index
    %c0_182 = arith.constant 0 : index
    %596 = vector.load %arg11[%c0_181, %c0_182] : memref<16x64xf32, #tpu.memory_space<vmem>>, vector<16x64xf32>
    tpu.vector_store %arg11[%c0_181, %c0_182], %595 {strides = array<i32>} : memref<16x64xf32, #tpu.memory_space<vmem>>, vector<16x64xf32>,
    %cst_183 = arith.constant 0.000000e+00 : f32
    %597 = vector.broadcast %cst_183 : f32 to vector<2x16xf32>
    %c0_i32_184 = arith.constant 0 : i32
    %c2_i32_185 = arith.constant 2 : i32
    %598 = arith.muli %c0_i32_184, %c2_i32_185 : i32
    %599 = tpu.assume_multiple %598, 2 : i32
    %600 = arith.index_cast %599 : i32 to index
    %c0_186 = arith.constant 0 : index
    %601 = vector.load %arg10[%600, %c0_186] : memref<16x64xf32, #tpu.memory_space<vmem>>, vector<2x64xf32>
    %cst_187 = arith.constant dense<0.000000e+00> : vector<2x64xf32>
    %602 = tpu.matmul %597, %582, %cst_187 {dimension_numbers = #tpu.dot_dimension_numbers<[1], [0], [0], [1], [0, 0, 1, 1], [], []>} : vector<2x16xf32>, vector<16x64xf32>, vector<2x64xf32> -> vector<2x64xf32>
    %603 = arith.addf %601, %602 : vector<2x64xf32>
    %604 = vector.extract_strided_slice %603 {offsets = [0, 0], sizes = [2, 16], strides = [1, 1]} : vector<2x64xf32> to vector<2x16xf32>
    %605 = arith.negf %604 : vector<2x16xf32>
    %606 = math.exp %605 : vector<2x16xf32>
    %cst_188 = arith.constant 1.000000e+00 : f32
    %607 = vector.broadcast %cst_188 : f32 to vector<2x16xf32>
    %608 = arith.addf %607, %606 : vector<2x16xf32>
    %609 = arith.divf %607, %608 : vector<2x16xf32>
    %610 = vector.extract_strided_slice %603 {offsets = [0, 16], sizes = [2, 16], strides = [1, 1]} : vector<2x64xf32> to vector<2x16xf32>
    %611 = arith.negf %610 : vector<2x16xf32>
    %612 = math.exp %611 : vector<2x16xf32>
    %cst_189 = arith.constant 1.000000e+00 : f32
    %613 = vector.broadcast %cst_189 : f32 to vector<2x16xf32>
    %614 = arith.addf %613, %612 : vector<2x16xf32>
    %615 = arith.divf %613, %614 : vector<2x16xf32>
    %616 = vector.extract_strided_slice %603 {offsets = [0, 32], sizes = [2, 16], strides = [1, 1]} : vector<2x64xf32> to vector<2x16xf32>
    %617 = math.tanh %616 : vector<2x16xf32>
    %618 = vector.extract_strided_slice %603 {offsets = [0, 48], sizes = [2, 16], strides = [1, 1]} : vector<2x64xf32> to vector<2x16xf32>
    %619 = arith.negf %618 : vector<2x16xf32>
    %620 = math.exp %619 : vector<2x16xf32>
    %cst_190 = arith.constant 1.000000e+00 : f32
    %621 = vector.broadcast %cst_190 : f32 to vector<2x16xf32>
    %622 = arith.addf %621, %620 : vector<2x16xf32>
    %623 = arith.divf %621, %622 : vector<2x16xf32>
    %624 = arith.mulf %615, %597 : vector<2x16xf32>
    %625 = arith.mulf %609, %617 : vector<2x16xf32>
    %626 = arith.addf %624, %625 : vector<2x16xf32>
    %627 = math.tanh %626 : vector<2x16xf32>
    %628 = arith.mulf %623, %627 : vector<2x16xf32>
    %629 = arith.index_cast %599 : i32 to index
    %c0_191 = arith.constant 0 : index
    %630 = vector.load %arg12[%629, %c0_191] : memref<16x16xf32, #tpu.memory_space<vmem>>, vector<2x16xf32>
    tpu.vector_store %arg12[%629, %c0_191], %628 {strides = array<i32>} : memref<16x16xf32, #tpu.memory_space<vmem>>, vector<2x16xf32>,
    %c7_i32_192 = arith.constant 7 : i32
    %631 = arith.subi %c7_i32_192, %c0_i32_184 : i32
    %c2_i32_193 = arith.constant 2 : i32
    %632 = arith.muli %631, %c2_i32_193 : i32
    %633 = tpu.assume_multiple %632, 2 : i32
    %634 = arith.index_cast %633 : i32 to index
    %c0_194 = arith.constant 0 : index
    %635 = vector.load %arg11[%634, %c0_194] : memref<16x64xf32, #tpu.memory_space<vmem>>, vector<2x64xf32>
    %cst_195 = arith.constant dense<0.000000e+00> : vector<2x64xf32>
    %636 = tpu.matmul %597, %584, %cst_195 {dimension_numbers = #tpu.dot_dimension_numbers<[1], [0], [0], [1], [0, 0, 1, 1], [], []>} : vector<2x16xf32>, vector<16x64xf32>, vector<2x64xf32> -> vector<2x64xf32>
    %637 = arith.addf %635, %636 : vector<2x64xf32>
    %638 = vector.extract_strided_slice %637 {offsets = [0, 0], sizes = [2, 16], strides = [1, 1]} : vector<2x64xf32> to vector<2x16xf32>
    %639 = arith.negf %638 : vector<2x16xf32>
    %640 = math.exp %639 : vector<2x16xf32>
    %cst_196 = arith.constant 1.000000e+00 : f32
    %641 = vector.broadcast %cst_196 : f32 to vector<2x16xf32>
    %642 = arith.addf %641, %640 : vector<2x16xf32>
    %643 = arith.divf %641, %642 : vector<2x16xf32>
    %644 = vector.extract_strided_slice %637 {offsets = [0, 16], sizes = [2, 16], strides = [1, 1]} : vector<2x64xf32> to vector<2x16xf32>
    %645 = arith.negf %644 : vector<2x16xf32>
    %646 = math.exp %645 : vector<2x16xf32>
    %cst_197 = arith.constant 1.000000e+00 : f32
    %647 = vector.broadcast %cst_197 : f32 to vector<2x16xf32>
    %648 = arith.addf %647, %646 : vector<2x16xf32>
    %649 = arith.divf %647, %648 : vector<2x16xf32>
    %650 = vector.extract_strided_slice %637 {offsets = [0, 32], sizes = [2, 16], strides = [1, 1]} : vector<2x64xf32> to vector<2x16xf32>
    %651 = math.tanh %650 : vector<2x16xf32>
    %652 = vector.extract_strided_slice %637 {offsets = [0, 48], sizes = [2, 16], strides = [1, 1]} : vector<2x64xf32> to vector<2x16xf32>
    %653 = arith.negf %652 : vector<2x16xf32>
    %654 = math.exp %653 : vector<2x16xf32>
    %cst_198 = arith.constant 1.000000e+00 : f32
    %655 = vector.broadcast %cst_198 : f32 to vector<2x16xf32>
    %656 = arith.addf %655, %654 : vector<2x16xf32>
    %657 = arith.divf %655, %656 : vector<2x16xf32>
    %658 = arith.mulf %649, %597 : vector<2x16xf32>
    %659 = arith.mulf %643, %651 : vector<2x16xf32>
    %660 = arith.addf %658, %659 : vector<2x16xf32>
    %661 = math.tanh %660 : vector<2x16xf32>
    %662 = arith.mulf %657, %661 : vector<2x16xf32>
    %663 = arith.index_cast %633 : i32 to index
    %c0_199 = arith.constant 0 : index
    %664 = vector.load %arg13[%663, %c0_199] : memref<16x16xf32, #tpu.memory_space<vmem>>, vector<2x16xf32>
    tpu.vector_store %arg13[%663, %c0_199], %662 {strides = array<i32>} : memref<16x16xf32, #tpu.memory_space<vmem>>, vector<2x16xf32>,
    %c1_i32_200 = arith.constant 1 : i32
    %c2_i32_201 = arith.constant 2 : i32
    %665 = arith.muli %c1_i32_200, %c2_i32_201 : i32
    %666 = tpu.assume_multiple %665, 2 : i32
    %667 = arith.index_cast %666 : i32 to index
    %c0_202 = arith.constant 0 : index
    %668 = vector.load %arg10[%667, %c0_202] : memref<16x64xf32, #tpu.memory_space<vmem>>, vector<2x64xf32>
    %cst_203 = arith.constant dense<0.000000e+00> : vector<2x64xf32>
    %669 = tpu.matmul %628, %582, %cst_203 {dimension_numbers = #tpu.dot_dimension_numbers<[1], [0], [0], [1], [0, 0, 1, 1], [], []>} : vector<2x16xf32>, vector<16x64xf32>, vector<2x64xf32> -> vector<2x64xf32>
    %670 = arith.addf %668, %669 : vector<2x64xf32>
    %671 = vector.extract_strided_slice %670 {offsets = [0, 0], sizes = [2, 16], strides = [1, 1]} : vector<2x64xf32> to vector<2x16xf32>
    %672 = arith.negf %671 : vector<2x16xf32>
    %673 = math.exp %672 : vector<2x16xf32>
    %cst_204 = arith.constant 1.000000e+00 : f32
    %674 = vector.broadcast %cst_204 : f32 to vector<2x16xf32>
    %675 = arith.addf %674, %673 : vector<2x16xf32>
    %676 = arith.divf %674, %675 : vector<2x16xf32>
    %677 = vector.extract_strided_slice %670 {offsets = [0, 16], sizes = [2, 16], strides = [1, 1]} : vector<2x64xf32> to vector<2x16xf32>
    %678 = arith.negf %677 : vector<2x16xf32>
    %679 = math.exp %678 : vector<2x16xf32>
    %cst_205 = arith.constant 1.000000e+00 : f32
    %680 = vector.broadcast %cst_205 : f32 to vector<2x16xf32>
    %681 = arith.addf %680, %679 : vector<2x16xf32>
    %682 = arith.divf %680, %681 : vector<2x16xf32>
    %683 = vector.extract_strided_slice %670 {offsets = [0, 32], sizes = [2, 16], strides = [1, 1]} : vector<2x64xf32> to vector<2x16xf32>
    %684 = math.tanh %683 : vector<2x16xf32>
    %685 = vector.extract_strided_slice %670 {offsets = [0, 48], sizes = [2, 16], strides = [1, 1]} : vector<2x64xf32> to vector<2x16xf32>
    %686 = arith.negf %685 : vector<2x16xf32>
    %687 = math.exp %686 : vector<2x16xf32>
    %cst_206 = arith.constant 1.000000e+00 : f32
    %688 = vector.broadcast %cst_206 : f32 to vector<2x16xf32>
    %689 = arith.addf %688, %687 : vector<2x16xf32>
    %690 = arith.divf %688, %689 : vector<2x16xf32>
    %691 = arith.mulf %682, %626 : vector<2x16xf32>
    %692 = arith.mulf %676, %684 : vector<2x16xf32>
    %693 = arith.addf %691, %692 : vector<2x16xf32>
    %694 = math.tanh %693 : vector<2x16xf32>
    %695 = arith.mulf %690, %694 : vector<2x16xf32>
    %696 = arith.index_cast %666 : i32 to index
    %c0_207 = arith.constant 0 : index
    %697 = vector.load %arg12[%696, %c0_207] : memref<16x16xf32, #tpu.memory_space<vmem>>, vector<2x16xf32>
    tpu.vector_store %arg12[%696, %c0_207], %695 {strides = array<i32>} : memref<16x16xf32, #tpu.memory_space<vmem>>, vector<2x16xf32>,
    %c7_i32_208 = arith.constant 7 : i32
    %698 = arith.subi %c7_i32_208, %c1_i32_200 : i32
    %c2_i32_209 = arith.constant 2 : i32
    %699 = arith.muli %698, %c2_i32_209 : i32
    %700 = tpu.assume_multiple %699, 2 : i32
    %701 = arith.index_cast %700 : i32 to index
    %c0_210 = arith.constant 0 : index
    %702 = vector.load %arg11[%701, %c0_210] : memref<16x64xf32, #tpu.memory_space<vmem>>, vector<2x64xf32>
    %cst_211 = arith.constant dense<0.000000e+00> : vector<2x64xf32>
    %703 = tpu.matmul %662, %584, %cst_211 {dimension_numbers = #tpu.dot_dimension_numbers<[1], [0], [0], [1], [0, 0, 1, 1], [], []>} : vector<2x16xf32>, vector<16x64xf32>, vector<2x64xf32> -> vector<2x64xf32>
    %704 = arith.addf %702, %703 : vector<2x64xf32>
    %705 = vector.extract_strided_slice %704 {offsets = [0, 0], sizes = [2, 16], strides = [1, 1]} : vector<2x64xf32> to vector<2x16xf32>
    %706 = arith.negf %705 : vector<2x16xf32>
    %707 = math.exp %706 : vector<2x16xf32>
    %cst_212 = arith.constant 1.000000e+00 : f32
    %708 = vector.broadcast %cst_212 : f32 to vector<2x16xf32>
    %709 = arith.addf %708, %707 : vector<2x16xf32>
    %710 = arith.divf %708, %709 : vector<2x16xf32>
    %711 = vector.extract_strided_slice %704 {offsets = [0, 16], sizes = [2, 16], strides = [1, 1]} : vector<2x64xf32> to vector<2x16xf32>
    %712 = arith.negf %711 : vector<2x16xf32>
    %713 = math.exp %712 : vector<2x16xf32>
    %cst_213 = arith.constant 1.000000e+00 : f32
    %714 = vector.broadcast %cst_213 : f32 to vector<2x16xf32>
    %715 = arith.addf %714, %713 : vector<2x16xf32>
    %716 = arith.divf %714, %715 : vector<2x16xf32>
    %717 = vector.extract_strided_slice %704 {offsets = [0, 32], sizes = [2, 16], strides = [1, 1]} : vector<2x64xf32> to vector<2x16xf32>
    %718 = math.tanh %717 : vector<2x16xf32>
    %719 = vector.extract_strided_slice %704 {offsets = [0, 48], sizes = [2, 16], strides = [1, 1]} : vector<2x64xf32> to vector<2x16xf32>
    %720 = arith.negf %719 : vector<2x16xf32>
    %721 = math.exp %720 : vector<2x16xf32>
    %cst_214 = arith.constant 1.000000e+00 : f32
    %722 = vector.broadcast %cst_214 : f32 to vector<2x16xf32>
    %723 = arith.addf %722, %721 : vector<2x16xf32>
    %724 = arith.divf %722, %723 : vector<2x16xf32>
    %725 = arith.mulf %716, %660 : vector<2x16xf32>
    %726 = arith.mulf %710, %718 : vector<2x16xf32>
    %727 = arith.addf %725, %726 : vector<2x16xf32>
    %728 = math.tanh %727 : vector<2x16xf32>
    %729 = arith.mulf %724, %728 : vector<2x16xf32>
    %730 = arith.index_cast %700 : i32 to index
    %c0_215 = arith.constant 0 : index
    %731 = vector.load %arg13[%730, %c0_215] : memref<16x16xf32, #tpu.memory_space<vmem>>, vector<2x16xf32>
    tpu.vector_store %arg13[%730, %c0_215], %729 {strides = array<i32>} : memref<16x16xf32, #tpu.memory_space<vmem>>, vector<2x16xf32>,
    %c2_i32_216 = arith.constant 2 : i32
    %c2_i32_217 = arith.constant 2 : i32
    %732 = arith.muli %c2_i32_216, %c2_i32_217 : i32
    %733 = tpu.assume_multiple %732, 2 : i32
    %734 = arith.index_cast %733 : i32 to index
    %c0_218 = arith.constant 0 : index
    %735 = vector.load %arg10[%734, %c0_218] : memref<16x64xf32, #tpu.memory_space<vmem>>, vector<2x64xf32>
    %cst_219 = arith.constant dense<0.000000e+00> : vector<2x64xf32>
    %736 = tpu.matmul %695, %582, %cst_219 {dimension_numbers = #tpu.dot_dimension_numbers<[1], [0], [0], [1], [0, 0, 1, 1], [], []>} : vector<2x16xf32>, vector<16x64xf32>, vector<2x64xf32> -> vector<2x64xf32>
    %737 = arith.addf %735, %736 : vector<2x64xf32>
    %738 = vector.extract_strided_slice %737 {offsets = [0, 0], sizes = [2, 16], strides = [1, 1]} : vector<2x64xf32> to vector<2x16xf32>
    %739 = arith.negf %738 : vector<2x16xf32>
    %740 = math.exp %739 : vector<2x16xf32>
    %cst_220 = arith.constant 1.000000e+00 : f32
    %741 = vector.broadcast %cst_220 : f32 to vector<2x16xf32>
    %742 = arith.addf %741, %740 : vector<2x16xf32>
    %743 = arith.divf %741, %742 : vector<2x16xf32>
    %744 = vector.extract_strided_slice %737 {offsets = [0, 16], sizes = [2, 16], strides = [1, 1]} : vector<2x64xf32> to vector<2x16xf32>
    %745 = arith.negf %744 : vector<2x16xf32>
    %746 = math.exp %745 : vector<2x16xf32>
    %cst_221 = arith.constant 1.000000e+00 : f32
    %747 = vector.broadcast %cst_221 : f32 to vector<2x16xf32>
    %748 = arith.addf %747, %746 : vector<2x16xf32>
    %749 = arith.divf %747, %748 : vector<2x16xf32>
    %750 = vector.extract_strided_slice %737 {offsets = [0, 32], sizes = [2, 16], strides = [1, 1]} : vector<2x64xf32> to vector<2x16xf32>
    %751 = math.tanh %750 : vector<2x16xf32>
    %752 = vector.extract_strided_slice %737 {offsets = [0, 48], sizes = [2, 16], strides = [1, 1]} : vector<2x64xf32> to vector<2x16xf32>
    %753 = arith.negf %752 : vector<2x16xf32>
    %754 = math.exp %753 : vector<2x16xf32>
    %cst_222 = arith.constant 1.000000e+00 : f32
    %755 = vector.broadcast %cst_222 : f32 to vector<2x16xf32>
    %756 = arith.addf %755, %754 : vector<2x16xf32>
    %757 = arith.divf %755, %756 : vector<2x16xf32>
    %758 = arith.mulf %749, %693 : vector<2x16xf32>
    %759 = arith.mulf %743, %751 : vector<2x16xf32>
    %760 = arith.addf %758, %759 : vector<2x16xf32>
    %761 = math.tanh %760 : vector<2x16xf32>
    %762 = arith.mulf %757, %761 : vector<2x16xf32>
    %763 = arith.index_cast %733 : i32 to index
    %c0_223 = arith.constant 0 : index
    %764 = vector.load %arg12[%763, %c0_223] : memref<16x16xf32, #tpu.memory_space<vmem>>, vector<2x16xf32>
    tpu.vector_store %arg12[%763, %c0_223], %762 {strides = array<i32>} : memref<16x16xf32, #tpu.memory_space<vmem>>, vector<2x16xf32>,
    %c7_i32_224 = arith.constant 7 : i32
    %765 = arith.subi %c7_i32_224, %c2_i32_216 : i32
    %c2_i32_225 = arith.constant 2 : i32
    %766 = arith.muli %765, %c2_i32_225 : i32
    %767 = tpu.assume_multiple %766, 2 : i32
    %768 = arith.index_cast %767 : i32 to index
    %c0_226 = arith.constant 0 : index
    %769 = vector.load %arg11[%768, %c0_226] : memref<16x64xf32, #tpu.memory_space<vmem>>, vector<2x64xf32>
    %cst_227 = arith.constant dense<0.000000e+00> : vector<2x64xf32>
    %770 = tpu.matmul %729, %584, %cst_227 {dimension_numbers = #tpu.dot_dimension_numbers<[1], [0], [0], [1], [0, 0, 1, 1], [], []>} : vector<2x16xf32>, vector<16x64xf32>, vector<2x64xf32> -> vector<2x64xf32>
    %771 = arith.addf %769, %770 : vector<2x64xf32>
    %772 = vector.extract_strided_slice %771 {offsets = [0, 0], sizes = [2, 16], strides = [1, 1]} : vector<2x64xf32> to vector<2x16xf32>
    %773 = arith.negf %772 : vector<2x16xf32>
    %774 = math.exp %773 : vector<2x16xf32>
    %cst_228 = arith.constant 1.000000e+00 : f32
    %775 = vector.broadcast %cst_228 : f32 to vector<2x16xf32>
    %776 = arith.addf %775, %774 : vector<2x16xf32>
    %777 = arith.divf %775, %776 : vector<2x16xf32>
    %778 = vector.extract_strided_slice %771 {offsets = [0, 16], sizes = [2, 16], strides = [1, 1]} : vector<2x64xf32> to vector<2x16xf32>
    %779 = arith.negf %778 : vector<2x16xf32>
    %780 = math.exp %779 : vector<2x16xf32>
    %cst_229 = arith.constant 1.000000e+00 : f32
    %781 = vector.broadcast %cst_229 : f32 to vector<2x16xf32>
    %782 = arith.addf %781, %780 : vector<2x16xf32>
    %783 = arith.divf %781, %782 : vector<2x16xf32>
    %784 = vector.extract_strided_slice %771 {offsets = [0, 32], sizes = [2, 16], strides = [1, 1]} : vector<2x64xf32> to vector<2x16xf32>
    %785 = math.tanh %784 : vector<2x16xf32>
    %786 = vector.extract_strided_slice %771 {offsets = [0, 48], sizes = [2, 16], strides = [1, 1]} : vector<2x64xf32> to vector<2x16xf32>
    %787 = arith.negf %786 : vector<2x16xf32>
    %788 = math.exp %787 : vector<2x16xf32>
    %cst_230 = arith.constant 1.000000e+00 : f32
    %789 = vector.broadcast %cst_230 : f32 to vector<2x16xf32>
    %790 = arith.addf %789, %788 : vector<2x16xf32>
    %791 = arith.divf %789, %790 : vector<2x16xf32>
    %792 = arith.mulf %783, %727 : vector<2x16xf32>
    %793 = arith.mulf %777, %785 : vector<2x16xf32>
    %794 = arith.addf %792, %793 : vector<2x16xf32>
    %795 = math.tanh %794 : vector<2x16xf32>
    %796 = arith.mulf %791, %795 : vector<2x16xf32>
    %797 = arith.index_cast %767 : i32 to index
    %c0_231 = arith.constant 0 : index
    %798 = vector.load %arg13[%797, %c0_231] : memref<16x16xf32, #tpu.memory_space<vmem>>, vector<2x16xf32>
    tpu.vector_store %arg13[%797, %c0_231], %796 {strides = array<i32>} : memref<16x16xf32, #tpu.memory_space<vmem>>, vector<2x16xf32>,
    %c3_i32_232 = arith.constant 3 : i32
    %c2_i32_233 = arith.constant 2 : i32
    %799 = arith.muli %c3_i32_232, %c2_i32_233 : i32
    %800 = tpu.assume_multiple %799, 2 : i32
    %801 = arith.index_cast %800 : i32 to index
    %c0_234 = arith.constant 0 : index
    %802 = vector.load %arg10[%801, %c0_234] : memref<16x64xf32, #tpu.memory_space<vmem>>, vector<2x64xf32>
    %cst_235 = arith.constant dense<0.000000e+00> : vector<2x64xf32>
    %803 = tpu.matmul %762, %582, %cst_235 {dimension_numbers = #tpu.dot_dimension_numbers<[1], [0], [0], [1], [0, 0, 1, 1], [], []>} : vector<2x16xf32>, vector<16x64xf32>, vector<2x64xf32> -> vector<2x64xf32>
    %804 = arith.addf %802, %803 : vector<2x64xf32>
    %805 = vector.extract_strided_slice %804 {offsets = [0, 0], sizes = [2, 16], strides = [1, 1]} : vector<2x64xf32> to vector<2x16xf32>
    %806 = arith.negf %805 : vector<2x16xf32>
    %807 = math.exp %806 : vector<2x16xf32>
    %cst_236 = arith.constant 1.000000e+00 : f32
    %808 = vector.broadcast %cst_236 : f32 to vector<2x16xf32>
    %809 = arith.addf %808, %807 : vector<2x16xf32>
    %810 = arith.divf %808, %809 : vector<2x16xf32>
    %811 = vector.extract_strided_slice %804 {offsets = [0, 16], sizes = [2, 16], strides = [1, 1]} : vector<2x64xf32> to vector<2x16xf32>
    %812 = arith.negf %811 : vector<2x16xf32>
    %813 = math.exp %812 : vector<2x16xf32>
    %cst_237 = arith.constant 1.000000e+00 : f32
    %814 = vector.broadcast %cst_237 : f32 to vector<2x16xf32>
    %815 = arith.addf %814, %813 : vector<2x16xf32>
    %816 = arith.divf %814, %815 : vector<2x16xf32>
    %817 = vector.extract_strided_slice %804 {offsets = [0, 32], sizes = [2, 16], strides = [1, 1]} : vector<2x64xf32> to vector<2x16xf32>
    %818 = math.tanh %817 : vector<2x16xf32>
    %819 = vector.extract_strided_slice %804 {offsets = [0, 48], sizes = [2, 16], strides = [1, 1]} : vector<2x64xf32> to vector<2x16xf32>
    %820 = arith.negf %819 : vector<2x16xf32>
    %821 = math.exp %820 : vector<2x16xf32>
    %cst_238 = arith.constant 1.000000e+00 : f32
    %822 = vector.broadcast %cst_238 : f32 to vector<2x16xf32>
    %823 = arith.addf %822, %821 : vector<2x16xf32>
    %824 = arith.divf %822, %823 : vector<2x16xf32>
    %825 = arith.mulf %816, %760 : vector<2x16xf32>
    %826 = arith.mulf %810, %818 : vector<2x16xf32>
    %827 = arith.addf %825, %826 : vector<2x16xf32>
    %828 = math.tanh %827 : vector<2x16xf32>
    %829 = arith.mulf %824, %828 : vector<2x16xf32>
    %830 = arith.index_cast %800 : i32 to index
    %c0_239 = arith.constant 0 : index
    %831 = vector.load %arg12[%830, %c0_239] : memref<16x16xf32, #tpu.memory_space<vmem>>, vector<2x16xf32>
    tpu.vector_store %arg12[%830, %c0_239], %829 {strides = array<i32>} : memref<16x16xf32, #tpu.memory_space<vmem>>, vector<2x16xf32>,
    %c7_i32_240 = arith.constant 7 : i32
    %832 = arith.subi %c7_i32_240, %c3_i32_232 : i32
    %c2_i32_241 = arith.constant 2 : i32
    %833 = arith.muli %832, %c2_i32_241 : i32
    %834 = tpu.assume_multiple %833, 2 : i32
    %835 = arith.index_cast %834 : i32 to index
    %c0_242 = arith.constant 0 : index
    %836 = vector.load %arg11[%835, %c0_242] : memref<16x64xf32, #tpu.memory_space<vmem>>, vector<2x64xf32>
    %cst_243 = arith.constant dense<0.000000e+00> : vector<2x64xf32>
    %837 = tpu.matmul %796, %584, %cst_243 {dimension_numbers = #tpu.dot_dimension_numbers<[1], [0], [0], [1], [0, 0, 1, 1], [], []>} : vector<2x16xf32>, vector<16x64xf32>, vector<2x64xf32> -> vector<2x64xf32>
    %838 = arith.addf %836, %837 : vector<2x64xf32>
    %839 = vector.extract_strided_slice %838 {offsets = [0, 0], sizes = [2, 16], strides = [1, 1]} : vector<2x64xf32> to vector<2x16xf32>
    %840 = arith.negf %839 : vector<2x16xf32>
    %841 = math.exp %840 : vector<2x16xf32>
    %cst_244 = arith.constant 1.000000e+00 : f32
    %842 = vector.broadcast %cst_244 : f32 to vector<2x16xf32>
    %843 = arith.addf %842, %841 : vector<2x16xf32>
    %844 = arith.divf %842, %843 : vector<2x16xf32>
    %845 = vector.extract_strided_slice %838 {offsets = [0, 16], sizes = [2, 16], strides = [1, 1]} : vector<2x64xf32> to vector<2x16xf32>
    %846 = arith.negf %845 : vector<2x16xf32>
    %847 = math.exp %846 : vector<2x16xf32>
    %cst_245 = arith.constant 1.000000e+00 : f32
    %848 = vector.broadcast %cst_245 : f32 to vector<2x16xf32>
    %849 = arith.addf %848, %847 : vector<2x16xf32>
    %850 = arith.divf %848, %849 : vector<2x16xf32>
    %851 = vector.extract_strided_slice %838 {offsets = [0, 32], sizes = [2, 16], strides = [1, 1]} : vector<2x64xf32> to vector<2x16xf32>
    %852 = math.tanh %851 : vector<2x16xf32>
    %853 = vector.extract_strided_slice %838 {offsets = [0, 48], sizes = [2, 16], strides = [1, 1]} : vector<2x64xf32> to vector<2x16xf32>
    %854 = arith.negf %853 : vector<2x16xf32>
    %855 = math.exp %854 : vector<2x16xf32>
    %cst_246 = arith.constant 1.000000e+00 : f32
    %856 = vector.broadcast %cst_246 : f32 to vector<2x16xf32>
    %857 = arith.addf %856, %855 : vector<2x16xf32>
    %858 = arith.divf %856, %857 : vector<2x16xf32>
    %859 = arith.mulf %850, %794 : vector<2x16xf32>
    %860 = arith.mulf %844, %852 : vector<2x16xf32>
    %861 = arith.addf %859, %860 : vector<2x16xf32>
    %862 = math.tanh %861 : vector<2x16xf32>
    %863 = arith.mulf %858, %862 : vector<2x16xf32>
    %864 = arith.index_cast %834 : i32 to index
    %c0_247 = arith.constant 0 : index
    %865 = vector.load %arg13[%864, %c0_247] : memref<16x16xf32, #tpu.memory_space<vmem>>, vector<2x16xf32>
    tpu.vector_store %arg13[%864, %c0_247], %863 {strides = array<i32>} : memref<16x16xf32, #tpu.memory_space<vmem>>, vector<2x16xf32>,
    %c4_i32_248 = arith.constant 4 : i32
    %c2_i32_249 = arith.constant 2 : i32
    %866 = arith.muli %c4_i32_248, %c2_i32_249 : i32
    %867 = tpu.assume_multiple %866, 2 : i32
    %868 = arith.index_cast %867 : i32 to index
    %c0_250 = arith.constant 0 : index
    %869 = vector.load %arg10[%868, %c0_250] : memref<16x64xf32, #tpu.memory_space<vmem>>, vector<2x64xf32>
    %cst_251 = arith.constant dense<0.000000e+00> : vector<2x64xf32>
    %870 = tpu.matmul %829, %582, %cst_251 {dimension_numbers = #tpu.dot_dimension_numbers<[1], [0], [0], [1], [0, 0, 1, 1], [], []>} : vector<2x16xf32>, vector<16x64xf32>, vector<2x64xf32> -> vector<2x64xf32>
    %871 = arith.addf %869, %870 : vector<2x64xf32>
    %872 = vector.extract_strided_slice %871 {offsets = [0, 0], sizes = [2, 16], strides = [1, 1]} : vector<2x64xf32> to vector<2x16xf32>
    %873 = arith.negf %872 : vector<2x16xf32>
    %874 = math.exp %873 : vector<2x16xf32>
    %cst_252 = arith.constant 1.000000e+00 : f32
    %875 = vector.broadcast %cst_252 : f32 to vector<2x16xf32>
    %876 = arith.addf %875, %874 : vector<2x16xf32>
    %877 = arith.divf %875, %876 : vector<2x16xf32>
    %878 = vector.extract_strided_slice %871 {offsets = [0, 16], sizes = [2, 16], strides = [1, 1]} : vector<2x64xf32> to vector<2x16xf32>
    %879 = arith.negf %878 : vector<2x16xf32>
    %880 = math.exp %879 : vector<2x16xf32>
    %cst_253 = arith.constant 1.000000e+00 : f32
    %881 = vector.broadcast %cst_253 : f32 to vector<2x16xf32>
    %882 = arith.addf %881, %880 : vector<2x16xf32>
    %883 = arith.divf %881, %882 : vector<2x16xf32>
    %884 = vector.extract_strided_slice %871 {offsets = [0, 32], sizes = [2, 16], strides = [1, 1]} : vector<2x64xf32> to vector<2x16xf32>
    %885 = math.tanh %884 : vector<2x16xf32>
    %886 = vector.extract_strided_slice %871 {offsets = [0, 48], sizes = [2, 16], strides = [1, 1]} : vector<2x64xf32> to vector<2x16xf32>
    %887 = arith.negf %886 : vector<2x16xf32>
    %888 = math.exp %887 : vector<2x16xf32>
    %cst_254 = arith.constant 1.000000e+00 : f32
    %889 = vector.broadcast %cst_254 : f32 to vector<2x16xf32>
    %890 = arith.addf %889, %888 : vector<2x16xf32>
    %891 = arith.divf %889, %890 : vector<2x16xf32>
    %892 = arith.mulf %883, %827 : vector<2x16xf32>
    %893 = arith.mulf %877, %885 : vector<2x16xf32>
    %894 = arith.addf %892, %893 : vector<2x16xf32>
    %895 = math.tanh %894 : vector<2x16xf32>
    %896 = arith.mulf %891, %895 : vector<2x16xf32>
    %897 = arith.index_cast %867 : i32 to index
    %c0_255 = arith.constant 0 : index
    %898 = vector.load %arg12[%897, %c0_255] : memref<16x16xf32, #tpu.memory_space<vmem>>, vector<2x16xf32>
    tpu.vector_store %arg12[%897, %c0_255], %896 {strides = array<i32>} : memref<16x16xf32, #tpu.memory_space<vmem>>, vector<2x16xf32>,
    %c7_i32_256 = arith.constant 7 : i32
    %899 = arith.subi %c7_i32_256, %c4_i32_248 : i32
    %c2_i32_257 = arith.constant 2 : i32
    %900 = arith.muli %899, %c2_i32_257 : i32
    %901 = tpu.assume_multiple %900, 2 : i32
    %902 = arith.index_cast %901 : i32 to index
    %c0_258 = arith.constant 0 : index
    %903 = vector.load %arg11[%902, %c0_258] : memref<16x64xf32, #tpu.memory_space<vmem>>, vector<2x64xf32>
    %cst_259 = arith.constant dense<0.000000e+00> : vector<2x64xf32>
    %904 = tpu.matmul %863, %584, %cst_259 {dimension_numbers = #tpu.dot_dimension_numbers<[1], [0], [0], [1], [0, 0, 1, 1], [], []>} : vector<2x16xf32>, vector<16x64xf32>, vector<2x64xf32> -> vector<2x64xf32>
    %905 = arith.addf %903, %904 : vector<2x64xf32>
    %906 = vector.extract_strided_slice %905 {offsets = [0, 0], sizes = [2, 16], strides = [1, 1]} : vector<2x64xf32> to vector<2x16xf32>
    %907 = arith.negf %906 : vector<2x16xf32>
    %908 = math.exp %907 : vector<2x16xf32>
    %cst_260 = arith.constant 1.000000e+00 : f32
    %909 = vector.broadcast %cst_260 : f32 to vector<2x16xf32>
    %910 = arith.addf %909, %908 : vector<2x16xf32>
    %911 = arith.divf %909, %910 : vector<2x16xf32>
    %912 = vector.extract_strided_slice %905 {offsets = [0, 16], sizes = [2, 16], strides = [1, 1]} : vector<2x64xf32> to vector<2x16xf32>
    %913 = arith.negf %912 : vector<2x16xf32>
    %914 = math.exp %913 : vector<2x16xf32>
    %cst_261 = arith.constant 1.000000e+00 : f32
    %915 = vector.broadcast %cst_261 : f32 to vector<2x16xf32>
    %916 = arith.addf %915, %914 : vector<2x16xf32>
    %917 = arith.divf %915, %916 : vector<2x16xf32>
    %918 = vector.extract_strided_slice %905 {offsets = [0, 32], sizes = [2, 16], strides = [1, 1]} : vector<2x64xf32> to vector<2x16xf32>
    %919 = math.tanh %918 : vector<2x16xf32>
    %920 = vector.extract_strided_slice %905 {offsets = [0, 48], sizes = [2, 16], strides = [1, 1]} : vector<2x64xf32> to vector<2x16xf32>
    %921 = arith.negf %920 : vector<2x16xf32>
    %922 = math.exp %921 : vector<2x16xf32>
    %cst_262 = arith.constant 1.000000e+00 : f32
    %923 = vector.broadcast %cst_262 : f32 to vector<2x16xf32>
    %924 = arith.addf %923, %922 : vector<2x16xf32>
    %925 = arith.divf %923, %924 : vector<2x16xf32>
    %926 = arith.mulf %917, %861 : vector<2x16xf32>
    %927 = arith.mulf %911, %919 : vector<2x16xf32>
    %928 = arith.addf %926, %927 : vector<2x16xf32>
    %929 = math.tanh %928 : vector<2x16xf32>
    %930 = arith.mulf %925, %929 : vector<2x16xf32>
    %931 = arith.index_cast %901 : i32 to index
    %c0_263 = arith.constant 0 : index
    %932 = vector.load %arg13[%931, %c0_263] : memref<16x16xf32, #tpu.memory_space<vmem>>, vector<2x16xf32>
    tpu.vector_store %arg13[%931, %c0_263], %930 {strides = array<i32>} : memref<16x16xf32, #tpu.memory_space<vmem>>, vector<2x16xf32>,
    %c5_i32_264 = arith.constant 5 : i32
    %c2_i32_265 = arith.constant 2 : i32
    %933 = arith.muli %c5_i32_264, %c2_i32_265 : i32
    %934 = tpu.assume_multiple %933, 2 : i32
    %935 = arith.index_cast %934 : i32 to index
    %c0_266 = arith.constant 0 : index
    %936 = vector.load %arg10[%935, %c0_266] : memref<16x64xf32, #tpu.memory_space<vmem>>, vector<2x64xf32>
    %cst_267 = arith.constant dense<0.000000e+00> : vector<2x64xf32>
    %937 = tpu.matmul %896, %582, %cst_267 {dimension_numbers = #tpu.dot_dimension_numbers<[1], [0], [0], [1], [0, 0, 1, 1], [], []>} : vector<2x16xf32>, vector<16x64xf32>, vector<2x64xf32> -> vector<2x64xf32>
    %938 = arith.addf %936, %937 : vector<2x64xf32>
    %939 = vector.extract_strided_slice %938 {offsets = [0, 0], sizes = [2, 16], strides = [1, 1]} : vector<2x64xf32> to vector<2x16xf32>
    %940 = arith.negf %939 : vector<2x16xf32>
    %941 = math.exp %940 : vector<2x16xf32>
    %cst_268 = arith.constant 1.000000e+00 : f32
    %942 = vector.broadcast %cst_268 : f32 to vector<2x16xf32>
    %943 = arith.addf %942, %941 : vector<2x16xf32>
    %944 = arith.divf %942, %943 : vector<2x16xf32>
    %945 = vector.extract_strided_slice %938 {offsets = [0, 16], sizes = [2, 16], strides = [1, 1]} : vector<2x64xf32> to vector<2x16xf32>
    %946 = arith.negf %945 : vector<2x16xf32>
    %947 = math.exp %946 : vector<2x16xf32>
    %cst_269 = arith.constant 1.000000e+00 : f32
    %948 = vector.broadcast %cst_269 : f32 to vector<2x16xf32>
    %949 = arith.addf %948, %947 : vector<2x16xf32>
    %950 = arith.divf %948, %949 : vector<2x16xf32>
    %951 = vector.extract_strided_slice %938 {offsets = [0, 32], sizes = [2, 16], strides = [1, 1]} : vector<2x64xf32> to vector<2x16xf32>
    %952 = math.tanh %951 : vector<2x16xf32>
    %953 = vector.extract_strided_slice %938 {offsets = [0, 48], sizes = [2, 16], strides = [1, 1]} : vector<2x64xf32> to vector<2x16xf32>
    %954 = arith.negf %953 : vector<2x16xf32>
    %955 = math.exp %954 : vector<2x16xf32>
    %cst_270 = arith.constant 1.000000e+00 : f32
    %956 = vector.broadcast %cst_270 : f32 to vector<2x16xf32>
    %957 = arith.addf %956, %955 : vector<2x16xf32>
    %958 = arith.divf %956, %957 : vector<2x16xf32>
    %959 = arith.mulf %950, %894 : vector<2x16xf32>
    %960 = arith.mulf %944, %952 : vector<2x16xf32>
    %961 = arith.addf %959, %960 : vector<2x16xf32>
    %962 = math.tanh %961 : vector<2x16xf32>
    %963 = arith.mulf %958, %962 : vector<2x16xf32>
    %964 = arith.index_cast %934 : i32 to index
    %c0_271 = arith.constant 0 : index
    %965 = vector.load %arg12[%964, %c0_271] : memref<16x16xf32, #tpu.memory_space<vmem>>, vector<2x16xf32>
    tpu.vector_store %arg12[%964, %c0_271], %963 {strides = array<i32>} : memref<16x16xf32, #tpu.memory_space<vmem>>, vector<2x16xf32>,
    %c7_i32_272 = arith.constant 7 : i32
    %966 = arith.subi %c7_i32_272, %c5_i32_264 : i32
    %c2_i32_273 = arith.constant 2 : i32
    %967 = arith.muli %966, %c2_i32_273 : i32
    %968 = tpu.assume_multiple %967, 2 : i32
    %969 = arith.index_cast %968 : i32 to index
    %c0_274 = arith.constant 0 : index
    %970 = vector.load %arg11[%969, %c0_274] : memref<16x64xf32, #tpu.memory_space<vmem>>, vector<2x64xf32>
    %cst_275 = arith.constant dense<0.000000e+00> : vector<2x64xf32>
    %971 = tpu.matmul %930, %584, %cst_275 {dimension_numbers = #tpu.dot_dimension_numbers<[1], [0], [0], [1], [0, 0, 1, 1], [], []>} : vector<2x16xf32>, vector<16x64xf32>, vector<2x64xf32> -> vector<2x64xf32>
    %972 = arith.addf %970, %971 : vector<2x64xf32>
    %973 = vector.extract_strided_slice %972 {offsets = [0, 0], sizes = [2, 16], strides = [1, 1]} : vector<2x64xf32> to vector<2x16xf32>
    %974 = arith.negf %973 : vector<2x16xf32>
    %975 = math.exp %974 : vector<2x16xf32>
    %cst_276 = arith.constant 1.000000e+00 : f32
    %976 = vector.broadcast %cst_276 : f32 to vector<2x16xf32>
    %977 = arith.addf %976, %975 : vector<2x16xf32>
    %978 = arith.divf %976, %977 : vector<2x16xf32>
    %979 = vector.extract_strided_slice %972 {offsets = [0, 16], sizes = [2, 16], strides = [1, 1]} : vector<2x64xf32> to vector<2x16xf32>
    %980 = arith.negf %979 : vector<2x16xf32>
    %981 = math.exp %980 : vector<2x16xf32>
    %cst_277 = arith.constant 1.000000e+00 : f32
    %982 = vector.broadcast %cst_277 : f32 to vector<2x16xf32>
    %983 = arith.addf %982, %981 : vector<2x16xf32>
    %984 = arith.divf %982, %983 : vector<2x16xf32>
    %985 = vector.extract_strided_slice %972 {offsets = [0, 32], sizes = [2, 16], strides = [1, 1]} : vector<2x64xf32> to vector<2x16xf32>
    %986 = math.tanh %985 : vector<2x16xf32>
    %987 = vector.extract_strided_slice %972 {offsets = [0, 48], sizes = [2, 16], strides = [1, 1]} : vector<2x64xf32> to vector<2x16xf32>
    %988 = arith.negf %987 : vector<2x16xf32>
    %989 = math.exp %988 : vector<2x16xf32>
    %cst_278 = arith.constant 1.000000e+00 : f32
    %990 = vector.broadcast %cst_278 : f32 to vector<2x16xf32>
    %991 = arith.addf %990, %989 : vector<2x16xf32>
    %992 = arith.divf %990, %991 : vector<2x16xf32>
    %993 = arith.mulf %984, %928 : vector<2x16xf32>
    %994 = arith.mulf %978, %986 : vector<2x16xf32>
    %995 = arith.addf %993, %994 : vector<2x16xf32>
    %996 = math.tanh %995 : vector<2x16xf32>
    %997 = arith.mulf %992, %996 : vector<2x16xf32>
    %998 = arith.index_cast %968 : i32 to index
    %c0_279 = arith.constant 0 : index
    %999 = vector.load %arg13[%998, %c0_279] : memref<16x16xf32, #tpu.memory_space<vmem>>, vector<2x16xf32>
    tpu.vector_store %arg13[%998, %c0_279], %997 {strides = array<i32>} : memref<16x16xf32, #tpu.memory_space<vmem>>, vector<2x16xf32>,
    %c6_i32_280 = arith.constant 6 : i32
    %c2_i32_281 = arith.constant 2 : i32
    %1000 = arith.muli %c6_i32_280, %c2_i32_281 : i32
    %1001 = tpu.assume_multiple %1000, 2 : i32
    %1002 = arith.index_cast %1001 : i32 to index
    %c0_282 = arith.constant 0 : index
    %1003 = vector.load %arg10[%1002, %c0_282] : memref<16x64xf32, #tpu.memory_space<vmem>>, vector<2x64xf32>
    %cst_283 = arith.constant dense<0.000000e+00> : vector<2x64xf32>
    %1004 = tpu.matmul %963, %582, %cst_283 {dimension_numbers = #tpu.dot_dimension_numbers<[1], [0], [0], [1], [0, 0, 1, 1], [], []>} : vector<2x16xf32>, vector<16x64xf32>, vector<2x64xf32> -> vector<2x64xf32>
    %1005 = arith.addf %1003, %1004 : vector<2x64xf32>
    %1006 = vector.extract_strided_slice %1005 {offsets = [0, 0], sizes = [2, 16], strides = [1, 1]} : vector<2x64xf32> to vector<2x16xf32>
    %1007 = arith.negf %1006 : vector<2x16xf32>
    %1008 = math.exp %1007 : vector<2x16xf32>
    %cst_284 = arith.constant 1.000000e+00 : f32
    %1009 = vector.broadcast %cst_284 : f32 to vector<2x16xf32>
    %1010 = arith.addf %1009, %1008 : vector<2x16xf32>
    %1011 = arith.divf %1009, %1010 : vector<2x16xf32>
    %1012 = vector.extract_strided_slice %1005 {offsets = [0, 16], sizes = [2, 16], strides = [1, 1]} : vector<2x64xf32> to vector<2x16xf32>
    %1013 = arith.negf %1012 : vector<2x16xf32>
    %1014 = math.exp %1013 : vector<2x16xf32>
    %cst_285 = arith.constant 1.000000e+00 : f32
    %1015 = vector.broadcast %cst_285 : f32 to vector<2x16xf32>
    %1016 = arith.addf %1015, %1014 : vector<2x16xf32>
    %1017 = arith.divf %1015, %1016 : vector<2x16xf32>
    %1018 = vector.extract_strided_slice %1005 {offsets = [0, 32], sizes = [2, 16], strides = [1, 1]} : vector<2x64xf32> to vector<2x16xf32>
    %1019 = math.tanh %1018 : vector<2x16xf32>
    %1020 = vector.extract_strided_slice %1005 {offsets = [0, 48], sizes = [2, 16], strides = [1, 1]} : vector<2x64xf32> to vector<2x16xf32>
    %1021 = arith.negf %1020 : vector<2x16xf32>
    %1022 = math.exp %1021 : vector<2x16xf32>
    %cst_286 = arith.constant 1.000000e+00 : f32
    %1023 = vector.broadcast %cst_286 : f32 to vector<2x16xf32>
    %1024 = arith.addf %1023, %1022 : vector<2x16xf32>
    %1025 = arith.divf %1023, %1024 : vector<2x16xf32>
    %1026 = arith.mulf %1017, %961 : vector<2x16xf32>
    %1027 = arith.mulf %1011, %1019 : vector<2x16xf32>
    %1028 = arith.addf %1026, %1027 : vector<2x16xf32>
    %1029 = math.tanh %1028 : vector<2x16xf32>
    %1030 = arith.mulf %1025, %1029 : vector<2x16xf32>
    %1031 = arith.index_cast %1001 : i32 to index
    %c0_287 = arith.constant 0 : index
    %1032 = vector.load %arg12[%1031, %c0_287] : memref<16x16xf32, #tpu.memory_space<vmem>>, vector<2x16xf32>
    tpu.vector_store %arg12[%1031, %c0_287], %1030 {strides = array<i32>} : memref<16x16xf32, #tpu.memory_space<vmem>>, vector<2x16xf32>,
    %c7_i32_288 = arith.constant 7 : i32
    %1033 = arith.subi %c7_i32_288, %c6_i32_280 : i32
    %c2_i32_289 = arith.constant 2 : i32
    %1034 = arith.muli %1033, %c2_i32_289 : i32
    %1035 = tpu.assume_multiple %1034, 2 : i32
    %1036 = arith.index_cast %1035 : i32 to index
    %c0_290 = arith.constant 0 : index
    %1037 = vector.load %arg11[%1036, %c0_290] : memref<16x64xf32, #tpu.memory_space<vmem>>, vector<2x64xf32>
    %cst_291 = arith.constant dense<0.000000e+00> : vector<2x64xf32>
    %1038 = tpu.matmul %997, %584, %cst_291 {dimension_numbers = #tpu.dot_dimension_numbers<[1], [0], [0], [1], [0, 0, 1, 1], [], []>} : vector<2x16xf32>, vector<16x64xf32>, vector<2x64xf32> -> vector<2x64xf32>
    %1039 = arith.addf %1037, %1038 : vector<2x64xf32>
    %1040 = vector.extract_strided_slice %1039 {offsets = [0, 0], sizes = [2, 16], strides = [1, 1]} : vector<2x64xf32> to vector<2x16xf32>
    %1041 = arith.negf %1040 : vector<2x16xf32>
    %1042 = math.exp %1041 : vector<2x16xf32>
    %cst_292 = arith.constant 1.000000e+00 : f32
    %1043 = vector.broadcast %cst_292 : f32 to vector<2x16xf32>
    %1044 = arith.addf %1043, %1042 : vector<2x16xf32>
    %1045 = arith.divf %1043, %1044 : vector<2x16xf32>
    %1046 = vector.extract_strided_slice %1039 {offsets = [0, 16], sizes = [2, 16], strides = [1, 1]} : vector<2x64xf32> to vector<2x16xf32>
    %1047 = arith.negf %1046 : vector<2x16xf32>
    %1048 = math.exp %1047 : vector<2x16xf32>
    %cst_293 = arith.constant 1.000000e+00 : f32
    %1049 = vector.broadcast %cst_293 : f32 to vector<2x16xf32>
    %1050 = arith.addf %1049, %1048 : vector<2x16xf32>
    %1051 = arith.divf %1049, %1050 : vector<2x16xf32>
    %1052 = vector.extract_strided_slice %1039 {offsets = [0, 32], sizes = [2, 16], strides = [1, 1]} : vector<2x64xf32> to vector<2x16xf32>
    %1053 = math.tanh %1052 : vector<2x16xf32>
    %1054 = vector.extract_strided_slice %1039 {offsets = [0, 48], sizes = [2, 16], strides = [1, 1]} : vector<2x64xf32> to vector<2x16xf32>
    %1055 = arith.negf %1054 : vector<2x16xf32>
    %1056 = math.exp %1055 : vector<2x16xf32>
    %cst_294 = arith.constant 1.000000e+00 : f32
    %1057 = vector.broadcast %cst_294 : f32 to vector<2x16xf32>
    %1058 = arith.addf %1057, %1056 : vector<2x16xf32>
    %1059 = arith.divf %1057, %1058 : vector<2x16xf32>
    %1060 = arith.mulf %1051, %995 : vector<2x16xf32>
    %1061 = arith.mulf %1045, %1053 : vector<2x16xf32>
    %1062 = arith.addf %1060, %1061 : vector<2x16xf32>
    %1063 = math.tanh %1062 : vector<2x16xf32>
    %1064 = arith.mulf %1059, %1063 : vector<2x16xf32>
    %1065 = arith.index_cast %1035 : i32 to index
    %c0_295 = arith.constant 0 : index
    %1066 = vector.load %arg13[%1065, %c0_295] : memref<16x16xf32, #tpu.memory_space<vmem>>, vector<2x16xf32>
    tpu.vector_store %arg13[%1065, %c0_295], %1064 {strides = array<i32>} : memref<16x16xf32, #tpu.memory_space<vmem>>, vector<2x16xf32>,
    %c7_i32_296 = arith.constant 7 : i32
    %c2_i32_297 = arith.constant 2 : i32
    %1067 = arith.muli %c7_i32_296, %c2_i32_297 : i32
    %1068 = tpu.assume_multiple %1067, 2 : i32
    %1069 = arith.index_cast %1068 : i32 to index
    %c0_298 = arith.constant 0 : index
    %1070 = vector.load %arg10[%1069, %c0_298] : memref<16x64xf32, #tpu.memory_space<vmem>>, vector<2x64xf32>
    %cst_299 = arith.constant dense<0.000000e+00> : vector<2x64xf32>
    %1071 = tpu.matmul %1030, %582, %cst_299 {dimension_numbers = #tpu.dot_dimension_numbers<[1], [0], [0], [1], [0, 0, 1, 1], [], []>} : vector<2x16xf32>, vector<16x64xf32>, vector<2x64xf32> -> vector<2x64xf32>
    %1072 = arith.addf %1070, %1071 : vector<2x64xf32>
    %1073 = vector.extract_strided_slice %1072 {offsets = [0, 0], sizes = [2, 16], strides = [1, 1]} : vector<2x64xf32> to vector<2x16xf32>
    %1074 = arith.negf %1073 : vector<2x16xf32>
    %1075 = math.exp %1074 : vector<2x16xf32>
    %cst_300 = arith.constant 1.000000e+00 : f32
    %1076 = vector.broadcast %cst_300 : f32 to vector<2x16xf32>
    %1077 = arith.addf %1076, %1075 : vector<2x16xf32>
    %1078 = arith.divf %1076, %1077 : vector<2x16xf32>
    %1079 = vector.extract_strided_slice %1072 {offsets = [0, 16], sizes = [2, 16], strides = [1, 1]} : vector<2x64xf32> to vector<2x16xf32>
    %1080 = arith.negf %1079 : vector<2x16xf32>
    %1081 = math.exp %1080 : vector<2x16xf32>
    %cst_301 = arith.constant 1.000000e+00 : f32
    %1082 = vector.broadcast %cst_301 : f32 to vector<2x16xf32>
    %1083 = arith.addf %1082, %1081 : vector<2x16xf32>
    %1084 = arith.divf %1082, %1083 : vector<2x16xf32>
    %1085 = vector.extract_strided_slice %1072 {offsets = [0, 32], sizes = [2, 16], strides = [1, 1]} : vector<2x64xf32> to vector<2x16xf32>
    %1086 = math.tanh %1085 : vector<2x16xf32>
    %1087 = vector.extract_strided_slice %1072 {offsets = [0, 48], sizes = [2, 16], strides = [1, 1]} : vector<2x64xf32> to vector<2x16xf32>
    %1088 = arith.negf %1087 : vector<2x16xf32>
    %1089 = math.exp %1088 : vector<2x16xf32>
    %cst_302 = arith.constant 1.000000e+00 : f32
    %1090 = vector.broadcast %cst_302 : f32 to vector<2x16xf32>
    %1091 = arith.addf %1090, %1089 : vector<2x16xf32>
    %1092 = arith.divf %1090, %1091 : vector<2x16xf32>
    %1093 = arith.mulf %1084, %1028 : vector<2x16xf32>
    %1094 = arith.mulf %1078, %1086 : vector<2x16xf32>
    %1095 = arith.addf %1093, %1094 : vector<2x16xf32>
    %1096 = math.tanh %1095 : vector<2x16xf32>
    %1097 = arith.mulf %1092, %1096 : vector<2x16xf32>
    %1098 = arith.index_cast %1068 : i32 to index
    %c0_303 = arith.constant 0 : index
    %1099 = vector.load %arg12[%1098, %c0_303] : memref<16x16xf32, #tpu.memory_space<vmem>>, vector<2x16xf32>
    tpu.vector_store %arg12[%1098, %c0_303], %1097 {strides = array<i32>} : memref<16x16xf32, #tpu.memory_space<vmem>>, vector<2x16xf32>,
    %c7_i32_304 = arith.constant 7 : i32
    %1100 = arith.subi %c7_i32_304, %c7_i32_296 : i32
    %c2_i32_305 = arith.constant 2 : i32
    %1101 = arith.muli %1100, %c2_i32_305 : i32
    %1102 = tpu.assume_multiple %1101, 2 : i32
    %1103 = arith.index_cast %1102 : i32 to index
    %c0_306 = arith.constant 0 : index
    %1104 = vector.load %arg11[%1103, %c0_306] : memref<16x64xf32, #tpu.memory_space<vmem>>, vector<2x64xf32>
    %cst_307 = arith.constant dense<0.000000e+00> : vector<2x64xf32>
    %1105 = tpu.matmul %1064, %584, %cst_307 {dimension_numbers = #tpu.dot_dimension_numbers<[1], [0], [0], [1], [0, 0, 1, 1], [], []>} : vector<2x16xf32>, vector<16x64xf32>, vector<2x64xf32> -> vector<2x64xf32>
    %1106 = arith.addf %1104, %1105 : vector<2x64xf32>
    %1107 = vector.extract_strided_slice %1106 {offsets = [0, 0], sizes = [2, 16], strides = [1, 1]} : vector<2x64xf32> to vector<2x16xf32>
    %1108 = arith.negf %1107 : vector<2x16xf32>
    %1109 = math.exp %1108 : vector<2x16xf32>
    %cst_308 = arith.constant 1.000000e+00 : f32
    %1110 = vector.broadcast %cst_308 : f32 to vector<2x16xf32>
    %1111 = arith.addf %1110, %1109 : vector<2x16xf32>
    %1112 = arith.divf %1110, %1111 : vector<2x16xf32>
    %1113 = vector.extract_strided_slice %1106 {offsets = [0, 16], sizes = [2, 16], strides = [1, 1]} : vector<2x64xf32> to vector<2x16xf32>
    %1114 = arith.negf %1113 : vector<2x16xf32>
    %1115 = math.exp %1114 : vector<2x16xf32>
    %cst_309 = arith.constant 1.000000e+00 : f32
    %1116 = vector.broadcast %cst_309 : f32 to vector<2x16xf32>
    %1117 = arith.addf %1116, %1115 : vector<2x16xf32>
    %1118 = arith.divf %1116, %1117 : vector<2x16xf32>
    %1119 = vector.extract_strided_slice %1106 {offsets = [0, 32], sizes = [2, 16], strides = [1, 1]} : vector<2x64xf32> to vector<2x16xf32>
    %1120 = math.tanh %1119 : vector<2x16xf32>
    %1121 = vector.extract_strided_slice %1106 {offsets = [0, 48], sizes = [2, 16], strides = [1, 1]} : vector<2x64xf32> to vector<2x16xf32>
    %1122 = arith.negf %1121 : vector<2x16xf32>
    %1123 = math.exp %1122 : vector<2x16xf32>
    %cst_310 = arith.constant 1.000000e+00 : f32
    %1124 = vector.broadcast %cst_310 : f32 to vector<2x16xf32>
    %1125 = arith.addf %1124, %1123 : vector<2x16xf32>
    %1126 = arith.divf %1124, %1125 : vector<2x16xf32>
    %1127 = arith.mulf %1118, %1062 : vector<2x16xf32>
    %1128 = arith.mulf %1112, %1120 : vector<2x16xf32>
    %1129 = arith.addf %1127, %1128 : vector<2x16xf32>
    %1130 = math.tanh %1129 : vector<2x16xf32>
    %1131 = arith.mulf %1126, %1130 : vector<2x16xf32>
    %1132 = arith.index_cast %1102 : i32 to index
    %c0_311 = arith.constant 0 : index
    %1133 = vector.load %arg13[%1132, %c0_311] : memref<16x16xf32, #tpu.memory_space<vmem>>, vector<2x16xf32>
    tpu.vector_store %arg13[%1132, %c0_311], %1131 {strides = array<i32>} : memref<16x16xf32, #tpu.memory_space<vmem>>, vector<2x16xf32>,
    %c8_i32_312 = arith.constant 8 : i32
    %c0_313 = arith.constant 0 : index
    %c0_314 = arith.constant 0 : index
    %1134 = vector.load %arg12[%c0_313, %c0_314] : memref<16x16xf32, #tpu.memory_space<vmem>>, vector<16x16xf32>
    %c0_315 = arith.constant 0 : index
    %c0_316 = arith.constant 0 : index
    %1135 = vector.load %arg13[%c0_315, %c0_316] : memref<16x16xf32, #tpu.memory_space<vmem>>, vector<16x16xf32>
    %1136 = tpu.concatenate %1134, %1135 in 1 : vector<16x16xf32>, vector<16x16xf32> -> vector<16x32xf32>
    %c4 = arith.constant 4 : index
    %c0_317 = arith.constant 0 : index
    %c0_318 = arith.constant 0 : index
    %1137 = vector.load %arg6[%c4, %c0_317, %c0_318] : memref<6x32x64xf32, #tpu.memory_space<vmem>>, vector<1x32x64xf32>
    %1138 = vector.shape_cast %1137 : vector<1x32x64xf32> to vector<32x64xf32>
    %c5 = arith.constant 5 : index
    %c0_319 = arith.constant 0 : index
    %c0_320 = arith.constant 0 : index
    %1139 = vector.load %arg6[%c5, %c0_319, %c0_320] : memref<6x32x64xf32, #tpu.memory_space<vmem>>, vector<1x32x64xf32>
    %1140 = vector.shape_cast %1139 : vector<1x32x64xf32> to vector<32x64xf32>
    %c4_321 = arith.constant 4 : index
    %c0_322 = arith.constant 0 : index
    %c0_323 = arith.constant 0 : index
    %1141 = vector.load %arg7[%c4_321, %c0_322, %c0_323] : memref<6x16x64xf32, #tpu.memory_space<vmem>>, vector<1x16x64xf32>
    %1142 = vector.shape_cast %1141 : vector<1x16x64xf32> to vector<16x64xf32>
    %c5_324 = arith.constant 5 : index
    %c0_325 = arith.constant 0 : index
    %c0_326 = arith.constant 0 : index
    %1143 = vector.load %arg7[%c5_324, %c0_325, %c0_326] : memref<6x16x64xf32, #tpu.memory_space<vmem>>, vector<1x16x64xf32>
    %1144 = vector.shape_cast %1143 : vector<1x16x64xf32> to vector<16x64xf32>
    %c4_327 = arith.constant 4 : index
    %c0_328 = arith.constant 0 : index
    %c0_329 = arith.constant 0 : index
    %1145 = vector.load %arg8[%c4_327, %c0_328, %c0_329] : memref<6x1x64xf32, #tpu.memory_space<vmem>>, vector<1x1x64xf32>
    %1146 = vector.shape_cast %1145 : vector<1x1x64xf32> to vector<1x64xf32>
    %c5_330 = arith.constant 5 : index
    %c0_331 = arith.constant 0 : index
    %c0_332 = arith.constant 0 : index
    %1147 = vector.load %arg8[%c5_330, %c0_331, %c0_332] : memref<6x1x64xf32, #tpu.memory_space<vmem>>, vector<1x1x64xf32>
    %1148 = vector.shape_cast %1147 : vector<1x1x64xf32> to vector<1x64xf32>
    %cst_333 = arith.constant dense<0.000000e+00> : vector<16x64xf32>
    %1149 = tpu.matmul %1136, %1138, %cst_333 {dimension_numbers = #tpu.dot_dimension_numbers<[1], [0], [0], [1], [0, 0, 1, 1], [], []>} : vector<16x32xf32>, vector<32x64xf32>, vector<16x64xf32> -> vector<16x64xf32>
    %1150 = vector.broadcast %1146 : vector<1x64xf32> to vector<16x64xf32>
    %1151 = arith.addf %1149, %1150 : vector<16x64xf32>
    %c0_334 = arith.constant 0 : index
    %c0_335 = arith.constant 0 : index
    %1152 = vector.load %arg10[%c0_334, %c0_335] : memref<16x64xf32, #tpu.memory_space<vmem>>, vector<16x64xf32>
    tpu.vector_store %arg10[%c0_334, %c0_335], %1151 {strides = array<i32>} : memref<16x64xf32, #tpu.memory_space<vmem>>, vector<16x64xf32>,
    %cst_336 = arith.constant dense<0.000000e+00> : vector<16x64xf32>
    %1153 = tpu.matmul %1136, %1140, %cst_336 {dimension_numbers = #tpu.dot_dimension_numbers<[1], [0], [0], [1], [0, 0, 1, 1], [], []>} : vector<16x32xf32>, vector<32x64xf32>, vector<16x64xf32> -> vector<16x64xf32>
    %1154 = vector.broadcast %1148 : vector<1x64xf32> to vector<16x64xf32>
    %1155 = arith.addf %1153, %1154 : vector<16x64xf32>
    %c0_337 = arith.constant 0 : index
    %c0_338 = arith.constant 0 : index
    %1156 = vector.load %arg11[%c0_337, %c0_338] : memref<16x64xf32, #tpu.memory_space<vmem>>, vector<16x64xf32>
    tpu.vector_store %arg11[%c0_337, %c0_338], %1155 {strides = array<i32>} : memref<16x64xf32, #tpu.memory_space<vmem>>, vector<16x64xf32>,
    %cst_339 = arith.constant 0.000000e+00 : f32
    %1157 = vector.broadcast %cst_339 : f32 to vector<2x16xf32>
    %c0_i32_340 = arith.constant 0 : i32
    %c2_i32_341 = arith.constant 2 : i32
    %1158 = arith.muli %c0_i32_340, %c2_i32_341 : i32
    %1159 = tpu.assume_multiple %1158, 2 : i32
    %1160 = arith.index_cast %1159 : i32 to index
    %c0_342 = arith.constant 0 : index
    %1161 = vector.load %arg10[%1160, %c0_342] : memref<16x64xf32, #tpu.memory_space<vmem>>, vector<2x64xf32>
    %cst_343 = arith.constant dense<0.000000e+00> : vector<2x64xf32>
    %1162 = tpu.matmul %1157, %1142, %cst_343 {dimension_numbers = #tpu.dot_dimension_numbers<[1], [0], [0], [1], [0, 0, 1, 1], [], []>} : vector<2x16xf32>, vector<16x64xf32>, vector<2x64xf32> -> vector<2x64xf32>
    %1163 = arith.addf %1161, %1162 : vector<2x64xf32>
    %1164 = vector.extract_strided_slice %1163 {offsets = [0, 0], sizes = [2, 16], strides = [1, 1]} : vector<2x64xf32> to vector<2x16xf32>
    %1165 = arith.negf %1164 : vector<2x16xf32>
    %1166 = math.exp %1165 : vector<2x16xf32>
    %cst_344 = arith.constant 1.000000e+00 : f32
    %1167 = vector.broadcast %cst_344 : f32 to vector<2x16xf32>
    %1168 = arith.addf %1167, %1166 : vector<2x16xf32>
    %1169 = arith.divf %1167, %1168 : vector<2x16xf32>
    %1170 = vector.extract_strided_slice %1163 {offsets = [0, 16], sizes = [2, 16], strides = [1, 1]} : vector<2x64xf32> to vector<2x16xf32>
    %1171 = arith.negf %1170 : vector<2x16xf32>
    %1172 = math.exp %1171 : vector<2x16xf32>
    %cst_345 = arith.constant 1.000000e+00 : f32
    %1173 = vector.broadcast %cst_345 : f32 to vector<2x16xf32>
    %1174 = arith.addf %1173, %1172 : vector<2x16xf32>
    %1175 = arith.divf %1173, %1174 : vector<2x16xf32>
    %1176 = vector.extract_strided_slice %1163 {offsets = [0, 32], sizes = [2, 16], strides = [1, 1]} : vector<2x64xf32> to vector<2x16xf32>
    %1177 = math.tanh %1176 : vector<2x16xf32>
    %1178 = vector.extract_strided_slice %1163 {offsets = [0, 48], sizes = [2, 16], strides = [1, 1]} : vector<2x64xf32> to vector<2x16xf32>
    %1179 = arith.negf %1178 : vector<2x16xf32>
    %1180 = math.exp %1179 : vector<2x16xf32>
    %cst_346 = arith.constant 1.000000e+00 : f32
    %1181 = vector.broadcast %cst_346 : f32 to vector<2x16xf32>
    %1182 = arith.addf %1181, %1180 : vector<2x16xf32>
    %1183 = arith.divf %1181, %1182 : vector<2x16xf32>
    %1184 = arith.mulf %1175, %1157 : vector<2x16xf32>
    %1185 = arith.mulf %1169, %1177 : vector<2x16xf32>
    %1186 = arith.addf %1184, %1185 : vector<2x16xf32>
    %1187 = math.tanh %1186 : vector<2x16xf32>
    %1188 = arith.mulf %1183, %1187 : vector<2x16xf32>
    %1189 = arith.index_cast %1159 : i32 to index
    %c0_347 = arith.constant 0 : index
    %1190 = vector.load %arg12[%1189, %c0_347] : memref<16x16xf32, #tpu.memory_space<vmem>>, vector<2x16xf32>
    tpu.vector_store %arg12[%1189, %c0_347], %1188 {strides = array<i32>} : memref<16x16xf32, #tpu.memory_space<vmem>>, vector<2x16xf32>,
    %c7_i32_348 = arith.constant 7 : i32
    %1191 = arith.subi %c7_i32_348, %c0_i32_340 : i32
    %c2_i32_349 = arith.constant 2 : i32
    %1192 = arith.muli %1191, %c2_i32_349 : i32
    %1193 = tpu.assume_multiple %1192, 2 : i32
    %1194 = arith.index_cast %1193 : i32 to index
    %c0_350 = arith.constant 0 : index
    %1195 = vector.load %arg11[%1194, %c0_350] : memref<16x64xf32, #tpu.memory_space<vmem>>, vector<2x64xf32>
    %cst_351 = arith.constant dense<0.000000e+00> : vector<2x64xf32>
    %1196 = tpu.matmul %1157, %1144, %cst_351 {dimension_numbers = #tpu.dot_dimension_numbers<[1], [0], [0], [1], [0, 0, 1, 1], [], []>} : vector<2x16xf32>, vector<16x64xf32>, vector<2x64xf32> -> vector<2x64xf32>
    %1197 = arith.addf %1195, %1196 : vector<2x64xf32>
    %1198 = vector.extract_strided_slice %1197 {offsets = [0, 0], sizes = [2, 16], strides = [1, 1]} : vector<2x64xf32> to vector<2x16xf32>
    %1199 = arith.negf %1198 : vector<2x16xf32>
    %1200 = math.exp %1199 : vector<2x16xf32>
    %cst_352 = arith.constant 1.000000e+00 : f32
    %1201 = vector.broadcast %cst_352 : f32 to vector<2x16xf32>
    %1202 = arith.addf %1201, %1200 : vector<2x16xf32>
    %1203 = arith.divf %1201, %1202 : vector<2x16xf32>
    %1204 = vector.extract_strided_slice %1197 {offsets = [0, 16], sizes = [2, 16], strides = [1, 1]} : vector<2x64xf32> to vector<2x16xf32>
    %1205 = arith.negf %1204 : vector<2x16xf32>
    %1206 = math.exp %1205 : vector<2x16xf32>
    %cst_353 = arith.constant 1.000000e+00 : f32
    %1207 = vector.broadcast %cst_353 : f32 to vector<2x16xf32>
    %1208 = arith.addf %1207, %1206 : vector<2x16xf32>
    %1209 = arith.divf %1207, %1208 : vector<2x16xf32>
    %1210 = vector.extract_strided_slice %1197 {offsets = [0, 32], sizes = [2, 16], strides = [1, 1]} : vector<2x64xf32> to vector<2x16xf32>
    %1211 = math.tanh %1210 : vector<2x16xf32>
    %1212 = vector.extract_strided_slice %1197 {offsets = [0, 48], sizes = [2, 16], strides = [1, 1]} : vector<2x64xf32> to vector<2x16xf32>
    %1213 = arith.negf %1212 : vector<2x16xf32>
    %1214 = math.exp %1213 : vector<2x16xf32>
    %cst_354 = arith.constant 1.000000e+00 : f32
    %1215 = vector.broadcast %cst_354 : f32 to vector<2x16xf32>
    %1216 = arith.addf %1215, %1214 : vector<2x16xf32>
    %1217 = arith.divf %1215, %1216 : vector<2x16xf32>
    %1218 = arith.mulf %1209, %1157 : vector<2x16xf32>
    %1219 = arith.mulf %1203, %1211 : vector<2x16xf32>
    %1220 = arith.addf %1218, %1219 : vector<2x16xf32>
    %1221 = math.tanh %1220 : vector<2x16xf32>
    %1222 = arith.mulf %1217, %1221 : vector<2x16xf32>
    %1223 = arith.index_cast %1193 : i32 to index
    %c0_355 = arith.constant 0 : index
    %1224 = vector.load %arg13[%1223, %c0_355] : memref<16x16xf32, #tpu.memory_space<vmem>>, vector<2x16xf32>
    tpu.vector_store %arg13[%1223, %c0_355], %1222 {strides = array<i32>} : memref<16x16xf32, #tpu.memory_space<vmem>>, vector<2x16xf32>,
    %c1_i32_356 = arith.constant 1 : i32
    %c2_i32_357 = arith.constant 2 : i32
    %1225 = arith.muli %c1_i32_356, %c2_i32_357 : i32
    %1226 = tpu.assume_multiple %1225, 2 : i32
    %1227 = arith.index_cast %1226 : i32 to index
    %c0_358 = arith.constant 0 : index
    %1228 = vector.load %arg10[%1227, %c0_358] : memref<16x64xf32, #tpu.memory_space<vmem>>, vector<2x64xf32>
    %cst_359 = arith.constant dense<0.000000e+00> : vector<2x64xf32>
    %1229 = tpu.matmul %1188, %1142, %cst_359 {dimension_numbers = #tpu.dot_dimension_numbers<[1], [0], [0], [1], [0, 0, 1, 1], [], []>} : vector<2x16xf32>, vector<16x64xf32>, vector<2x64xf32> -> vector<2x64xf32>
    %1230 = arith.addf %1228, %1229 : vector<2x64xf32>
    %1231 = vector.extract_strided_slice %1230 {offsets = [0, 0], sizes = [2, 16], strides = [1, 1]} : vector<2x64xf32> to vector<2x16xf32>
    %1232 = arith.negf %1231 : vector<2x16xf32>
    %1233 = math.exp %1232 : vector<2x16xf32>
    %cst_360 = arith.constant 1.000000e+00 : f32
    %1234 = vector.broadcast %cst_360 : f32 to vector<2x16xf32>
    %1235 = arith.addf %1234, %1233 : vector<2x16xf32>
    %1236 = arith.divf %1234, %1235 : vector<2x16xf32>
    %1237 = vector.extract_strided_slice %1230 {offsets = [0, 16], sizes = [2, 16], strides = [1, 1]} : vector<2x64xf32> to vector<2x16xf32>
    %1238 = arith.negf %1237 : vector<2x16xf32>
    %1239 = math.exp %1238 : vector<2x16xf32>
    %cst_361 = arith.constant 1.000000e+00 : f32
    %1240 = vector.broadcast %cst_361 : f32 to vector<2x16xf32>
    %1241 = arith.addf %1240, %1239 : vector<2x16xf32>
    %1242 = arith.divf %1240, %1241 : vector<2x16xf32>
    %1243 = vector.extract_strided_slice %1230 {offsets = [0, 32], sizes = [2, 16], strides = [1, 1]} : vector<2x64xf32> to vector<2x16xf32>
    %1244 = math.tanh %1243 : vector<2x16xf32>
    %1245 = vector.extract_strided_slice %1230 {offsets = [0, 48], sizes = [2, 16], strides = [1, 1]} : vector<2x64xf32> to vector<2x16xf32>
    %1246 = arith.negf %1245 : vector<2x16xf32>
    %1247 = math.exp %1246 : vector<2x16xf32>
    %cst_362 = arith.constant 1.000000e+00 : f32
    %1248 = vector.broadcast %cst_362 : f32 to vector<2x16xf32>
    %1249 = arith.addf %1248, %1247 : vector<2x16xf32>
    %1250 = arith.divf %1248, %1249 : vector<2x16xf32>
    %1251 = arith.mulf %1242, %1186 : vector<2x16xf32>
    %1252 = arith.mulf %1236, %1244 : vector<2x16xf32>
    %1253 = arith.addf %1251, %1252 : vector<2x16xf32>
    %1254 = math.tanh %1253 : vector<2x16xf32>
    %1255 = arith.mulf %1250, %1254 : vector<2x16xf32>
    %1256 = arith.index_cast %1226 : i32 to index
    %c0_363 = arith.constant 0 : index
    %1257 = vector.load %arg12[%1256, %c0_363] : memref<16x16xf32, #tpu.memory_space<vmem>>, vector<2x16xf32>
    tpu.vector_store %arg12[%1256, %c0_363], %1255 {strides = array<i32>} : memref<16x16xf32, #tpu.memory_space<vmem>>, vector<2x16xf32>,
    %c7_i32_364 = arith.constant 7 : i32
    %1258 = arith.subi %c7_i32_364, %c1_i32_356 : i32
    %c2_i32_365 = arith.constant 2 : i32
    %1259 = arith.muli %1258, %c2_i32_365 : i32
    %1260 = tpu.assume_multiple %1259, 2 : i32
    %1261 = arith.index_cast %1260 : i32 to index
    %c0_366 = arith.constant 0 : index
    %1262 = vector.load %arg11[%1261, %c0_366] : memref<16x64xf32, #tpu.memory_space<vmem>>, vector<2x64xf32>
    %cst_367 = arith.constant dense<0.000000e+00> : vector<2x64xf32>
    %1263 = tpu.matmul %1222, %1144, %cst_367 {dimension_numbers = #tpu.dot_dimension_numbers<[1], [0], [0], [1], [0, 0, 1, 1], [], []>} : vector<2x16xf32>, vector<16x64xf32>, vector<2x64xf32> -> vector<2x64xf32>
    %1264 = arith.addf %1262, %1263 : vector<2x64xf32>
    %1265 = vector.extract_strided_slice %1264 {offsets = [0, 0], sizes = [2, 16], strides = [1, 1]} : vector<2x64xf32> to vector<2x16xf32>
    %1266 = arith.negf %1265 : vector<2x16xf32>
    %1267 = math.exp %1266 : vector<2x16xf32>
    %cst_368 = arith.constant 1.000000e+00 : f32
    %1268 = vector.broadcast %cst_368 : f32 to vector<2x16xf32>
    %1269 = arith.addf %1268, %1267 : vector<2x16xf32>
    %1270 = arith.divf %1268, %1269 : vector<2x16xf32>
    %1271 = vector.extract_strided_slice %1264 {offsets = [0, 16], sizes = [2, 16], strides = [1, 1]} : vector<2x64xf32> to vector<2x16xf32>
    %1272 = arith.negf %1271 : vector<2x16xf32>
    %1273 = math.exp %1272 : vector<2x16xf32>
    %cst_369 = arith.constant 1.000000e+00 : f32
    %1274 = vector.broadcast %cst_369 : f32 to vector<2x16xf32>
    %1275 = arith.addf %1274, %1273 : vector<2x16xf32>
    %1276 = arith.divf %1274, %1275 : vector<2x16xf32>
    %1277 = vector.extract_strided_slice %1264 {offsets = [0, 32], sizes = [2, 16], strides = [1, 1]} : vector<2x64xf32> to vector<2x16xf32>
    %1278 = math.tanh %1277 : vector<2x16xf32>
    %1279 = vector.extract_strided_slice %1264 {offsets = [0, 48], sizes = [2, 16], strides = [1, 1]} : vector<2x64xf32> to vector<2x16xf32>
    %1280 = arith.negf %1279 : vector<2x16xf32>
    %1281 = math.exp %1280 : vector<2x16xf32>
    %cst_370 = arith.constant 1.000000e+00 : f32
    %1282 = vector.broadcast %cst_370 : f32 to vector<2x16xf32>
    %1283 = arith.addf %1282, %1281 : vector<2x16xf32>
    %1284 = arith.divf %1282, %1283 : vector<2x16xf32>
    %1285 = arith.mulf %1276, %1220 : vector<2x16xf32>
    %1286 = arith.mulf %1270, %1278 : vector<2x16xf32>
    %1287 = arith.addf %1285, %1286 : vector<2x16xf32>
    %1288 = math.tanh %1287 : vector<2x16xf32>
    %1289 = arith.mulf %1284, %1288 : vector<2x16xf32>
    %1290 = arith.index_cast %1260 : i32 to index
    %c0_371 = arith.constant 0 : index
    %1291 = vector.load %arg13[%1290, %c0_371] : memref<16x16xf32, #tpu.memory_space<vmem>>, vector<2x16xf32>
    tpu.vector_store %arg13[%1290, %c0_371], %1289 {strides = array<i32>} : memref<16x16xf32, #tpu.memory_space<vmem>>, vector<2x16xf32>,
    %c2_i32_372 = arith.constant 2 : i32
    %c2_i32_373 = arith.constant 2 : i32
    %1292 = arith.muli %c2_i32_372, %c2_i32_373 : i32
    %1293 = tpu.assume_multiple %1292, 2 : i32
    %1294 = arith.index_cast %1293 : i32 to index
    %c0_374 = arith.constant 0 : index
    %1295 = vector.load %arg10[%1294, %c0_374] : memref<16x64xf32, #tpu.memory_space<vmem>>, vector<2x64xf32>
    %cst_375 = arith.constant dense<0.000000e+00> : vector<2x64xf32>
    %1296 = tpu.matmul %1255, %1142, %cst_375 {dimension_numbers = #tpu.dot_dimension_numbers<[1], [0], [0], [1], [0, 0, 1, 1], [], []>} : vector<2x16xf32>, vector<16x64xf32>, vector<2x64xf32> -> vector<2x64xf32>
    %1297 = arith.addf %1295, %1296 : vector<2x64xf32>
    %1298 = vector.extract_strided_slice %1297 {offsets = [0, 0], sizes = [2, 16], strides = [1, 1]} : vector<2x64xf32> to vector<2x16xf32>
    %1299 = arith.negf %1298 : vector<2x16xf32>
    %1300 = math.exp %1299 : vector<2x16xf32>
    %cst_376 = arith.constant 1.000000e+00 : f32
    %1301 = vector.broadcast %cst_376 : f32 to vector<2x16xf32>
    %1302 = arith.addf %1301, %1300 : vector<2x16xf32>
    %1303 = arith.divf %1301, %1302 : vector<2x16xf32>
    %1304 = vector.extract_strided_slice %1297 {offsets = [0, 16], sizes = [2, 16], strides = [1, 1]} : vector<2x64xf32> to vector<2x16xf32>
    %1305 = arith.negf %1304 : vector<2x16xf32>
    %1306 = math.exp %1305 : vector<2x16xf32>
    %cst_377 = arith.constant 1.000000e+00 : f32
    %1307 = vector.broadcast %cst_377 : f32 to vector<2x16xf32>
    %1308 = arith.addf %1307, %1306 : vector<2x16xf32>
    %1309 = arith.divf %1307, %1308 : vector<2x16xf32>
    %1310 = vector.extract_strided_slice %1297 {offsets = [0, 32], sizes = [2, 16], strides = [1, 1]} : vector<2x64xf32> to vector<2x16xf32>
    %1311 = math.tanh %1310 : vector<2x16xf32>
    %1312 = vector.extract_strided_slice %1297 {offsets = [0, 48], sizes = [2, 16], strides = [1, 1]} : vector<2x64xf32> to vector<2x16xf32>
    %1313 = arith.negf %1312 : vector<2x16xf32>
    %1314 = math.exp %1313 : vector<2x16xf32>
    %cst_378 = arith.constant 1.000000e+00 : f32
    %1315 = vector.broadcast %cst_378 : f32 to vector<2x16xf32>
    %1316 = arith.addf %1315, %1314 : vector<2x16xf32>
    %1317 = arith.divf %1315, %1316 : vector<2x16xf32>
    %1318 = arith.mulf %1309, %1253 : vector<2x16xf32>
    %1319 = arith.mulf %1303, %1311 : vector<2x16xf32>
    %1320 = arith.addf %1318, %1319 : vector<2x16xf32>
    %1321 = math.tanh %1320 : vector<2x16xf32>
    %1322 = arith.mulf %1317, %1321 : vector<2x16xf32>
    %1323 = arith.index_cast %1293 : i32 to index
    %c0_379 = arith.constant 0 : index
    %1324 = vector.load %arg12[%1323, %c0_379] : memref<16x16xf32, #tpu.memory_space<vmem>>, vector<2x16xf32>
    tpu.vector_store %arg12[%1323, %c0_379], %1322 {strides = array<i32>} : memref<16x16xf32, #tpu.memory_space<vmem>>, vector<2x16xf32>,
    %c7_i32_380 = arith.constant 7 : i32
    %1325 = arith.subi %c7_i32_380, %c2_i32_372 : i32
    %c2_i32_381 = arith.constant 2 : i32
    %1326 = arith.muli %1325, %c2_i32_381 : i32
    %1327 = tpu.assume_multiple %1326, 2 : i32
    %1328 = arith.index_cast %1327 : i32 to index
    %c0_382 = arith.constant 0 : index
    %1329 = vector.load %arg11[%1328, %c0_382] : memref<16x64xf32, #tpu.memory_space<vmem>>, vector<2x64xf32>
    %cst_383 = arith.constant dense<0.000000e+00> : vector<2x64xf32>
    %1330 = tpu.matmul %1289, %1144, %cst_383 {dimension_numbers = #tpu.dot_dimension_numbers<[1], [0], [0], [1], [0, 0, 1, 1], [], []>} : vector<2x16xf32>, vector<16x64xf32>, vector<2x64xf32> -> vector<2x64xf32>
    %1331 = arith.addf %1329, %1330 : vector<2x64xf32>
    %1332 = vector.extract_strided_slice %1331 {offsets = [0, 0], sizes = [2, 16], strides = [1, 1]} : vector<2x64xf32> to vector<2x16xf32>
    %1333 = arith.negf %1332 : vector<2x16xf32>
    %1334 = math.exp %1333 : vector<2x16xf32>
    %cst_384 = arith.constant 1.000000e+00 : f32
    %1335 = vector.broadcast %cst_384 : f32 to vector<2x16xf32>
    %1336 = arith.addf %1335, %1334 : vector<2x16xf32>
    %1337 = arith.divf %1335, %1336 : vector<2x16xf32>
    %1338 = vector.extract_strided_slice %1331 {offsets = [0, 16], sizes = [2, 16], strides = [1, 1]} : vector<2x64xf32> to vector<2x16xf32>
    %1339 = arith.negf %1338 : vector<2x16xf32>
    %1340 = math.exp %1339 : vector<2x16xf32>
    %cst_385 = arith.constant 1.000000e+00 : f32
    %1341 = vector.broadcast %cst_385 : f32 to vector<2x16xf32>
    %1342 = arith.addf %1341, %1340 : vector<2x16xf32>
    %1343 = arith.divf %1341, %1342 : vector<2x16xf32>
    %1344 = vector.extract_strided_slice %1331 {offsets = [0, 32], sizes = [2, 16], strides = [1, 1]} : vector<2x64xf32> to vector<2x16xf32>
    %1345 = math.tanh %1344 : vector<2x16xf32>
    %1346 = vector.extract_strided_slice %1331 {offsets = [0, 48], sizes = [2, 16], strides = [1, 1]} : vector<2x64xf32> to vector<2x16xf32>
    %1347 = arith.negf %1346 : vector<2x16xf32>
    %1348 = math.exp %1347 : vector<2x16xf32>
    %cst_386 = arith.constant 1.000000e+00 : f32
    %1349 = vector.broadcast %cst_386 : f32 to vector<2x16xf32>
    %1350 = arith.addf %1349, %1348 : vector<2x16xf32>
    %1351 = arith.divf %1349, %1350 : vector<2x16xf32>
    %1352 = arith.mulf %1343, %1287 : vector<2x16xf32>
    %1353 = arith.mulf %1337, %1345 : vector<2x16xf32>
    %1354 = arith.addf %1352, %1353 : vector<2x16xf32>
    %1355 = math.tanh %1354 : vector<2x16xf32>
    %1356 = arith.mulf %1351, %1355 : vector<2x16xf32>
    %1357 = arith.index_cast %1327 : i32 to index
    %c0_387 = arith.constant 0 : index
    %1358 = vector.load %arg13[%1357, %c0_387] : memref<16x16xf32, #tpu.memory_space<vmem>>, vector<2x16xf32>
    tpu.vector_store %arg13[%1357, %c0_387], %1356 {strides = array<i32>} : memref<16x16xf32, #tpu.memory_space<vmem>>, vector<2x16xf32>,
    %c3_i32_388 = arith.constant 3 : i32
    %c2_i32_389 = arith.constant 2 : i32
    %1359 = arith.muli %c3_i32_388, %c2_i32_389 : i32
    %1360 = tpu.assume_multiple %1359, 2 : i32
    %1361 = arith.index_cast %1360 : i32 to index
    %c0_390 = arith.constant 0 : index
    %1362 = vector.load %arg10[%1361, %c0_390] : memref<16x64xf32, #tpu.memory_space<vmem>>, vector<2x64xf32>
    %cst_391 = arith.constant dense<0.000000e+00> : vector<2x64xf32>
    %1363 = tpu.matmul %1322, %1142, %cst_391 {dimension_numbers = #tpu.dot_dimension_numbers<[1], [0], [0], [1], [0, 0, 1, 1], [], []>} : vector<2x16xf32>, vector<16x64xf32>, vector<2x64xf32> -> vector<2x64xf32>
    %1364 = arith.addf %1362, %1363 : vector<2x64xf32>
    %1365 = vector.extract_strided_slice %1364 {offsets = [0, 0], sizes = [2, 16], strides = [1, 1]} : vector<2x64xf32> to vector<2x16xf32>
    %1366 = arith.negf %1365 : vector<2x16xf32>
    %1367 = math.exp %1366 : vector<2x16xf32>
    %cst_392 = arith.constant 1.000000e+00 : f32
    %1368 = vector.broadcast %cst_392 : f32 to vector<2x16xf32>
    %1369 = arith.addf %1368, %1367 : vector<2x16xf32>
    %1370 = arith.divf %1368, %1369 : vector<2x16xf32>
    %1371 = vector.extract_strided_slice %1364 {offsets = [0, 16], sizes = [2, 16], strides = [1, 1]} : vector<2x64xf32> to vector<2x16xf32>
    %1372 = arith.negf %1371 : vector<2x16xf32>
    %1373 = math.exp %1372 : vector<2x16xf32>
    %cst_393 = arith.constant 1.000000e+00 : f32
    %1374 = vector.broadcast %cst_393 : f32 to vector<2x16xf32>
    %1375 = arith.addf %1374, %1373 : vector<2x16xf32>
    %1376 = arith.divf %1374, %1375 : vector<2x16xf32>
    %1377 = vector.extract_strided_slice %1364 {offsets = [0, 32], sizes = [2, 16], strides = [1, 1]} : vector<2x64xf32> to vector<2x16xf32>
    %1378 = math.tanh %1377 : vector<2x16xf32>
    %1379 = vector.extract_strided_slice %1364 {offsets = [0, 48], sizes = [2, 16], strides = [1, 1]} : vector<2x64xf32> to vector<2x16xf32>
    %1380 = arith.negf %1379 : vector<2x16xf32>
    %1381 = math.exp %1380 : vector<2x16xf32>
    %cst_394 = arith.constant 1.000000e+00 : f32
    %1382 = vector.broadcast %cst_394 : f32 to vector<2x16xf32>
    %1383 = arith.addf %1382, %1381 : vector<2x16xf32>
    %1384 = arith.divf %1382, %1383 : vector<2x16xf32>
    %1385 = arith.mulf %1376, %1320 : vector<2x16xf32>
    %1386 = arith.mulf %1370, %1378 : vector<2x16xf32>
    %1387 = arith.addf %1385, %1386 : vector<2x16xf32>
    %1388 = math.tanh %1387 : vector<2x16xf32>
    %1389 = arith.mulf %1384, %1388 : vector<2x16xf32>
    %1390 = arith.index_cast %1360 : i32 to index
    %c0_395 = arith.constant 0 : index
    %1391 = vector.load %arg12[%1390, %c0_395] : memref<16x16xf32, #tpu.memory_space<vmem>>, vector<2x16xf32>
    tpu.vector_store %arg12[%1390, %c0_395], %1389 {strides = array<i32>} : memref<16x16xf32, #tpu.memory_space<vmem>>, vector<2x16xf32>,
    %c7_i32_396 = arith.constant 7 : i32
    %1392 = arith.subi %c7_i32_396, %c3_i32_388 : i32
    %c2_i32_397 = arith.constant 2 : i32
    %1393 = arith.muli %1392, %c2_i32_397 : i32
    %1394 = tpu.assume_multiple %1393, 2 : i32
    %1395 = arith.index_cast %1394 : i32 to index
    %c0_398 = arith.constant 0 : index
    %1396 = vector.load %arg11[%1395, %c0_398] : memref<16x64xf32, #tpu.memory_space<vmem>>, vector<2x64xf32>
    %cst_399 = arith.constant dense<0.000000e+00> : vector<2x64xf32>
    %1397 = tpu.matmul %1356, %1144, %cst_399 {dimension_numbers = #tpu.dot_dimension_numbers<[1], [0], [0], [1], [0, 0, 1, 1], [], []>} : vector<2x16xf32>, vector<16x64xf32>, vector<2x64xf32> -> vector<2x64xf32>
    %1398 = arith.addf %1396, %1397 : vector<2x64xf32>
    %1399 = vector.extract_strided_slice %1398 {offsets = [0, 0], sizes = [2, 16], strides = [1, 1]} : vector<2x64xf32> to vector<2x16xf32>
    %1400 = arith.negf %1399 : vector<2x16xf32>
    %1401 = math.exp %1400 : vector<2x16xf32>
    %cst_400 = arith.constant 1.000000e+00 : f32
    %1402 = vector.broadcast %cst_400 : f32 to vector<2x16xf32>
    %1403 = arith.addf %1402, %1401 : vector<2x16xf32>
    %1404 = arith.divf %1402, %1403 : vector<2x16xf32>
    %1405 = vector.extract_strided_slice %1398 {offsets = [0, 16], sizes = [2, 16], strides = [1, 1]} : vector<2x64xf32> to vector<2x16xf32>
    %1406 = arith.negf %1405 : vector<2x16xf32>
    %1407 = math.exp %1406 : vector<2x16xf32>
    %cst_401 = arith.constant 1.000000e+00 : f32
    %1408 = vector.broadcast %cst_401 : f32 to vector<2x16xf32>
    %1409 = arith.addf %1408, %1407 : vector<2x16xf32>
    %1410 = arith.divf %1408, %1409 : vector<2x16xf32>
    %1411 = vector.extract_strided_slice %1398 {offsets = [0, 32], sizes = [2, 16], strides = [1, 1]} : vector<2x64xf32> to vector<2x16xf32>
    %1412 = math.tanh %1411 : vector<2x16xf32>
    %1413 = vector.extract_strided_slice %1398 {offsets = [0, 48], sizes = [2, 16], strides = [1, 1]} : vector<2x64xf32> to vector<2x16xf32>
    %1414 = arith.negf %1413 : vector<2x16xf32>
    %1415 = math.exp %1414 : vector<2x16xf32>
    %cst_402 = arith.constant 1.000000e+00 : f32
    %1416 = vector.broadcast %cst_402 : f32 to vector<2x16xf32>
    %1417 = arith.addf %1416, %1415 : vector<2x16xf32>
    %1418 = arith.divf %1416, %1417 : vector<2x16xf32>
    %1419 = arith.mulf %1410, %1354 : vector<2x16xf32>
    %1420 = arith.mulf %1404, %1412 : vector<2x16xf32>
    %1421 = arith.addf %1419, %1420 : vector<2x16xf32>
    %1422 = math.tanh %1421 : vector<2x16xf32>
    %1423 = arith.mulf %1418, %1422 : vector<2x16xf32>
    %1424 = arith.index_cast %1394 : i32 to index
    %c0_403 = arith.constant 0 : index
    %1425 = vector.load %arg13[%1424, %c0_403] : memref<16x16xf32, #tpu.memory_space<vmem>>, vector<2x16xf32>
    tpu.vector_store %arg13[%1424, %c0_403], %1423 {strides = array<i32>} : memref<16x16xf32, #tpu.memory_space<vmem>>, vector<2x16xf32>,
    %c4_i32_404 = arith.constant 4 : i32
    %c2_i32_405 = arith.constant 2 : i32
    %1426 = arith.muli %c4_i32_404, %c2_i32_405 : i32
    %1427 = tpu.assume_multiple %1426, 2 : i32
    %1428 = arith.index_cast %1427 : i32 to index
    %c0_406 = arith.constant 0 : index
    %1429 = vector.load %arg10[%1428, %c0_406] : memref<16x64xf32, #tpu.memory_space<vmem>>, vector<2x64xf32>
    %cst_407 = arith.constant dense<0.000000e+00> : vector<2x64xf32>
    %1430 = tpu.matmul %1389, %1142, %cst_407 {dimension_numbers = #tpu.dot_dimension_numbers<[1], [0], [0], [1], [0, 0, 1, 1], [], []>} : vector<2x16xf32>, vector<16x64xf32>, vector<2x64xf32> -> vector<2x64xf32>
    %1431 = arith.addf %1429, %1430 : vector<2x64xf32>
    %1432 = vector.extract_strided_slice %1431 {offsets = [0, 0], sizes = [2, 16], strides = [1, 1]} : vector<2x64xf32> to vector<2x16xf32>
    %1433 = arith.negf %1432 : vector<2x16xf32>
    %1434 = math.exp %1433 : vector<2x16xf32>
    %cst_408 = arith.constant 1.000000e+00 : f32
    %1435 = vector.broadcast %cst_408 : f32 to vector<2x16xf32>
    %1436 = arith.addf %1435, %1434 : vector<2x16xf32>
    %1437 = arith.divf %1435, %1436 : vector<2x16xf32>
    %1438 = vector.extract_strided_slice %1431 {offsets = [0, 16], sizes = [2, 16], strides = [1, 1]} : vector<2x64xf32> to vector<2x16xf32>
    %1439 = arith.negf %1438 : vector<2x16xf32>
    %1440 = math.exp %1439 : vector<2x16xf32>
    %cst_409 = arith.constant 1.000000e+00 : f32
    %1441 = vector.broadcast %cst_409 : f32 to vector<2x16xf32>
    %1442 = arith.addf %1441, %1440 : vector<2x16xf32>
    %1443 = arith.divf %1441, %1442 : vector<2x16xf32>
    %1444 = vector.extract_strided_slice %1431 {offsets = [0, 32], sizes = [2, 16], strides = [1, 1]} : vector<2x64xf32> to vector<2x16xf32>
    %1445 = math.tanh %1444 : vector<2x16xf32>
    %1446 = vector.extract_strided_slice %1431 {offsets = [0, 48], sizes = [2, 16], strides = [1, 1]} : vector<2x64xf32> to vector<2x16xf32>
    %1447 = arith.negf %1446 : vector<2x16xf32>
    %1448 = math.exp %1447 : vector<2x16xf32>
    %cst_410 = arith.constant 1.000000e+00 : f32
    %1449 = vector.broadcast %cst_410 : f32 to vector<2x16xf32>
    %1450 = arith.addf %1449, %1448 : vector<2x16xf32>
    %1451 = arith.divf %1449, %1450 : vector<2x16xf32>
    %1452 = arith.mulf %1443, %1387 : vector<2x16xf32>
    %1453 = arith.mulf %1437, %1445 : vector<2x16xf32>
    %1454 = arith.addf %1452, %1453 : vector<2x16xf32>
    %1455 = math.tanh %1454 : vector<2x16xf32>
    %1456 = arith.mulf %1451, %1455 : vector<2x16xf32>
    %1457 = arith.index_cast %1427 : i32 to index
    %c0_411 = arith.constant 0 : index
    %1458 = vector.load %arg12[%1457, %c0_411] : memref<16x16xf32, #tpu.memory_space<vmem>>, vector<2x16xf32>
    tpu.vector_store %arg12[%1457, %c0_411], %1456 {strides = array<i32>} : memref<16x16xf32, #tpu.memory_space<vmem>>, vector<2x16xf32>,
    %c7_i32_412 = arith.constant 7 : i32
    %1459 = arith.subi %c7_i32_412, %c4_i32_404 : i32
    %c2_i32_413 = arith.constant 2 : i32
    %1460 = arith.muli %1459, %c2_i32_413 : i32
    %1461 = tpu.assume_multiple %1460, 2 : i32
    %1462 = arith.index_cast %1461 : i32 to index
    %c0_414 = arith.constant 0 : index
    %1463 = vector.load %arg11[%1462, %c0_414] : memref<16x64xf32, #tpu.memory_space<vmem>>, vector<2x64xf32>
    %cst_415 = arith.constant dense<0.000000e+00> : vector<2x64xf32>
    %1464 = tpu.matmul %1423, %1144, %cst_415 {dimension_numbers = #tpu.dot_dimension_numbers<[1], [0], [0], [1], [0, 0, 1, 1], [], []>} : vector<2x16xf32>, vector<16x64xf32>, vector<2x64xf32> -> vector<2x64xf32>
    %1465 = arith.addf %1463, %1464 : vector<2x64xf32>
    %1466 = vector.extract_strided_slice %1465 {offsets = [0, 0], sizes = [2, 16], strides = [1, 1]} : vector<2x64xf32> to vector<2x16xf32>
    %1467 = arith.negf %1466 : vector<2x16xf32>
    %1468 = math.exp %1467 : vector<2x16xf32>
    %cst_416 = arith.constant 1.000000e+00 : f32
    %1469 = vector.broadcast %cst_416 : f32 to vector<2x16xf32>
    %1470 = arith.addf %1469, %1468 : vector<2x16xf32>
    %1471 = arith.divf %1469, %1470 : vector<2x16xf32>
    %1472 = vector.extract_strided_slice %1465 {offsets = [0, 16], sizes = [2, 16], strides = [1, 1]} : vector<2x64xf32> to vector<2x16xf32>
    %1473 = arith.negf %1472 : vector<2x16xf32>
    %1474 = math.exp %1473 : vector<2x16xf32>
    %cst_417 = arith.constant 1.000000e+00 : f32
    %1475 = vector.broadcast %cst_417 : f32 to vector<2x16xf32>
    %1476 = arith.addf %1475, %1474 : vector<2x16xf32>
    %1477 = arith.divf %1475, %1476 : vector<2x16xf32>
    %1478 = vector.extract_strided_slice %1465 {offsets = [0, 32], sizes = [2, 16], strides = [1, 1]} : vector<2x64xf32> to vector<2x16xf32>
    %1479 = math.tanh %1478 : vector<2x16xf32>
    %1480 = vector.extract_strided_slice %1465 {offsets = [0, 48], sizes = [2, 16], strides = [1, 1]} : vector<2x64xf32> to vector<2x16xf32>
    %1481 = arith.negf %1480 : vector<2x16xf32>
    %1482 = math.exp %1481 : vector<2x16xf32>
    %cst_418 = arith.constant 1.000000e+00 : f32
    %1483 = vector.broadcast %cst_418 : f32 to vector<2x16xf32>
    %1484 = arith.addf %1483, %1482 : vector<2x16xf32>
    %1485 = arith.divf %1483, %1484 : vector<2x16xf32>
    %1486 = arith.mulf %1477, %1421 : vector<2x16xf32>
    %1487 = arith.mulf %1471, %1479 : vector<2x16xf32>
    %1488 = arith.addf %1486, %1487 : vector<2x16xf32>
    %1489 = math.tanh %1488 : vector<2x16xf32>
    %1490 = arith.mulf %1485, %1489 : vector<2x16xf32>
    %1491 = arith.index_cast %1461 : i32 to index
    %c0_419 = arith.constant 0 : index
    %1492 = vector.load %arg13[%1491, %c0_419] : memref<16x16xf32, #tpu.memory_space<vmem>>, vector<2x16xf32>
    tpu.vector_store %arg13[%1491, %c0_419], %1490 {strides = array<i32>} : memref<16x16xf32, #tpu.memory_space<vmem>>, vector<2x16xf32>,
    %c5_i32_420 = arith.constant 5 : i32
    %c2_i32_421 = arith.constant 2 : i32
    %1493 = arith.muli %c5_i32_420, %c2_i32_421 : i32
    %1494 = tpu.assume_multiple %1493, 2 : i32
    %1495 = arith.index_cast %1494 : i32 to index
    %c0_422 = arith.constant 0 : index
    %1496 = vector.load %arg10[%1495, %c0_422] : memref<16x64xf32, #tpu.memory_space<vmem>>, vector<2x64xf32>
    %cst_423 = arith.constant dense<0.000000e+00> : vector<2x64xf32>
    %1497 = tpu.matmul %1456, %1142, %cst_423 {dimension_numbers = #tpu.dot_dimension_numbers<[1], [0], [0], [1], [0, 0, 1, 1], [], []>} : vector<2x16xf32>, vector<16x64xf32>, vector<2x64xf32> -> vector<2x64xf32>
    %1498 = arith.addf %1496, %1497 : vector<2x64xf32>
    %1499 = vector.extract_strided_slice %1498 {offsets = [0, 0], sizes = [2, 16], strides = [1, 1]} : vector<2x64xf32> to vector<2x16xf32>
    %1500 = arith.negf %1499 : vector<2x16xf32>
    %1501 = math.exp %1500 : vector<2x16xf32>
    %cst_424 = arith.constant 1.000000e+00 : f32
    %1502 = vector.broadcast %cst_424 : f32 to vector<2x16xf32>
    %1503 = arith.addf %1502, %1501 : vector<2x16xf32>
    %1504 = arith.divf %1502, %1503 : vector<2x16xf32>
    %1505 = vector.extract_strided_slice %1498 {offsets = [0, 16], sizes = [2, 16], strides = [1, 1]} : vector<2x64xf32> to vector<2x16xf32>
    %1506 = arith.negf %1505 : vector<2x16xf32>
    %1507 = math.exp %1506 : vector<2x16xf32>
    %cst_425 = arith.constant 1.000000e+00 : f32
    %1508 = vector.broadcast %cst_425 : f32 to vector<2x16xf32>
    %1509 = arith.addf %1508, %1507 : vector<2x16xf32>
    %1510 = arith.divf %1508, %1509 : vector<2x16xf32>
    %1511 = vector.extract_strided_slice %1498 {offsets = [0, 32], sizes = [2, 16], strides = [1, 1]} : vector<2x64xf32> to vector<2x16xf32>
    %1512 = math.tanh %1511 : vector<2x16xf32>
    %1513 = vector.extract_strided_slice %1498 {offsets = [0, 48], sizes = [2, 16], strides = [1, 1]} : vector<2x64xf32> to vector<2x16xf32>
    %1514 = arith.negf %1513 : vector<2x16xf32>
    %1515 = math.exp %1514 : vector<2x16xf32>
    %cst_426 = arith.constant 1.000000e+00 : f32
    %1516 = vector.broadcast %cst_426 : f32 to vector<2x16xf32>
    %1517 = arith.addf %1516, %1515 : vector<2x16xf32>
    %1518 = arith.divf %1516, %1517 : vector<2x16xf32>
    %1519 = arith.mulf %1510, %1454 : vector<2x16xf32>
    %1520 = arith.mulf %1504, %1512 : vector<2x16xf32>
    %1521 = arith.addf %1519, %1520 : vector<2x16xf32>
    %1522 = math.tanh %1521 : vector<2x16xf32>
    %1523 = arith.mulf %1518, %1522 : vector<2x16xf32>
    %1524 = arith.index_cast %1494 : i32 to index
    %c0_427 = arith.constant 0 : index
    %1525 = vector.load %arg12[%1524, %c0_427] : memref<16x16xf32, #tpu.memory_space<vmem>>, vector<2x16xf32>
    tpu.vector_store %arg12[%1524, %c0_427], %1523 {strides = array<i32>} : memref<16x16xf32, #tpu.memory_space<vmem>>, vector<2x16xf32>,
    %c7_i32_428 = arith.constant 7 : i32
    %1526 = arith.subi %c7_i32_428, %c5_i32_420 : i32
    %c2_i32_429 = arith.constant 2 : i32
    %1527 = arith.muli %1526, %c2_i32_429 : i32
    %1528 = tpu.assume_multiple %1527, 2 : i32
    %1529 = arith.index_cast %1528 : i32 to index
    %c0_430 = arith.constant 0 : index
    %1530 = vector.load %arg11[%1529, %c0_430] : memref<16x64xf32, #tpu.memory_space<vmem>>, vector<2x64xf32>
    %cst_431 = arith.constant dense<0.000000e+00> : vector<2x64xf32>
    %1531 = tpu.matmul %1490, %1144, %cst_431 {dimension_numbers = #tpu.dot_dimension_numbers<[1], [0], [0], [1], [0, 0, 1, 1], [], []>} : vector<2x16xf32>, vector<16x64xf32>, vector<2x64xf32> -> vector<2x64xf32>
    %1532 = arith.addf %1530, %1531 : vector<2x64xf32>
    %1533 = vector.extract_strided_slice %1532 {offsets = [0, 0], sizes = [2, 16], strides = [1, 1]} : vector<2x64xf32> to vector<2x16xf32>
    %1534 = arith.negf %1533 : vector<2x16xf32>
    %1535 = math.exp %1534 : vector<2x16xf32>
    %cst_432 = arith.constant 1.000000e+00 : f32
    %1536 = vector.broadcast %cst_432 : f32 to vector<2x16xf32>
    %1537 = arith.addf %1536, %1535 : vector<2x16xf32>
    %1538 = arith.divf %1536, %1537 : vector<2x16xf32>
    %1539 = vector.extract_strided_slice %1532 {offsets = [0, 16], sizes = [2, 16], strides = [1, 1]} : vector<2x64xf32> to vector<2x16xf32>
    %1540 = arith.negf %1539 : vector<2x16xf32>
    %1541 = math.exp %1540 : vector<2x16xf32>
    %cst_433 = arith.constant 1.000000e+00 : f32
    %1542 = vector.broadcast %cst_433 : f32 to vector<2x16xf32>
    %1543 = arith.addf %1542, %1541 : vector<2x16xf32>
    %1544 = arith.divf %1542, %1543 : vector<2x16xf32>
    %1545 = vector.extract_strided_slice %1532 {offsets = [0, 32], sizes = [2, 16], strides = [1, 1]} : vector<2x64xf32> to vector<2x16xf32>
    %1546 = math.tanh %1545 : vector<2x16xf32>
    %1547 = vector.extract_strided_slice %1532 {offsets = [0, 48], sizes = [2, 16], strides = [1, 1]} : vector<2x64xf32> to vector<2x16xf32>
    %1548 = arith.negf %1547 : vector<2x16xf32>
    %1549 = math.exp %1548 : vector<2x16xf32>
    %cst_434 = arith.constant 1.000000e+00 : f32
    %1550 = vector.broadcast %cst_434 : f32 to vector<2x16xf32>
    %1551 = arith.addf %1550, %1549 : vector<2x16xf32>
    %1552 = arith.divf %1550, %1551 : vector<2x16xf32>
    %1553 = arith.mulf %1544, %1488 : vector<2x16xf32>
    %1554 = arith.mulf %1538, %1546 : vector<2x16xf32>
    %1555 = arith.addf %1553, %1554 : vector<2x16xf32>
    %1556 = math.tanh %1555 : vector<2x16xf32>
    %1557 = arith.mulf %1552, %1556 : vector<2x16xf32>
    %1558 = arith.index_cast %1528 : i32 to index
    %c0_435 = arith.constant 0 : index
    %1559 = vector.load %arg13[%1558, %c0_435] : memref<16x16xf32, #tpu.memory_space<vmem>>, vector<2x16xf32>
    tpu.vector_store %arg13[%1558, %c0_435], %1557 {strides = array<i32>} : memref<16x16xf32, #tpu.memory_space<vmem>>, vector<2x16xf32>,
    %c6_i32_436 = arith.constant 6 : i32
    %c2_i32_437 = arith.constant 2 : i32
    %1560 = arith.muli %c6_i32_436, %c2_i32_437 : i32
    %1561 = tpu.assume_multiple %1560, 2 : i32
    %1562 = arith.index_cast %1561 : i32 to index
    %c0_438 = arith.constant 0 : index
    %1563 = vector.load %arg10[%1562, %c0_438] : memref<16x64xf32, #tpu.memory_space<vmem>>, vector<2x64xf32>
    %cst_439 = arith.constant dense<0.000000e+00> : vector<2x64xf32>
    %1564 = tpu.matmul %1523, %1142, %cst_439 {dimension_numbers = #tpu.dot_dimension_numbers<[1], [0], [0], [1], [0, 0, 1, 1], [], []>} : vector<2x16xf32>, vector<16x64xf32>, vector<2x64xf32> -> vector<2x64xf32>
    %1565 = arith.addf %1563, %1564 : vector<2x64xf32>
    %1566 = vector.extract_strided_slice %1565 {offsets = [0, 0], sizes = [2, 16], strides = [1, 1]} : vector<2x64xf32> to vector<2x16xf32>
    %1567 = arith.negf %1566 : vector<2x16xf32>
    %1568 = math.exp %1567 : vector<2x16xf32>
    %cst_440 = arith.constant 1.000000e+00 : f32
    %1569 = vector.broadcast %cst_440 : f32 to vector<2x16xf32>
    %1570 = arith.addf %1569, %1568 : vector<2x16xf32>
    %1571 = arith.divf %1569, %1570 : vector<2x16xf32>
    %1572 = vector.extract_strided_slice %1565 {offsets = [0, 16], sizes = [2, 16], strides = [1, 1]} : vector<2x64xf32> to vector<2x16xf32>
    %1573 = arith.negf %1572 : vector<2x16xf32>
    %1574 = math.exp %1573 : vector<2x16xf32>
    %cst_441 = arith.constant 1.000000e+00 : f32
    %1575 = vector.broadcast %cst_441 : f32 to vector<2x16xf32>
    %1576 = arith.addf %1575, %1574 : vector<2x16xf32>
    %1577 = arith.divf %1575, %1576 : vector<2x16xf32>
    %1578 = vector.extract_strided_slice %1565 {offsets = [0, 32], sizes = [2, 16], strides = [1, 1]} : vector<2x64xf32> to vector<2x16xf32>
    %1579 = math.tanh %1578 : vector<2x16xf32>
    %1580 = vector.extract_strided_slice %1565 {offsets = [0, 48], sizes = [2, 16], strides = [1, 1]} : vector<2x64xf32> to vector<2x16xf32>
    %1581 = arith.negf %1580 : vector<2x16xf32>
    %1582 = math.exp %1581 : vector<2x16xf32>
    %cst_442 = arith.constant 1.000000e+00 : f32
    %1583 = vector.broadcast %cst_442 : f32 to vector<2x16xf32>
    %1584 = arith.addf %1583, %1582 : vector<2x16xf32>
    %1585 = arith.divf %1583, %1584 : vector<2x16xf32>
    %1586 = arith.mulf %1577, %1521 : vector<2x16xf32>
    %1587 = arith.mulf %1571, %1579 : vector<2x16xf32>
    %1588 = arith.addf %1586, %1587 : vector<2x16xf32>
    %1589 = math.tanh %1588 : vector<2x16xf32>
    %1590 = arith.mulf %1585, %1589 : vector<2x16xf32>
    %1591 = arith.index_cast %1561 : i32 to index
    %c0_443 = arith.constant 0 : index
    %1592 = vector.load %arg12[%1591, %c0_443] : memref<16x16xf32, #tpu.memory_space<vmem>>, vector<2x16xf32>
    tpu.vector_store %arg12[%1591, %c0_443], %1590 {strides = array<i32>} : memref<16x16xf32, #tpu.memory_space<vmem>>, vector<2x16xf32>,
    %c7_i32_444 = arith.constant 7 : i32
    %1593 = arith.subi %c7_i32_444, %c6_i32_436 : i32
    %c2_i32_445 = arith.constant 2 : i32
    %1594 = arith.muli %1593, %c2_i32_445 : i32
    %1595 = tpu.assume_multiple %1594, 2 : i32
    %1596 = arith.index_cast %1595 : i32 to index
    %c0_446 = arith.constant 0 : index
    %1597 = vector.load %arg11[%1596, %c0_446] : memref<16x64xf32, #tpu.memory_space<vmem>>, vector<2x64xf32>
    %cst_447 = arith.constant dense<0.000000e+00> : vector<2x64xf32>
    %1598 = tpu.matmul %1557, %1144, %cst_447 {dimension_numbers = #tpu.dot_dimension_numbers<[1], [0], [0], [1], [0, 0, 1, 1], [], []>} : vector<2x16xf32>, vector<16x64xf32>, vector<2x64xf32> -> vector<2x64xf32>
    %1599 = arith.addf %1597, %1598 : vector<2x64xf32>
    %1600 = vector.extract_strided_slice %1599 {offsets = [0, 0], sizes = [2, 16], strides = [1, 1]} : vector<2x64xf32> to vector<2x16xf32>
    %1601 = arith.negf %1600 : vector<2x16xf32>
    %1602 = math.exp %1601 : vector<2x16xf32>
    %cst_448 = arith.constant 1.000000e+00 : f32
    %1603 = vector.broadcast %cst_448 : f32 to vector<2x16xf32>
    %1604 = arith.addf %1603, %1602 : vector<2x16xf32>
    %1605 = arith.divf %1603, %1604 : vector<2x16xf32>
    %1606 = vector.extract_strided_slice %1599 {offsets = [0, 16], sizes = [2, 16], strides = [1, 1]} : vector<2x64xf32> to vector<2x16xf32>
    %1607 = arith.negf %1606 : vector<2x16xf32>
    %1608 = math.exp %1607 : vector<2x16xf32>
    %cst_449 = arith.constant 1.000000e+00 : f32
    %1609 = vector.broadcast %cst_449 : f32 to vector<2x16xf32>
    %1610 = arith.addf %1609, %1608 : vector<2x16xf32>
    %1611 = arith.divf %1609, %1610 : vector<2x16xf32>
    %1612 = vector.extract_strided_slice %1599 {offsets = [0, 32], sizes = [2, 16], strides = [1, 1]} : vector<2x64xf32> to vector<2x16xf32>
    %1613 = math.tanh %1612 : vector<2x16xf32>
    %1614 = vector.extract_strided_slice %1599 {offsets = [0, 48], sizes = [2, 16], strides = [1, 1]} : vector<2x64xf32> to vector<2x16xf32>
    %1615 = arith.negf %1614 : vector<2x16xf32>
    %1616 = math.exp %1615 : vector<2x16xf32>
    %cst_450 = arith.constant 1.000000e+00 : f32
    %1617 = vector.broadcast %cst_450 : f32 to vector<2x16xf32>
    %1618 = arith.addf %1617, %1616 : vector<2x16xf32>
    %1619 = arith.divf %1617, %1618 : vector<2x16xf32>
    %1620 = arith.mulf %1611, %1555 : vector<2x16xf32>
    %1621 = arith.mulf %1605, %1613 : vector<2x16xf32>
    %1622 = arith.addf %1620, %1621 : vector<2x16xf32>
    %1623 = math.tanh %1622 : vector<2x16xf32>
    %1624 = arith.mulf %1619, %1623 : vector<2x16xf32>
    %1625 = arith.index_cast %1595 : i32 to index
    %c0_451 = arith.constant 0 : index
    %1626 = vector.load %arg13[%1625, %c0_451] : memref<16x16xf32, #tpu.memory_space<vmem>>, vector<2x16xf32>
    tpu.vector_store %arg13[%1625, %c0_451], %1624 {strides = array<i32>} : memref<16x16xf32, #tpu.memory_space<vmem>>, vector<2x16xf32>,
    %c7_i32_452 = arith.constant 7 : i32
    %c2_i32_453 = arith.constant 2 : i32
    %1627 = arith.muli %c7_i32_452, %c2_i32_453 : i32
    %1628 = tpu.assume_multiple %1627, 2 : i32
    %1629 = arith.index_cast %1628 : i32 to index
    %c0_454 = arith.constant 0 : index
    %1630 = vector.load %arg10[%1629, %c0_454] : memref<16x64xf32, #tpu.memory_space<vmem>>, vector<2x64xf32>
    %cst_455 = arith.constant dense<0.000000e+00> : vector<2x64xf32>
    %1631 = tpu.matmul %1590, %1142, %cst_455 {dimension_numbers = #tpu.dot_dimension_numbers<[1], [0], [0], [1], [0, 0, 1, 1], [], []>} : vector<2x16xf32>, vector<16x64xf32>, vector<2x64xf32> -> vector<2x64xf32>
    %1632 = arith.addf %1630, %1631 : vector<2x64xf32>
    %1633 = vector.extract_strided_slice %1632 {offsets = [0, 0], sizes = [2, 16], strides = [1, 1]} : vector<2x64xf32> to vector<2x16xf32>
    %1634 = arith.negf %1633 : vector<2x16xf32>
    %1635 = math.exp %1634 : vector<2x16xf32>
    %cst_456 = arith.constant 1.000000e+00 : f32
    %1636 = vector.broadcast %cst_456 : f32 to vector<2x16xf32>
    %1637 = arith.addf %1636, %1635 : vector<2x16xf32>
    %1638 = arith.divf %1636, %1637 : vector<2x16xf32>
    %1639 = vector.extract_strided_slice %1632 {offsets = [0, 16], sizes = [2, 16], strides = [1, 1]} : vector<2x64xf32> to vector<2x16xf32>
    %1640 = arith.negf %1639 : vector<2x16xf32>
    %1641 = math.exp %1640 : vector<2x16xf32>
    %cst_457 = arith.constant 1.000000e+00 : f32
    %1642 = vector.broadcast %cst_457 : f32 to vector<2x16xf32>
    %1643 = arith.addf %1642, %1641 : vector<2x16xf32>
    %1644 = arith.divf %1642, %1643 : vector<2x16xf32>
    %1645 = vector.extract_strided_slice %1632 {offsets = [0, 32], sizes = [2, 16], strides = [1, 1]} : vector<2x64xf32> to vector<2x16xf32>
    %1646 = math.tanh %1645 : vector<2x16xf32>
    %1647 = vector.extract_strided_slice %1632 {offsets = [0, 48], sizes = [2, 16], strides = [1, 1]} : vector<2x64xf32> to vector<2x16xf32>
    %1648 = arith.negf %1647 : vector<2x16xf32>
    %1649 = math.exp %1648 : vector<2x16xf32>
    %cst_458 = arith.constant 1.000000e+00 : f32
    %1650 = vector.broadcast %cst_458 : f32 to vector<2x16xf32>
    %1651 = arith.addf %1650, %1649 : vector<2x16xf32>
    %1652 = arith.divf %1650, %1651 : vector<2x16xf32>
    %1653 = arith.mulf %1644, %1588 : vector<2x16xf32>
    %1654 = arith.mulf %1638, %1646 : vector<2x16xf32>
    %1655 = arith.addf %1653, %1654 : vector<2x16xf32>
    %1656 = math.tanh %1655 : vector<2x16xf32>
    %1657 = arith.mulf %1652, %1656 : vector<2x16xf32>
    %1658 = arith.index_cast %1628 : i32 to index
    %c0_459 = arith.constant 0 : index
    %1659 = vector.load %arg12[%1658, %c0_459] : memref<16x16xf32, #tpu.memory_space<vmem>>, vector<2x16xf32>
    tpu.vector_store %arg12[%1658, %c0_459], %1657 {strides = array<i32>} : memref<16x16xf32, #tpu.memory_space<vmem>>, vector<2x16xf32>,
    %c7_i32_460 = arith.constant 7 : i32
    %1660 = arith.subi %c7_i32_460, %c7_i32_452 : i32
    %c2_i32_461 = arith.constant 2 : i32
    %1661 = arith.muli %1660, %c2_i32_461 : i32
    %1662 = tpu.assume_multiple %1661, 2 : i32
    %1663 = arith.index_cast %1662 : i32 to index
    %c0_462 = arith.constant 0 : index
    %1664 = vector.load %arg11[%1663, %c0_462] : memref<16x64xf32, #tpu.memory_space<vmem>>, vector<2x64xf32>
    %cst_463 = arith.constant dense<0.000000e+00> : vector<2x64xf32>
    %1665 = tpu.matmul %1624, %1144, %cst_463 {dimension_numbers = #tpu.dot_dimension_numbers<[1], [0], [0], [1], [0, 0, 1, 1], [], []>} : vector<2x16xf32>, vector<16x64xf32>, vector<2x64xf32> -> vector<2x64xf32>
    %1666 = arith.addf %1664, %1665 : vector<2x64xf32>
    %1667 = vector.extract_strided_slice %1666 {offsets = [0, 0], sizes = [2, 16], strides = [1, 1]} : vector<2x64xf32> to vector<2x16xf32>
    %1668 = arith.negf %1667 : vector<2x16xf32>
    %1669 = math.exp %1668 : vector<2x16xf32>
    %cst_464 = arith.constant 1.000000e+00 : f32
    %1670 = vector.broadcast %cst_464 : f32 to vector<2x16xf32>
    %1671 = arith.addf %1670, %1669 : vector<2x16xf32>
    %1672 = arith.divf %1670, %1671 : vector<2x16xf32>
    %1673 = vector.extract_strided_slice %1666 {offsets = [0, 16], sizes = [2, 16], strides = [1, 1]} : vector<2x64xf32> to vector<2x16xf32>
    %1674 = arith.negf %1673 : vector<2x16xf32>
    %1675 = math.exp %1674 : vector<2x16xf32>
    %cst_465 = arith.constant 1.000000e+00 : f32
    %1676 = vector.broadcast %cst_465 : f32 to vector<2x16xf32>
    %1677 = arith.addf %1676, %1675 : vector<2x16xf32>
    %1678 = arith.divf %1676, %1677 : vector<2x16xf32>
    %1679 = vector.extract_strided_slice %1666 {offsets = [0, 32], sizes = [2, 16], strides = [1, 1]} : vector<2x64xf32> to vector<2x16xf32>
    %1680 = math.tanh %1679 : vector<2x16xf32>
    %1681 = vector.extract_strided_slice %1666 {offsets = [0, 48], sizes = [2, 16], strides = [1, 1]} : vector<2x64xf32> to vector<2x16xf32>
    %1682 = arith.negf %1681 : vector<2x16xf32>
    %1683 = math.exp %1682 : vector<2x16xf32>
    %cst_466 = arith.constant 1.000000e+00 : f32
    %1684 = vector.broadcast %cst_466 : f32 to vector<2x16xf32>
    %1685 = arith.addf %1684, %1683 : vector<2x16xf32>
    %1686 = arith.divf %1684, %1685 : vector<2x16xf32>
    %1687 = arith.mulf %1678, %1622 : vector<2x16xf32>
    %1688 = arith.mulf %1672, %1680 : vector<2x16xf32>
    %1689 = arith.addf %1687, %1688 : vector<2x16xf32>
    %1690 = math.tanh %1689 : vector<2x16xf32>
    %1691 = arith.mulf %1686, %1690 : vector<2x16xf32>
    %1692 = arith.index_cast %1662 : i32 to index
    %c0_467 = arith.constant 0 : index
    %1693 = vector.load %arg13[%1692, %c0_467] : memref<16x16xf32, #tpu.memory_space<vmem>>, vector<2x16xf32>
    tpu.vector_store %arg13[%1692, %c0_467], %1691 {strides = array<i32>} : memref<16x16xf32, #tpu.memory_space<vmem>>, vector<2x16xf32>,
    %c8_i32_468 = arith.constant 8 : i32
    %c0_469 = arith.constant 0 : index
    %c0_470 = arith.constant 0 : index
    %1694 = vector.load %arg12[%c0_469, %c0_470] : memref<16x16xf32, #tpu.memory_space<vmem>>, vector<16x16xf32>
    %c0_471 = arith.constant 0 : index
    %c0_472 = arith.constant 0 : index
    %1695 = vector.load %arg13[%c0_471, %c0_472] : memref<16x16xf32, #tpu.memory_space<vmem>>, vector<16x16xf32>
    %1696 = tpu.concatenate %1694, %1695 in 1 : vector<16x16xf32>, vector<16x16xf32> -> vector<16x32xf32>
    %c0_473 = arith.constant 0 : index
    %c32 = arith.constant 32 : index
    %1697 = vector.load %arg9[%c0_473, %c32] : memref<16x64xf32, #tpu.memory_space<vmem>>, vector<16x32xf32>
    tpu.vector_store %arg9[%c0_473, %c32], %1696 {strides = array<i32>} : memref<16x64xf32, #tpu.memory_space<vmem>>, vector<16x32xf32>,
    return
  }
}

</mosaic_0001>

<llo_original>
// kernel: tile.24
$region0: #{tile.24}
  %s0 = inlined_call_operand.vmem [shape: f32[2,17], index: 0, kind: input, shape index: {}]
  %s1 = inlined_call_operand.vmem [shape: f32[1,34], index: 1, kind: output, shape index: {}]
  $region1: #{tile.24} parent=0
    #allocation0 [shape = 'u8[4096]{0}', space=vmem, size = 0x1000, scoped, tag = 'scoped mem for output reshape']
    #allocation1 [shape = 'u8[4096]{0}', space=vmem, size = 0x1000, scoped, tag = 'scoped mem for input reshape']
    %s3 = ssub.s32 4, 1
    %v4 = vld [vmem:[%s0] sm:%s3]
    %5 = vst [vmem:[#allocation1] sm:%s3] %v4
    %v6 = vld [vmem:[#allocation1] sm:$0x1]
    %vm7 = vcmask 138240
    %8 = vst.msk [vmem:[#allocation0] sm:$0x1] %vm7, %v6
    %s9 = scalar_lea.vmem [#allocation1], 1
    %v10 = vld [vmem:[%s9] sm:$0x1]
    %11 = vrot.lane.b32.xlu0 %v10, 17
    %v12 = vpop.permute.xlu0 %11
    %vm13 = vcmask 277640
    %14 = vst.msk [vmem:[#allocation0] sm:$0x1] %vm13, %v12
    %s16 = ssub.s32 2, 1
    %v17 = vld [vmem:[#allocation0] sm:%s16]
    %s19 = ssub.s32 2, 1
    %20 = vst [vmem:[%s1] sm:%s19] %v17

// kernel: tile.23
$region0: #{tile.23}
  #allocation0 [shape = 's32[1]{0}', space=sflag, size = 0x4, scoped, tag = 'scoped memory for tile.23']
  %s0 = inlined_call_operand.vmem [shape: f32[17], index: 0, kind: input, shape index: {}]
  %s1 = inlined_call_operand.vmem [shape: f32[2,17], index: 1, kind: output, shape index: {}]
  // Predicated region
  $region2: #{tile.23} parent=0 // pred_check
    _
  $region3: #{tile.23} parent=0 // pred_check_branch
    %3 = sbr.rel (0) target = $region5
  $region4: #{tile.23} parent=0 // pred_region
    _
  $region5: #{tile.23} parent=0 // pred_fallthru
    _
  %v4 = vld [vmem:[%s0] ss:$0 sm:$0xff]
  %5 = vst [vmem:[%s1] sm:$0x3] %v4

// kernel: open_unmix_mtl_conv_late_forward.3
$region0: #{open_unmix_mtl_conv_late_forward.3}
  #allocation0 [shape = 'u32[]', space=smem, size = 0x4, offset = 0x4, fixed_abs, tag = 'smem constant byte address 0x4 - core index']
  #allocation1 [shape = 'u32[72,128]{1,0:T(1,128)}', space=vmem, size = 0x9000, scoped, tag = 'internal scratch']
  %s0 = inlined_call_operand.vmem [shape: f32[16,64], index: 0, kind: input, shape index: {}]
  %s1 = inlined_call_operand.vmem [shape: f32[64,32], index: 1, kind: input, shape index: {}]
  %s2 = inlined_call_operand.vmem [shape: f32[1,32], index: 2, kind: input, shape index: {}]
  %s3 = inlined_call_operand.vmem [shape: f32[1,32], index: 3, kind: input, shape index: {}]
  %s4 = inlined_call_operand.vmem [shape: f32[32,34], index: 4, kind: input, shape index: {}]
  %s5 = inlined_call_operand.vmem [shape: f32[1,34], index: 5, kind: input, shape index: {}]
  %s6 = inlined_call_operand.vmem [shape: f32[1,34], index: 6, kind: input, shape index: {}]
  %s7 = inlined_call_operand.vmem [shape: f32[16,34], index: 7, kind: input, shape index: {}]
  %s8 = inlined_call_operand.vmem [shape: f32[8], index: 8, kind: input, shape index: {}]
  %s9 = inlined_call_operand.vmem [shape: f32[16,34], index: 9, kind: output, shape index: {0}]
  %s10 = inlined_call_operand.vmem [shape: f32[16,1], index: 10, kind: output, shape index: {1}]
  %11 = xla_tuple %s9, %s10
  %s12 = sld [smem:[#allocation0]]
  $region58: #{open_unmix_mtl_conv_late_forward.3} parent=0
    _
  %s14 = ssub.s32 1, %s12
  %s15 = scalar_select 0, %s14, %s12
  $region1: #{open_unmix_mtl_conv_late_forward.3} parent=0
    #allocation2 [shape = 'u8[512]{0}', space=smem, size = 0x200, scoped, tag = 'input window, operand 8, single buffered']
    #allocation3 [shape = 's32[1]{0}', space=sflag, size = 0x4, scoped, tag = 'scoped memory for open_unmix_mtl_conv_late_forward.3']
    %16 = vsyncpa [#allocation3], 0
    // Predicated region
    $region2: #{open_unmix_mtl_conv_late_forward.3} parent=1 // pred_check
      _
    $region3: #{open_unmix_mtl_conv_late_forward.3} parent=1 // pred_check_branch
      %18 = sbr.rel (0) target = $region5
    $region4: #{open_unmix_mtl_conv_late_forward.3} parent=1 // pred_region
      _
    $region5: #{open_unmix_mtl_conv_late_forward.3} parent=1 // pred_fallthru
      _
    // Predicated region
    $region6: #{open_unmix_mtl_conv_late_forward.3} parent=1 // pred_check
      _
    $region7: #{open_unmix_mtl_conv_late_forward.3} parent=1 // pred_check_branch
      %20 = sbr.rel (0) target = $region9
    $region8: #{open_unmix_mtl_conv_late_forward.3} parent=1 // pred_region
      _
    $region9: #{open_unmix_mtl_conv_late_forward.3} parent=1 // pred_fallthru
      _
    // Predicated region
    $region10: #{open_unmix_mtl_conv_late_forward.3} parent=1 // pred_check
      _
    $region11: #{open_unmix_mtl_conv_late_forward.3} parent=1 // pred_check_branch
      %22 = sbr.rel (0) target = $region13
    $region12: #{open_unmix_mtl_conv_late_forward.3} parent=1 // pred_region
      _
    $region13: #{open_unmix_mtl_conv_late_forward.3} parent=1 // pred_fallthru
      _
    // Predicated region
    $region14: #{open_unmix_mtl_conv_late_forward.3} parent=1 // pred_check
      _
    $region15: #{open_unmix_mtl_conv_late_forward.3} parent=1 // pred_check_branch
      %24 = sbr.rel (0) target = $region17
    $region16: #{open_unmix_mtl_conv_late_forward.3} parent=1 // pred_region
      _
    $region17: #{open_unmix_mtl_conv_late_forward.3} parent=1 // pred_fallthru
      _
    // Predicated region
    $region18: #{open_unmix_mtl_conv_late_forward.3} parent=1 // pred_check
      _
    $region19: #{open_unmix_mtl_conv_late_forward.3} parent=1 // pred_check_branch
      %26 = sbr.rel (0) target = $region21
    $region20: #{open_unmix_mtl_conv_late_forward.3} parent=1 // pred_region
      _
    $region21: #{open_unmix_mtl_conv_late_forward.3} parent=1 // pred_fallthru
      _
    // Predicated region
    $region22: #{open_unmix_mtl_conv_late_forward.3} parent=1 // pred_check
      _
    $region23: #{open_unmix_mtl_conv_late_forward.3} parent=1 // pred_check_branch
      %28 = sbr.rel (0) target = $region25
    $region24: #{open_unmix_mtl_conv_late_forward.3} parent=1 // pred_region
      _
    $region25: #{open_unmix_mtl_conv_late_forward.3} parent=1 // pred_fallthru
      _
    // Predicated region
    $region26: #{open_unmix_mtl_conv_late_forward.3} parent=1 // pred_check
      _
    $region27: #{open_unmix_mtl_conv_late_forward.3} parent=1 // pred_check_branch
      %30 = sbr.rel (0) target = $region29
    $region28: #{open_unmix_mtl_conv_late_forward.3} parent=1 // pred_region
      _
    $region29: #{open_unmix_mtl_conv_late_forward.3} parent=1 // pred_fallthru
      _
    // Predicated region
    $region30: #{open_unmix_mtl_conv_late_forward.3} parent=1 // pred_check
      _
    $region31: #{open_unmix_mtl_conv_late_forward.3} parent=1 // pred_check_branch
      %32 = sbr.rel (0) target = $region33
    $region32: #{open_unmix_mtl_conv_late_forward.3} parent=1 // pred_region
      _
    $region33: #{open_unmix_mtl_conv_late_forward.3} parent=1 // pred_fallthru
      _
    // Predicated region
    $region34: #{open_unmix_mtl_conv_late_forward.3} parent=1 // pred_check
      _
    $region35: #{open_unmix_mtl_conv_late_forward.3} parent=1 // pred_check_branch
      %34 = sbr.rel (0) target = $region37
    $region36: #{open_unmix_mtl_conv_late_forward.3} parent=1 // pred_region
      %36 = vsyncadd [#allocation3], 0
      %s38 = sshll.u32 %s8, 4
      %s39 = int_to_ptr.vmem [resolvable:$true] %s38
      %41 = dma.vmem_to_smem %s39, 16, [#allocation2], [#allocation3]
    $region37: #{open_unmix_mtl_conv_late_forward.3} parent=1 // pred_fallthru
      _
    // Predicated region
    $region38: #{open_unmix_mtl_conv_late_forward.3} parent=1 // pred_check
      _
    $region39: #{open_unmix_mtl_conv_late_forward.3} parent=1 // pred_check_branch
      %43 = sbr.rel (0) target = $region41
    $region40: #{open_unmix_mtl_conv_late_forward.3} parent=1 // pred_region
      %45 = dma.done [#allocation3], 16
    $region41: #{open_unmix_mtl_conv_late_forward.3} parent=1 // pred_fallthru
      _
    %46 = sfence
    %v47 = vld [vmem:[%s0] sm:$0xff]
    %v48 = vld [vmem:[%s0 + $0x8] sm:$0xff]
    %v49 = vld [vmem:[%s1] sm:$0xff]
    %v50 = vld [vmem:[%s1 + $0x8] sm:$0xff]
    %v51 = vld [vmem:[%s1 + $0x10] sm:$0xff]
    %v52 = vld [vmem:[%s1 + $0x18] sm:$0xff]
    %v53 = vld [vmem:[%s1 + $0x20] sm:$0xff]
    %v54 = vld [vmem:[%s1 + $0x28] sm:$0xff]
    %v55 = vld [vmem:[%s1 + $0x30] sm:$0xff]
    %v56 = vld [vmem:[%s1 + $0x38] sm:$0xff]
    %vm57 = vcmask 523264
    %v59 = vsel %vm57, %v47, 0
    %v62 = vsel %vm57, %v48, 0
    %64 = vmatpush.msra.mxu0 0.0
    %65 = vmatpush.msra.mxu0 0.0
    %66 = vmatpush.msra.mxu0 0.0
    %67 = vmatpush.msra.mxu0 0.0
    %68 = vmatpush.msra.mxu0 0.0
    %69 = vmatpush.msra.mxu0 0.0
    %70 = vmatpush.msra.mxu0 0.0
    %71 = vmatpush.msra.mxu0 0.0
    %72 = vmatpush.msra.mxu0 %v56
    %73 = vmatpush.msra.mxu0 %v55
    %74 = vmatpush.msra.mxu0 %v54
    %75 = vmatpush.msra.mxu0 %v53
    %76 = vmatpush.msra.mxu0 %v52
    %77 = vmatpush.msra.mxu0 %v51
    %78 = vmatpush.msra.mxu0 %v50
    %79 = vmatpush.msra.mxu0 %v49
    %80 = vmatmul.f32.gmra.mxu0 %v59
    %v81 = vpop.f32.mrf.mxu0
    %v82 = vadd.f32 0.0, %v81
    %83 = vmatmul.f32.gmra.mxu0 %v62
    %v84 = vpop.f32.mrf.mxu0
    %v85 = vadd.f32 0.0, %v84
    %86 = vdwg.mxu0
    %v87 = vld [vmem:[%s2] sm:$0x1]
    %v89 = vperm.slane %v87, 0
    %v91 = vmul.f32 %v82, %v89
    %v92 = vmul.f32 %v85, %v89
    %v93 = vld [vmem:[%s3] sm:$0x1]
    %v95 = vperm.slane %v93, 0
    %v97 = vadd.f32 %v91, %v95
    %v98 = vadd.f32 %v92, %v95
    %v99 = vmax.f32 %v97, 0.0
    %v100 = vmax.f32 %v98, 0.0
    %v101 = vld [vmem:[%s4] sm:$0xff]
    %v102 = vld [vmem:[%s4 + $0x8] sm:$0xff]
    %v103 = vld [vmem:[%s4 + $0x10] sm:$0xff]
    %v104 = vld [vmem:[%s4 + $0x18] sm:$0xff]
    %vm105 = vcmask 261120
    %v107 = vsel %vm105, %v99, 0
    %v110 = vsel %vm105, %v100, 0
    %112 = vmatpush.msra.mxu0 0.0
    %113 = vmatpush.msra.mxu0 0.0
    %114 = vmatpush.msra.mxu0 0.0
    %115 = vmatpush.msra.mxu0 0.0
    %116 = vmatpush.msra.mxu0 0.0
    %117 = vmatpush.msra.mxu0 0.0
    %118 = vmatpush.msra.mxu0 0.0
    %119 = vmatpush.msra.mxu0 0.0
    %120 = vmatpush.msra.mxu0 0.0
    %121 = vmatpush.msra.mxu0 0.0
    %122 = vmatpush.msra.mxu0 0.0
    %123 = vmatpush.msra.mxu0 0.0
    %124 = vmatpush.msra.mxu0 %v104
    %125 = vmatpush.msra.mxu0 %v103
    %126 = vmatpush.msra.mxu0 %v102
    %127 = vmatpush.msra.mxu0 %v101
    %128 = vmatmul.f32.gmra.mxu0 %v107
    %v129 = vpop.f32.mrf.mxu0
    %v130 = vadd.f32 0.0, %v129
    %131 = vmatmul.f32.gmra.mxu0 %v110
    %v132 = vpop.f32.mrf.mxu0
    %v133 = vadd.f32 0.0, %v132
    %134 = vdwg.mxu0
    %v135 = vld [vmem:[%s5] sm:$0x1]
    %v137 = vperm.slane %v135, 0
    %v139 = vmul.f32 %v130, %v137
    %v140 = vmul.f32 %v133, %v137
    %v141 = vld [vmem:[%s6] sm:$0x1]
    %v143 = vperm.slane %v141, 0
    %v145 = vadd.f32 %v139, %v143
    %v146 = vadd.f32 %v140, %v143
    %v147 = vmax.f32 %v145, 0.0
    %v148 = vmax.f32 %v146, 0.0
    %v149 = vld [vmem:[%s7] sm:$0xff]
    %v150 = vld [vmem:[%s7 + $0x8] sm:$0xff]
    %v151 = vmul.f32 %v147, %v149
    %v152 = vmul.f32 %v148, %v150
    %vm153 = vcmask 277504
    %154 = vst.msk [vmem:[%s9] sm:$0xff] %vm153, %v151
    %155 = vst.msk [vmem:[%s9 + $0x8] sm:$0xff] %vm153, %v152
    %v156 = vsel %vm105, %v99, 0.0
    %157 = vadd.xlane.f32.xlu0 %v156
    %v158 = vpop.xlane.xlu0 %157
    %v159 = vsel %vm105, %v100, 0.0
    %160 = vadd.xlane.f32.xlu0 %v159
    %v161 = vpop.xlane.xlu0 %160
    %v162 = vrcp.pop 32.0
    %v163 = vmul.f32 32.0, %v162
    %v164 = vsub.f32 1.0, %v163
    %v165 = vmul.f32 %v162, %v164
    %v166 = vadd.f32 %v162, %v165
    %vm167 = vweird.f32 %v162
    %v168 = vsel %vm167, %v162, %v166
    %v169 = vmul.f32 %v158, %v168
    %v170 = vmul.f32 %v161, %v168
    %vm173 = vcmask 1045504
    %v174 = vrot.slane %v169, 2
    %v175 = vrot.slane %v170, 2
    %v176 = vsel %vm173, %v174, %v175
    %v180 = vsel %vm173, 0.0, %v174
    %v181 = vsel %vm173, %v175, 0.0
    %s182 = sld [smem:[#allocation2]]
    %v183 = vstv %s182
    %v184 = vmul.f32 %v183, %v180
    %v185 = vmul.f32 %v183, %v176
    %v186 = vadd.f32 %v184, 0.0
    %v187 = vadd.f32 %v185, 0.0
    %s188 = sld [smem:[#allocation2 + $0x1]]
    %v189 = vstv %s188
    %v190 = vmul.f32 %v189, %v180
    %v191 = vmul.f32 %v189, %v176
    %v192 = vmul.f32 %v189, %v181
    %v196 = vrot.slane %v190, 2
    %v197 = vrot.slane %v191, 2
    %v198 = vsel %vm173, %v196, %v197
    %v199 = vrot.slane %v192, 2
    %v200 = vsel %vm173, %v197, %v199
    %v203 = vadd.f32 %v186, %v198
    %v204 = vadd.f32 %v187, %v200
    %s205 = sld [smem:[#allocation2 + $0x2]]
    %v206 = vstv %s205
    %v207 = vmul.f32 %v206, %v180
    %v208 = vmul.f32 %v206, %v176
    %v209 = vmul.f32 %v206, %v181
    %vm213 = vcmask 1043456
    %v214 = vrot.slane %v207, 4
    %v215 = vrot.slane %v208, 4
    %v216 = vsel %vm213, %v214, %v215
    %v217 = vrot.slane %v209, 4
    %v218 = vsel %vm213, %v215, %v217
    %v221 = vadd.f32 %v203, %v216
    %v222 = vadd.f32 %v204, %v218
    %s223 = sld [smem:[#allocation2 + $0x3]]
    %v224 = vstv %s223
    %v225 = vmul.f32 %v224, %v180
    %v226 = vmul.f32 %v224, %v176
    %v227 = vmul.f32 %v224, %v181
    %vm231 = vcmask 1041408
    %v232 = vrot.slane %v225, 6
    %v233 = vrot.slane %v226, 6
    %v234 = vsel %vm231, %v232, %v233
    %v235 = vrot.slane %v227, 6
    %v236 = vsel %vm231, %v233, %v235
    %v239 = vadd.f32 %v221, %v234
    %v240 = vadd.f32 %v222, %v236
    %s241 = sld [smem:[#allocation2 + $0x4]]
    %v242 = vstv %s241
    %v243 = vmul.f32 %v242, %v176
    %v244 = vmul.f32 %v242, %v181
    %v245 = vadd.f32 %v239, %v243
    %v246 = vadd.f32 %v240, %v244
    %s247 = sld [smem:[#allocation2 + $0x5]]
    %v248 = vstv %s247
    %v249 = vmul.f32 %v248, %v176
    %v250 = vmul.f32 %v248, %v181
    %v251 = vmul.f32 %v248, 0.0
    %v255 = vrot.slane %v249, 2
    %v256 = vrot.slane %v250, 2
    %v257 = vsel %vm173, %v255, %v256
    %v258 = vrot.slane %v251, 2
    %v259 = vsel %vm173, %v256, %v258
    %v262 = vadd.f32 %v245, %v257
    %v263 = vadd.f32 %v246, %v259
    %s264 = sld [smem:[#allocation2 + $0x6]]
    %v265 = vstv %s264
    %v266 = vmul.f32 %v265, %v176
    %v267 = vmul.f32 %v265, %v181
    %v268 = vmul.f32 %v265, 0.0
    %v272 = vrot.slane %v266, 4
    %v273 = vrot.slane %v267, 4
    %v274 = vsel %vm213, %v272, %v273
    %v275 = vrot.slane %v268, 4
    %v276 = vsel %vm213, %v273, %v275
    %v279 = vadd.f32 %v262, %v274
    %v280 = vadd.f32 %v263, %v276
    %s281 = sld [smem:[#allocation2 + $0x7]]
    %v282 = vstv %s281
    %v283 = vadd.f32 %v279, %v282
    %v284 = vadd.f32 %v280, %v282
    %v285 = vxor.u32 %v283, 2147483648
    %v286 = vxor.u32 %v284, 2147483648
    %v287 = vmul.f32 %v285, 1.442695
    %v288 = vpow.pop %v287
    %v289 = vmul.f32 %v286, 1.442695
    %v290 = vpow.pop %v289
    %v291 = vadd.f32 %v288, 1.0
    %v292 = vadd.f32 %v290, 1.0
    %v293 = vrcp.pop %v291
    %v294 = vmul.f32 %v291, %v293
    %v295 = vsub.f32 1.0, %v294
    %v296 = vmul.f32 %v293, %v295
    %v297 = vadd.f32 %v293, %v296
    %vm298 = vweird.f32 %v291
    %vm299 = vweird.f32 %v293
    %vm300 = vmor %vm298, %vm299
    %v301 = vsel %vm300, %v293, %v297
    %v302 = vand.u32 2147483647, %v291
    %vm303 = vcmp.eq.f32.partialorder %v302, 8.507059e+37
    %v304 = vand.u32 %v291, 2147483648
    %v305 = vor.u32 1.1754944e-38, %v304
    %v306 = vsel %vm303, %v305, %v301
    %v307 = vmul.f32 1.0, %v306
    %v308 = vrcp.pop %v292
    %v309 = vmul.f32 %v292, %v308
    %v310 = vsub.f32 1.0, %v309
    %v311 = vmul.f32 %v308, %v310
    %v312 = vadd.f32 %v308, %v311
    %vm313 = vweird.f32 %v292
    %vm314 = vweird.f32 %v308
    %vm315 = vmor %vm313, %vm314
    %v316 = vsel %vm315, %v308, %v312
    %v317 = vand.u32 2147483647, %v292
    %vm318 = vcmp.eq.f32.partialorder %v317, 8.507059e+37
    %v319 = vand.u32 %v292, 2147483648
    %v320 = vor.u32 1.1754944e-38, %v319
    %v321 = vsel %vm318, %v320, %v316
    %v322 = vmul.f32 1.0, %v321
    %vm323 = vcmask 7168
    %324 = vst.msk [vmem:[%s10] sm:$0xff] %vm323, %v307
    %325 = vst.msk [vmem:[%s10 + $0x8] sm:$0xff] %vm323, %v322
    // Predicated region
    $region42: #{open_unmix_mtl_conv_late_forward.3} parent=1 // pred_check
      _
    $region43: #{open_unmix_mtl_conv_late_forward.3} parent=1 // pred_check_branch
      %327 = sbr.rel (0) target = $region45
    $region44: #{open_unmix_mtl_conv_late_forward.3} parent=1 // pred_region
      _
    $region45: #{open_unmix_mtl_conv_late_forward.3} parent=1 // pred_fallthru
      _
    // Predicated region
    $region46: #{open_unmix_mtl_conv_late_forward.3} parent=1 // pred_check
      _
    $region47: #{open_unmix_mtl_conv_late_forward.3} parent=1 // pred_check_branch
      %329 = sbr.rel (0) target = $region49
    $region48: #{open_unmix_mtl_conv_late_forward.3} parent=1 // pred_region
      _
    $region49: #{open_unmix_mtl_conv_late_forward.3} parent=1 // pred_fallthru
      _
    // Predicated region
    $region50: #{open_unmix_mtl_conv_late_forward.3} parent=1 // pred_check
      _
    $region51: #{open_unmix_mtl_conv_late_forward.3} parent=1 // pred_check_branch
      %331 = sbr.rel (0) target = $region53
    $region52: #{open_unmix_mtl_conv_late_forward.3} parent=1 // pred_region
      _
    $region53: #{open_unmix_mtl_conv_late_forward.3} parent=1 // pred_fallthru
      _
    // Predicated region
    $region54: #{open_unmix_mtl_conv_late_forward.3} parent=1 // pred_check
      _
    $region55: #{open_unmix_mtl_conv_late_forward.3} parent=1 // pred_check_branch
      %333 = sbr.rel (0) target = $region57
    $region56: #{open_unmix_mtl_conv_late_forward.3} parent=1 // pred_region
      _
    $region57: #{open_unmix_mtl_conv_late_forward.3} parent=1 // pred_fallthru
      _
    %334 = vsyncpa [#allocation3], 1

// kernel: open_unmix_mtl_conv_late_forward.2
$region0: #{open_unmix_mtl_conv_late_forward.2}
  #allocation0 [shape = 'u32[]', space=smem, size = 0x4, offset = 0x4, fixed_abs, tag = 'smem constant byte address 0x4 - core index']
  #allocation1 [shape = 'u32[72,128]{1,0:T(1,128)}', space=vmem, size = 0x9000, scoped, tag = 'internal scratch']
  #allocation2 [shape = 'f32[16,64]{1,0:T(8,128)}', space=vmem, size = 0x2000, scoped, tag = 'scratch operand']
  #allocation3 [shape = 'f32[16,64]{1,0:T(8,128)}', space=vmem, size = 0x2000, scoped, tag = 'scratch operand']
  #allocation4 [shape = 'f32[16,16]{1,0:T(8,128)}', space=vmem, size = 0x2000, scoped, tag = 'scratch operand']
  #allocation5 [shape = 'f32[16,16]{1,0:T(8,128)}', space=vmem, size = 0x2000, scoped, tag = 'scratch operand']
  %s0 = inlined_call_operand.vmem [shape: f32[16,34], index: 0, kind: input, shape index: {}]
  %s1 = inlined_call_operand.vmem [shape: f32[1,34], index: 1, kind: input, shape index: {}]
  %s2 = inlined_call_operand.vmem [shape: f32[1,34], index: 2, kind: input, shape index: {}]
  %s3 = inlined_call_operand.vmem [shape: f32[34,32], index: 3, kind: input, shape index: {}]
  %s4 = inlined_call_operand.vmem [shape: f32[1,32], index: 4, kind: input, shape index: {}]
  %s5 = inlined_call_operand.vmem [shape: f32[1,32], index: 5, kind: input, shape index: {}]
  %s6 = inlined_call_operand.vmem [shape: f32[6,32,64], index: 6, kind: input, shape index: {}]
  %s7 = inlined_call_operand.vmem [shape: f32[6,16,64], index: 7, kind: input, shape index: {}]
  %s8 = inlined_call_operand.vmem [shape: f32[6,1,64], index: 8, kind: input, shape index: {}]
  %s9 = inlined_call_operand.vmem [shape: f32[16,64], index: 9, kind: output, shape index: {}]
  %s10 = sld [smem:[#allocation0]]
  $region46: #{open_unmix_mtl_conv_late_forward.2} parent=0
    _
  %s12 = ssub.s32 1, %s10
  %s13 = scalar_select 0, %s12, %s10
  // Predicated region
  $region2: #{open_unmix_mtl_conv_late_forward.2} parent=0 // pred_check
    _
  $region3: #{open_unmix_mtl_conv_late_forward.2} parent=0 // pred_check_branch
    %15 = sbr.rel (0) target = $region5
  $region4: #{open_unmix_mtl_conv_late_forward.2} parent=0 // pred_region
    _
  $region5: #{open_unmix_mtl_conv_late_forward.2} parent=0 // pred_fallthru
    _
  // Predicated region
  $region6: #{open_unmix_mtl_conv_late_forward.2} parent=0 // pred_check
    _
  $region7: #{open_unmix_mtl_conv_late_forward.2} parent=0 // pred_check_branch
    %17 = sbr.rel (0) target = $region9
  $region8: #{open_unmix_mtl_conv_late_forward.2} parent=0 // pred_region
    _
  $region9: #{open_unmix_mtl_conv_late_forward.2} parent=0 // pred_fallthru
    _
  // Predicated region
  $region10: #{open_unmix_mtl_conv_late_forward.2} parent=0 // pred_check
    _
  $region11: #{open_unmix_mtl_conv_late_forward.2} parent=0 // pred_check_branch
    %19 = sbr.rel (0) target = $region13
  $region12: #{open_unmix_mtl_conv_late_forward.2} parent=0 // pred_region
    _
  $region13: #{open_unmix_mtl_conv_late_forward.2} parent=0 // pred_fallthru
    _
  // Predicated region
  $region14: #{open_unmix_mtl_conv_late_forward.2} parent=0 // pred_check
    _
  $region15: #{open_unmix_mtl_conv_late_forward.2} parent=0 // pred_check_branch
    %21 = sbr.rel (0) target = $region17
  $region16: #{open_unmix_mtl_conv_late_forward.2} parent=0 // pred_region
    _
  $region17: #{open_unmix_mtl_conv_late_forward.2} parent=0 // pred_fallthru
    _
  // Predicated region
  $region18: #{open_unmix_mtl_conv_late_forward.2} parent=0 // pred_check
    _
  $region19: #{open_unmix_mtl_conv_late_forward.2} parent=0 // pred_check_branch
    %23 = sbr.rel (0) target = $region21
  $region20: #{open_unmix_mtl_conv_late_forward.2} parent=0 // pred_region
    _
  $region21: #{open_unmix_mtl_conv_late_forward.2} parent=0 // pred_fallthru
    _
  // Predicated region
  $region22: #{open_unmix_mtl_conv_late_forward.2} parent=0 // pred_check
    _
  $region23: #{open_unmix_mtl_conv_late_forward.2} parent=0 // pred_check_branch
    %25 = sbr.rel (0) target = $region25
  $region24: #{open_unmix_mtl_conv_late_forward.2} parent=0 // pred_region
    _
  $region25: #{open_unmix_mtl_conv_late_forward.2} parent=0 // pred_fallthru
    _
  // Predicated region
  $region26: #{open_unmix_mtl_conv_late_forward.2} parent=0 // pred_check
    _
  $region27: #{open_unmix_mtl_conv_late_forward.2} parent=0 // pred_check_branch
    %27 = sbr.rel (0) target = $region29
  $region28: #{open_unmix_mtl_conv_late_forward.2} parent=0 // pred_region
    _
  $region29: #{open_unmix_mtl_conv_late_forward.2} parent=0 // pred_fallthru
    _
  // Predicated region
  $region30: #{open_unmix_mtl_conv_late_forward.2} parent=0 // pred_check
    _
  $region31: #{open_unmix_mtl_conv_late_forward.2} parent=0 // pred_check_branch
    %29 = sbr.rel (0) target = $region33
  $region32: #{open_unmix_mtl_conv_late_forward.2} parent=0 // pred_region
    _
  $region33: #{open_unmix_mtl_conv_late_forward.2} parent=0 // pred_fallthru
    _
  // Predicated region
  $region34: #{open_unmix_mtl_conv_late_forward.2} parent=0 // pred_check
    _
  $region35: #{open_unmix_mtl_conv_late_forward.2} parent=0 // pred_check_branch
    %31 = sbr.rel (0) target = $region37
  $region36: #{open_unmix_mtl_conv_late_forward.2} parent=0 // pred_region
    _
  $region37: #{open_unmix_mtl_conv_late_forward.2} parent=0 // pred_fallthru
    _
  %v32 = vld [vmem:[%s0] sm:$0xff]
  %v33 = vld [vmem:[%s0 + $0x8] sm:$0xff]
  %v34 = vld [vmem:[%s1] sm:$0x1]
  %v36 = vperm.slane %v34, 0
  %v38 = vadd.f32 %v32, %v36
  %v39 = vadd.f32 %v33, %v36
  %v40 = vld [vmem:[%s2] sm:$0x1]
  %v42 = vperm.slane %v40, 0
  %v44 = vmul.f32 %v38, %v42
  %v45 = vmul.f32 %v39, %v42
  %v46 = vld [vmem:[%s3] sm:$0xff]
  %v47 = vld [vmem:[%s3 + $0x8] sm:$0xff]
  %v48 = vld [vmem:[%s3 + $0x10] sm:$0xff]
  %v49 = vld [vmem:[%s3 + $0x18] sm:$0xff]
  %v50 = vld [vmem:[%s3 + $0x20] sm:$0x3]
  %vm51 = vcmask 277504
  %v53 = vsel %vm51, %v44, 0
  %v56 = vsel %vm51, %v45, 0
  %vm58 = vcmask 1041408
  %v60 = vsel %vm58, %v50, 0
  %62 = vmatpush.msra.mxu0 0.0
  %63 = vmatpush.msra.mxu0 0.0
  %64 = vmatpush.msra.mxu0 0.0
  %65 = vmatpush.msra.mxu0 0.0
  %66 = vmatpush.msra.mxu0 0.0
  %67 = vmatpush.msra.mxu0 0.0
  %68 = vmatpush.msra.mxu0 0.0
  %69 = vmatpush.msra.mxu0 0.0
  %70 = vmatpush.msra.mxu0 0.0
  %71 = vmatpush.msra.mxu0 0.0
  %72 = vmatpush.msra.mxu0 0.0
  %73 = vmatpush.msra.mxu0 %v60
  %74 = vmatpush.msra.mxu0 %v49
  %75 = vmatpush.msra.mxu0 %v48
  %76 = vmatpush.msra.mxu0 %v47
  %77 = vmatpush.msra.mxu0 %v46
  %78 = vmatmul.f32.gmra.mxu0 %v53
  %v79 = vpop.f32.mrf.mxu0
  %v80 = vadd.f32 0.0, %v79
  %81 = vmatmul.f32.gmra.mxu0 %v56
  %v82 = vpop.f32.mrf.mxu0
  %v83 = vadd.f32 0.0, %v82
  %84 = vdwg.mxu0
  %v85 = vld [vmem:[%s4] sm:$0x1]
  %v87 = vperm.slane %v85, 0
  %v89 = vmul.f32 %v80, %v87
  %v90 = vmul.f32 %v83, %v87
  %v91 = vld [vmem:[%s5] sm:$0x1]
  %v93 = vperm.slane %v91, 0
  %v95 = vadd.f32 %v89, %v93
  %v96 = vadd.f32 %v90, %v93
  %v97 = vtanh.pop %v95
  %v98 = vtanh.pop %v96
  %vm99 = vcmask 261120
  %100 = vst.msk [vmem:[%s9] sm:$0xff] %vm99, %v97
  %101 = vst.msk [vmem:[%s9 + $0x8] sm:$0xff] %vm99, %v98
  %v102 = vld [vmem:[%s6] sm:$0xff]
  %v103 = vld [vmem:[%s6 + $0x8] sm:$0xff]
  %v104 = vld [vmem:[%s6 + $0x10] sm:$0xff]
  %v105 = vld [vmem:[%s6 + $0x18] sm:$0xff]
  %s106 = scalar_lea.vmem %s6, 32
  %v107 = vld [vmem:[%s106] sm:$0xff]
  %v108 = vld [vmem:[%s106 + $0x8] sm:$0xff]
  %v109 = vld [vmem:[%s106 + $0x10] sm:$0xff]
  %v110 = vld [vmem:[%s106 + $0x18] sm:$0xff]
  %v111 = vld [vmem:[%s7] sm:$0xff]
  %v112 = vld [vmem:[%s7 + $0x8] sm:$0xff]
  %s113 = scalar_lea.vmem %s7, 16
  %v114 = vld [vmem:[%s113] sm:$0xff]
  %v115 = vld [vmem:[%s113 + $0x8] sm:$0xff]
  %v116 = vld [vmem:[%s8] sm:$0x1]
  %s117 = scalar_lea.vmem %s8, 1
  %v118 = vld [vmem:[%s117] sm:$0x1]
  %v120 = vperm.slane %v116, 0
  %v123 = vsel %vm99, %v97, 0
  %v126 = vsel %vm99, %v98, 0
  %128 = vmatpush.msra.mxu0 0.0
  %129 = vmatpush.msra.mxu0 0.0
  %130 = vmatpush.msra.mxu0 0.0
  %131 = vmatpush.msra.mxu0 0.0
  %132 = vmatpush.msra.mxu0 0.0
  %133 = vmatpush.msra.mxu0 0.0
  %134 = vmatpush.msra.mxu0 0.0
  %135 = vmatpush.msra.mxu0 0.0
  %136 = vmatpush.msra.mxu0 0.0
  %137 = vmatpush.msra.mxu0 0.0
  %138 = vmatpush.msra.mxu0 0.0
  %139 = vmatpush.msra.mxu0 0.0
  %140 = vmatpush.msra.mxu0 %v105
  %141 = vmatpush.msra.mxu0 %v104
  %142 = vmatpush.msra.mxu0 %v103
  %143 = vmatpush.msra.mxu0 %v102
  %144 = vmatmul.f32.gmra.mxu0 %v123
  %v145 = vpop.f32.mrf.mxu0
  %v146 = vadd.f32 %v120, %v145
  %147 = vmatmul.f32.gmra.mxu0 %v126
  %v148 = vpop.f32.mrf.mxu0
  %v149 = vadd.f32 %v120, %v148
  %150 = vdwg.mxu0
  %vm151 = vcmask 523264
  %152 = vst.msk [vmem:[#allocation2] sm:$0xff] %vm151, %v146
  %153 = vst.msk [vmem:[#allocation2 + $0x8] sm:$0xff] %vm151, %v149
  %v155 = vperm.slane %v118, 0
  %157 = vmatpush.msra.mxu0 0.0
  %158 = vmatpush.msra.mxu0 0.0
  %159 = vmatpush.msra.mxu0 0.0
  %160 = vmatpush.msra.mxu0 0.0
  %161 = vmatpush.msra.mxu0 0.0
  %162 = vmatpush.msra.mxu0 0.0
  %163 = vmatpush.msra.mxu0 0.0
  %164 = vmatpush.msra.mxu0 0.0
  %165 = vmatpush.msra.mxu0 0.0
  %166 = vmatpush.msra.mxu0 0.0
  %167 = vmatpush.msra.mxu0 0.0
  %168 = vmatpush.msra.mxu0 0.0
  %169 = vmatpush.msra.mxu0 %v110
  %170 = vmatpush.msra.mxu0 %v109
  %171 = vmatpush.msra.mxu0 %v108
  %172 = vmatpush.msra.mxu0 %v107
  %173 = vmatmul.f32.gmra.mxu0 %v123
  %v174 = vpop.f32.mrf.mxu0
  %v175 = vadd.f32 %v155, %v174
  %176 = vmatmul.f32.gmra.mxu0 %v126
  %v177 = vpop.f32.mrf.mxu0
  %v178 = vadd.f32 %v155, %v177
  %179 = vdwg.mxu0
  %180 = vst.msk [vmem:[#allocation3] sm:$0xff] %vm151, %v175
  %181 = vst.msk [vmem:[#allocation3 + $0x8] sm:$0xff] %vm151, %v178
  %v182 = vld [vmem:[#allocation2] sm:$0x3]
  %vm183 = vcmask 130048
  %v185 = vsel %vm183, 0.0, 0
  %187 = vmatpush.msra.mxu0 0.0
  %188 = vmatpush.msra.mxu0 0.0
  %189 = vmatpush.msra.mxu0 0.0
  %190 = vmatpush.msra.mxu0 0.0
  %191 = vmatpush.msra.mxu0 0.0
  %192 = vmatpush.msra.mxu0 0.0
  %193 = vmatpush.msra.mxu0 0.0
  %194 = vmatpush.msra.mxu0 0.0
  %195 = vmatpush.msra.mxu0 0.0
  %196 = vmatpush.msra.mxu0 0.0
  %197 = vmatpush.msra.mxu0 0.0
  %198 = vmatpush.msra.mxu0 0.0
  %199 = vmatpush.msra.mxu0 0.0
  %200 = vmatpush.msra.mxu0 0.0
  %201 = vmatpush.msra.mxu0 %v112
  %202 = vmatpush.msra.mxu0 %v111
  %203 = vmatmul.f32.gmra.mxu0 %v185
  %v204 = vpop.f32.mrf.mxu0
  %v205 = vadd.f32 0.0, %v204
  %206 = vdwg.mxu0
  %v207 = vadd.f32 %v182, %v205
  %v208 = vxor.u32 %v207, 2147483648
  %v209 = vmul.f32 %v208, 1.442695
  %v210 = vpow.pop %v209
  %v211 = vadd.f32 %v210, 1.0
  %v212 = vrcp.pop %v211
  %v213 = vmul.f32 %v211, %v212
  %v214 = vsub.f32 1.0, %v213
  %v215 = vmul.f32 %v212, %v214
  %v216 = vadd.f32 %v212, %v215
  %vm217 = vweird.f32 %v211
  %vm218 = vweird.f32 %v212
  %vm219 = vmor %vm217, %vm218
  %v220 = vsel %vm219, %v212, %v216
  %v221 = vand.u32 2147483647, %v211
  %vm222 = vcmp.eq.f32.partialorder %v221, 8.507059e+37
  %v223 = vand.u32 %v211, 2147483648
  %v224 = vor.u32 1.1754944e-38, %v223
  %v225 = vsel %vm222, %v224, %v220
  %v226 = vmul.f32 1.0, %v225
  %v227 = vtanh.pop %v207
  %v228 = vmul.f32 %v226, 0.0
  %230 = vrot.lane.b32.xlu0 %v227, 96
  %v231 = vpop.permute.xlu0 %230
  %v233 = vmul.f32 %v226, %v231
  %235 = vrot.lane.b32.xlu0 %v233, 16
  %v236 = vpop.permute.xlu0 %235
  %v238 = vadd.f32 %v228, %v236
  %v239 = vtanh.pop %v238
  %241 = vrot.lane.b32.xlu0 %v239, 32
  %v242 = vpop.permute.xlu0 %241
  %v244 = vmul.f32 %v226, %v242
  %246 = vrot.lane.b32.xlu0 %v244, 80
  %v247 = vpop.permute.xlu0 %246
  %vm249 = vcmask 123904
  %250 = vst.msk [vmem:[#allocation4] sm:$0x3] %vm249, %v247
  %s251 = scalar_lea.vmem [#allocation3], 14
  %v252 = vld [vmem:[%s251] sm:$0x3]
  %253 = vmatpush.msra.mxu0 0.0
  %254 = vmatpush.msra.mxu0 0.0
  %255 = vmatpush.msra.mxu0 0.0
  %256 = vmatpush.msra.mxu0 0.0
  %257 = vmatpush.msra.mxu0 0.0
  %258 = vmatpush.msra.mxu0 0.0
  %259 = vmatpush.msra.mxu0 0.0
  %260 = vmatpush.msra.mxu0 0.0
  %261 = vmatpush.msra.mxu0 0.0
  %262 = vmatpush.msra.mxu0 0.0
  %263 = vmatpush.msra.mxu0 0.0
  %264 = vmatpush.msra.mxu0 0.0
  %265 = vmatpush.msra.mxu0 0.0
  %266 = vmatpush.msra.mxu0 0.0
  %267 = vmatpush.msra.mxu0 %v115
  %268 = vmatpush.msra.mxu0 %v114
  %269 = vmatmul.f32.gmra.mxu0 %v185
  %v270 = vpop.f32.mrf.mxu0
  %v271 = vadd.f32 0.0, %v270
  %272 = vdwg.mxu0
  %v273 = vadd.f32 %v252, %v271
  %v274 = vxor.u32 %v273, 2147483648
  %v275 = vmul.f32 %v274, 1.442695
  %v276 = vpow.pop %v275
  %v277 = vadd.f32 %v276, 1.0
  %v278 = vrcp.pop %v277
  %v279 = vmul.f32 %v277, %v278
  %v280 = vsub.f32 1.0, %v279
  %v281 = vmul.f32 %v278, %v280
  %v282 = vadd.f32 %v278, %v281
  %vm283 = vweird.f32 %v277
  %vm284 = vweird.f32 %v278
  %vm285 = vmor %vm283, %vm284
  %v286 = vsel %vm285, %v278, %v282
  %v287 = vand.u32 2147483647, %v277
  %vm288 = vcmp.eq.f32.partialorder %v287, 8.507059e+37
  %v289 = vand.u32 %v277, 2147483648
  %v290 = vor.u32 1.1754944e-38, %v289
  %v291 = vsel %vm288, %v290, %v286
  %v292 = vmul.f32 1.0, %v291
  %v293 = vtanh.pop %v273
  %v294 = vmul.f32 %v292, 0.0
  %296 = vrot.lane.b32.xlu0 %v293, 96
  %v297 = vpop.permute.xlu0 %296
  %v299 = vmul.f32 %v292, %v297
  %301 = vrot.lane.b32.xlu0 %v299, 16
  %v302 = vpop.permute.xlu0 %301
  %v304 = vadd.f32 %v294, %v302
  %v305 = vtanh.pop %v304
  %307 = vrot.lane.b32.xlu0 %v305, 32
  %v308 = vpop.permute.xlu0 %307
  %v310 = vmul.f32 %v292, %v308
  %312 = vrot.lane.b32.xlu0 %v310, 80
  %v313 = vpop.permute.xlu0 %312
  %s315 = scalar_lea.vmem [#allocation5], 14
  %316 = vst.msk [vmem:[%s315] sm:$0x3] %vm249, %v313
  %s317 = scalar_lea.vmem [#allocation2], 2
  %v318 = vld [vmem:[%s317] sm:$0x3]
  %v319 = vsel %vm183, %v247, 0
  %321 = vmatpush.msra.mxu0 0.0
  %322 = vmatpush.msra.mxu0 0.0
  %323 = vmatpush.msra.mxu0 0.0
  %324 = vmatpush.msra.mxu0 0.0
  %325 = vmatpush.msra.mxu0 0.0
  %326 = vmatpush.msra.mxu0 0.0
  %327 = vmatpush.msra.mxu0 0.0
  %328 = vmatpush.msra.mxu0 0.0
  %329 = vmatpush.msra.mxu0 0.0
  %330 = vmatpush.msra.mxu0 0.0
  %331 = vmatpush.msra.mxu0 0.0
  %332 = vmatpush.msra.mxu0 0.0
  %333 = vmatpush.msra.mxu0 0.0
  %334 = vmatpush.msra.mxu0 0.0
  %335 = vmatpush.msra.mxu0 %v112
  %336 = vmatpush.msra.mxu0 %v111
  %337 = vmatmul.f32.gmra.mxu0 %v319
  %v338 = vpop.f32.mrf.mxu0
  %v339 = vadd.f32 0.0, %v338
  %340 = vdwg.mxu0
  %v341 = vadd.f32 %v318, %v339
  %v342 = vxor.u32 %v341, 2147483648
  %v343 = vmul.f32 %v342, 1.442695
  %v344 = vpow.pop %v343
  %v345 = vadd.f32 %v344, 1.0
  %v346 = vrcp.pop %v345
  %v347 = vmul.f32 %v345, %v346
  %v348 = vsub.f32 1.0, %v347
  %v349 = vmul.f32 %v346, %v348
  %v350 = vadd.f32 %v346, %v349
  %vm351 = vweird.f32 %v345
  %vm352 = vweird.f32 %v346
  %vm353 = vmor %vm351, %vm352
  %v354 = vsel %vm353, %v346, %v350
  %v355 = vand.u32 2147483647, %v345
  %vm356 = vcmp.eq.f32.partialorder %v355, 8.507059e+37
  %v357 = vand.u32 %v345, 2147483648
  %v358 = vor.u32 1.1754944e-38, %v357
  %v359 = vsel %vm356, %v358, %v354
  %v360 = vmul.f32 1.0, %v359
  %v361 = vtanh.pop %v341
  %v362 = vmul.f32 %v360, %v238
  %364 = vrot.lane.b32.xlu0 %v361, 96
  %v365 = vpop.permute.xlu0 %364
  %v367 = vmul.f32 %v360, %v365
  %369 = vrot.lane.b32.xlu0 %v367, 16
  %v370 = vpop.permute.xlu0 %369
  %v372 = vadd.f32 %v362, %v370
  %v373 = vtanh.pop %v372
  %375 = vrot.lane.b32.xlu0 %v373, 32
  %v376 = vpop.permute.xlu0 %375
  %v378 = vmul.f32 %v360, %v376
  %380 = vrot.lane.b32.xlu0 %v378, 80
  %v381 = vpop.permute.xlu0 %380
  %s383 = scalar_lea.vmem [#allocation4], 2
  %384 = vst.msk [vmem:[%s383] sm:$0x3] %vm249, %v381
  %s385 = scalar_lea.vmem [#allocation3], 12
  %v386 = vld [vmem:[%s385] sm:$0x3]
  %v387 = vsel %vm183, %v313, 0
  %389 = vmatpush.msra.mxu0 0.0
  %390 = vmatpush.msra.mxu0 0.0
  %391 = vmatpush.msra.mxu0 0.0
  %392 = vmatpush.msra.mxu0 0.0
  %393 = vmatpush.msra.mxu0 0.0
  %394 = vmatpush.msra.mxu0 0.0
  %395 = vmatpush.msra.mxu0 0.0
  %396 = vmatpush.msra.mxu0 0.0
  %397 = vmatpush.msra.mxu0 0.0
  %398 = vmatpush.msra.mxu0 0.0
  %399 = vmatpush.msra.mxu0 0.0
  %400 = vmatpush.msra.mxu0 0.0
  %401 = vmatpush.msra.mxu0 0.0
  %402 = vmatpush.msra.mxu0 0.0
  %403 = vmatpush.msra.mxu0 %v115
  %404 = vmatpush.msra.mxu0 %v114
  %405 = vmatmul.f32.gmra.mxu0 %v387
  %v406 = vpop.f32.mrf.mxu0
  %v407 = vadd.f32 0.0, %v406
  %408 = vdwg.mxu0
  %v409 = vadd.f32 %v386, %v407
  %v410 = vxor.u32 %v409, 2147483648
  %v411 = vmul.f32 %v410, 1.442695
  %v412 = vpow.pop %v411
  %v413 = vadd.f32 %v412, 1.0
  %v414 = vrcp.pop %v413
  %v415 = vmul.f32 %v413, %v414
  %v416 = vsub.f32 1.0, %v415
  %v417 = vmul.f32 %v414, %v416
  %v418 = vadd.f32 %v414, %v417
  %vm419 = vweird.f32 %v413
  %vm420 = vweird.f32 %v414
  %vm421 = vmor %vm419, %vm420
  %v422 = vsel %vm421, %v414, %v418
  %v423 = vand.u32 2147483647, %v413
  %vm424 = vcmp.eq.f32.partialorder %v423, 8.507059e+37
  %v425 = vand.u32 %v413, 2147483648
  %v426 = vor.u32 1.1754944e-38, %v425
  %v427 = vsel %vm424, %v426, %v422
  %v428 = vmul.f32 1.0, %v427
  %v429 = vtanh.pop %v409
  %v430 = vmul.f32 %v428, %v304
  %432 = vrot.lane.b32.xlu0 %v429, 96
  %v433 = vpop.permute.xlu0 %432
  %v435 = vmul.f32 %v428, %v433
  %437 = vrot.lane.b32.xlu0 %v435, 16
  %v438 = vpop.permute.xlu0 %437
  %v440 = vadd.f32 %v430, %v438
  %v441 = vtanh.pop %v440
  %443 = vrot.lane.b32.xlu0 %v441, 32
  %v444 = vpop.permute.xlu0 %443
  %v446 = vmul.f32 %v428, %v444
  %448 = vrot.lane.b32.xlu0 %v446, 80
  %v449 = vpop.permute.xlu0 %448
  %s451 = scalar_lea.vmem [#allocation5], 12
  %452 = vst.msk [vmem:[%s451] sm:$0x3] %vm249, %v449
  %s453 = scalar_lea.vmem [#allocation2], 4
  %v454 = vld [vmem:[%s453] sm:$0x3]
  %v455 = vsel %vm183, %v381, 0
  %457 = vmatpush.msra.mxu0 0.0
  %458 = vmatpush.msra.mxu0 0.0
  %459 = vmatpush.msra.mxu0 0.0
  %460 = vmatpush.msra.mxu0 0.0
  %461 = vmatpush.msra.mxu0 0.0
  %462 = vmatpush.msra.mxu0 0.0
  %463 = vmatpush.msra.mxu0 0.0
  %464 = vmatpush.msra.mxu0 0.0
  %465 = vmatpush.msra.mxu0 0.0
  %466 = vmatpush.msra.mxu0 0.0
  %467 = vmatpush.msra.mxu0 0.0
  %468 = vmatpush.msra.mxu0 0.0
  %469 = vmatpush.msra.mxu0 0.0
  %470 = vmatpush.msra.mxu0 0.0
  %471 = vmatpush.msra.mxu0 %v112
  %472 = vmatpush.msra.mxu0 %v111
  %473 = vmatmul.f32.gmra.mxu0 %v455
  %v474 = vpop.f32.mrf.mxu0
  %v475 = vadd.f32 0.0, %v474
  %476 = vdwg.mxu0
  %v477 = vadd.f32 %v454, %v475
  %v478 = vxor.u32 %v477, 2147483648
  %v479 = vmul.f32 %v478, 1.442695
  %v480 = vpow.pop %v479
  %v481 = vadd.f32 %v480, 1.0
  %v482 = vrcp.pop %v481
  %v483 = vmul.f32 %v481, %v482
  %v484 = vsub.f32 1.0, %v483
  %v485 = vmul.f32 %v482, %v484
  %v486 = vadd.f32 %v482, %v485
  %vm487 = vweird.f32 %v481
  %vm488 = vweird.f32 %v482
  %vm489 = vmor %vm487, %vm488
  %v490 = vsel %vm489, %v482, %v486
  %v491 = vand.u32 2147483647, %v481
  %vm492 = vcmp.eq.f32.partialorder %v491, 8.507059e+37
  %v493 = vand.u32 %v481, 2147483648
  %v494 = vor.u32 1.1754944e-38, %v493
  %v495 = vsel %vm492, %v494, %v490
  %v496 = vmul.f32 1.0, %v495
  %v497 = vtanh.pop %v477
  %v498 = vmul.f32 %v496, %v372
  %500 = vrot.lane.b32.xlu0 %v497, 96
  %v501 = vpop.permute.xlu0 %500
  %v503 = vmul.f32 %v496, %v501
  %505 = vrot.lane.b32.xlu0 %v503, 16
  %v506 = vpop.permute.xlu0 %505
  %v508 = vadd.f32 %v498, %v506
  %v509 = vtanh.pop %v508
  %511 = vrot.lane.b32.xlu0 %v509, 32
  %v512 = vpop.permute.xlu0 %511
  %v514 = vmul.f32 %v496, %v512
  %516 = vrot.lane.b32.xlu0 %v514, 80
  %v517 = vpop.permute.xlu0 %516
  %s519 = scalar_lea.vmem [#allocation4], 4
  %520 = vst.msk [vmem:[%s519] sm:$0x3] %vm249, %v517
  %s521 = scalar_lea.vmem [#allocation3], 10
  %v522 = vld [vmem:[%s521] sm:$0x3]
  %v523 = vsel %vm183, %v449, 0
  %525 = vmatpush.msra.mxu0 0.0
  %526 = vmatpush.msra.mxu0 0.0
  %527 = vmatpush.msra.mxu0 0.0
  %528 = vmatpush.msra.mxu0 0.0
  %529 = vmatpush.msra.mxu0 0.0
  %530 = vmatpush.msra.mxu0 0.0
  %531 = vmatpush.msra.mxu0 0.0
  %532 = vmatpush.msra.mxu0 0.0
  %533 = vmatpush.msra.mxu0 0.0
  %534 = vmatpush.msra.mxu0 0.0
  %535 = vmatpush.msra.mxu0 0.0
  %536 = vmatpush.msra.mxu0 0.0
  %537 = vmatpush.msra.mxu0 0.0
  %538 = vmatpush.msra.mxu0 0.0
  %539 = vmatpush.msra.mxu0 %v115
  %540 = vmatpush.msra.mxu0 %v114
  %541 = vmatmul.f32.gmra.mxu0 %v523
  %v542 = vpop.f32.mrf.mxu0
  %v543 = vadd.f32 0.0, %v542
  %544 = vdwg.mxu0
  %v545 = vadd.f32 %v522, %v543
  %v546 = vxor.u32 %v545, 2147483648
  %v547 = vmul.f32 %v546, 1.442695
  %v548 = vpow.pop %v547
  %v549 = vadd.f32 %v548, 1.0
  %v550 = vrcp.pop %v549
  %v551 = vmul.f32 %v549, %v550
  %v552 = vsub.f32 1.0, %v551
  %v553 = vmul.f32 %v550, %v552
  %v554 = vadd.f32 %v550, %v553
  %vm555 = vweird.f32 %v549
  %vm556 = vweird.f32 %v550
  %vm557 = vmor %vm555, %vm556
  %v558 = vsel %vm557, %v550, %v554
  %v559 = vand.u32 2147483647, %v549
  %vm560 = vcmp.eq.f32.partialorder %v559, 8.507059e+37
  %v561 = vand.u32 %v549, 2147483648
  %v562 = vor.u32 1.1754944e-38, %v561
  %v563 = vsel %vm560, %v562, %v558
  %v564 = vmul.f32 1.0, %v563
  %v565 = vtanh.pop %v545
  %v566 = vmul.f32 %v564, %v440
  %568 = vrot.lane.b32.xlu0 %v565, 96
  %v569 = vpop.permute.xlu0 %568
  %v571 = vmul.f32 %v564, %v569
  %573 = vrot.lane.b32.xlu0 %v571, 16
  %v574 = vpop.permute.xlu0 %573
  %v576 = vadd.f32 %v566, %v574
  %v577 = vtanh.pop %v576
  %579 = vrot.lane.b32.xlu0 %v577, 32
  %v580 = vpop.permute.xlu0 %579
  %v582 = vmul.f32 %v564, %v580
  %584 = vrot.lane.b32.xlu0 %v582, 80
  %v585 = vpop.permute.xlu0 %584
  %s587 = scalar_lea.vmem [#allocation5], 10
  %588 = vst.msk [vmem:[%s587] sm:$0x3] %vm249, %v585
  %s589 = scalar_lea.vmem [#allocation2], 6
  %v590 = vld [vmem:[%s589] sm:$0x3]
  %v591 = vsel %vm183, %v517, 0
  %593 = vmatpush.msra.mxu0 0.0
  %594 = vmatpush.msra.mxu0 0.0
  %595 = vmatpush.msra.mxu0 0.0
  %596 = vmatpush.msra.mxu0 0.0
  %597 = vmatpush.msra.mxu0 0.0
  %598 = vmatpush.msra.mxu0 0.0
  %599 = vmatpush.msra.mxu0 0.0
  %600 = vmatpush.msra.mxu0 0.0
  %601 = vmatpush.msra.mxu0 0.0
  %602 = vmatpush.msra.mxu0 0.0
  %603 = vmatpush.msra.mxu0 0.0
  %604 = vmatpush.msra.mxu0 0.0
  %605 = vmatpush.msra.mxu0 0.0
  %606 = vmatpush.msra.mxu0 0.0
  %607 = vmatpush.msra.mxu0 %v112
  %608 = vmatpush.msra.mxu0 %v111
  %609 = vmatmul.f32.gmra.mxu0 %v591
  %v610 = vpop.f32.mrf.mxu0
  %v611 = vadd.f32 0.0, %v610
  %612 = vdwg.mxu0
  %v613 = vadd.f32 %v590, %v611
  %v614 = vxor.u32 %v613, 2147483648
  %v615 = vmul.f32 %v614, 1.442695
  %v616 = vpow.pop %v615
  %v617 = vadd.f32 %v616, 1.0
  %v618 = vrcp.pop %v617
  %v619 = vmul.f32 %v617, %v618
  %v620 = vsub.f32 1.0, %v619
  %v621 = vmul.f32 %v618, %v620
  %v622 = vadd.f32 %v618, %v621
  %vm623 = vweird.f32 %v617
  %vm624 = vweird.f32 %v618
  %vm625 = vmor %vm623, %vm624
  %v626 = vsel %vm625, %v618, %v622
  %v627 = vand.u32 2147483647, %v617
  %vm628 = vcmp.eq.f32.partialorder %v627, 8.507059e+37
  %v629 = vand.u32 %v617, 2147483648
  %v630 = vor.u32 1.1754944e-38, %v629
  %v631 = vsel %vm628, %v630, %v626
  %v632 = vmul.f32 1.0, %v631
  %v633 = vtanh.pop %v613
  %v634 = vmul.f32 %v632, %v508
  %636 = vrot.lane.b32.xlu0 %v633, 96
  %v637 = vpop.permute.xlu0 %636
  %v639 = vmul.f32 %v632, %v637
  %641 = vrot.lane.b32.xlu0 %v639, 16
  %v642 = vpop.permute.xlu0 %641
  %v644 = vadd.f32 %v634, %v642
  %v645 = vtanh.pop %v644
  %647 = vrot.lane.b32.xlu0 %v645, 32
  %v648 = vpop.permute.xlu0 %647
  %v650 = vmul.f32 %v632, %v648
  %652 = vrot.lane.b32.xlu0 %v650, 80
  %v653 = vpop.permute.xlu0 %652
  %s655 = scalar_lea.vmem [#allocation4], 6
  %656 = vst.msk [vmem:[%s655] sm:$0x3] %vm249, %v653
  %s657 = scalar_lea.vmem [#allocation3], 8
  %v658 = vld [vmem:[%s657] sm:$0x3]
  %v659 = vsel %vm183, %v585, 0
  %661 = vmatpush.msra.mxu0 0.0
  %662 = vmatpush.msra.mxu0 0.0
  %663 = vmatpush.msra.mxu0 0.0
  %664 = vmatpush.msra.mxu0 0.0
  %665 = vmatpush.msra.mxu0 0.0
  %666 = vmatpush.msra.mxu0 0.0
  %667 = vmatpush.msra.mxu0 0.0
  %668 = vmatpush.msra.mxu0 0.0
  %669 = vmatpush.msra.mxu0 0.0
  %670 = vmatpush.msra.mxu0 0.0
  %671 = vmatpush.msra.mxu0 0.0
  %672 = vmatpush.msra.mxu0 0.0
  %673 = vmatpush.msra.mxu0 0.0
  %674 = vmatpush.msra.mxu0 0.0
  %675 = vmatpush.msra.mxu0 %v115
  %676 = vmatpush.msra.mxu0 %v114
  %677 = vmatmul.f32.gmra.mxu0 %v659
  %v678 = vpop.f32.mrf.mxu0
  %v679 = vadd.f32 0.0, %v678
  %680 = vdwg.mxu0
  %v681 = vadd.f32 %v658, %v679
  %v682 = vxor.u32 %v681, 2147483648
  %v683 = vmul.f32 %v682, 1.442695
  %v684 = vpow.pop %v683
  %v685 = vadd.f32 %v684, 1.0
  %v686 = vrcp.pop %v685
  %v687 = vmul.f32 %v685, %v686
  %v688 = vsub.f32 1.0, %v687
  %v689 = vmul.f32 %v686, %v688
  %v690 = vadd.f32 %v686, %v689
  %vm691 = vweird.f32 %v685
  %vm692 = vweird.f32 %v686
  %vm693 = vmor %vm691, %vm692
  %v694 = vsel %vm693, %v686, %v690
  %v695 = vand.u32 2147483647, %v685
  %vm696 = vcmp.eq.f32.partialorder %v695, 8.507059e+37
  %v697 = vand.u32 %v685, 2147483648
  %v698 = vor.u32 1.1754944e-38, %v697
  %v699 = vsel %vm696, %v698, %v694
  %v700 = vmul.f32 1.0, %v699
  %v701 = vtanh.pop %v681
  %v702 = vmul.f32 %v700, %v576
  %704 = vrot.lane.b32.xlu0 %v701, 96
  %v705 = vpop.permute.xlu0 %704
  %v707 = vmul.f32 %v700, %v705
  %709 = vrot.lane.b32.xlu0 %v707, 16
  %v710 = vpop.permute.xlu0 %709
  %v712 = vadd.f32 %v702, %v710
  %v713 = vtanh.pop %v712
  %715 = vrot.lane.b32.xlu0 %v713, 32
  %v716 = vpop.permute.xlu0 %715
  %v718 = vmul.f32 %v700, %v716
  %720 = vrot.lane.b32.xlu0 %v718, 80
  %v721 = vpop.permute.xlu0 %720
  %s723 = scalar_lea.vmem [#allocation5], 8
  %724 = vst.msk [vmem:[%s723] sm:$0x3] %vm249, %v721
  %s725 = scalar_lea.vmem [#allocation2], 8
  %v726 = vld [vmem:[%s725] sm:$0x3]
  %v727 = vsel %vm183, %v653, 0
  %729 = vmatpush.msra.mxu0 0.0
  %730 = vmatpush.msra.mxu0 0.0
  %731 = vmatpush.msra.mxu0 0.0
  %732 = vmatpush.msra.mxu0 0.0
  %733 = vmatpush.msra.mxu0 0.0
  %734 = vmatpush.msra.mxu0 0.0
  %735 = vmatpush.msra.mxu0 0.0
  %736 = vmatpush.msra.mxu0 0.0
  %737 = vmatpush.msra.mxu0 0.0
  %738 = vmatpush.msra.mxu0 0.0
  %739 = vmatpush.msra.mxu0 0.0
  %740 = vmatpush.msra.mxu0 0.0
  %741 = vmatpush.msra.mxu0 0.0
  %742 = vmatpush.msra.mxu0 0.0
  %743 = vmatpush.msra.mxu0 %v112
  %744 = vmatpush.msra.mxu0 %v111
  %745 = vmatmul.f32.gmra.mxu0 %v727
  %v746 = vpop.f32.mrf.mxu0
  %v747 = vadd.f32 0.0, %v746
  %748 = vdwg.mxu0
  %v749 = vadd.f32 %v726, %v747
  %v750 = vxor.u32 %v749, 2147483648
  %v751 = vmul.f32 %v750, 1.442695
  %v752 = vpow.pop %v751
  %v753 = vadd.f32 %v752, 1.0
  %v754 = vrcp.pop %v753
  %v755 = vmul.f32 %v753, %v754
  %v756 = vsub.f32 1.0, %v755
  %v757 = vmul.f32 %v754, %v756
  %v758 = vadd.f32 %v754, %v757
  %vm759 = vweird.f32 %v753
  %vm760 = vweird.f32 %v754
  %vm761 = vmor %vm759, %vm760
  %v762 = vsel %vm761, %v754, %v758
  %v763 = vand.u32 2147483647, %v753
  %vm764 = vcmp.eq.f32.partialorder %v763, 8.507059e+37
  %v765 = vand.u32 %v753, 2147483648
  %v766 = vor.u32 1.1754944e-38, %v765
  %v767 = vsel %vm764, %v766, %v762
  %v768 = vmul.f32 1.0, %v767
  %v769 = vtanh.pop %v749
  %v770 = vmul.f32 %v768, %v644
  %772 = vrot.lane.b32.xlu0 %v769, 96
  %v773 = vpop.permute.xlu0 %772
  %v775 = vmul.f32 %v768, %v773
  %777 = vrot.lane.b32.xlu0 %v775, 16
  %v778 = vpop.permute.xlu0 %777
  %v780 = vadd.f32 %v770, %v778
  %v781 = vtanh.pop %v780
  %783 = vrot.lane.b32.xlu0 %v781, 32
  %v784 = vpop.permute.xlu0 %783
  %v786 = vmul.f32 %v768, %v784
  %788 = vrot.lane.b32.xlu0 %v786, 80
  %v789 = vpop.permute.xlu0 %788
  %s791 = scalar_lea.vmem [#allocation4], 8
  %792 = vst.msk [vmem:[%s791] sm:$0x3] %vm249, %v789
  %s793 = scalar_lea.vmem [#allocation3], 6
  %v794 = vld [vmem:[%s793] sm:$0x3]
  %v795 = vsel %vm183, %v721, 0
  %797 = vmatpush.msra.mxu0 0.0
  %798 = vmatpush.msra.mxu0 0.0
  %799 = vmatpush.msra.mxu0 0.0
  %800 = vmatpush.msra.mxu0 0.0
  %801 = vmatpush.msra.mxu0 0.0
  %802 = vmatpush.msra.mxu0 0.0
  %803 = vmatpush.msra.mxu0 0.0
  %804 = vmatpush.msra.mxu0 0.0
  %805 = vmatpush.msra.mxu0 0.0
  %806 = vmatpush.msra.mxu0 0.0
  %807 = vmatpush.msra.mxu0 0.0
  %808 = vmatpush.msra.mxu0 0.0
  %809 = vmatpush.msra.mxu0 0.0
  %810 = vmatpush.msra.mxu0 0.0
  %811 = vmatpush.msra.mxu0 %v115
  %812 = vmatpush.msra.mxu0 %v114
  %813 = vmatmul.f32.gmra.mxu0 %v795
  %v814 = vpop.f32.mrf.mxu0
  %v815 = vadd.f32 0.0, %v814
  %816 = vdwg.mxu0
  %v817 = vadd.f32 %v794, %v815
  %v818 = vxor.u32 %v817, 2147483648
  %v819 = vmul.f32 %v818, 1.442695
  %v820 = vpow.pop %v819
  %v821 = vadd.f32 %v820, 1.0
  %v822 = vrcp.pop %v821
  %v823 = vmul.f32 %v821, %v822
  %v824 = vsub.f32 1.0, %v823
  %v825 = vmul.f32 %v822, %v824
  %v826 = vadd.f32 %v822, %v825
  %vm827 = vweird.f32 %v821
  %vm828 = vweird.f32 %v822
  %vm829 = vmor %vm827, %vm828
  %v830 = vsel %vm829, %v822, %v826
  %v831 = vand.u32 2147483647, %v821
  %vm832 = vcmp.eq.f32.partialorder %v831, 8.507059e+37
  %v833 = vand.u32 %v821, 2147483648
  %v834 = vor.u32 1.1754944e-38, %v833
  %v835 = vsel %vm832, %v834, %v830
  %v836 = vmul.f32 1.0, %v835
  %v837 = vtanh.pop %v817
  %v838 = vmul.f32 %v836, %v712
  %840 = vrot.lane.b32.xlu0 %v837, 96
  %v841 = vpop.permute.xlu0 %840
  %v843 = vmul.f32 %v836, %v841
  %845 = vrot.lane.b32.xlu0 %v843, 16
  %v846 = vpop.permute.xlu0 %845
  %v848 = vadd.f32 %v838, %v846
  %v849 = vtanh.pop %v848
  %851 = vrot.lane.b32.xlu0 %v849, 32
  %v852 = vpop.permute.xlu0 %851
  %v854 = vmul.f32 %v836, %v852
  %856 = vrot.lane.b32.xlu0 %v854, 80
  %v857 = vpop.permute.xlu0 %856
  %s859 = scalar_lea.vmem [#allocation5], 6
  %860 = vst.msk [vmem:[%s859] sm:$0x3] %vm249, %v857
  %s861 = scalar_lea.vmem [#allocation2], 10
  %v862 = vld [vmem:[%s861] sm:$0x3]
  %v863 = vsel %vm183, %v789, 0
  %865 = vmatpush.msra.mxu0 0.0
  %866 = vmatpush.msra.mxu0 0.0
  %867 = vmatpush.msra.mxu0 0.0
  %868 = vmatpush.msra.mxu0 0.0
  %869 = vmatpush.msra.mxu0 0.0
  %870 = vmatpush.msra.mxu0 0.0
  %871 = vmatpush.msra.mxu0 0.0
  %872 = vmatpush.msra.mxu0 0.0
  %873 = vmatpush.msra.mxu0 0.0
  %874 = vmatpush.msra.mxu0 0.0
  %875 = vmatpush.msra.mxu0 0.0
  %876 = vmatpush.msra.mxu0 0.0
  %877 = vmatpush.msra.mxu0 0.0
  %878 = vmatpush.msra.mxu0 0.0
  %879 = vmatpush.msra.mxu0 %v112
  %880 = vmatpush.msra.mxu0 %v111
  %881 = vmatmul.f32.gmra.mxu0 %v863
  %v882 = vpop.f32.mrf.mxu0
  %v883 = vadd.f32 0.0, %v882
  %884 = vdwg.mxu0
  %v885 = vadd.f32 %v862, %v883
  %v886 = vxor.u32 %v885, 2147483648
  %v887 = vmul.f32 %v886, 1.442695
  %v888 = vpow.pop %v887
  %v889 = vadd.f32 %v888, 1.0
  %v890 = vrcp.pop %v889
  %v891 = vmul.f32 %v889, %v890
  %v892 = vsub.f32 1.0, %v891
  %v893 = vmul.f32 %v890, %v892
  %v894 = vadd.f32 %v890, %v893
  %vm895 = vweird.f32 %v889
  %vm896 = vweird.f32 %v890
  %vm897 = vmor %vm895, %vm896
  %v898 = vsel %vm897, %v890, %v894
  %v899 = vand.u32 2147483647, %v889
  %vm900 = vcmp.eq.f32.partialorder %v899, 8.507059e+37
  %v901 = vand.u32 %v889, 2147483648
  %v902 = vor.u32 1.1754944e-38, %v901
  %v903 = vsel %vm900, %v902, %v898
  %v904 = vmul.f32 1.0, %v903
  %v905 = vtanh.pop %v885
  %v906 = vmul.f32 %v904, %v780
  %908 = vrot.lane.b32.xlu0 %v905, 96
  %v909 = vpop.permute.xlu0 %908
  %v911 = vmul.f32 %v904, %v909
  %913 = vrot.lane.b32.xlu0 %v911, 16
  %v914 = vpop.permute.xlu0 %913
  %v916 = vadd.f32 %v906, %v914
  %v917 = vtanh.pop %v916
  %919 = vrot.lane.b32.xlu0 %v917, 32
  %v920 = vpop.permute.xlu0 %919
  %v922 = vmul.f32 %v904, %v920
  %924 = vrot.lane.b32.xlu0 %v922, 80
  %v925 = vpop.permute.xlu0 %924
  %s927 = scalar_lea.vmem [#allocation4], 10
  %928 = vst.msk [vmem:[%s927] sm:$0x3] %vm249, %v925
  %s929 = scalar_lea.vmem [#allocation3], 4
  %v930 = vld [vmem:[%s929] sm:$0x3]
  %v931 = vsel %vm183, %v857, 0
  %933 = vmatpush.msra.mxu0 0.0
  %934 = vmatpush.msra.mxu0 0.0
  %935 = vmatpush.msra.mxu0 0.0
  %936 = vmatpush.msra.mxu0 0.0
  %937 = vmatpush.msra.mxu0 0.0
  %938 = vmatpush.msra.mxu0 0.0
  %939 = vmatpush.msra.mxu0 0.0
  %940 = vmatpush.msra.mxu0 0.0
  %941 = vmatpush.msra.mxu0 0.0
  %942 = vmatpush.msra.mxu0 0.0
  %943 = vmatpush.msra.mxu0 0.0
  %944 = vmatpush.msra.mxu0 0.0
  %945 = vmatpush.msra.mxu0 0.0
  %946 = vmatpush.msra.mxu0 0.0
  %947 = vmatpush.msra.mxu0 %v115
  %948 = vmatpush.msra.mxu0 %v114
  %949 = vmatmul.f32.gmra.mxu0 %v931
  %v950 = vpop.f32.mrf.mxu0
  %v951 = vadd.f32 0.0, %v950
  %952 = vdwg.mxu0
  %v953 = vadd.f32 %v930, %v951
  %v954 = vxor.u32 %v953, 2147483648
  %v955 = vmul.f32 %v954, 1.442695
  %v956 = vpow.pop %v955
  %v957 = vadd.f32 %v956, 1.0
  %v958 = vrcp.pop %v957
  %v959 = vmul.f32 %v957, %v958
  %v960 = vsub.f32 1.0, %v959
  %v961 = vmul.f32 %v958, %v960
  %v962 = vadd.f32 %v958, %v961
  %vm963 = vweird.f32 %v957
  %vm964 = vweird.f32 %v958
  %vm965 = vmor %vm963, %vm964
  %v966 = vsel %vm965, %v958, %v962
  %v967 = vand.u32 2147483647, %v957
  %vm968 = vcmp.eq.f32.partialorder %v967, 8.507059e+37
  %v969 = vand.u32 %v957, 2147483648
  %v970 = vor.u32 1.1754944e-38, %v969
  %v971 = vsel %vm968, %v970, %v966
  %v972 = vmul.f32 1.0, %v971
  %v973 = vtanh.pop %v953
  %v974 = vmul.f32 %v972, %v848
  %976 = vrot.lane.b32.xlu0 %v973, 96
  %v977 = vpop.permute.xlu0 %976
  %v979 = vmul.f32 %v972, %v977
  %981 = vrot.lane.b32.xlu0 %v979, 16
  %v982 = vpop.permute.xlu0 %981
  %v984 = vadd.f32 %v974, %v982
  %v985 = vtanh.pop %v984
  %987 = vrot.lane.b32.xlu0 %v985, 32
  %v988 = vpop.permute.xlu0 %987
  %v990 = vmul.f32 %v972, %v988
  %992 = vrot.lane.b32.xlu0 %v990, 80
  %v993 = vpop.permute.xlu0 %992
  %s995 = scalar_lea.vmem [#allocation5], 4
  %996 = vst.msk [vmem:[%s995] sm:$0x3] %vm249, %v993
  %s997 = scalar_lea.vmem [#allocation2], 12
  %v998 = vld [vmem:[%s997] sm:$0x3]
  %v999 = vsel %vm183, %v925, 0
  %1001 = vmatpush.msra.mxu0 0.0
  %1002 = vmatpush.msra.mxu0 0.0
  %1003 = vmatpush.msra.mxu0 0.0
  %1004 = vmatpush.msra.mxu0 0.0
  %1005 = vmatpush.msra.mxu0 0.0
  %1006 = vmatpush.msra.mxu0 0.0
  %1007 = vmatpush.msra.mxu0 0.0
  %1008 = vmatpush.msra.mxu0 0.0
  %1009 = vmatpush.msra.mxu0 0.0
  %1010 = vmatpush.msra.mxu0 0.0
  %1011 = vmatpush.msra.mxu0 0.0
  %1012 = vmatpush.msra.mxu0 0.0
  %1013 = vmatpush.msra.mxu0 0.0
  %1014 = vmatpush.msra.mxu0 0.0
  %1015 = vmatpush.msra.mxu0 %v112
  %1016 = vmatpush.msra.mxu0 %v111
  %1017 = vmatmul.f32.gmra.mxu0 %v999
  %v1018 = vpop.f32.mrf.mxu0
  %v1019 = vadd.f32 0.0, %v1018
  %1020 = vdwg.mxu0
  %v1021 = vadd.f32 %v998, %v1019
  %v1022 = vxor.u32 %v1021, 2147483648
  %v1023 = vmul.f32 %v1022, 1.442695
  %v1024 = vpow.pop %v1023
  %v1025 = vadd.f32 %v1024, 1.0
  %v1026 = vrcp.pop %v1025
  %v1027 = vmul.f32 %v1025, %v1026
  %v1028 = vsub.f32 1.0, %v1027
  %v1029 = vmul.f32 %v1026, %v1028
  %v1030 = vadd.f32 %v1026, %v1029
  %vm1031 = vweird.f32 %v1025
  %vm1032 = vweird.f32 %v1026
  %vm1033 = vmor %vm1031, %vm1032
  %v1034 = vsel %vm1033, %v1026, %v1030
  %v1035 = vand.u32 2147483647, %v1025
  %vm1036 = vcmp.eq.f32.partialorder %v1035, 8.507059e+37
  %v1037 = vand.u32 %v1025, 2147483648
  %v1038 = vor.u32 1.1754944e-38, %v1037
  %v1039 = vsel %vm1036, %v1038, %v1034
  %v1040 = vmul.f32 1.0, %v1039
  %v1041 = vtanh.pop %v1021
  %v1042 = vmul.f32 %v1040, %v916
  %1044 = vrot.lane.b32.xlu0 %v1041, 96
  %v1045 = vpop.permute.xlu0 %1044
  %v1047 = vmul.f32 %v1040, %v1045
  %1049 = vrot.lane.b32.xlu0 %v1047, 16
  %v1050 = vpop.permute.xlu0 %1049
  %v1052 = vadd.f32 %v1042, %v1050
  %v1053 = vtanh.pop %v1052
  %1055 = vrot.lane.b32.xlu0 %v1053, 32
  %v1056 = vpop.permute.xlu0 %1055
  %v1058 = vmul.f32 %v1040, %v1056
  %1060 = vrot.lane.b32.xlu0 %v1058, 80
  %v1061 = vpop.permute.xlu0 %1060
  %s1063 = scalar_lea.vmem [#allocation4], 12
  %1064 = vst.msk [vmem:[%s1063] sm:$0x3] %vm249, %v1061
  %s1065 = scalar_lea.vmem [#allocation3], 2
  %v1066 = vld [vmem:[%s1065] sm:$0x3]
  %v1067 = vsel %vm183, %v993, 0
  %1069 = vmatpush.msra.mxu0 0.0
  %1070 = vmatpush.msra.mxu0 0.0
  %1071 = vmatpush.msra.mxu0 0.0
  %1072 = vmatpush.msra.mxu0 0.0
  %1073 = vmatpush.msra.mxu0 0.0
  %1074 = vmatpush.msra.mxu0 0.0
  %1075 = vmatpush.msra.mxu0 0.0
  %1076 = vmatpush.msra.mxu0 0.0
  %1077 = vmatpush.msra.mxu0 0.0
  %1078 = vmatpush.msra.mxu0 0.0
  %1079 = vmatpush.msra.mxu0 0.0
  %1080 = vmatpush.msra.mxu0 0.0
  %1081 = vmatpush.msra.mxu0 0.0
  %1082 = vmatpush.msra.mxu0 0.0
  %1083 = vmatpush.msra.mxu0 %v115
  %1084 = vmatpush.msra.mxu0 %v114
  %1085 = vmatmul.f32.gmra.mxu0 %v1067
  %v1086 = vpop.f32.mrf.mxu0
  %v1087 = vadd.f32 0.0, %v1086
  %1088 = vdwg.mxu0
  %v1089 = vadd.f32 %v1066, %v1087
  %v1090 = vxor.u32 %v1089, 2147483648
  %v1091 = vmul.f32 %v1090, 1.442695
  %v1092 = vpow.pop %v1091
  %v1093 = vadd.f32 %v1092, 1.0
  %v1094 = vrcp.pop %v1093
  %v1095 = vmul.f32 %v1093, %v1094
  %v1096 = vsub.f32 1.0, %v1095
  %v1097 = vmul.f32 %v1094, %v1096
  %v1098 = vadd.f32 %v1094, %v1097
  %vm1099 = vweird.f32 %v1093
  %vm1100 = vweird.f32 %v1094
  %vm1101 = vmor %vm1099, %vm1100
  %v1102 = vsel %vm1101, %v1094, %v1098
  %v1103 = vand.u32 2147483647, %v1093
  %vm1104 = vcmp.eq.f32.partialorder %v1103, 8.507059e+37
  %v1105 = vand.u32 %v1093, 2147483648
  %v1106 = vor.u32 1.1754944e-38, %v1105
  %v1107 = vsel %vm1104, %v1106, %v1102
  %v1108 = vmul.f32 1.0, %v1107
  %v1109 = vtanh.pop %v1089
  %v1110 = vmul.f32 %v1108, %v984
  %1112 = vrot.lane.b32.xlu0 %v1109, 96
  %v1113 = vpop.permute.xlu0 %1112
  %v1115 = vmul.f32 %v1108, %v1113
  %1117 = vrot.lane.b32.xlu0 %v1115, 16
  %v1118 = vpop.permute.xlu0 %1117
  %v1120 = vadd.f32 %v1110, %v1118
  %v1121 = vtanh.pop %v1120
  %1123 = vrot.lane.b32.xlu0 %v1121, 32
  %v1124 = vpop.permute.xlu0 %1123
  %v1126 = vmul.f32 %v1108, %v1124
  %1128 = vrot.lane.b32.xlu0 %v1126, 80
  %v1129 = vpop.permute.xlu0 %1128
  %s1131 = scalar_lea.vmem [#allocation5], 2
  %1132 = vst.msk [vmem:[%s1131] sm:$0x3] %vm249, %v1129
  %s1133 = scalar_lea.vmem [#allocation2], 14
  %v1134 = vld [vmem:[%s1133] sm:$0x3]
  %v1135 = vsel %vm183, %v1061, 0
  %1137 = vmatpush.msra.mxu0 0.0
  %1138 = vmatpush.msra.mxu0 0.0
  %1139 = vmatpush.msra.mxu0 0.0
  %1140 = vmatpush.msra.mxu0 0.0
  %1141 = vmatpush.msra.mxu0 0.0
  %1142 = vmatpush.msra.mxu0 0.0
  %1143 = vmatpush.msra.mxu0 0.0
  %1144 = vmatpush.msra.mxu0 0.0
  %1145 = vmatpush.msra.mxu0 0.0
  %1146 = vmatpush.msra.mxu0 0.0
  %1147 = vmatpush.msra.mxu0 0.0
  %1148 = vmatpush.msra.mxu0 0.0
  %1149 = vmatpush.msra.mxu0 0.0
  %1150 = vmatpush.msra.mxu0 0.0
  %1151 = vmatpush.msra.mxu0 %v112
  %1152 = vmatpush.msra.mxu0 %v111
  %1153 = vmatmul.f32.gmra.mxu0 %v1135
  %v1154 = vpop.f32.mrf.mxu0
  %v1155 = vadd.f32 0.0, %v1154
  %1156 = vdwg.mxu0
  %v1157 = vadd.f32 %v1134, %v1155
  %v1158 = vxor.u32 %v1157, 2147483648
  %v1159 = vmul.f32 %v1158, 1.442695
  %v1160 = vpow.pop %v1159
  %v1161 = vadd.f32 %v1160, 1.0
  %v1162 = vrcp.pop %v1161
  %v1163 = vmul.f32 %v1161, %v1162
  %v1164 = vsub.f32 1.0, %v1163
  %v1165 = vmul.f32 %v1162, %v1164
  %v1166 = vadd.f32 %v1162, %v1165
  %vm1167 = vweird.f32 %v1161
  %vm1168 = vweird.f32 %v1162
  %vm1169 = vmor %vm1167, %vm1168
  %v1170 = vsel %vm1169, %v1162, %v1166
  %v1171 = vand.u32 2147483647, %v1161
  %vm1172 = vcmp.eq.f32.partialorder %v1171, 8.507059e+37
  %v1173 = vand.u32 %v1161, 2147483648
  %v1174 = vor.u32 1.1754944e-38, %v1173
  %v1175 = vsel %vm1172, %v1174, %v1170
  %v1176 = vmul.f32 1.0, %v1175
  %v1177 = vtanh.pop %v1157
  %v1178 = vmul.f32 %v1176, %v1052
  %1180 = vrot.lane.b32.xlu0 %v1177, 96
  %v1181 = vpop.permute.xlu0 %1180
  %v1183 = vmul.f32 %v1176, %v1181
  %1185 = vrot.lane.b32.xlu0 %v1183, 16
  %v1186 = vpop.permute.xlu0 %1185
  %v1188 = vadd.f32 %v1178, %v1186
  %v1189 = vtanh.pop %v1188
  %1191 = vrot.lane.b32.xlu0 %v1189, 32
  %v1192 = vpop.permute.xlu0 %1191
  %v1194 = vmul.f32 %v1176, %v1192
  %1196 = vrot.lane.b32.xlu0 %v1194, 80
  %v1197 = vpop.permute.xlu0 %1196
  %s1199 = scalar_lea.vmem [#allocation4], 14
  %1200 = vst.msk [vmem:[%s1199] sm:$0x3] %vm249, %v1197
  %v1201 = vld [vmem:[#allocation3] sm:$0x3]
  %v1202 = vsel %vm183, %v1129, 0
  %1204 = vmatpush.msra.mxu0 0.0
  %1205 = vmatpush.msra.mxu0 0.0
  %1206 = vmatpush.msra.mxu0 0.0
  %1207 = vmatpush.msra.mxu0 0.0
  %1208 = vmatpush.msra.mxu0 0.0
  %1209 = vmatpush.msra.mxu0 0.0
  %1210 = vmatpush.msra.mxu0 0.0
  %1211 = vmatpush.msra.mxu0 0.0
  %1212 = vmatpush.msra.mxu0 0.0
  %1213 = vmatpush.msra.mxu0 0.0
  %1214 = vmatpush.msra.mxu0 0.0
  %1215 = vmatpush.msra.mxu0 0.0
  %1216 = vmatpush.msra.mxu0 0.0
  %1217 = vmatpush.msra.mxu0 0.0
  %1218 = vmatpush.msra.mxu0 %v115
  %1219 = vmatpush.msra.mxu0 %v114
  %1220 = vmatmul.f32.gmra.mxu0 %v1202
  %v1221 = vpop.f32.mrf.mxu0
  %v1222 = vadd.f32 0.0, %v1221
  %1223 = vdwg.mxu0
  %v1224 = vadd.f32 %v1201, %v1222
  %v1225 = vxor.u32 %v1224, 2147483648
  %v1226 = vmul.f32 %v1225, 1.442695
  %v1227 = vpow.pop %v1226
  %v1228 = vadd.f32 %v1227, 1.0
  %v1229 = vrcp.pop %v1228
  %v1230 = vmul.f32 %v1228, %v1229
  %v1231 = vsub.f32 1.0, %v1230
  %v1232 = vmul.f32 %v1229, %v1231
  %v1233 = vadd.f32 %v1229, %v1232
  %vm1234 = vweird.f32 %v1228
  %vm1235 = vweird.f32 %v1229
  %vm1236 = vmor %vm1234, %vm1235
  %v1237 = vsel %vm1236, %v1229, %v1233
  %v1238 = vand.u32 2147483647, %v1228
  %vm1239 = vcmp.eq.f32.partialorder %v1238, 8.507059e+37
  %v1240 = vand.u32 %v1228, 2147483648
  %v1241 = vor.u32 1.1754944e-38, %v1240
  %v1242 = vsel %vm1239, %v1241, %v1237
  %v1243 = vmul.f32 1.0, %v1242
  %v1244 = vtanh.pop %v1224
  %v1245 = vmul.f32 %v1243, %v1120
  %1247 = vrot.lane.b32.xlu0 %v1244, 96
  %v1248 = vpop.permute.xlu0 %1247
  %v1250 = vmul.f32 %v1243, %v1248
  %1252 = vrot.lane.b32.xlu0 %v1250, 16
  %v1253 = vpop.permute.xlu0 %1252
  %v1255 = vadd.f32 %v1245, %v1253
  %v1256 = vtanh.pop %v1255
  %1258 = vrot.lane.b32.xlu0 %v1256, 32
  %v1259 = vpop.permute.xlu0 %1258
  %v1261 = vmul.f32 %v1243, %v1259
  %1263 = vrot.lane.b32.xlu0 %v1261, 80
  %v1264 = vpop.permute.xlu0 %1263
  %1266 = vst.msk [vmem:[#allocation5] sm:$0x3] %vm249, %v1264
  %v1267 = vld [vmem:[#allocation4] sm:$0xff]
  %v1268 = vld [vmem:[#allocation4 + $0x8] sm:$0xff]
  %v1269 = vld [vmem:[#allocation5] sm:$0xff]
  %v1270 = vld [vmem:[#allocation5 + $0x8] sm:$0xff]
  %1273 = vrot.lane.b32.xlu0 %v1269, 16
  %v1274 = vpop.permute.xlu0 %1273
  %1275 = vrot.lane.b32.xlu0 %v1270, 16
  %v1276 = vpop.permute.xlu0 %1275
  %v1279 = vsel %vm183, %v1267, %v1274
  %v1280 = vsel %vm183, %v1268, %v1276
  %s1281 = scalar_lea.vmem %s6, 64
  %v1282 = vld [vmem:[%s1281] sm:$0xff]
  %v1283 = vld [vmem:[%s1281 + $0x8] sm:$0xff]
  %v1284 = vld [vmem:[%s1281 + $0x10] sm:$0xff]
  %v1285 = vld [vmem:[%s1281 + $0x18] sm:$0xff]
  %s1286 = scalar_lea.vmem %s6, 96
  %v1287 = vld [vmem:[%s1286] sm:$0xff]
  %v1288 = vld [vmem:[%s1286 + $0x8] sm:$0xff]
  %v1289 = vld [vmem:[%s1286 + $0x10] sm:$0xff]
  %v1290 = vld [vmem:[%s1286 + $0x18] sm:$0xff]
  %s1291 = scalar_lea.vmem %s7, 32
  %v1292 = vld [vmem:[%s1291] sm:$0xff]
  %v1293 = vld [vmem:[%s1291 + $0x8] sm:$0xff]
  %s1294 = scalar_lea.vmem %s7, 48
  %v1295 = vld [vmem:[%s1294] sm:$0xff]
  %v1296 = vld [vmem:[%s1294 + $0x8] sm:$0xff]
  %s1297 = scalar_lea.vmem %s8, 2
  %v1298 = vld [vmem:[%s1297] sm:$0x1]
  %s1299 = scalar_lea.vmem %s8, 3
  %v1300 = vld [vmem:[%s1299] sm:$0x1]
  %v1302 = vperm.slane %v1298, 0
  %v1305 = vsel %vm99, %v1279, 0
  %v1308 = vsel %vm99, %v1280, 0
  %1310 = vmatpush.msra.mxu0 0.0
  %1311 = vmatpush.msra.mxu0 0.0
  %1312 = vmatpush.msra.mxu0 0.0
  %1313 = vmatpush.msra.mxu0 0.0
  %1314 = vmatpush.msra.mxu0 0.0
  %1315 = vmatpush.msra.mxu0 0.0
  %1316 = vmatpush.msra.mxu0 0.0
  %1317 = vmatpush.msra.mxu0 0.0
  %1318 = vmatpush.msra.mxu0 0.0
  %1319 = vmatpush.msra.mxu0 0.0
  %1320 = vmatpush.msra.mxu0 0.0
  %1321 = vmatpush.msra.mxu0 0.0
  %1322 = vmatpush.msra.mxu0 %v1285
  %1323 = vmatpush.msra.mxu0 %v1284
  %1324 = vmatpush.msra.mxu0 %v1283
  %1325 = vmatpush.msra.mxu0 %v1282
  %1326 = vmatmul.f32.gmra.mxu0 %v1305
  %v1327 = vpop.f32.mrf.mxu0
  %v1328 = vadd.f32 %v1302, %v1327
  %1329 = vmatmul.f32.gmra.mxu0 %v1308
  %v1330 = vpop.f32.mrf.mxu0
  %v1331 = vadd.f32 %v1302, %v1330
  %1332 = vdwg.mxu0
  %1333 = vst.msk [vmem:[#allocation2] sm:$0xff] %vm151, %v1328
  %1334 = vst.msk [vmem:[#allocation2 + $0x8] sm:$0xff] %vm151, %v1331
  %v1336 = vperm.slane %v1300, 0
  %1338 = vmatpush.msra.mxu0 0.0
  %1339 = vmatpush.msra.mxu0 0.0
  %1340 = vmatpush.msra.mxu0 0.0
  %1341 = vmatpush.msra.mxu0 0.0
  %1342 = vmatpush.msra.mxu0 0.0
  %1343 = vmatpush.msra.mxu0 0.0
  %1344 = vmatpush.msra.mxu0 0.0
  %1345 = vmatpush.msra.mxu0 0.0
  %1346 = vmatpush.msra.mxu0 0.0
  %1347 = vmatpush.msra.mxu0 0.0
  %1348 = vmatpush.msra.mxu0 0.0
  %1349 = vmatpush.msra.mxu0 0.0
  %1350 = vmatpush.msra.mxu0 %v1290
  %1351 = vmatpush.msra.mxu0 %v1289
  %1352 = vmatpush.msra.mxu0 %v1288
  %1353 = vmatpush.msra.mxu0 %v1287
  %1354 = vmatmul.f32.gmra.mxu0 %v1305
  %v1355 = vpop.f32.mrf.mxu0
  %v1356 = vadd.f32 %v1336, %v1355
  %1357 = vmatmul.f32.gmra.mxu0 %v1308
  %v1358 = vpop.f32.mrf.mxu0
  %v1359 = vadd.f32 %v1336, %v1358
  %1360 = vdwg.mxu0
  %1361 = vst.msk [vmem:[#allocation3] sm:$0xff] %vm151, %v1356
  %1362 = vst.msk [vmem:[#allocation3 + $0x8] sm:$0xff] %vm151, %v1359
  %v1363 = vld [vmem:[#allocation2] sm:$0x3]
  %1364 = vmatpush.msra.mxu0 0.0
  %1365 = vmatpush.msra.mxu0 0.0
  %1366 = vmatpush.msra.mxu0 0.0
  %1367 = vmatpush.msra.mxu0 0.0
  %1368 = vmatpush.msra.mxu0 0.0
  %1369 = vmatpush.msra.mxu0 0.0
  %1370 = vmatpush.msra.mxu0 0.0
  %1371 = vmatpush.msra.mxu0 0.0
  %1372 = vmatpush.msra.mxu0 0.0
  %1373 = vmatpush.msra.mxu0 0.0
  %1374 = vmatpush.msra.mxu0 0.0
  %1375 = vmatpush.msra.mxu0 0.0
  %1376 = vmatpush.msra.mxu0 0.0
  %1377 = vmatpush.msra.mxu0 0.0
  %1378 = vmatpush.msra.mxu0 %v1293
  %1379 = vmatpush.msra.mxu0 %v1292
  %1380 = vmatmul.f32.gmra.mxu0 %v185
  %v1381 = vpop.f32.mrf.mxu0
  %v1382 = vadd.f32 0.0, %v1381
  %1383 = vdwg.mxu0
  %v1384 = vadd.f32 %v1363, %v1382
  %v1385 = vxor.u32 %v1384, 2147483648
  %v1386 = vmul.f32 %v1385, 1.442695
  %v1387 = vpow.pop %v1386
  %v1388 = vadd.f32 %v1387, 1.0
  %v1389 = vrcp.pop %v1388
  %v1390 = vmul.f32 %v1388, %v1389
  %v1391 = vsub.f32 1.0, %v1390
  %v1392 = vmul.f32 %v1389, %v1391
  %v1393 = vadd.f32 %v1389, %v1392
  %vm1394 = vweird.f32 %v1388
  %vm1395 = vweird.f32 %v1389
  %vm1396 = vmor %vm1394, %vm1395
  %v1397 = vsel %vm1396, %v1389, %v1393
  %v1398 = vand.u32 2147483647, %v1388
  %vm1399 = vcmp.eq.f32.partialorder %v1398, 8.507059e+37
  %v1400 = vand.u32 %v1388, 2147483648
  %v1401 = vor.u32 1.1754944e-38, %v1400
  %v1402 = vsel %vm1399, %v1401, %v1397
  %v1403 = vmul.f32 1.0, %v1402
  %v1404 = vtanh.pop %v1384
  %v1405 = vmul.f32 %v1403, 0.0
  %1407 = vrot.lane.b32.xlu0 %v1404, 96
  %v1408 = vpop.permute.xlu0 %1407
  %v1410 = vmul.f32 %v1403, %v1408
  %1412 = vrot.lane.b32.xlu0 %v1410, 16
  %v1413 = vpop.permute.xlu0 %1412
  %v1415 = vadd.f32 %v1405, %v1413
  %v1416 = vtanh.pop %v1415
  %1418 = vrot.lane.b32.xlu0 %v1416, 32
  %v1419 = vpop.permute.xlu0 %1418
  %v1421 = vmul.f32 %v1403, %v1419
  %1423 = vrot.lane.b32.xlu0 %v1421, 80
  %v1424 = vpop.permute.xlu0 %1423
  %1426 = vst.msk [vmem:[#allocation4] sm:$0x3] %vm249, %v1424
  %v1427 = vld [vmem:[%s251] sm:$0x3]
  %1428 = vmatpush.msra.mxu0 0.0
  %1429 = vmatpush.msra.mxu0 0.0
  %1430 = vmatpush.msra.mxu0 0.0
  %1431 = vmatpush.msra.mxu0 0.0
  %1432 = vmatpush.msra.mxu0 0.0
  %1433 = vmatpush.msra.mxu0 0.0
  %1434 = vmatpush.msra.mxu0 0.0
  %1435 = vmatpush.msra.mxu0 0.0
  %1436 = vmatpush.msra.mxu0 0.0
  %1437 = vmatpush.msra.mxu0 0.0
  %1438 = vmatpush.msra.mxu0 0.0
  %1439 = vmatpush.msra.mxu0 0.0
  %1440 = vmatpush.msra.mxu0 0.0
  %1441 = vmatpush.msra.mxu0 0.0
  %1442 = vmatpush.msra.mxu0 %v1296
  %1443 = vmatpush.msra.mxu0 %v1295
  %1444 = vmatmul.f32.gmra.mxu0 %v185
  %v1445 = vpop.f32.mrf.mxu0
  %v1446 = vadd.f32 0.0, %v1445
  %1447 = vdwg.mxu0
  %v1448 = vadd.f32 %v1427, %v1446
  %v1449 = vxor.u32 %v1448, 2147483648
  %v1450 = vmul.f32 %v1449, 1.442695
  %v1451 = vpow.pop %v1450
  %v1452 = vadd.f32 %v1451, 1.0
  %v1453 = vrcp.pop %v1452
  %v1454 = vmul.f32 %v1452, %v1453
  %v1455 = vsub.f32 1.0, %v1454
  %v1456 = vmul.f32 %v1453, %v1455
  %v1457 = vadd.f32 %v1453, %v1456
  %vm1458 = vweird.f32 %v1452
  %vm1459 = vweird.f32 %v1453
  %vm1460 = vmor %vm1458, %vm1459
  %v1461 = vsel %vm1460, %v1453, %v1457
  %v1462 = vand.u32 2147483647, %v1452
  %vm1463 = vcmp.eq.f32.partialorder %v1462, 8.507059e+37
  %v1464 = vand.u32 %v1452, 2147483648
  %v1465 = vor.u32 1.1754944e-38, %v1464
  %v1466 = vsel %vm1463, %v1465, %v1461
  %v1467 = vmul.f32 1.0, %v1466
  %v1468 = vtanh.pop %v1448
  %v1469 = vmul.f32 %v1467, 0.0
  %1471 = vrot.lane.b32.xlu0 %v1468, 96
  %v1472 = vpop.permute.xlu0 %1471
  %v1474 = vmul.f32 %v1467, %v1472
  %1476 = vrot.lane.b32.xlu0 %v1474, 16
  %v1477 = vpop.permute.xlu0 %1476
  %v1479 = vadd.f32 %v1469, %v1477
  %v1480 = vtanh.pop %v1479
  %1482 = vrot.lane.b32.xlu0 %v1480, 32
  %v1483 = vpop.permute.xlu0 %1482
  %v1485 = vmul.f32 %v1467, %v1483
  %1487 = vrot.lane.b32.xlu0 %v1485, 80
  %v1488 = vpop.permute.xlu0 %1487
  %1490 = vst.msk [vmem:[%s315] sm:$0x3] %vm249, %v1488
  %v1491 = vld [vmem:[%s317] sm:$0x3]
  %v1492 = vsel %vm183, %v1424, 0
  %1494 = vmatpush.msra.mxu0 0.0
  %1495 = vmatpush.msra.mxu0 0.0
  %1496 = vmatpush.msra.mxu0 0.0
  %1497 = vmatpush.msra.mxu0 0.0
  %1498 = vmatpush.msra.mxu0 0.0
  %1499 = vmatpush.msra.mxu0 0.0
  %1500 = vmatpush.msra.mxu0 0.0
  %1501 = vmatpush.msra.mxu0 0.0
  %1502 = vmatpush.msra.mxu0 0.0
  %1503 = vmatpush.msra.mxu0 0.0
  %1504 = vmatpush.msra.mxu0 0.0
  %1505 = vmatpush.msra.mxu0 0.0
  %1506 = vmatpush.msra.mxu0 0.0
  %1507 = vmatpush.msra.mxu0 0.0
  %1508 = vmatpush.msra.mxu0 %v1293
  %1509 = vmatpush.msra.mxu0 %v1292
  %1510 = vmatmul.f32.gmra.mxu0 %v1492
  %v1511 = vpop.f32.mrf.mxu0
  %v1512 = vadd.f32 0.0, %v1511
  %1513 = vdwg.mxu0
  %v1514 = vadd.f32 %v1491, %v1512
  %v1515 = vxor.u32 %v1514, 2147483648
  %v1516 = vmul.f32 %v1515, 1.442695
  %v1517 = vpow.pop %v1516
  %v1518 = vadd.f32 %v1517, 1.0
  %v1519 = vrcp.pop %v1518
  %v1520 = vmul.f32 %v1518, %v1519
  %v1521 = vsub.f32 1.0, %v1520
  %v1522 = vmul.f32 %v1519, %v1521
  %v1523 = vadd.f32 %v1519, %v1522
  %vm1524 = vweird.f32 %v1518
  %vm1525 = vweird.f32 %v1519
  %vm1526 = vmor %vm1524, %vm1525
  %v1527 = vsel %vm1526, %v1519, %v1523
  %v1528 = vand.u32 2147483647, %v1518
  %vm1529 = vcmp.eq.f32.partialorder %v1528, 8.507059e+37
  %v1530 = vand.u32 %v1518, 2147483648
  %v1531 = vor.u32 1.1754944e-38, %v1530
  %v1532 = vsel %vm1529, %v1531, %v1527
  %v1533 = vmul.f32 1.0, %v1532
  %v1534 = vtanh.pop %v1514
  %v1535 = vmul.f32 %v1533, %v1415
  %1537 = vrot.lane.b32.xlu0 %v1534, 96
  %v1538 = vpop.permute.xlu0 %1537
  %v1540 = vmul.f32 %v1533, %v1538
  %1542 = vrot.lane.b32.xlu0 %v1540, 16
  %v1543 = vpop.permute.xlu0 %1542
  %v1545 = vadd.f32 %v1535, %v1543
  %v1546 = vtanh.pop %v1545
  %1548 = vrot.lane.b32.xlu0 %v1546, 32
  %v1549 = vpop.permute.xlu0 %1548
  %v1551 = vmul.f32 %v1533, %v1549
  %1553 = vrot.lane.b32.xlu0 %v1551, 80
  %v1554 = vpop.permute.xlu0 %1553
  %1556 = vst.msk [vmem:[%s383] sm:$0x3] %vm249, %v1554
  %v1557 = vld [vmem:[%s385] sm:$0x3]
  %v1558 = vsel %vm183, %v1488, 0
  %1560 = vmatpush.msra.mxu0 0.0
  %1561 = vmatpush.msra.mxu0 0.0
  %1562 = vmatpush.msra.mxu0 0.0
  %1563 = vmatpush.msra.mxu0 0.0
  %1564 = vmatpush.msra.mxu0 0.0
  %1565 = vmatpush.msra.mxu0 0.0
  %1566 = vmatpush.msra.mxu0 0.0
  %1567 = vmatpush.msra.mxu0 0.0
  %1568 = vmatpush.msra.mxu0 0.0
  %1569 = vmatpush.msra.mxu0 0.0
  %1570 = vmatpush.msra.mxu0 0.0
  %1571 = vmatpush.msra.mxu0 0.0
  %1572 = vmatpush.msra.mxu0 0.0
  %1573 = vmatpush.msra.mxu0 0.0
  %1574 = vmatpush.msra.mxu0 %v1296
  %1575 = vmatpush.msra.mxu0 %v1295
  %1576 = vmatmul.f32.gmra.mxu0 %v1558
  %v1577 = vpop.f32.mrf.mxu0
  %v1578 = vadd.f32 0.0, %v1577
  %1579 = vdwg.mxu0
  %v1580 = vadd.f32 %v1557, %v1578
  %v1581 = vxor.u32 %v1580, 2147483648
  %v1582 = vmul.f32 %v1581, 1.442695
  %v1583 = vpow.pop %v1582
  %v1584 = vadd.f32 %v1583, 1.0
  %v1585 = vrcp.pop %v1584
  %v1586 = vmul.f32 %v1584, %v1585
  %v1587 = vsub.f32 1.0, %v1586
  %v1588 = vmul.f32 %v1585, %v1587
  %v1589 = vadd.f32 %v1585, %v1588
  %vm1590 = vweird.f32 %v1584
  %vm1591 = vweird.f32 %v1585
  %vm1592 = vmor %vm1590, %vm1591
  %v1593 = vsel %vm1592, %v1585, %v1589
  %v1594 = vand.u32 2147483647, %v1584
  %vm1595 = vcmp.eq.f32.partialorder %v1594, 8.507059e+37
  %v1596 = vand.u32 %v1584, 2147483648
  %v1597 = vor.u32 1.1754944e-38, %v1596
  %v1598 = vsel %vm1595, %v1597, %v1593
  %v1599 = vmul.f32 1.0, %v1598
  %v1600 = vtanh.pop %v1580
  %v1601 = vmul.f32 %v1599, %v1479
  %1603 = vrot.lane.b32.xlu0 %v1600, 96
  %v1604 = vpop.permute.xlu0 %1603
  %v1606 = vmul.f32 %v1599, %v1604
  %1608 = vrot.lane.b32.xlu0 %v1606, 16
  %v1609 = vpop.permute.xlu0 %1608
  %v1611 = vadd.f32 %v1601, %v1609
  %v1612 = vtanh.pop %v1611
  %1614 = vrot.lane.b32.xlu0 %v1612, 32
  %v1615 = vpop.permute.xlu0 %1614
  %v1617 = vmul.f32 %v1599, %v1615
  %1619 = vrot.lane.b32.xlu0 %v1617, 80
  %v1620 = vpop.permute.xlu0 %1619
  %1622 = vst.msk [vmem:[%s451] sm:$0x3] %vm249, %v1620
  %v1623 = vld [vmem:[%s453] sm:$0x3]
  %v1624 = vsel %vm183, %v1554, 0
  %1626 = vmatpush.msra.mxu0 0.0
  %1627 = vmatpush.msra.mxu0 0.0
  %1628 = vmatpush.msra.mxu0 0.0
  %1629 = vmatpush.msra.mxu0 0.0
  %1630 = vmatpush.msra.mxu0 0.0
  %1631 = vmatpush.msra.mxu0 0.0
  %1632 = vmatpush.msra.mxu0 0.0
  %1633 = vmatpush.msra.mxu0 0.0
  %1634 = vmatpush.msra.mxu0 0.0
  %1635 = vmatpush.msra.mxu0 0.0
  %1636 = vmatpush.msra.mxu0 0.0
  %1637 = vmatpush.msra.mxu0 0.0
  %1638 = vmatpush.msra.mxu0 0.0
  %1639 = vmatpush.msra.mxu0 0.0
  %1640 = vmatpush.msra.mxu0 %v1293
  %1641 = vmatpush.msra.mxu0 %v1292
  %1642 = vmatmul.f32.gmra.mxu0 %v1624
  %v1643 = vpop.f32.mrf.mxu0
  %v1644 = vadd.f32 0.0, %v1643
  %1645 = vdwg.mxu0
  %v1646 = vadd.f32 %v1623, %v1644
  %v1647 = vxor.u32 %v1646, 2147483648
  %v1648 = vmul.f32 %v1647, 1.442695
  %v1649 = vpow.pop %v1648
  %v1650 = vadd.f32 %v1649, 1.0
  %v1651 = vrcp.pop %v1650
  %v1652 = vmul.f32 %v1650, %v1651
  %v1653 = vsub.f32 1.0, %v1652
  %v1654 = vmul.f32 %v1651, %v1653
  %v1655 = vadd.f32 %v1651, %v1654
  %vm1656 = vweird.f32 %v1650
  %vm1657 = vweird.f32 %v1651
  %vm1658 = vmor %vm1656, %vm1657
  %v1659 = vsel %vm1658, %v1651, %v1655
  %v1660 = vand.u32 2147483647, %v1650
  %vm1661 = vcmp.eq.f32.partialorder %v1660, 8.507059e+37
  %v1662 = vand.u32 %v1650, 2147483648
  %v1663 = vor.u32 1.1754944e-38, %v1662
  %v1664 = vsel %vm1661, %v1663, %v1659
  %v1665 = vmul.f32 1.0, %v1664
  %v1666 = vtanh.pop %v1646
  %v1667 = vmul.f32 %v1665, %v1545
  %1669 = vrot.lane.b32.xlu0 %v1666, 96
  %v1670 = vpop.permute.xlu0 %1669
  %v1672 = vmul.f32 %v1665, %v1670
  %1674 = vrot.lane.b32.xlu0 %v1672, 16
  %v1675 = vpop.permute.xlu0 %1674
  %v1677 = vadd.f32 %v1667, %v1675
  %v1678 = vtanh.pop %v1677
  %1680 = vrot.lane.b32.xlu0 %v1678, 32
  %v1681 = vpop.permute.xlu0 %1680
  %v1683 = vmul.f32 %v1665, %v1681
  %1685 = vrot.lane.b32.xlu0 %v1683, 80
  %v1686 = vpop.permute.xlu0 %1685
  %1688 = vst.msk [vmem:[%s519] sm:$0x3] %vm249, %v1686
  %v1689 = vld [vmem:[%s521] sm:$0x3]
  %v1690 = vsel %vm183, %v1620, 0
  %1692 = vmatpush.msra.mxu0 0.0
  %1693 = vmatpush.msra.mxu0 0.0
  %1694 = vmatpush.msra.mxu0 0.0
  %1695 = vmatpush.msra.mxu0 0.0
  %1696 = vmatpush.msra.mxu0 0.0
  %1697 = vmatpush.msra.mxu0 0.0
  %1698 = vmatpush.msra.mxu0 0.0
  %1699 = vmatpush.msra.mxu0 0.0
  %1700 = vmatpush.msra.mxu0 0.0
  %1701 = vmatpush.msra.mxu0 0.0
  %1702 = vmatpush.msra.mxu0 0.0
  %1703 = vmatpush.msra.mxu0 0.0
  %1704 = vmatpush.msra.mxu0 0.0
  %1705 = vmatpush.msra.mxu0 0.0
  %1706 = vmatpush.msra.mxu0 %v1296
  %1707 = vmatpush.msra.mxu0 %v1295
  %1708 = vmatmul.f32.gmra.mxu0 %v1690
  %v1709 = vpop.f32.mrf.mxu0
  %v1710 = vadd.f32 0.0, %v1709
  %1711 = vdwg.mxu0
  %v1712 = vadd.f32 %v1689, %v1710
  %v1713 = vxor.u32 %v1712, 2147483648
  %v1714 = vmul.f32 %v1713, 1.442695
  %v1715 = vpow.pop %v1714
  %v1716 = vadd.f32 %v1715, 1.0
  %v1717 = vrcp.pop %v1716
  %v1718 = vmul.f32 %v1716, %v1717
  %v1719 = vsub.f32 1.0, %v1718
  %v1720 = vmul.f32 %v1717, %v1719
  %v1721 = vadd.f32 %v1717, %v1720
  %vm1722 = vweird.f32 %v1716
  %vm1723 = vweird.f32 %v1717
  %vm1724 = vmor %vm1722, %vm1723
  %v1725 = vsel %vm1724, %v1717, %v1721
  %v1726 = vand.u32 2147483647, %v1716
  %vm1727 = vcmp.eq.f32.partialorder %v1726, 8.507059e+37
  %v1728 = vand.u32 %v1716, 2147483648
  %v1729 = vor.u32 1.1754944e-38, %v1728
  %v1730 = vsel %vm1727, %v1729, %v1725
  %v1731 = vmul.f32 1.0, %v1730
  %v1732 = vtanh.pop %v1712
  %v1733 = vmul.f32 %v1731, %v1611
  %1735 = vrot.lane.b32.xlu0 %v1732, 96
  %v1736 = vpop.permute.xlu0 %1735
  %v1738 = vmul.f32 %v1731, %v1736
  %1740 = vrot.lane.b32.xlu0 %v1738, 16
  %v1741 = vpop.permute.xlu0 %1740
  %v1743 = vadd.f32 %v1733, %v1741
  %v1744 = vtanh.pop %v1743
  %1746 = vrot.lane.b32.xlu0 %v1744, 32
  %v1747 = vpop.permute.xlu0 %1746
  %v1749 = vmul.f32 %v1731, %v1747
  %1751 = vrot.lane.b32.xlu0 %v1749, 80
  %v1752 = vpop.permute.xlu0 %1751
  %1754 = vst.msk [vmem:[%s587] sm:$0x3] %vm249, %v1752
  %v1755 = vld [vmem:[%s589] sm:$0x3]
  %v1756 = vsel %vm183, %v1686, 0
  %1758 = vmatpush.msra.mxu0 0.0
  %1759 = vmatpush.msra.mxu0 0.0
  %1760 = vmatpush.msra.mxu0 0.0
  %1761 = vmatpush.msra.mxu0 0.0
  %1762 = vmatpush.msra.mxu0 0.0
  %1763 = vmatpush.msra.mxu0 0.0
  %1764 = vmatpush.msra.mxu0 0.0
  %1765 = vmatpush.msra.mxu0 0.0
  %1766 = vmatpush.msra.mxu0 0.0
  %1767 = vmatpush.msra.mxu0 0.0
  %1768 = vmatpush.msra.mxu0 0.0
  %1769 = vmatpush.msra.mxu0 0.0
  %1770 = vmatpush.msra.mxu0 0.0
  %1771 = vmatpush.msra.mxu0 0.0
  %1772 = vmatpush.msra.mxu0 %v1293
  %1773 = vmatpush.msra.mxu0 %v1292
  %1774 = vmatmul.f32.gmra.mxu0 %v1756
  %v1775 = vpop.f32.mrf.mxu0
  %v1776 = vadd.f32 0.0, %v1775
  %1777 = vdwg.mxu0
  %v1778 = vadd.f32 %v1755, %v1776
  %v1779 = vxor.u32 %v1778, 2147483648
  %v1780 = vmul.f32 %v1779, 1.442695
  %v1781 = vpow.pop %v1780
  %v1782 = vadd.f32 %v1781, 1.0
  %v1783 = vrcp.pop %v1782
  %v1784 = vmul.f32 %v1782, %v1783
  %v1785 = vsub.f32 1.0, %v1784
  %v1786 = vmul.f32 %v1783, %v1785
  %v1787 = vadd.f32 %v1783, %v1786
  %vm1788 = vweird.f32 %v1782
  %vm1789 = vweird.f32 %v1783
  %vm1790 = vmor %vm1788, %vm1789
  %v1791 = vsel %vm1790, %v1783, %v1787
  %v1792 = vand.u32 2147483647, %v1782
  %vm1793 = vcmp.eq.f32.partialorder %v1792, 8.507059e+37
  %v1794 = vand.u32 %v1782, 2147483648
  %v1795 = vor.u32 1.1754944e-38, %v1794
  %v1796 = vsel %vm1793, %v1795, %v1791
  %v1797 = vmul.f32 1.0, %v1796
  %v1798 = vtanh.pop %v1778
  %v1799 = vmul.f32 %v1797, %v1677
  %1801 = vrot.lane.b32.xlu0 %v1798, 96
  %v1802 = vpop.permute.xlu0 %1801
  %v1804 = vmul.f32 %v1797, %v1802
  %1806 = vrot.lane.b32.xlu0 %v1804, 16
  %v1807 = vpop.permute.xlu0 %1806
  %v1809 = vadd.f32 %v1799, %v1807
  %v1810 = vtanh.pop %v1809
  %1812 = vrot.lane.b32.xlu0 %v1810, 32
  %v1813 = vpop.permute.xlu0 %1812
  %v1815 = vmul.f32 %v1797, %v1813
  %1817 = vrot.lane.b32.xlu0 %v1815, 80
  %v1818 = vpop.permute.xlu0 %1817
  %1820 = vst.msk [vmem:[%s655] sm:$0x3] %vm249, %v1818
  %v1821 = vld [vmem:[%s657] sm:$0x3]
  %v1822 = vsel %vm183, %v1752, 0
  %1824 = vmatpush.msra.mxu0 0.0
  %1825 = vmatpush.msra.mxu0 0.0
  %1826 = vmatpush.msra.mxu0 0.0
  %1827 = vmatpush.msra.mxu0 0.0
  %1828 = vmatpush.msra.mxu0 0.0
  %1829 = vmatpush.msra.mxu0 0.0
  %1830 = vmatpush.msra.mxu0 0.0
  %1831 = vmatpush.msra.mxu0 0.0
  %1832 = vmatpush.msra.mxu0 0.0
  %1833 = vmatpush.msra.mxu0 0.0
  %1834 = vmatpush.msra.mxu0 0.0
  %1835 = vmatpush.msra.mxu0 0.0
  %1836 = vmatpush.msra.mxu0 0.0
  %1837 = vmatpush.msra.mxu0 0.0
  %1838 = vmatpush.msra.mxu0 %v1296
  %1839 = vmatpush.msra.mxu0 %v1295
  %1840 = vmatmul.f32.gmra.mxu0 %v1822
  %v1841 = vpop.f32.mrf.mxu0
  %v1842 = vadd.f32 0.0, %v1841
  %1843 = vdwg.mxu0
  %v1844 = vadd.f32 %v1821, %v1842
  %v1845 = vxor.u32 %v1844, 2147483648
  %v1846 = vmul.f32 %v1845, 1.442695
  %v1847 = vpow.pop %v1846
  %v1848 = vadd.f32 %v1847, 1.0
  %v1849 = vrcp.pop %v1848
  %v1850 = vmul.f32 %v1848, %v1849
  %v1851 = vsub.f32 1.0, %v1850
  %v1852 = vmul.f32 %v1849, %v1851
  %v1853 = vadd.f32 %v1849, %v1852
  %vm1854 = vweird.f32 %v1848
  %vm1855 = vweird.f32 %v1849
  %vm1856 = vmor %vm1854, %vm1855
  %v1857 = vsel %vm1856, %v1849, %v1853
  %v1858 = vand.u32 2147483647, %v1848
  %vm1859 = vcmp.eq.f32.partialorder %v1858, 8.507059e+37
  %v1860 = vand.u32 %v1848, 2147483648
  %v1861 = vor.u32 1.1754944e-38, %v1860
  %v1862 = vsel %vm1859, %v1861, %v1857
  %v1863 = vmul.f32 1.0, %v1862
  %v1864 = vtanh.pop %v1844
  %v1865 = vmul.f32 %v1863, %v1743
  %1867 = vrot.lane.b32.xlu0 %v1864, 96
  %v1868 = vpop.permute.xlu0 %1867
  %v1870 = vmul.f32 %v1863, %v1868
  %1872 = vrot.lane.b32.xlu0 %v1870, 16
  %v1873 = vpop.permute.xlu0 %1872
  %v1875 = vadd.f32 %v1865, %v1873
  %v1876 = vtanh.pop %v1875
  %1878 = vrot.lane.b32.xlu0 %v1876, 32
  %v1879 = vpop.permute.xlu0 %1878
  %v1881 = vmul.f32 %v1863, %v1879
  %1883 = vrot.lane.b32.xlu0 %v1881, 80
  %v1884 = vpop.permute.xlu0 %1883
  %1886 = vst.msk [vmem:[%s723] sm:$0x3] %vm249, %v1884
  %v1887 = vld [vmem:[%s725] sm:$0x3]
  %v1888 = vsel %vm183, %v1818, 0
  %1890 = vmatpush.msra.mxu0 0.0
  %1891 = vmatpush.msra.mxu0 0.0
  %1892 = vmatpush.msra.mxu0 0.0
  %1893 = vmatpush.msra.mxu0 0.0
  %1894 = vmatpush.msra.mxu0 0.0
  %1895 = vmatpush.msra.mxu0 0.0
  %1896 = vmatpush.msra.mxu0 0.0
  %1897 = vmatpush.msra.mxu0 0.0
  %1898 = vmatpush.msra.mxu0 0.0
  %1899 = vmatpush.msra.mxu0 0.0
  %1900 = vmatpush.msra.mxu0 0.0
  %1901 = vmatpush.msra.mxu0 0.0
  %1902 = vmatpush.msra.mxu0 0.0
  %1903 = vmatpush.msra.mxu0 0.0
  %1904 = vmatpush.msra.mxu0 %v1293
  %1905 = vmatpush.msra.mxu0 %v1292
  %1906 = vmatmul.f32.gmra.mxu0 %v1888
  %v1907 = vpop.f32.mrf.mxu0
  %v1908 = vadd.f32 0.0, %v1907
  %1909 = vdwg.mxu0
  %v1910 = vadd.f32 %v1887, %v1908
  %v1911 = vxor.u32 %v1910, 2147483648
  %v1912 = vmul.f32 %v1911, 1.442695
  %v1913 = vpow.pop %v1912
  %v1914 = vadd.f32 %v1913, 1.0
  %v1915 = vrcp.pop %v1914
  %v1916 = vmul.f32 %v1914, %v1915
  %v1917 = vsub.f32 1.0, %v1916
  %v1918 = vmul.f32 %v1915, %v1917
  %v1919 = vadd.f32 %v1915, %v1918
  %vm1920 = vweird.f32 %v1914
  %vm1921 = vweird.f32 %v1915
  %vm1922 = vmor %vm1920, %vm1921
  %v1923 = vsel %vm1922, %v1915, %v1919
  %v1924 = vand.u32 2147483647, %v1914
  %vm1925 = vcmp.eq.f32.partialorder %v1924, 8.507059e+37
  %v1926 = vand.u32 %v1914, 2147483648
  %v1927 = vor.u32 1.1754944e-38, %v1926
  %v1928 = vsel %vm1925, %v1927, %v1923
  %v1929 = vmul.f32 1.0, %v1928
  %v1930 = vtanh.pop %v1910
  %v1931 = vmul.f32 %v1929, %v1809
  %1933 = vrot.lane.b32.xlu0 %v1930, 96
  %v1934 = vpop.permute.xlu0 %1933
  %v1936 = vmul.f32 %v1929, %v1934
  %1938 = vrot.lane.b32.xlu0 %v1936, 16
  %v1939 = vpop.permute.xlu0 %1938
  %v1941 = vadd.f32 %v1931, %v1939
  %v1942 = vtanh.pop %v1941
  %1944 = vrot.lane.b32.xlu0 %v1942, 32
  %v1945 = vpop.permute.xlu0 %1944
  %v1947 = vmul.f32 %v1929, %v1945
  %1949 = vrot.lane.b32.xlu0 %v1947, 80
  %v1950 = vpop.permute.xlu0 %1949
  %1952 = vst.msk [vmem:[%s791] sm:$0x3] %vm249, %v1950
  %v1953 = vld [vmem:[%s793] sm:$0x3]
  %v1954 = vsel %vm183, %v1884, 0
  %1956 = vmatpush.msra.mxu0 0.0
  %1957 = vmatpush.msra.mxu0 0.0
  %1958 = vmatpush.msra.mxu0 0.0
  %1959 = vmatpush.msra.mxu0 0.0
  %1960 = vmatpush.msra.mxu0 0.0
  %1961 = vmatpush.msra.mxu0 0.0
  %1962 = vmatpush.msra.mxu0 0.0
  %1963 = vmatpush.msra.mxu0 0.0
  %1964 = vmatpush.msra.mxu0 0.0
  %1965 = vmatpush.msra.mxu0 0.0
  %1966 = vmatpush.msra.mxu0 0.0
  %1967 = vmatpush.msra.mxu0 0.0
  %1968 = vmatpush.msra.mxu0 0.0
  %1969 = vmatpush.msra.mxu0 0.0
  %1970 = vmatpush.msra.mxu0 %v1296
  %1971 = vmatpush.msra.mxu0 %v1295
  %1972 = vmatmul.f32.gmra.mxu0 %v1954
  %v1973 = vpop.f32.mrf.mxu0
  %v1974 = vadd.f32 0.0, %v1973
  %1975 = vdwg.mxu0
  %v1976 = vadd.f32 %v1953, %v1974
  %v1977 = vxor.u32 %v1976, 2147483648
  %v1978 = vmul.f32 %v1977, 1.442695
  %v1979 = vpow.pop %v1978
  %v1980 = vadd.f32 %v1979, 1.0
  %v1981 = vrcp.pop %v1980
  %v1982 = vmul.f32 %v1980, %v1981
  %v1983 = vsub.f32 1.0, %v1982
  %v1984 = vmul.f32 %v1981, %v1983
  %v1985 = vadd.f32 %v1981, %v1984
  %vm1986 = vweird.f32 %v1980
  %vm1987 = vweird.f32 %v1981
  %vm1988 = vmor %vm1986, %vm1987
  %v1989 = vsel %vm1988, %v1981, %v1985
  %v1990 = vand.u32 2147483647, %v1980
  %vm1991 = vcmp.eq.f32.partialorder %v1990, 8.507059e+37
  %v1992 = vand.u32 %v1980, 2147483648
  %v1993 = vor.u32 1.1754944e-38, %v1992
  %v1994 = vsel %vm1991, %v1993, %v1989
  %v1995 = vmul.f32 1.0, %v1994
  %v1996 = vtanh.pop %v1976
  %v1997 = vmul.f32 %v1995, %v1875
  %1999 = vrot.lane.b32.xlu0 %v1996, 96
  %v2000 = vpop.permute.xlu0 %1999
  %v2002 = vmul.f32 %v1995, %v2000
  %2004 = vrot.lane.b32.xlu0 %v2002, 16
  %v2005 = vpop.permute.xlu0 %2004
  %v2007 = vadd.f32 %v1997, %v2005
  %v2008 = vtanh.pop %v2007
  %2010 = vrot.lane.b32.xlu0 %v2008, 32
  %v2011 = vpop.permute.xlu0 %2010
  %v2013 = vmul.f32 %v1995, %v2011
  %2015 = vrot.lane.b32.xlu0 %v2013, 80
  %v2016 = vpop.permute.xlu0 %2015
  %2018 = vst.msk [vmem:[%s859] sm:$0x3] %vm249, %v2016
  %v2019 = vld [vmem:[%s861] sm:$0x3]
  %v2020 = vsel %vm183, %v1950, 0
  %2022 = vmatpush.msra.mxu0 0.0
  %2023 = vmatpush.msra.mxu0 0.0
  %2024 = vmatpush.msra.mxu0 0.0
  %2025 = vmatpush.msra.mxu0 0.0
  %2026 = vmatpush.msra.mxu0 0.0
  %2027 = vmatpush.msra.mxu0 0.0
  %2028 = vmatpush.msra.mxu0 0.0
  %2029 = vmatpush.msra.mxu0 0.0
  %2030 = vmatpush.msra.mxu0 0.0
  %2031 = vmatpush.msra.mxu0 0.0
  %2032 = vmatpush.msra.mxu0 0.0
  %2033 = vmatpush.msra.mxu0 0.0
  %2034 = vmatpush.msra.mxu0 0.0
  %2035 = vmatpush.msra.mxu0 0.0
  %2036 = vmatpush.msra.mxu0 %v1293
  %2037 = vmatpush.msra.mxu0 %v1292
  %2038 = vmatmul.f32.gmra.mxu0 %v2020
  %v2039 = vpop.f32.mrf.mxu0
  %v2040 = vadd.f32 0.0, %v2039
  %2041 = vdwg.mxu0
  %v2042 = vadd.f32 %v2019, %v2040
  %v2043 = vxor.u32 %v2042, 2147483648
  %v2044 = vmul.f32 %v2043, 1.442695
  %v2045 = vpow.pop %v2044
  %v2046 = vadd.f32 %v2045, 1.0
  %v2047 = vrcp.pop %v2046
  %v2048 = vmul.f32 %v2046, %v2047
  %v2049 = vsub.f32 1.0, %v2048
  %v2050 = vmul.f32 %v2047, %v2049
  %v2051 = vadd.f32 %v2047, %v2050
  %vm2052 = vweird.f32 %v2046
  %vm2053 = vweird.f32 %v2047
  %vm2054 = vmor %vm2052, %vm2053
  %v2055 = vsel %vm2054, %v2047, %v2051
  %v2056 = vand.u32 2147483647, %v2046
  %vm2057 = vcmp.eq.f32.partialorder %v2056, 8.507059e+37
  %v2058 = vand.u32 %v2046, 2147483648
  %v2059 = vor.u32 1.1754944e-38, %v2058
  %v2060 = vsel %vm2057, %v2059, %v2055
  %v2061 = vmul.f32 1.0, %v2060
  %v2062 = vtanh.pop %v2042
  %v2063 = vmul.f32 %v2061, %v1941
  %2065 = vrot.lane.b32.xlu0 %v2062, 96
  %v2066 = vpop.permute.xlu0 %2065
  %v2068 = vmul.f32 %v2061, %v2066
  %2070 = vrot.lane.b32.xlu0 %v2068, 16
  %v2071 = vpop.permute.xlu0 %2070
  %v2073 = vadd.f32 %v2063, %v2071
  %v2074 = vtanh.pop %v2073
  %2076 = vrot.lane.b32.xlu0 %v2074, 32
  %v2077 = vpop.permute.xlu0 %2076
  %v2079 = vmul.f32 %v2061, %v2077
  %2081 = vrot.lane.b32.xlu0 %v2079, 80
  %v2082 = vpop.permute.xlu0 %2081
  %2084 = vst.msk [vmem:[%s927] sm:$0x3] %vm249, %v2082
  %v2085 = vld [vmem:[%s929] sm:$0x3]
  %v2086 = vsel %vm183, %v2016, 0
  %2088 = vmatpush.msra.mxu0 0.0
  %2089 = vmatpush.msra.mxu0 0.0
  %2090 = vmatpush.msra.mxu0 0.0
  %2091 = vmatpush.msra.mxu0 0.0
  %2092 = vmatpush.msra.mxu0 0.0
  %2093 = vmatpush.msra.mxu0 0.0
  %2094 = vmatpush.msra.mxu0 0.0
  %2095 = vmatpush.msra.mxu0 0.0
  %2096 = vmatpush.msra.mxu0 0.0
  %2097 = vmatpush.msra.mxu0 0.0
  %2098 = vmatpush.msra.mxu0 0.0
  %2099 = vmatpush.msra.mxu0 0.0
  %2100 = vmatpush.msra.mxu0 0.0
  %2101 = vmatpush.msra.mxu0 0.0
  %2102 = vmatpush.msra.mxu0 %v1296
  %2103 = vmatpush.msra.mxu0 %v1295
  %2104 = vmatmul.f32.gmra.mxu0 %v2086
  %v2105 = vpop.f32.mrf.mxu0
  %v2106 = vadd.f32 0.0, %v2105
  %2107 = vdwg.mxu0
  %v2108 = vadd.f32 %v2085, %v2106
  %v2109 = vxor.u32 %v2108, 2147483648
  %v2110 = vmul.f32 %v2109, 1.442695
  %v2111 = vpow.pop %v2110
  %v2112 = vadd.f32 %v2111, 1.0
  %v2113 = vrcp.pop %v2112
  %v2114 = vmul.f32 %v2112, %v2113
  %v2115 = vsub.f32 1.0, %v2114
  %v2116 = vmul.f32 %v2113, %v2115
  %v2117 = vadd.f32 %v2113, %v2116
  %vm2118 = vweird.f32 %v2112
  %vm2119 = vweird.f32 %v2113
  %vm2120 = vmor %vm2118, %vm2119
  %v2121 = vsel %vm2120, %v2113, %v2117
  %v2122 = vand.u32 2147483647, %v2112
  %vm2123 = vcmp.eq.f32.partialorder %v2122, 8.507059e+37
  %v2124 = vand.u32 %v2112, 2147483648
  %v2125 = vor.u32 1.1754944e-38, %v2124
  %v2126 = vsel %vm2123, %v2125, %v2121
  %v2127 = vmul.f32 1.0, %v2126
  %v2128 = vtanh.pop %v2108
  %v2129 = vmul.f32 %v2127, %v2007
  %2131 = vrot.lane.b32.xlu0 %v2128, 96
  %v2132 = vpop.permute.xlu0 %2131
  %v2134 = vmul.f32 %v2127, %v2132
  %2136 = vrot.lane.b32.xlu0 %v2134, 16
  %v2137 = vpop.permute.xlu0 %2136
  %v2139 = vadd.f32 %v2129, %v2137
  %v2140 = vtanh.pop %v2139
  %2142 = vrot.lane.b32.xlu0 %v2140, 32
  %v2143 = vpop.permute.xlu0 %2142
  %v2145 = vmul.f32 %v2127, %v2143
  %2147 = vrot.lane.b32.xlu0 %v2145, 80
  %v2148 = vpop.permute.xlu0 %2147
  %2150 = vst.msk [vmem:[%s995] sm:$0x3] %vm249, %v2148
  %v2151 = vld [vmem:[%s997] sm:$0x3]
  %v2152 = vsel %vm183, %v2082, 0
  %2154 = vmatpush.msra.mxu0 0.0
  %2155 = vmatpush.msra.mxu0 0.0
  %2156 = vmatpush.msra.mxu0 0.0
  %2157 = vmatpush.msra.mxu0 0.0
  %2158 = vmatpush.msra.mxu0 0.0
  %2159 = vmatpush.msra.mxu0 0.0
  %2160 = vmatpush.msra.mxu0 0.0
  %2161 = vmatpush.msra.mxu0 0.0
  %2162 = vmatpush.msra.mxu0 0.0
  %2163 = vmatpush.msra.mxu0 0.0
  %2164 = vmatpush.msra.mxu0 0.0
  %2165 = vmatpush.msra.mxu0 0.0
  %2166 = vmatpush.msra.mxu0 0.0
  %2167 = vmatpush.msra.mxu0 0.0
  %2168 = vmatpush.msra.mxu0 %v1293
  %2169 = vmatpush.msra.mxu0 %v1292
  %2170 = vmatmul.f32.gmra.mxu0 %v2152
  %v2171 = vpop.f32.mrf.mxu0
  %v2172 = vadd.f32 0.0, %v2171
  %2173 = vdwg.mxu0
  %v2174 = vadd.f32 %v2151, %v2172
  %v2175 = vxor.u32 %v2174, 2147483648
  %v2176 = vmul.f32 %v2175, 1.442695
  %v2177 = vpow.pop %v2176
  %v2178 = vadd.f32 %v2177, 1.0
  %v2179 = vrcp.pop %v2178
  %v2180 = vmul.f32 %v2178, %v2179
  %v2181 = vsub.f32 1.0, %v2180
  %v2182 = vmul.f32 %v2179, %v2181
  %v2183 = vadd.f32 %v2179, %v2182
  %vm2184 = vweird.f32 %v2178
  %vm2185 = vweird.f32 %v2179
  %vm2186 = vmor %vm2184, %vm2185
  %v2187 = vsel %vm2186, %v2179, %v2183
  %v2188 = vand.u32 2147483647, %v2178
  %vm2189 = vcmp.eq.f32.partialorder %v2188, 8.507059e+37
  %v2190 = vand.u32 %v2178, 2147483648
  %v2191 = vor.u32 1.1754944e-38, %v2190
  %v2192 = vsel %vm2189, %v2191, %v2187
  %v2193 = vmul.f32 1.0, %v2192
  %v2194 = vtanh.pop %v2174
  %v2195 = vmul.f32 %v2193, %v2073
  %2197 = vrot.lane.b32.xlu0 %v2194, 96
  %v2198 = vpop.permute.xlu0 %2197
  %v2200 = vmul.f32 %v2193, %v2198
  %2202 = vrot.lane.b32.xlu0 %v2200, 16
  %v2203 = vpop.permute.xlu0 %2202
  %v2205 = vadd.f32 %v2195, %v2203
  %v2206 = vtanh.pop %v2205
  %2208 = vrot.lane.b32.xlu0 %v2206, 32
  %v2209 = vpop.permute.xlu0 %2208
  %v2211 = vmul.f32 %v2193, %v2209
  %2213 = vrot.lane.b32.xlu0 %v2211, 80
  %v2214 = vpop.permute.xlu0 %2213
  %2216 = vst.msk [vmem:[%s1063] sm:$0x3] %vm249, %v2214
  %v2217 = vld [vmem:[%s1065] sm:$0x3]
  %v2218 = vsel %vm183, %v2148, 0
  %2220 = vmatpush.msra.mxu0 0.0
  %2221 = vmatpush.msra.mxu0 0.0
  %2222 = vmatpush.msra.mxu0 0.0
  %2223 = vmatpush.msra.mxu0 0.0
  %2224 = vmatpush.msra.mxu0 0.0
  %2225 = vmatpush.msra.mxu0 0.0
  %2226 = vmatpush.msra.mxu0 0.0
  %2227 = vmatpush.msra.mxu0 0.0
  %2228 = vmatpush.msra.mxu0 0.0
  %2229 = vmatpush.msra.mxu0 0.0
  %2230 = vmatpush.msra.mxu0 0.0
  %2231 = vmatpush.msra.mxu0 0.0
  %2232 = vmatpush.msra.mxu0 0.0
  %2233 = vmatpush.msra.mxu0 0.0
  %2234 = vmatpush.msra.mxu0 %v1296
  %2235 = vmatpush.msra.mxu0 %v1295
  %2236 = vmatmul.f32.gmra.mxu0 %v2218
  %v2237 = vpop.f32.mrf.mxu0
  %v2238 = vadd.f32 0.0, %v2237
  %2239 = vdwg.mxu0
  %v2240 = vadd.f32 %v2217, %v2238
  %v2241 = vxor.u32 %v2240, 2147483648
  %v2242 = vmul.f32 %v2241, 1.442695
  %v2243 = vpow.pop %v2242
  %v2244 = vadd.f32 %v2243, 1.0
  %v2245 = vrcp.pop %v2244
  %v2246 = vmul.f32 %v2244, %v2245
  %v2247 = vsub.f32 1.0, %v2246
  %v2248 = vmul.f32 %v2245, %v2247
  %v2249 = vadd.f32 %v2245, %v2248
  %vm2250 = vweird.f32 %v2244
  %vm2251 = vweird.f32 %v2245
  %vm2252 = vmor %vm2250, %vm2251
  %v2253 = vsel %vm2252, %v2245, %v2249
  %v2254 = vand.u32 2147483647, %v2244
  %vm2255 = vcmp.eq.f32.partialorder %v2254, 8.507059e+37
  %v2256 = vand.u32 %v2244, 2147483648
  %v2257 = vor.u32 1.1754944e-38, %v2256
  %v2258 = vsel %vm2255, %v2257, %v2253
  %v2259 = vmul.f32 1.0, %v2258
  %v2260 = vtanh.pop %v2240
  %v2261 = vmul.f32 %v2259, %v2139
  %2263 = vrot.lane.b32.xlu0 %v2260, 96
  %v2264 = vpop.permute.xlu0 %2263
  %v2266 = vmul.f32 %v2259, %v2264
  %2268 = vrot.lane.b32.xlu0 %v2266, 16
  %v2269 = vpop.permute.xlu0 %2268
  %v2271 = vadd.f32 %v2261, %v2269
  %v2272 = vtanh.pop %v2271
  %2274 = vrot.lane.b32.xlu0 %v2272, 32
  %v2275 = vpop.permute.xlu0 %2274
  %v2277 = vmul.f32 %v2259, %v2275
  %2279 = vrot.lane.b32.xlu0 %v2277, 80
  %v2280 = vpop.permute.xlu0 %2279
  %2282 = vst.msk [vmem:[%s1131] sm:$0x3] %vm249, %v2280
  %v2283 = vld [vmem:[%s1133] sm:$0x3]
  %v2284 = vsel %vm183, %v2214, 0
  %2286 = vmatpush.msra.mxu0 0.0
  %2287 = vmatpush.msra.mxu0 0.0
  %2288 = vmatpush.msra.mxu0 0.0
  %2289 = vmatpush.msra.mxu0 0.0
  %2290 = vmatpush.msra.mxu0 0.0
  %2291 = vmatpush.msra.mxu0 0.0
  %2292 = vmatpush.msra.mxu0 0.0
  %2293 = vmatpush.msra.mxu0 0.0
  %2294 = vmatpush.msra.mxu0 0.0
  %2295 = vmatpush.msra.mxu0 0.0
  %2296 = vmatpush.msra.mxu0 0.0
  %2297 = vmatpush.msra.mxu0 0.0
  %2298 = vmatpush.msra.mxu0 0.0
  %2299 = vmatpush.msra.mxu0 0.0
  %2300 = vmatpush.msra.mxu0 %v1293
  %2301 = vmatpush.msra.mxu0 %v1292
  %2302 = vmatmul.f32.gmra.mxu0 %v2284
  %v2303 = vpop.f32.mrf.mxu0
  %v2304 = vadd.f32 0.0, %v2303
  %2305 = vdwg.mxu0
  %v2306 = vadd.f32 %v2283, %v2304
  %v2307 = vxor.u32 %v2306, 2147483648
  %v2308 = vmul.f32 %v2307, 1.442695
  %v2309 = vpow.pop %v2308
  %v2310 = vadd.f32 %v2309, 1.0
  %v2311 = vrcp.pop %v2310
  %v2312 = vmul.f32 %v2310, %v2311
  %v2313 = vsub.f32 1.0, %v2312
  %v2314 = vmul.f32 %v2311, %v2313
  %v2315 = vadd.f32 %v2311, %v2314
  %vm2316 = vweird.f32 %v2310
  %vm2317 = vweird.f32 %v2311
  %vm2318 = vmor %vm2316, %vm2317
  %v2319 = vsel %vm2318, %v2311, %v2315
  %v2320 = vand.u32 2147483647, %v2310
  %vm2321 = vcmp.eq.f32.partialorder %v2320, 8.507059e+37
  %v2322 = vand.u32 %v2310, 2147483648
  %v2323 = vor.u32 1.1754944e-38, %v2322
  %v2324 = vsel %vm2321, %v2323, %v2319
  %v2325 = vmul.f32 1.0, %v2324
  %v2326 = vtanh.pop %v2306
  %v2327 = vmul.f32 %v2325, %v2205
  %2329 = vrot.lane.b32.xlu0 %v2326, 96
  %v2330 = vpop.permute.xlu0 %2329
  %v2332 = vmul.f32 %v2325, %v2330
  %2334 = vrot.lane.b32.xlu0 %v2332, 16
  %v2335 = vpop.permute.xlu0 %2334
  %v2337 = vadd.f32 %v2327, %v2335
  %v2338 = vtanh.pop %v2337
  %2340 = vrot.lane.b32.xlu0 %v2338, 32
  %v2341 = vpop.permute.xlu0 %2340
  %v2343 = vmul.f32 %v2325, %v2341
  %2345 = vrot.lane.b32.xlu0 %v2343, 80
  %v2346 = vpop.permute.xlu0 %2345
  %2348 = vst.msk [vmem:[%s1199] sm:$0x3] %vm249, %v2346
  %v2349 = vld [vmem:[#allocation3] sm:$0x3]
  %v2350 = vsel %vm183, %v2280, 0
  %2352 = vmatpush.msra.mxu0 0.0
  %2353 = vmatpush.msra.mxu0 0.0
  %2354 = vmatpush.msra.mxu0 0.0
  %2355 = vmatpush.msra.mxu0 0.0
  %2356 = vmatpush.msra.mxu0 0.0
  %2357 = vmatpush.msra.mxu0 0.0
  %2358 = vmatpush.msra.mxu0 0.0
  %2359 = vmatpush.msra.mxu0 0.0
  %2360 = vmatpush.msra.mxu0 0.0
  %2361 = vmatpush.msra.mxu0 0.0
  %2362 = vmatpush.msra.mxu0 0.0
  %2363 = vmatpush.msra.mxu0 0.0
  %2364 = vmatpush.msra.mxu0 0.0
  %2365 = vmatpush.msra.mxu0 0.0
  %2366 = vmatpush.msra.mxu0 %v1296
  %2367 = vmatpush.msra.mxu0 %v1295
  %2368 = vmatmul.f32.gmra.mxu0 %v2350
  %v2369 = vpop.f32.mrf.mxu0
  %v2370 = vadd.f32 0.0, %v2369
  %2371 = vdwg.mxu0
  %v2372 = vadd.f32 %v2349, %v2370
  %v2373 = vxor.u32 %v2372, 2147483648
  %v2374 = vmul.f32 %v2373, 1.442695
  %v2375 = vpow.pop %v2374
  %v2376 = vadd.f32 %v2375, 1.0
  %v2377 = vrcp.pop %v2376
  %v2378 = vmul.f32 %v2376, %v2377
  %v2379 = vsub.f32 1.0, %v2378
  %v2380 = vmul.f32 %v2377, %v2379
  %v2381 = vadd.f32 %v2377, %v2380
  %vm2382 = vweird.f32 %v2376
  %vm2383 = vweird.f32 %v2377
  %vm2384 = vmor %vm2382, %vm2383
  %v2385 = vsel %vm2384, %v2377, %v2381
  %v2386 = vand.u32 2147483647, %v2376
  %vm2387 = vcmp.eq.f32.partialorder %v2386, 8.507059e+37
  %v2388 = vand.u32 %v2376, 2147483648
  %v2389 = vor.u32 1.1754944e-38, %v2388
  %v2390 = vsel %vm2387, %v2389, %v2385
  %v2391 = vmul.f32 1.0, %v2390
  %v2392 = vtanh.pop %v2372
  %v2393 = vmul.f32 %v2391, %v2271
  %2395 = vrot.lane.b32.xlu0 %v2392, 96
  %v2396 = vpop.permute.xlu0 %2395
  %v2398 = vmul.f32 %v2391, %v2396
  %2400 = vrot.lane.b32.xlu0 %v2398, 16
  %v2401 = vpop.permute.xlu0 %2400
  %v2403 = vadd.f32 %v2393, %v2401
  %v2404 = vtanh.pop %v2403
  %2406 = vrot.lane.b32.xlu0 %v2404, 32
  %v2407 = vpop.permute.xlu0 %2406
  %v2409 = vmul.f32 %v2391, %v2407
  %2411 = vrot.lane.b32.xlu0 %v2409, 80
  %v2412 = vpop.permute.xlu0 %2411
  %2414 = vst.msk [vmem:[#allocation5] sm:$0x3] %vm249, %v2412
  %v2415 = vld [vmem:[#allocation4] sm:$0xff]
  %v2416 = vld [vmem:[#allocation4 + $0x8] sm:$0xff]
  %v2417 = vld [vmem:[#allocation5] sm:$0xff]
  %v2418 = vld [vmem:[#allocation5 + $0x8] sm:$0xff]
  %2421 = vrot.lane.b32.xlu0 %v2417, 16
  %v2422 = vpop.permute.xlu0 %2421
  %2423 = vrot.lane.b32.xlu0 %v2418, 16
  %v2424 = vpop.permute.xlu0 %2423
  %v2427 = vsel %vm183, %v2415, %v2422
  %v2428 = vsel %vm183, %v2416, %v2424
  %s2429 = scalar_lea.vmem %s6, 128
  %v2430 = vld [vmem:[%s2429] sm:$0xff]
  %v2431 = vld [vmem:[%s2429 + $0x8] sm:$0xff]
  %v2432 = vld [vmem:[%s2429 + $0x10] sm:$0xff]
  %v2433 = vld [vmem:[%s2429 + $0x18] sm:$0xff]
  %s2434 = scalar_lea.vmem %s6, 160
  %v2435 = vld [vmem:[%s2434] sm:$0xff]
  %v2436 = vld [vmem:[%s2434 + $0x8] sm:$0xff]
  %v2437 = vld [vmem:[%s2434 + $0x10] sm:$0xff]
  %v2438 = vld [vmem:[%s2434 + $0x18] sm:$0xff]
  %s2439 = scalar_lea.vmem %s7, 64
  %v2440 = vld [vmem:[%s2439] sm:$0xff]
  %v2441 = vld [vmem:[%s2439 + $0x8] sm:$0xff]
  %s2442 = scalar_lea.vmem %s7, 80
  %v2443 = vld [vmem:[%s2442] sm:$0xff]
  %v2444 = vld [vmem:[%s2442 + $0x8] sm:$0xff]
  %s2445 = scalar_lea.vmem %s8, 4
  %v2446 = vld [vmem:[%s2445] sm:$0x1]
  %s2447 = scalar_lea.vmem %s8, 5
  %v2448 = vld [vmem:[%s2447] sm:$0x1]
  %v2450 = vperm.slane %v2446, 0
  %v2453 = vsel %vm99, %v2427, 0
  %v2456 = vsel %vm99, %v2428, 0
  %2458 = vmatpush.msra.mxu0 0.0
  %2459 = vmatpush.msra.mxu0 0.0
  %2460 = vmatpush.msra.mxu0 0.0
  %2461 = vmatpush.msra.mxu0 0.0
  %2462 = vmatpush.msra.mxu0 0.0
  %2463 = vmatpush.msra.mxu0 0.0
  %2464 = vmatpush.msra.mxu0 0.0
  %2465 = vmatpush.msra.mxu0 0.0
  %2466 = vmatpush.msra.mxu0 0.0
  %2467 = vmatpush.msra.mxu0 0.0
  %2468 = vmatpush.msra.mxu0 0.0
  %2469 = vmatpush.msra.mxu0 0.0
  %2470 = vmatpush.msra.mxu0 %v2433
  %2471 = vmatpush.msra.mxu0 %v2432
  %2472 = vmatpush.msra.mxu0 %v2431
  %2473 = vmatpush.msra.mxu0 %v2430
  %2474 = vmatmul.f32.gmra.mxu0 %v2453
  %v2475 = vpop.f32.mrf.mxu0
  %v2476 = vadd.f32 %v2450, %v2475
  %2477 = vmatmul.f32.gmra.mxu0 %v2456
  %v2478 = vpop.f32.mrf.mxu0
  %v2479 = vadd.f32 %v2450, %v2478
  %2480 = vdwg.mxu0
  %2481 = vst.msk [vmem:[#allocation2] sm:$0xff] %vm151, %v2476
  %2482 = vst.msk [vmem:[#allocation2 + $0x8] sm:$0xff] %vm151, %v2479
  %v2484 = vperm.slane %v2448, 0
  %2486 = vmatpush.msra.mxu0 0.0
  %2487 = vmatpush.msra.mxu0 0.0
  %2488 = vmatpush.msra.mxu0 0.0
  %2489 = vmatpush.msra.mxu0 0.0
  %2490 = vmatpush.msra.mxu0 0.0
  %2491 = vmatpush.msra.mxu0 0.0
  %2492 = vmatpush.msra.mxu0 0.0
  %2493 = vmatpush.msra.mxu0 0.0
  %2494 = vmatpush.msra.mxu0 0.0
  %2495 = vmatpush.msra.mxu0 0.0
  %2496 = vmatpush.msra.mxu0 0.0
  %2497 = vmatpush.msra.mxu0 0.0
  %2498 = vmatpush.msra.mxu0 %v2438
  %2499 = vmatpush.msra.mxu0 %v2437
  %2500 = vmatpush.msra.mxu0 %v2436
  %2501 = vmatpush.msra.mxu0 %v2435
  %2502 = vmatmul.f32.gmra.mxu0 %v2453
  %v2503 = vpop.f32.mrf.mxu0
  %v2504 = vadd.f32 %v2484, %v2503
  %2505 = vmatmul.f32.gmra.mxu0 %v2456
  %v2506 = vpop.f32.mrf.mxu0
  %v2507 = vadd.f32 %v2484, %v2506
  %2508 = vdwg.mxu0
  %2509 = vst.msk [vmem:[#allocation3] sm:$0xff] %vm151, %v2504
  %2510 = vst.msk [vmem:[#allocation3 + $0x8] sm:$0xff] %vm151, %v2507
  %v2511 = vld [vmem:[#allocation2] sm:$0x3]
  %2512 = vmatpush.msra.mxu0 0.0
  %2513 = vmatpush.msra.mxu0 0.0
  %2514 = vmatpush.msra.mxu0 0.0
  %2515 = vmatpush.msra.mxu0 0.0
  %2516 = vmatpush.msra.mxu0 0.0
  %2517 = vmatpush.msra.mxu0 0.0
  %2518 = vmatpush.msra.mxu0 0.0
  %2519 = vmatpush.msra.mxu0 0.0
  %2520 = vmatpush.msra.mxu0 0.0
  %2521 = vmatpush.msra.mxu0 0.0
  %2522 = vmatpush.msra.mxu0 0.0
  %2523 = vmatpush.msra.mxu0 0.0
  %2524 = vmatpush.msra.mxu0 0.0
  %2525 = vmatpush.msra.mxu0 0.0
  %2526 = vmatpush.msra.mxu0 %v2441
  %2527 = vmatpush.msra.mxu0 %v2440
  %2528 = vmatmul.f32.gmra.mxu0 %v185
  %v2529 = vpop.f32.mrf.mxu0
  %v2530 = vadd.f32 0.0, %v2529
  %2531 = vdwg.mxu0
  %v2532 = vadd.f32 %v2511, %v2530
  %v2533 = vxor.u32 %v2532, 2147483648
  %v2534 = vmul.f32 %v2533, 1.442695
  %v2535 = vpow.pop %v2534
  %v2536 = vadd.f32 %v2535, 1.0
  %v2537 = vrcp.pop %v2536
  %v2538 = vmul.f32 %v2536, %v2537
  %v2539 = vsub.f32 1.0, %v2538
  %v2540 = vmul.f32 %v2537, %v2539
  %v2541 = vadd.f32 %v2537, %v2540
  %vm2542 = vweird.f32 %v2536
  %vm2543 = vweird.f32 %v2537
  %vm2544 = vmor %vm2542, %vm2543
  %v2545 = vsel %vm2544, %v2537, %v2541
  %v2546 = vand.u32 2147483647, %v2536
  %vm2547 = vcmp.eq.f32.partialorder %v2546, 8.507059e+37
  %v2548 = vand.u32 %v2536, 2147483648
  %v2549 = vor.u32 1.1754944e-38, %v2548
  %v2550 = vsel %vm2547, %v2549, %v2545
  %v2551 = vmul.f32 1.0, %v2550
  %v2552 = vtanh.pop %v2532
  %v2553 = vmul.f32 %v2551, 0.0
  %2555 = vrot.lane.b32.xlu0 %v2552, 96
  %v2556 = vpop.permute.xlu0 %2555
  %v2558 = vmul.f32 %v2551, %v2556
  %2560 = vrot.lane.b32.xlu0 %v2558, 16
  %v2561 = vpop.permute.xlu0 %2560
  %v2563 = vadd.f32 %v2553, %v2561
  %v2564 = vtanh.pop %v2563
  %2566 = vrot.lane.b32.xlu0 %v2564, 32
  %v2567 = vpop.permute.xlu0 %2566
  %v2569 = vmul.f32 %v2551, %v2567
  %2571 = vrot.lane.b32.xlu0 %v2569, 80
  %v2572 = vpop.permute.xlu0 %2571
  %2574 = vst.msk [vmem:[#allocation4] sm:$0x3] %vm249, %v2572
  %v2575 = vld [vmem:[%s251] sm:$0x3]
  %2576 = vmatpush.msra.mxu0 0.0
  %2577 = vmatpush.msra.mxu0 0.0
  %2578 = vmatpush.msra.mxu0 0.0
  %2579 = vmatpush.msra.mxu0 0.0
  %2580 = vmatpush.msra.mxu0 0.0
  %2581 = vmatpush.msra.mxu0 0.0
  %2582 = vmatpush.msra.mxu0 0.0
  %2583 = vmatpush.msra.mxu0 0.0
  %2584 = vmatpush.msra.mxu0 0.0
  %2585 = vmatpush.msra.mxu0 0.0
  %2586 = vmatpush.msra.mxu0 0.0
  %2587 = vmatpush.msra.mxu0 0.0
  %2588 = vmatpush.msra.mxu0 0.0
  %2589 = vmatpush.msra.mxu0 0.0
  %2590 = vmatpush.msra.mxu0 %v2444
  %2591 = vmatpush.msra.mxu0 %v2443
  %2592 = vmatmul.f32.gmra.mxu0 %v185
  %v2593 = vpop.f32.mrf.mxu0
  %v2594 = vadd.f32 0.0, %v2593
  %2595 = vdwg.mxu0
  %v2596 = vadd.f32 %v2575, %v2594
  %v2597 = vxor.u32 %v2596, 2147483648
  %v2598 = vmul.f32 %v2597, 1.442695
  %v2599 = vpow.pop %v2598
  %v2600 = vadd.f32 %v2599, 1.0
  %v2601 = vrcp.pop %v2600
  %v2602 = vmul.f32 %v2600, %v2601
  %v2603 = vsub.f32 1.0, %v2602
  %v2604 = vmul.f32 %v2601, %v2603
  %v2605 = vadd.f32 %v2601, %v2604
  %vm2606 = vweird.f32 %v2600
  %vm2607 = vweird.f32 %v2601
  %vm2608 = vmor %vm2606, %vm2607
  %v2609 = vsel %vm2608, %v2601, %v2605
  %v2610 = vand.u32 2147483647, %v2600
  %vm2611 = vcmp.eq.f32.partialorder %v2610, 8.507059e+37
  %v2612 = vand.u32 %v2600, 2147483648
  %v2613 = vor.u32 1.1754944e-38, %v2612
  %v2614 = vsel %vm2611, %v2613, %v2609
  %v2615 = vmul.f32 1.0, %v2614
  %v2616 = vtanh.pop %v2596
  %v2617 = vmul.f32 %v2615, 0.0
  %2619 = vrot.lane.b32.xlu0 %v2616, 96
  %v2620 = vpop.permute.xlu0 %2619
  %v2622 = vmul.f32 %v2615, %v2620
  %2624 = vrot.lane.b32.xlu0 %v2622, 16
  %v2625 = vpop.permute.xlu0 %2624
  %v2627 = vadd.f32 %v2617, %v2625
  %v2628 = vtanh.pop %v2627
  %2630 = vrot.lane.b32.xlu0 %v2628, 32
  %v2631 = vpop.permute.xlu0 %2630
  %v2633 = vmul.f32 %v2615, %v2631
  %2635 = vrot.lane.b32.xlu0 %v2633, 80
  %v2636 = vpop.permute.xlu0 %2635
  %2638 = vst.msk [vmem:[%s315] sm:$0x3] %vm249, %v2636
  %v2639 = vld [vmem:[%s317] sm:$0x3]
  %v2640 = vsel %vm183, %v2572, 0
  %2642 = vmatpush.msra.mxu0 0.0
  %2643 = vmatpush.msra.mxu0 0.0
  %2644 = vmatpush.msra.mxu0 0.0
  %2645 = vmatpush.msra.mxu0 0.0
  %2646 = vmatpush.msra.mxu0 0.0
  %2647 = vmatpush.msra.mxu0 0.0
  %2648 = vmatpush.msra.mxu0 0.0
  %2649 = vmatpush.msra.mxu0 0.0
  %2650 = vmatpush.msra.mxu0 0.0
  %2651 = vmatpush.msra.mxu0 0.0
  %2652 = vmatpush.msra.mxu0 0.0
  %2653 = vmatpush.msra.mxu0 0.0
  %2654 = vmatpush.msra.mxu0 0.0
  %2655 = vmatpush.msra.mxu0 0.0
  %2656 = vmatpush.msra.mxu0 %v2441
  %2657 = vmatpush.msra.mxu0 %v2440
  %2658 = vmatmul.f32.gmra.mxu0 %v2640
  %v2659 = vpop.f32.mrf.mxu0
  %v2660 = vadd.f32 0.0, %v2659
  %2661 = vdwg.mxu0
  %v2662 = vadd.f32 %v2639, %v2660
  %v2663 = vxor.u32 %v2662, 2147483648
  %v2664 = vmul.f32 %v2663, 1.442695
  %v2665 = vpow.pop %v2664
  %v2666 = vadd.f32 %v2665, 1.0
  %v2667 = vrcp.pop %v2666
  %v2668 = vmul.f32 %v2666, %v2667
  %v2669 = vsub.f32 1.0, %v2668
  %v2670 = vmul.f32 %v2667, %v2669
  %v2671 = vadd.f32 %v2667, %v2670
  %vm2672 = vweird.f32 %v2666
  %vm2673 = vweird.f32 %v2667
  %vm2674 = vmor %vm2672, %vm2673
  %v2675 = vsel %vm2674, %v2667, %v2671
  %v2676 = vand.u32 2147483647, %v2666
  %vm2677 = vcmp.eq.f32.partialorder %v2676, 8.507059e+37
  %v2678 = vand.u32 %v2666, 2147483648
  %v2679 = vor.u32 1.1754944e-38, %v2678
  %v2680 = vsel %vm2677, %v2679, %v2675
  %v2681 = vmul.f32 1.0, %v2680
  %v2682 = vtanh.pop %v2662
  %v2683 = vmul.f32 %v2681, %v2563
  %2685 = vrot.lane.b32.xlu0 %v2682, 96
  %v2686 = vpop.permute.xlu0 %2685
  %v2688 = vmul.f32 %v2681, %v2686
  %2690 = vrot.lane.b32.xlu0 %v2688, 16
  %v2691 = vpop.permute.xlu0 %2690
  %v2693 = vadd.f32 %v2683, %v2691
  %v2694 = vtanh.pop %v2693
  %2696 = vrot.lane.b32.xlu0 %v2694, 32
  %v2697 = vpop.permute.xlu0 %2696
  %v2699 = vmul.f32 %v2681, %v2697
  %2701 = vrot.lane.b32.xlu0 %v2699, 80
  %v2702 = vpop.permute.xlu0 %2701
  %2704 = vst.msk [vmem:[%s383] sm:$0x3] %vm249, %v2702
  %v2705 = vld [vmem:[%s385] sm:$0x3]
  %v2706 = vsel %vm183, %v2636, 0
  %2708 = vmatpush.msra.mxu0 0.0
  %2709 = vmatpush.msra.mxu0 0.0
  %2710 = vmatpush.msra.mxu0 0.0
  %2711 = vmatpush.msra.mxu0 0.0
  %2712 = vmatpush.msra.mxu0 0.0
  %2713 = vmatpush.msra.mxu0 0.0
  %2714 = vmatpush.msra.mxu0 0.0
  %2715 = vmatpush.msra.mxu0 0.0
  %2716 = vmatpush.msra.mxu0 0.0
  %2717 = vmatpush.msra.mxu0 0.0
  %2718 = vmatpush.msra.mxu0 0.0
  %2719 = vmatpush.msra.mxu0 0.0
  %2720 = vmatpush.msra.mxu0 0.0
  %2721 = vmatpush.msra.mxu0 0.0
  %2722 = vmatpush.msra.mxu0 %v2444
  %2723 = vmatpush.msra.mxu0 %v2443
  %2724 = vmatmul.f32.gmra.mxu0 %v2706
  %v2725 = vpop.f32.mrf.mxu0
  %v2726 = vadd.f32 0.0, %v2725
  %2727 = vdwg.mxu0
  %v2728 = vadd.f32 %v2705, %v2726
  %v2729 = vxor.u32 %v2728, 2147483648
  %v2730 = vmul.f32 %v2729, 1.442695
  %v2731 = vpow.pop %v2730
  %v2732 = vadd.f32 %v2731, 1.0
  %v2733 = vrcp.pop %v2732
  %v2734 = vmul.f32 %v2732, %v2733
  %v2735 = vsub.f32 1.0, %v2734
  %v2736 = vmul.f32 %v2733, %v2735
  %v2737 = vadd.f32 %v2733, %v2736
  %vm2738 = vweird.f32 %v2732
  %vm2739 = vweird.f32 %v2733
  %vm2740 = vmor %vm2738, %vm2739
  %v2741 = vsel %vm2740, %v2733, %v2737
  %v2742 = vand.u32 2147483647, %v2732
  %vm2743 = vcmp.eq.f32.partialorder %v2742, 8.507059e+37
  %v2744 = vand.u32 %v2732, 2147483648
  %v2745 = vor.u32 1.1754944e-38, %v2744
  %v2746 = vsel %vm2743, %v2745, %v2741
  %v2747 = vmul.f32 1.0, %v2746
  %v2748 = vtanh.pop %v2728
  %v2749 = vmul.f32 %v2747, %v2627
  %2751 = vrot.lane.b32.xlu0 %v2748, 96
  %v2752 = vpop.permute.xlu0 %2751
  %v2754 = vmul.f32 %v2747, %v2752
  %2756 = vrot.lane.b32.xlu0 %v2754, 16
  %v2757 = vpop.permute.xlu0 %2756
  %v2759 = vadd.f32 %v2749, %v2757
  %v2760 = vtanh.pop %v2759
  %2762 = vrot.lane.b32.xlu0 %v2760, 32
  %v2763 = vpop.permute.xlu0 %2762
  %v2765 = vmul.f32 %v2747, %v2763
  %2767 = vrot.lane.b32.xlu0 %v2765, 80
  %v2768 = vpop.permute.xlu0 %2767
  %2770 = vst.msk [vmem:[%s451] sm:$0x3] %vm249, %v2768
  %v2771 = vld [vmem:[%s453] sm:$0x3]
  %v2772 = vsel %vm183, %v2702, 0
  %2774 = vmatpush.msra.mxu0 0.0
  %2775 = vmatpush.msra.mxu0 0.0
  %2776 = vmatpush.msra.mxu0 0.0
  %2777 = vmatpush.msra.mxu0 0.0
  %2778 = vmatpush.msra.mxu0 0.0
  %2779 = vmatpush.msra.mxu0 0.0
  %2780 = vmatpush.msra.mxu0 0.0
  %2781 = vmatpush.msra.mxu0 0.0
  %2782 = vmatpush.msra.mxu0 0.0
  %2783 = vmatpush.msra.mxu0 0.0
  %2784 = vmatpush.msra.mxu0 0.0
  %2785 = vmatpush.msra.mxu0 0.0
  %2786 = vmatpush.msra.mxu0 0.0
  %2787 = vmatpush.msra.mxu0 0.0
  %2788 = vmatpush.msra.mxu0 %v2441
  %2789 = vmatpush.msra.mxu0 %v2440
  %2790 = vmatmul.f32.gmra.mxu0 %v2772
  %v2791 = vpop.f32.mrf.mxu0
  %v2792 = vadd.f32 0.0, %v2791
  %2793 = vdwg.mxu0
  %v2794 = vadd.f32 %v2771, %v2792
  %v2795 = vxor.u32 %v2794, 2147483648
  %v2796 = vmul.f32 %v2795, 1.442695
  %v2797 = vpow.pop %v2796
  %v2798 = vadd.f32 %v2797, 1.0
  %v2799 = vrcp.pop %v2798
  %v2800 = vmul.f32 %v2798, %v2799
  %v2801 = vsub.f32 1.0, %v2800
  %v2802 = vmul.f32 %v2799, %v2801
  %v2803 = vadd.f32 %v2799, %v2802
  %vm2804 = vweird.f32 %v2798
  %vm2805 = vweird.f32 %v2799
  %vm2806 = vmor %vm2804, %vm2805
  %v2807 = vsel %vm2806, %v2799, %v2803
  %v2808 = vand.u32 2147483647, %v2798
  %vm2809 = vcmp.eq.f32.partialorder %v2808, 8.507059e+37
  %v2810 = vand.u32 %v2798, 2147483648
  %v2811 = vor.u32 1.1754944e-38, %v2810
  %v2812 = vsel %vm2809, %v2811, %v2807
  %v2813 = vmul.f32 1.0, %v2812
  %v2814 = vtanh.pop %v2794
  %v2815 = vmul.f32 %v2813, %v2693
  %2817 = vrot.lane.b32.xlu0 %v2814, 96
  %v2818 = vpop.permute.xlu0 %2817
  %v2820 = vmul.f32 %v2813, %v2818
  %2822 = vrot.lane.b32.xlu0 %v2820, 16
  %v2823 = vpop.permute.xlu0 %2822
  %v2825 = vadd.f32 %v2815, %v2823
  %v2826 = vtanh.pop %v2825
  %2828 = vrot.lane.b32.xlu0 %v2826, 32
  %v2829 = vpop.permute.xlu0 %2828
  %v2831 = vmul.f32 %v2813, %v2829
  %2833 = vrot.lane.b32.xlu0 %v2831, 80
  %v2834 = vpop.permute.xlu0 %2833
  %2836 = vst.msk [vmem:[%s519] sm:$0x3] %vm249, %v2834
  %v2837 = vld [vmem:[%s521] sm:$0x3]
  %v2838 = vsel %vm183, %v2768, 0
  %2840 = vmatpush.msra.mxu0 0.0
  %2841 = vmatpush.msra.mxu0 0.0
  %2842 = vmatpush.msra.mxu0 0.0
  %2843 = vmatpush.msra.mxu0 0.0
  %2844 = vmatpush.msra.mxu0 0.0
  %2845 = vmatpush.msra.mxu0 0.0
  %2846 = vmatpush.msra.mxu0 0.0
  %2847 = vmatpush.msra.mxu0 0.0
  %2848 = vmatpush.msra.mxu0 0.0
  %2849 = vmatpush.msra.mxu0 0.0
  %2850 = vmatpush.msra.mxu0 0.0
  %2851 = vmatpush.msra.mxu0 0.0
  %2852 = vmatpush.msra.mxu0 0.0
  %2853 = vmatpush.msra.mxu0 0.0
  %2854 = vmatpush.msra.mxu0 %v2444
  %2855 = vmatpush.msra.mxu0 %v2443
  %2856 = vmatmul.f32.gmra.mxu0 %v2838
  %v2857 = vpop.f32.mrf.mxu0
  %v2858 = vadd.f32 0.0, %v2857
  %2859 = vdwg.mxu0
  %v2860 = vadd.f32 %v2837, %v2858
  %v2861 = vxor.u32 %v2860, 2147483648
  %v2862 = vmul.f32 %v2861, 1.442695
  %v2863 = vpow.pop %v2862
  %v2864 = vadd.f32 %v2863, 1.0
  %v2865 = vrcp.pop %v2864
  %v2866 = vmul.f32 %v2864, %v2865
  %v2867 = vsub.f32 1.0, %v2866
  %v2868 = vmul.f32 %v2865, %v2867
  %v2869 = vadd.f32 %v2865, %v2868
  %vm2870 = vweird.f32 %v2864
  %vm2871 = vweird.f32 %v2865
  %vm2872 = vmor %vm2870, %vm2871
  %v2873 = vsel %vm2872, %v2865, %v2869
  %v2874 = vand.u32 2147483647, %v2864
  %vm2875 = vcmp.eq.f32.partialorder %v2874, 8.507059e+37
  %v2876 = vand.u32 %v2864, 2147483648
  %v2877 = vor.u32 1.1754944e-38, %v2876
  %v2878 = vsel %vm2875, %v2877, %v2873
  %v2879 = vmul.f32 1.0, %v2878
  %v2880 = vtanh.pop %v2860
  %v2881 = vmul.f32 %v2879, %v2759
  %2883 = vrot.lane.b32.xlu0 %v2880, 96
  %v2884 = vpop.permute.xlu0 %2883
  %v2886 = vmul.f32 %v2879, %v2884
  %2888 = vrot.lane.b32.xlu0 %v2886, 16
  %v2889 = vpop.permute.xlu0 %2888
  %v2891 = vadd.f32 %v2881, %v2889
  %v2892 = vtanh.pop %v2891
  %2894 = vrot.lane.b32.xlu0 %v2892, 32
  %v2895 = vpop.permute.xlu0 %2894
  %v2897 = vmul.f32 %v2879, %v2895
  %2899 = vrot.lane.b32.xlu0 %v2897, 80
  %v2900 = vpop.permute.xlu0 %2899
  %2902 = vst.msk [vmem:[%s587] sm:$0x3] %vm249, %v2900
  %v2903 = vld [vmem:[%s589] sm:$0x3]
  %v2904 = vsel %vm183, %v2834, 0
  %2906 = vmatpush.msra.mxu0 0.0
  %2907 = vmatpush.msra.mxu0 0.0
  %2908 = vmatpush.msra.mxu0 0.0
  %2909 = vmatpush.msra.mxu0 0.0
  %2910 = vmatpush.msra.mxu0 0.0
  %2911 = vmatpush.msra.mxu0 0.0
  %2912 = vmatpush.msra.mxu0 0.0
  %2913 = vmatpush.msra.mxu0 0.0
  %2914 = vmatpush.msra.mxu0 0.0
  %2915 = vmatpush.msra.mxu0 0.0
  %2916 = vmatpush.msra.mxu0 0.0
  %2917 = vmatpush.msra.mxu0 0.0
  %2918 = vmatpush.msra.mxu0 0.0
  %2919 = vmatpush.msra.mxu0 0.0
  %2920 = vmatpush.msra.mxu0 %v2441
  %2921 = vmatpush.msra.mxu0 %v2440
  %2922 = vmatmul.f32.gmra.mxu0 %v2904
  %v2923 = vpop.f32.mrf.mxu0
  %v2924 = vadd.f32 0.0, %v2923
  %2925 = vdwg.mxu0
  %v2926 = vadd.f32 %v2903, %v2924
  %v2927 = vxor.u32 %v2926, 2147483648
  %v2928 = vmul.f32 %v2927, 1.442695
  %v2929 = vpow.pop %v2928
  %v2930 = vadd.f32 %v2929, 1.0
  %v2931 = vrcp.pop %v2930
  %v2932 = vmul.f32 %v2930, %v2931
  %v2933 = vsub.f32 1.0, %v2932
  %v2934 = vmul.f32 %v2931, %v2933
  %v2935 = vadd.f32 %v2931, %v2934
  %vm2936 = vweird.f32 %v2930
  %vm2937 = vweird.f32 %v2931
  %vm2938 = vmor %vm2936, %vm2937
  %v2939 = vsel %vm2938, %v2931, %v2935
  %v2940 = vand.u32 2147483647, %v2930
  %vm2941 = vcmp.eq.f32.partialorder %v2940, 8.507059e+37
  %v2942 = vand.u32 %v2930, 2147483648
  %v2943 = vor.u32 1.1754944e-38, %v2942
  %v2944 = vsel %vm2941, %v2943, %v2939
  %v2945 = vmul.f32 1.0, %v2944
  %v2946 = vtanh.pop %v2926
  %v2947 = vmul.f32 %v2945, %v2825
  %2949 = vrot.lane.b32.xlu0 %v2946, 96
  %v2950 = vpop.permute.xlu0 %2949
  %v2952 = vmul.f32 %v2945, %v2950
  %2954 = vrot.lane.b32.xlu0 %v2952, 16
  %v2955 = vpop.permute.xlu0 %2954
  %v2957 = vadd.f32 %v2947, %v2955
  %v2958 = vtanh.pop %v2957
  %2960 = vrot.lane.b32.xlu0 %v2958, 32
  %v2961 = vpop.permute.xlu0 %2960
  %v2963 = vmul.f32 %v2945, %v2961
  %2965 = vrot.lane.b32.xlu0 %v2963, 80
  %v2966 = vpop.permute.xlu0 %2965
  %2968 = vst.msk [vmem:[%s655] sm:$0x3] %vm249, %v2966
  %v2969 = vld [vmem:[%s657] sm:$0x3]
  %v2970 = vsel %vm183, %v2900, 0
  %2972 = vmatpush.msra.mxu0 0.0
  %2973 = vmatpush.msra.mxu0 0.0
  %2974 = vmatpush.msra.mxu0 0.0
  %2975 = vmatpush.msra.mxu0 0.0
  %2976 = vmatpush.msra.mxu0 0.0
  %2977 = vmatpush.msra.mxu0 0.0
  %2978 = vmatpush.msra.mxu0 0.0
  %2979 = vmatpush.msra.mxu0 0.0
  %2980 = vmatpush.msra.mxu0 0.0
  %2981 = vmatpush.msra.mxu0 0.0
  %2982 = vmatpush.msra.mxu0 0.0
  %2983 = vmatpush.msra.mxu0 0.0
  %2984 = vmatpush.msra.mxu0 0.0
  %2985 = vmatpush.msra.mxu0 0.0
  %2986 = vmatpush.msra.mxu0 %v2444
  %2987 = vmatpush.msra.mxu0 %v2443
  %2988 = vmatmul.f32.gmra.mxu0 %v2970
  %v2989 = vpop.f32.mrf.mxu0
  %v2990 = vadd.f32 0.0, %v2989
  %2991 = vdwg.mxu0
  %v2992 = vadd.f32 %v2969, %v2990
  %v2993 = vxor.u32 %v2992, 2147483648
  %v2994 = vmul.f32 %v2993, 1.442695
  %v2995 = vpow.pop %v2994
  %v2996 = vadd.f32 %v2995, 1.0
  %v2997 = vrcp.pop %v2996
  %v2998 = vmul.f32 %v2996, %v2997
  %v2999 = vsub.f32 1.0, %v2998
  %v3000 = vmul.f32 %v2997, %v2999
  %v3001 = vadd.f32 %v2997, %v3000
  %vm3002 = vweird.f32 %v2996
  %vm3003 = vweird.f32 %v2997
  %vm3004 = vmor %vm3002, %vm3003
  %v3005 = vsel %vm3004, %v2997, %v3001
  %v3006 = vand.u32 2147483647, %v2996
  %vm3007 = vcmp.eq.f32.partialorder %v3006, 8.507059e+37
  %v3008 = vand.u32 %v2996, 2147483648
  %v3009 = vor.u32 1.1754944e-38, %v3008
  %v3010 = vsel %vm3007, %v3009, %v3005
  %v3011 = vmul.f32 1.0, %v3010
  %v3012 = vtanh.pop %v2992
  %v3013 = vmul.f32 %v3011, %v2891
  %3015 = vrot.lane.b32.xlu0 %v3012, 96
  %v3016 = vpop.permute.xlu0 %3015
  %v3018 = vmul.f32 %v3011, %v3016
  %3020 = vrot.lane.b32.xlu0 %v3018, 16
  %v3021 = vpop.permute.xlu0 %3020
  %v3023 = vadd.f32 %v3013, %v3021
  %v3024 = vtanh.pop %v3023
  %3026 = vrot.lane.b32.xlu0 %v3024, 32
  %v3027 = vpop.permute.xlu0 %3026
  %v3029 = vmul.f32 %v3011, %v3027
  %3031 = vrot.lane.b32.xlu0 %v3029, 80
  %v3032 = vpop.permute.xlu0 %3031
  %3034 = vst.msk [vmem:[%s723] sm:$0x3] %vm249, %v3032
  %v3035 = vld [vmem:[%s725] sm:$0x3]
  %v3036 = vsel %vm183, %v2966, 0
  %3038 = vmatpush.msra.mxu0 0.0
  %3039 = vmatpush.msra.mxu0 0.0
  %3040 = vmatpush.msra.mxu0 0.0
  %3041 = vmatpush.msra.mxu0 0.0
  %3042 = vmatpush.msra.mxu0 0.0
  %3043 = vmatpush.msra.mxu0 0.0
  %3044 = vmatpush.msra.mxu0 0.0
  %3045 = vmatpush.msra.mxu0 0.0
  %3046 = vmatpush.msra.mxu0 0.0
  %3047 = vmatpush.msra.mxu0 0.0
  %3048 = vmatpush.msra.mxu0 0.0
  %3049 = vmatpush.msra.mxu0 0.0
  %3050 = vmatpush.msra.mxu0 0.0
  %3051 = vmatpush.msra.mxu0 0.0
  %3052 = vmatpush.msra.mxu0 %v2441
  %3053 = vmatpush.msra.mxu0 %v2440
  %3054 = vmatmul.f32.gmra.mxu0 %v3036
  %v3055 = vpop.f32.mrf.mxu0
  %v3056 = vadd.f32 0.0, %v3055
  %3057 = vdwg.mxu0
  %v3058 = vadd.f32 %v3035, %v3056
  %v3059 = vxor.u32 %v3058, 2147483648
  %v3060 = vmul.f32 %v3059, 1.442695
  %v3061 = vpow.pop %v3060
  %v3062 = vadd.f32 %v3061, 1.0
  %v3063 = vrcp.pop %v3062
  %v3064 = vmul.f32 %v3062, %v3063
  %v3065 = vsub.f32 1.0, %v3064
  %v3066 = vmul.f32 %v3063, %v3065
  %v3067 = vadd.f32 %v3063, %v3066
  %vm3068 = vweird.f32 %v3062
  %vm3069 = vweird.f32 %v3063
  %vm3070 = vmor %vm3068, %vm3069
  %v3071 = vsel %vm3070, %v3063, %v3067
  %v3072 = vand.u32 2147483647, %v3062
  %vm3073 = vcmp.eq.f32.partialorder %v3072, 8.507059e+37
  %v3074 = vand.u32 %v3062, 2147483648
  %v3075 = vor.u32 1.1754944e-38, %v3074
  %v3076 = vsel %vm3073, %v3075, %v3071
  %v3077 = vmul.f32 1.0, %v3076
  %v3078 = vtanh.pop %v3058
  %v3079 = vmul.f32 %v3077, %v2957
  %3081 = vrot.lane.b32.xlu0 %v3078, 96
  %v3082 = vpop.permute.xlu0 %3081
  %v3084 = vmul.f32 %v3077, %v3082
  %3086 = vrot.lane.b32.xlu0 %v3084, 16
  %v3087 = vpop.permute.xlu0 %3086
  %v3089 = vadd.f32 %v3079, %v3087
  %v3090 = vtanh.pop %v3089
  %3092 = vrot.lane.b32.xlu0 %v3090, 32
  %v3093 = vpop.permute.xlu0 %3092
  %v3095 = vmul.f32 %v3077, %v3093
  %3097 = vrot.lane.b32.xlu0 %v3095, 80
  %v3098 = vpop.permute.xlu0 %3097
  %3100 = vst.msk [vmem:[%s791] sm:$0x3] %vm249, %v3098
  %v3101 = vld [vmem:[%s793] sm:$0x3]
  %v3102 = vsel %vm183, %v3032, 0
  %3104 = vmatpush.msra.mxu0 0.0
  %3105 = vmatpush.msra.mxu0 0.0
  %3106 = vmatpush.msra.mxu0 0.0
  %3107 = vmatpush.msra.mxu0 0.0
  %3108 = vmatpush.msra.mxu0 0.0
  %3109 = vmatpush.msra.mxu0 0.0
  %3110 = vmatpush.msra.mxu0 0.0
  %3111 = vmatpush.msra.mxu0 0.0
  %3112 = vmatpush.msra.mxu0 0.0
  %3113 = vmatpush.msra.mxu0 0.0
  %3114 = vmatpush.msra.mxu0 0.0
  %3115 = vmatpush.msra.mxu0 0.0
  %3116 = vmatpush.msra.mxu0 0.0
  %3117 = vmatpush.msra.mxu0 0.0
  %3118 = vmatpush.msra.mxu0 %v2444
  %3119 = vmatpush.msra.mxu0 %v2443
  %3120 = vmatmul.f32.gmra.mxu0 %v3102
  %v3121 = vpop.f32.mrf.mxu0
  %v3122 = vadd.f32 0.0, %v3121
  %3123 = vdwg.mxu0
  %v3124 = vadd.f32 %v3101, %v3122
  %v3125 = vxor.u32 %v3124, 2147483648
  %v3126 = vmul.f32 %v3125, 1.442695
  %v3127 = vpow.pop %v3126
  %v3128 = vadd.f32 %v3127, 1.0
  %v3129 = vrcp.pop %v3128
  %v3130 = vmul.f32 %v3128, %v3129
  %v3131 = vsub.f32 1.0, %v3130
  %v3132 = vmul.f32 %v3129, %v3131
  %v3133 = vadd.f32 %v3129, %v3132
  %vm3134 = vweird.f32 %v3128
  %vm3135 = vweird.f32 %v3129
  %vm3136 = vmor %vm3134, %vm3135
  %v3137 = vsel %vm3136, %v3129, %v3133
  %v3138 = vand.u32 2147483647, %v3128
  %vm3139 = vcmp.eq.f32.partialorder %v3138, 8.507059e+37
  %v3140 = vand.u32 %v3128, 2147483648
  %v3141 = vor.u32 1.1754944e-38, %v3140
  %v3142 = vsel %vm3139, %v3141, %v3137
  %v3143 = vmul.f32 1.0, %v3142
  %v3144 = vtanh.pop %v3124
  %v3145 = vmul.f32 %v3143, %v3023
  %3147 = vrot.lane.b32.xlu0 %v3144, 96
  %v3148 = vpop.permute.xlu0 %3147
  %v3150 = vmul.f32 %v3143, %v3148
  %3152 = vrot.lane.b32.xlu0 %v3150, 16
  %v3153 = vpop.permute.xlu0 %3152
  %v3155 = vadd.f32 %v3145, %v3153
  %v3156 = vtanh.pop %v3155
  %3158 = vrot.lane.b32.xlu0 %v3156, 32
  %v3159 = vpop.permute.xlu0 %3158
  %v3161 = vmul.f32 %v3143, %v3159
  %3163 = vrot.lane.b32.xlu0 %v3161, 80
  %v3164 = vpop.permute.xlu0 %3163
  %3166 = vst.msk [vmem:[%s859] sm:$0x3] %vm249, %v3164
  %v3167 = vld [vmem:[%s861] sm:$0x3]
  %v3168 = vsel %vm183, %v3098, 0
  %3170 = vmatpush.msra.mxu0 0.0
  %3171 = vmatpush.msra.mxu0 0.0
  %3172 = vmatpush.msra.mxu0 0.0
  %3173 = vmatpush.msra.mxu0 0.0
  %3174 = vmatpush.msra.mxu0 0.0
  %3175 = vmatpush.msra.mxu0 0.0
  %3176 = vmatpush.msra.mxu0 0.0
  %3177 = vmatpush.msra.mxu0 0.0
  %3178 = vmatpush.msra.mxu0 0.0
  %3179 = vmatpush.msra.mxu0 0.0
  %3180 = vmatpush.msra.mxu0 0.0
  %3181 = vmatpush.msra.mxu0 0.0
  %3182 = vmatpush.msra.mxu0 0.0
  %3183 = vmatpush.msra.mxu0 0.0
  %3184 = vmatpush.msra.mxu0 %v2441
  %3185 = vmatpush.msra.mxu0 %v2440
  %3186 = vmatmul.f32.gmra.mxu0 %v3168
  %v3187 = vpop.f32.mrf.mxu0
  %v3188 = vadd.f32 0.0, %v3187
  %3189 = vdwg.mxu0
  %v3190 = vadd.f32 %v3167, %v3188
  %v3191 = vxor.u32 %v3190, 2147483648
  %v3192 = vmul.f32 %v3191, 1.442695
  %v3193 = vpow.pop %v3192
  %v3194 = vadd.f32 %v3193, 1.0
  %v3195 = vrcp.pop %v3194
  %v3196 = vmul.f32 %v3194, %v3195
  %v3197 = vsub.f32 1.0, %v3196
  %v3198 = vmul.f32 %v3195, %v3197
  %v3199 = vadd.f32 %v3195, %v3198
  %vm3200 = vweird.f32 %v3194
  %vm3201 = vweird.f32 %v3195
  %vm3202 = vmor %vm3200, %vm3201
  %v3203 = vsel %vm3202, %v3195, %v3199
  %v3204 = vand.u32 2147483647, %v3194
  %vm3205 = vcmp.eq.f32.partialorder %v3204, 8.507059e+37
  %v3206 = vand.u32 %v3194, 2147483648
  %v3207 = vor.u32 1.1754944e-38, %v3206
  %v3208 = vsel %vm3205, %v3207, %v3203
  %v3209 = vmul.f32 1.0, %v3208
  %v3210 = vtanh.pop %v3190
  %v3211 = vmul.f32 %v3209, %v3089
  %3213 = vrot.lane.b32.xlu0 %v3210, 96
  %v3214 = vpop.permute.xlu0 %3213
  %v3216 = vmul.f32 %v3209, %v3214
  %3218 = vrot.lane.b32.xlu0 %v3216, 16
  %v3219 = vpop.permute.xlu0 %3218
  %v3221 = vadd.f32 %v3211, %v3219
  %v3222 = vtanh.pop %v3221
  %3224 = vrot.lane.b32.xlu0 %v3222, 32
  %v3225 = vpop.permute.xlu0 %3224
  %v3227 = vmul.f32 %v3209, %v3225
  %3229 = vrot.lane.b32.xlu0 %v3227, 80
  %v3230 = vpop.permute.xlu0 %3229
  %3232 = vst.msk [vmem:[%s927] sm:$0x3] %vm249, %v3230
  %v3233 = vld [vmem:[%s929] sm:$0x3]
  %v3234 = vsel %vm183, %v3164, 0
  %3236 = vmatpush.msra.mxu0 0.0
  %3237 = vmatpush.msra.mxu0 0.0
  %3238 = vmatpush.msra.mxu0 0.0
  %3239 = vmatpush.msra.mxu0 0.0
  %3240 = vmatpush.msra.mxu0 0.0
  %3241 = vmatpush.msra.mxu0 0.0
  %3242 = vmatpush.msra.mxu0 0.0
  %3243 = vmatpush.msra.mxu0 0.0
  %3244 = vmatpush.msra.mxu0 0.0
  %3245 = vmatpush.msra.mxu0 0.0
  %3246 = vmatpush.msra.mxu0 0.0
  %3247 = vmatpush.msra.mxu0 0.0
  %3248 = vmatpush.msra.mxu0 0.0
  %3249 = vmatpush.msra.mxu0 0.0
  %3250 = vmatpush.msra.mxu0 %v2444
  %3251 = vmatpush.msra.mxu0 %v2443
  %3252 = vmatmul.f32.gmra.mxu0 %v3234
  %v3253 = vpop.f32.mrf.mxu0
  %v3254 = vadd.f32 0.0, %v3253
  %3255 = vdwg.mxu0
  %v3256 = vadd.f32 %v3233, %v3254
  %v3257 = vxor.u32 %v3256, 2147483648
  %v3258 = vmul.f32 %v3257, 1.442695
  %v3259 = vpow.pop %v3258
  %v3260 = vadd.f32 %v3259, 1.0
  %v3261 = vrcp.pop %v3260
  %v3262 = vmul.f32 %v3260, %v3261
  %v3263 = vsub.f32 1.0, %v3262
  %v3264 = vmul.f32 %v3261, %v3263
  %v3265 = vadd.f32 %v3261, %v3264
  %vm3266 = vweird.f32 %v3260
  %vm3267 = vweird.f32 %v3261
  %vm3268 = vmor %vm3266, %vm3267
  %v3269 = vsel %vm3268, %v3261, %v3265
  %v3270 = vand.u32 2147483647, %v3260
  %vm3271 = vcmp.eq.f32.partialorder %v3270, 8.507059e+37
  %v3272 = vand.u32 %v3260, 2147483648
  %v3273 = vor.u32 1.1754944e-38, %v3272
  %v3274 = vsel %vm3271, %v3273, %v3269
  %v3275 = vmul.f32 1.0, %v3274
  %v3276 = vtanh.pop %v3256
  %v3277 = vmul.f32 %v3275, %v3155
  %3279 = vrot.lane.b32.xlu0 %v3276, 96
  %v3280 = vpop.permute.xlu0 %3279
  %v3282 = vmul.f32 %v3275, %v3280
  %3284 = vrot.lane.b32.xlu0 %v3282, 16
  %v3285 = vpop.permute.xlu0 %3284
  %v3287 = vadd.f32 %v3277, %v3285
  %v3288 = vtanh.pop %v3287
  %3290 = vrot.lane.b32.xlu0 %v3288, 32
  %v3291 = vpop.permute.xlu0 %3290
  %v3293 = vmul.f32 %v3275, %v3291
  %3295 = vrot.lane.b32.xlu0 %v3293, 80
  %v3296 = vpop.permute.xlu0 %3295
  %3298 = vst.msk [vmem:[%s995] sm:$0x3] %vm249, %v3296
  %v3299 = vld [vmem:[%s997] sm:$0x3]
  %v3300 = vsel %vm183, %v3230, 0
  %3302 = vmatpush.msra.mxu0 0.0
  %3303 = vmatpush.msra.mxu0 0.0
  %3304 = vmatpush.msra.mxu0 0.0
  %3305 = vmatpush.msra.mxu0 0.0
  %3306 = vmatpush.msra.mxu0 0.0
  %3307 = vmatpush.msra.mxu0 0.0
  %3308 = vmatpush.msra.mxu0 0.0
  %3309 = vmatpush.msra.mxu0 0.0
  %3310 = vmatpush.msra.mxu0 0.0
  %3311 = vmatpush.msra.mxu0 0.0
  %3312 = vmatpush.msra.mxu0 0.0
  %3313 = vmatpush.msra.mxu0 0.0
  %3314 = vmatpush.msra.mxu0 0.0
  %3315 = vmatpush.msra.mxu0 0.0
  %3316 = vmatpush.msra.mxu0 %v2441
  %3317 = vmatpush.msra.mxu0 %v2440
  %3318 = vmatmul.f32.gmra.mxu0 %v3300
  %v3319 = vpop.f32.mrf.mxu0
  %v3320 = vadd.f32 0.0, %v3319
  %3321 = vdwg.mxu0
  %v3322 = vadd.f32 %v3299, %v3320
  %v3323 = vxor.u32 %v3322, 2147483648
  %v3324 = vmul.f32 %v3323, 1.442695
  %v3325 = vpow.pop %v3324
  %v3326 = vadd.f32 %v3325, 1.0
  %v3327 = vrcp.pop %v3326
  %v3328 = vmul.f32 %v3326, %v3327
  %v3329 = vsub.f32 1.0, %v3328
  %v3330 = vmul.f32 %v3327, %v3329
  %v3331 = vadd.f32 %v3327, %v3330
  %vm3332 = vweird.f32 %v3326
  %vm3333 = vweird.f32 %v3327
  %vm3334 = vmor %vm3332, %vm3333
  %v3335 = vsel %vm3334, %v3327, %v3331
  %v3336 = vand.u32 2147483647, %v3326
  %vm3337 = vcmp.eq.f32.partialorder %v3336, 8.507059e+37
  %v3338 = vand.u32 %v3326, 2147483648
  %v3339 = vor.u32 1.1754944e-38, %v3338
  %v3340 = vsel %vm3337, %v3339, %v3335
  %v3341 = vmul.f32 1.0, %v3340
  %v3342 = vtanh.pop %v3322
  %v3343 = vmul.f32 %v3341, %v3221
  %3345 = vrot.lane.b32.xlu0 %v3342, 96
  %v3346 = vpop.permute.xlu0 %3345
  %v3348 = vmul.f32 %v3341, %v3346
  %3350 = vrot.lane.b32.xlu0 %v3348, 16
  %v3351 = vpop.permute.xlu0 %3350
  %v3353 = vadd.f32 %v3343, %v3351
  %v3354 = vtanh.pop %v3353
  %3356 = vrot.lane.b32.xlu0 %v3354, 32
  %v3357 = vpop.permute.xlu0 %3356
  %v3359 = vmul.f32 %v3341, %v3357
  %3361 = vrot.lane.b32.xlu0 %v3359, 80
  %v3362 = vpop.permute.xlu0 %3361
  %3364 = vst.msk [vmem:[%s1063] sm:$0x3] %vm249, %v3362
  %v3365 = vld [vmem:[%s1065] sm:$0x3]
  %v3366 = vsel %vm183, %v3296, 0
  %3368 = vmatpush.msra.mxu0 0.0
  %3369 = vmatpush.msra.mxu0 0.0
  %3370 = vmatpush.msra.mxu0 0.0
  %3371 = vmatpush.msra.mxu0 0.0
  %3372 = vmatpush.msra.mxu0 0.0
  %3373 = vmatpush.msra.mxu0 0.0
  %3374 = vmatpush.msra.mxu0 0.0
  %3375 = vmatpush.msra.mxu0 0.0
  %3376 = vmatpush.msra.mxu0 0.0
  %3377 = vmatpush.msra.mxu0 0.0
  %3378 = vmatpush.msra.mxu0 0.0
  %3379 = vmatpush.msra.mxu0 0.0
  %3380 = vmatpush.msra.mxu0 0.0
  %3381 = vmatpush.msra.mxu0 0.0
  %3382 = vmatpush.msra.mxu0 %v2444
  %3383 = vmatpush.msra.mxu0 %v2443
  %3384 = vmatmul.f32.gmra.mxu0 %v3366
  %v3385 = vpop.f32.mrf.mxu0
  %v3386 = vadd.f32 0.0, %v3385
  %3387 = vdwg.mxu0
  %v3388 = vadd.f32 %v3365, %v3386
  %v3389 = vxor.u32 %v3388, 2147483648
  %v3390 = vmul.f32 %v3389, 1.442695
  %v3391 = vpow.pop %v3390
  %v3392 = vadd.f32 %v3391, 1.0
  %v3393 = vrcp.pop %v3392
  %v3394 = vmul.f32 %v3392, %v3393
  %v3395 = vsub.f32 1.0, %v3394
  %v3396 = vmul.f32 %v3393, %v3395
  %v3397 = vadd.f32 %v3393, %v3396
  %vm3398 = vweird.f32 %v3392
  %vm3399 = vweird.f32 %v3393
  %vm3400 = vmor %vm3398, %vm3399
  %v3401 = vsel %vm3400, %v3393, %v3397
  %v3402 = vand.u32 2147483647, %v3392
  %vm3403 = vcmp.eq.f32.partialorder %v3402, 8.507059e+37
  %v3404 = vand.u32 %v3392, 2147483648
  %v3405 = vor.u32 1.1754944e-38, %v3404
  %v3406 = vsel %vm3403, %v3405, %v3401
  %v3407 = vmul.f32 1.0, %v3406
  %v3408 = vtanh.pop %v3388
  %v3409 = vmul.f32 %v3407, %v3287
  %3411 = vrot.lane.b32.xlu0 %v3408, 96
  %v3412 = vpop.permute.xlu0 %3411
  %v3414 = vmul.f32 %v3407, %v3412
  %3416 = vrot.lane.b32.xlu0 %v3414, 16
  %v3417 = vpop.permute.xlu0 %3416
  %v3419 = vadd.f32 %v3409, %v3417
  %v3420 = vtanh.pop %v3419
  %3422 = vrot.lane.b32.xlu0 %v3420, 32
  %v3423 = vpop.permute.xlu0 %3422
  %v3425 = vmul.f32 %v3407, %v3423
  %3427 = vrot.lane.b32.xlu0 %v3425, 80
  %v3428 = vpop.permute.xlu0 %3427
  %3430 = vst.msk [vmem:[%s1131] sm:$0x3] %vm249, %v3428
  %v3431 = vld [vmem:[%s1133] sm:$0x3]
  %v3432 = vsel %vm183, %v3362, 0
  %3434 = vmatpush.msra.mxu0 0.0
  %3435 = vmatpush.msra.mxu0 0.0
  %3436 = vmatpush.msra.mxu0 0.0
  %3437 = vmatpush.msra.mxu0 0.0
  %3438 = vmatpush.msra.mxu0 0.0
  %3439 = vmatpush.msra.mxu0 0.0
  %3440 = vmatpush.msra.mxu0 0.0
  %3441 = vmatpush.msra.mxu0 0.0
  %3442 = vmatpush.msra.mxu0 0.0
  %3443 = vmatpush.msra.mxu0 0.0
  %3444 = vmatpush.msra.mxu0 0.0
  %3445 = vmatpush.msra.mxu0 0.0
  %3446 = vmatpush.msra.mxu0 0.0
  %3447 = vmatpush.msra.mxu0 0.0
  %3448 = vmatpush.msra.mxu0 %v2441
  %3449 = vmatpush.msra.mxu0 %v2440
  %3450 = vmatmul.f32.gmra.mxu0 %v3432
  %v3451 = vpop.f32.mrf.mxu0
  %v3452 = vadd.f32 0.0, %v3451
  %3453 = vdwg.mxu0
  %v3454 = vadd.f32 %v3431, %v3452
  %v3455 = vxor.u32 %v3454, 2147483648
  %v3456 = vmul.f32 %v3455, 1.442695
  %v3457 = vpow.pop %v3456
  %v3458 = vadd.f32 %v3457, 1.0
  %v3459 = vrcp.pop %v3458
  %v3460 = vmul.f32 %v3458, %v3459
  %v3461 = vsub.f32 1.0, %v3460
  %v3462 = vmul.f32 %v3459, %v3461
  %v3463 = vadd.f32 %v3459, %v3462
  %vm3464 = vweird.f32 %v3458
  %vm3465 = vweird.f32 %v3459
  %vm3466 = vmor %vm3464, %vm3465
  %v3467 = vsel %vm3466, %v3459, %v3463
  %v3468 = vand.u32 2147483647, %v3458
  %vm3469 = vcmp.eq.f32.partialorder %v3468, 8.507059e+37
  %v3470 = vand.u32 %v3458, 2147483648
  %v3471 = vor.u32 1.1754944e-38, %v3470
  %v3472 = vsel %vm3469, %v3471, %v3467
  %v3473 = vmul.f32 1.0, %v3472
  %v3474 = vtanh.pop %v3454
  %v3475 = vmul.f32 %v3473, %v3353
  %3477 = vrot.lane.b32.xlu0 %v3474, 96
  %v3478 = vpop.permute.xlu0 %3477
  %v3480 = vmul.f32 %v3473, %v3478
  %3482 = vrot.lane.b32.xlu0 %v3480, 16
  %v3483 = vpop.permute.xlu0 %3482
  %v3485 = vadd.f32 %v3475, %v3483
  %v3486 = vtanh.pop %v3485
  %3488 = vrot.lane.b32.xlu0 %v3486, 32
  %v3489 = vpop.permute.xlu0 %3488
  %v3491 = vmul.f32 %v3473, %v3489
  %3493 = vrot.lane.b32.xlu0 %v3491, 80
  %v3494 = vpop.permute.xlu0 %3493
  %3496 = vst.msk [vmem:[%s1199] sm:$0x3] %vm249, %v3494
  %v3497 = vld [vmem:[#allocation3] sm:$0x3]
  %v3498 = vsel %vm183, %v3428, 0
  %3500 = vmatpush.msra.mxu0 0.0
  %3501 = vmatpush.msra.mxu0 0.0
  %3502 = vmatpush.msra.mxu0 0.0
  %3503 = vmatpush.msra.mxu0 0.0
  %3504 = vmatpush.msra.mxu0 0.0
  %3505 = vmatpush.msra.mxu0 0.0
  %3506 = vmatpush.msra.mxu0 0.0
  %3507 = vmatpush.msra.mxu0 0.0
  %3508 = vmatpush.msra.mxu0 0.0
  %3509 = vmatpush.msra.mxu0 0.0
  %3510 = vmatpush.msra.mxu0 0.0
  %3511 = vmatpush.msra.mxu0 0.0
  %3512 = vmatpush.msra.mxu0 0.0
  %3513 = vmatpush.msra.mxu0 0.0
  %3514 = vmatpush.msra.mxu0 %v2444
  %3515 = vmatpush.msra.mxu0 %v2443
  %3516 = vmatmul.f32.gmra.mxu0 %v3498
  %v3517 = vpop.f32.mrf.mxu0
  %v3518 = vadd.f32 0.0, %v3517
  %3519 = vdwg.mxu0
  %v3520 = vadd.f32 %v3497, %v3518
  %v3521 = vxor.u32 %v3520, 2147483648
  %v3522 = vmul.f32 %v3521, 1.442695
  %v3523 = vpow.pop %v3522
  %v3524 = vadd.f32 %v3523, 1.0
  %v3525 = vrcp.pop %v3524
  %v3526 = vmul.f32 %v3524, %v3525
  %v3527 = vsub.f32 1.0, %v3526
  %v3528 = vmul.f32 %v3525, %v3527
  %v3529 = vadd.f32 %v3525, %v3528
  %vm3530 = vweird.f32 %v3524
  %vm3531 = vweird.f32 %v3525
  %vm3532 = vmor %vm3530, %vm3531
  %v3533 = vsel %vm3532, %v3525, %v3529
  %v3534 = vand.u32 2147483647, %v3524
  %vm3535 = vcmp.eq.f32.partialorder %v3534, 8.507059e+37
  %v3536 = vand.u32 %v3524, 2147483648
  %v3537 = vor.u32 1.1754944e-38, %v3536
  %v3538 = vsel %vm3535, %v3537, %v3533
  %v3539 = vmul.f32 1.0, %v3538
  %v3540 = vtanh.pop %v3520
  %v3541 = vmul.f32 %v3539, %v3419
  %3543 = vrot.lane.b32.xlu0 %v3540, 96
  %v3544 = vpop.permute.xlu0 %3543
  %v3546 = vmul.f32 %v3539, %v3544
  %3548 = vrot.lane.b32.xlu0 %v3546, 16
  %v3549 = vpop.permute.xlu0 %3548
  %v3551 = vadd.f32 %v3541, %v3549
  %v3552 = vtanh.pop %v3551
  %3554 = vrot.lane.b32.xlu0 %v3552, 32
  %v3555 = vpop.permute.xlu0 %3554
  %v3557 = vmul.f32 %v3539, %v3555
  %3559 = vrot.lane.b32.xlu0 %v3557, 80
  %v3560 = vpop.permute.xlu0 %3559
  %3562 = vst.msk [vmem:[#allocation5] sm:$0x3] %vm249, %v3560
  %v3563 = vld [vmem:[#allocation4] sm:$0xff]
  %v3564 = vld [vmem:[#allocation4 + $0x8] sm:$0xff]
  %v3565 = vld [vmem:[#allocation5] sm:$0xff]
  %v3566 = vld [vmem:[#allocation5 + $0x8] sm:$0xff]
  %3569 = vrot.lane.b32.xlu0 %v3565, 16
  %v3570 = vpop.permute.xlu0 %3569
  %3571 = vrot.lane.b32.xlu0 %v3566, 16
  %v3572 = vpop.permute.xlu0 %3571
  %v3575 = vsel %vm183, %v3563, %v3570
  %v3576 = vsel %vm183, %v3564, %v3572
  %3579 = vrot.lane.b32.xlu0 %v3575, 32
  %v3580 = vpop.permute.xlu0 %3579
  %3581 = vrot.lane.b32.xlu0 %v3576, 32
  %v3582 = vpop.permute.xlu0 %3581
  %vm3585 = vcmask 523520
  %3586 = vst.msk [vmem:[%s9] sm:$0xff] %vm3585, %v3580
  %3587 = vst.msk [vmem:[%s9 + $0x8] sm:$0xff] %vm3585, %v3582
  // Predicated region
  $region38: #{open_unmix_mtl_conv_late_forward.2} parent=0 // pred_check
    _
  $region39: #{open_unmix_mtl_conv_late_forward.2} parent=0 // pred_check_branch
    %3589 = sbr.rel (0) target = $region41
  $region40: #{open_unmix_mtl_conv_late_forward.2} parent=0 // pred_region
    _
  $region41: #{open_unmix_mtl_conv_late_forward.2} parent=0 // pred_fallthru
    _
  // Predicated region
  $region42: #{open_unmix_mtl_conv_late_forward.2} parent=0 // pred_check
    _
  $region43: #{open_unmix_mtl_conv_late_forward.2} parent=0 // pred_check_branch
    %3591 = sbr.rel (0) target = $region45
  $region44: #{open_unmix_mtl_conv_late_forward.2} parent=0 // pred_region
    _
  $region45: #{open_unmix_mtl_conv_late_forward.2} parent=0 // pred_fallthru
    _

</llo_original>
